<compile_context>
chip_gen: v7x
topology: tpu7x:2x2x1
jax: 0.10.0
libtpu: 0.0.40
codegen_flags: <defaults>
</compile_context>

<pallas_src>
import math
from functools import partial

import jax
import jax.numpy as jnp
from jax.experimental import pallas as pl
from jax.experimental.pallas import tpu as pltpu  # noqa: F401  (not needed for this grid-less kernel)

# ------------------------- model hyper-parameters ---------------------------
D_MODEL = 32
NHEAD = 4
HEAD_DIM = D_MODEL // NHEAD
DIM_FFN = 64
NUM_LAYERS = 2
T_TGT = 8       # number of decoder queries (tgt length)
S_MEM = 16      # memory (encoder output) length
BATCH = 2
LN_EPS = 1e-5

PARAM_ORDER = (
    "w_sa", "b_sa", "wo_sa", "bo_sa", "g1", "be1",
    "w_ca", "b_ca", "wo_ca", "bo_ca", "g2", "be2",
    "w1", "b1", "w2", "b2", "g3", "be3",
    "gf", "bf",
)


# ------------------------------ kernel helpers -------------------------------
def _layernorm(x, gamma, beta):
    mu = jnp.mean(x, axis=-1, keepdims=True)
    var = jnp.mean((x - mu) ** 2, axis=-1, keepdims=True)
    return (x - mu) * jax.lax.rsqrt(var + LN_EPS) * gamma + beta


def _mha(q, k, v, batch, t_q, t_k):
    """Multi-head attention on flat (batch*t, D) operands; returns (batch*t_q, D)."""
    d = q.shape[-1]
    hd = d // NHEAD
    scale = 1.0 / math.sqrt(hd)
    qb = (q * scale).reshape(batch, t_q, d)
    kb = k.reshape(batch, t_k, d)
    vb = v.reshape(batch, t_k, d)
    # Head-major batched layout (NHEAD*batch, t, hd) built from static lane slices +
    # a sublane concat, so ONE batched dot_general covers every head and batch element.
    qh = jnp.concatenate([qb[:, :, h * hd:(h + 1) * hd] for h in range(NHEAD)], axis=0)
    kh = jnp.concatenate([kb[:, :, h * hd:(h + 1) * hd] for h in range(NHEAD)], axis=0)
    vh = jnp.concatenate([vb[:, :, h * hd:(h + 1) * hd] for h in range(NHEAD)], axis=0)
    s = jnp.einsum("bqd,bkd->bqk", qh, kh, preferred_element_type=jnp.float32)
    a = jax.nn.softmax(s, axis=-1)
    o = jnp.einsum("bqk,bkd->bqd", a, vh, preferred_element_type=jnp.float32)
    # back to (batch, t_q, d): heads concatenated along the feature (lane) dim
    o = jnp.concatenate([o[h * batch:(h + 1) * batch] for h in range(NHEAD)], axis=-1)
    return o.reshape(batch * t_q, d)


# ------------------------------ fused decoder kernel -------------------------
def decoder_kernel(tgt_ref, mem_ref, qpos_ref, pos_ref,
                   w_sa_ref, b_sa_ref, wo_sa_ref, bo_sa_ref, g1_ref, be1_ref,
                   w_ca_ref, b_ca_ref, wo_ca_ref, bo_ca_ref, g2_ref, be2_ref,
                   w1_ref, b1_ref, w2_ref, b2_ref, g3_ref, be3_ref,
                   gf_ref, bf_ref, out_ref):
    B, T, D = tgt_ref.shape
    M = mem_ref.shape[1]
    NT, NM = B * T, B * M
    L = w_sa_ref.shape[0]

    # Flat (rows, D) batch-major activations; resident in VMEM across all layers.
    x = tgt_ref[...].reshape(NT, D)
    qpos = qpos_ref[...].reshape(NT, D)
    mem = mem_ref[...].reshape(NM, D)
    mem_k = mem + pos_ref[...].reshape(NM, D)   # with_pos_embed(memory, pos); layer-invariant

    for l in range(L):                          # static unroll over decoder layers
        # -------- self-attention: q = k = x + query_pos, v = x (fused in-proj) --------
        q_in = x + qpos
        rows = jnp.concatenate([q_in, x], axis=0)                          # (2*NT, D)
        proj = jnp.dot(rows, w_sa_ref[l],
                       preferred_element_type=jnp.float32) + b_sa_ref[l]   # (2*NT, 3D)
        att = _mha(proj[:NT, 0:D], proj[:NT, D:2 * D], proj[NT:, 2 * D:3 * D], B, T, T)
        att = jnp.dot(att, wo_sa_ref[l],
                      preferred_element_type=jnp.float32) + bo_sa_ref[l]
        x = _layernorm(x + att, g1_ref[l], be1_ref[l])

        # ---- cross-attention: q = x + query_pos, k = memory + pos, v = memory ----
        q_in = x + qpos
        rows = jnp.concatenate([q_in, mem_k, mem], axis=0)                 # (NT+2*NM, D)
        proj = jnp.dot(rows, w_ca_ref[l],
                       preferred_element_type=jnp.float32) + b_ca_ref[l]   # (NT+2*NM, 3D)
        att = _mha(proj[:NT, 0:D], proj[NT:NT + NM, D:2 * D],
                   proj[NT + NM:, 2 * D:3 * D], B, T, M)
        att = jnp.dot(att, wo_ca_ref[l],
                      preferred_element_type=jnp.float32) + bo_ca_ref[l]
        x = _layernorm(x + att, g2_ref[l], be2_ref[l])

        # ------------------------------ feed-forward ------------------------------
        h = jnp.maximum(
            jnp.dot(x, w1_ref[l], preferred_element_type=jnp.float32) + b1_ref[l], 0.0)
        h = jnp.dot(h, w2_ref[l], preferred_element_type=jnp.float32) + b2_ref[l]
        x = _layernorm(x + h, g3_ref[l], be3_ref[l])

    # Final TransformerDecoder.norm
    x = _layernorm(x, gf_ref[...], bf_ref[...])
    out_ref[...] = x.reshape(B, T, D).astype(out_ref.dtype)


# --------------------------------- wrapper -----------------------------------
def transformer_decoder(tgt_sbd, memory_sbd, query_pos_sbd, pos_sbd, params):
    """PyTorch-compatible entry: tgt/memory/query_pos/pos are seq-first (S, B, D)."""
    tgt = jnp.transpose(tgt_sbd, (1, 0, 2))        # -> (B, T, D)
    mem = jnp.transpose(memory_sbd, (1, 0, 2))     # -> (B, M, D)
    qpos = jnp.transpose(query_pos_sbd, (1, 0, 2))
    pos = jnp.transpose(pos_sbd, (1, 0, 2))
    B, T, D = tgt.shape
    M = mem.shape[1]
    F = params["w1"].shape[-1]
    L = params["w_sa"].shape[0]
    NT, NM = B * T, B * M

    weights = [params[name] for name in PARAM_ORDER]
    inputs = [tgt, mem, qpos, pos] + weights

    flops = int(L * (
        2 * (2 * NT) * D * (3 * D)                # self-attn fused in-projection
        + 2 * (NT + 2 * NM) * D * (3 * D)         # cross-attn fused in-projection
        + 2 * 2 * NT * D * D                      # two attention output projections
        + 2 * 2 * NT * D * F                      # FFN linear1 + linear2
        + 2 * 2 * (NT * T * D + NT * M * D)))     # attention scores + weighted values
    transcendentals = int(L * (NT * T + NT * M))  # softmax exps
    bytes_accessed = int(sum(a.size * a.dtype.itemsize for a in inputs)
                         + B * T * D * tgt.dtype.itemsize)

    out = pl.pallas_call(
        decoder_kernel,
        out_shape=jax.ShapeDtypeStruct((B, T, D), tgt.dtype),
        cost_estimate=pl.CostEstimate(flops=flops, transcendentals=transcendentals,
                                      bytes_accessed=bytes_accessed),
    )(*inputs)
    return jnp.transpose(out, (1, 0, 2))           # -> (T, B, D)


# --------------------------- parameter construction --------------------------
def make_params(key):
    L, D, F = NUM_LAYERS, D_MODEL, DIM_FFN
    ks = jax.random.split(key, 18)

    def w(k, shape, fan_in):
        return jax.random.normal(k, shape, jnp.float32) / math.sqrt(fan_in)

    def b(k, shape):
        return 0.02 * jax.random.normal(k, shape, jnp.float32)

    def g(k, shape):
        return 1.0 + 0.1 * jax.random.normal(k, shape, jnp.float32)

    return {
        "w_sa": w(ks[0], (L, D, 3 * D), D), "b_sa": b(ks[1], (L, 1, 3 * D)),
        "wo_sa": w(ks[2], (L, D, D), D),    "bo_sa": b(ks[3], (L, 1, D)),
        "g1": g(ks[4], (L, 1, D)),          "be1": b(ks[5], (L, 1, D)),
        "w_ca": w(ks[6], (L, D, 3 * D), D), "b_ca": b(ks[7], (L, 1, 3 * D)),
        "wo_ca": w(ks[8], (L, D, D), D),    "bo_ca": b(ks[9], (L, 1, D)),
        "g2": g(ks[10], (L, 1, D)),         "be2": b(ks[11], (L, 1, D)),
        "w1": w(ks[12], (L, D, F), D),      "b1": b(ks[13], (L, 1, F)),
        "w2": w(ks[14], (L, F, D), F),      "b2": b(ks[15], (L, 1, D)),
        "g3": g(ks[16], (L, 1, D)),         "be3": b(ks[17], (L, 1, D)),
        "gf": jnp.ones((1, D), jnp.float32), "bf": jnp.zeros((1, D), jnp.float32),
    }


# ------------------------------ pure-JAX reference ---------------------------
def _ref_ln(x, gamma, beta):
    mu = x.mean(-1, keepdims=True)
    var = ((x - mu) ** 2).mean(-1, keepdims=True)
    return (x - mu) / jnp.sqrt(var + LN_EPS) * gamma + beta


def _ref_mha(q_in, k_in, v_in, w_in, b_in, w_out, b_out):
    D = q_in.shape[-1]
    hd = D // NHEAD
    q = q_in @ w_in[:, 0:D] + b_in[0, 0:D]
    k = k_in @ w_in[:, D:2 * D] + b_in[0, D:2 * D]
    v = v_in @ w_in[:, 2 * D:] + b_in[0, 2 * D:]
    B, Tq, _ = q.shape
    Tk = k.shape[1]

    def split(t, s):
        return t.reshape(B, s, NHEAD, hd).transpose(0, 2, 1, 3)

    qh = split(q, Tq) / math.sqrt(hd)
    kh, vh = split(k, Tk), split(v, Tk)
    a = jax.nn.softmax(jnp.einsum("bhqd,bhkd->bhqk", qh, kh), axis=-1)
    o = jnp.einsum("bhqk,bhkd->bhqd", a, vh).transpose(0, 2, 1, 3).reshape(B, Tq, D)
    return o @ w_out + b_out[0]


def _ref_decoder(tgt_sbd, mem_sbd, qpos_sbd, pos_sbd, p):
    x = jnp.transpose(tgt_sbd, (1, 0, 2))
    mem = jnp.transpose(mem_sbd, (1, 0, 2))
    qpos = jnp.transpose(qpos_sbd, (1, 0, 2))
    pos = jnp.transpose(pos_sbd, (1, 0, 2))
    for l in range(p["w_sa"].shape[0]):
        q_in = x + qpos
        sa = _ref_mha(q_in, q_in, x,
                      p["w_sa"][l], p["b_sa"][l], p["wo_sa"][l], p["bo_sa"][l])
        x = _ref_ln(x + sa, p["g1"][l], p["be1"][l])
        ca = _ref_mha(x + qpos, mem + pos, mem,
                      p["w_ca"][l], p["b_ca"][l], p["wo_ca"][l], p["bo_ca"][l])
        x = _ref_ln(x + ca, p["g2"][l], p["be2"][l])
        h = jnp.maximum(x @ p["w1"][l] + p["b1"][l], 0.0) @ p["w2"][l] + p["b2"][l]
        x = _ref_ln(x + h, p["g3"][l], p["be3"][l])
    x = _ref_ln(x, p["gf"], p["bf"])
    return jnp.transpose(x, (1, 0, 2))


# ----------------------------------- main ------------------------------------
if __name__ == "__main__":
    key = jax.random.PRNGKey(0)
    k_tgt, k_mem, k_qpos, k_pos, k_par = jax.random.split(key, 5)

    # seq-first (S, B, D), matching the PyTorch module's expected input layout.
    tgt = jax.random.normal(k_tgt, (T_TGT, BATCH, D_MODEL), jnp.float32)
    memory = jax.random.normal(k_mem, (S_MEM, BATCH, D_MODEL), jnp.float32)
    query_pos = jax.random.normal(k_qpos, (T_TGT, BATCH, D_MODEL), jnp.float32)
    pos = jax.random.normal(k_pos, (S_MEM, BATCH, D_MODEL), jnp.float32)
    params = make_params(k_par)

    out = transformer_decoder(tgt, memory, query_pos, pos, params)
    out = jax.block_until_ready(out)

    ref = _ref_decoder(tgt, memory, query_pos, pos, params)
    assert out.shape == (T_TGT, BATCH, D_MODEL)
    assert bool(jnp.all(jnp.isfinite(out)))
    max_err = float(jnp.max(jnp.abs(out - ref)))
    assert jnp.allclose(out, ref, atol=1e-4, rtol=1e-4), f"max abs err = {max_err}"
    print("KERNEL_OK")
</pallas_src>

<mosaic_0001>
module attributes {stable_mosaic.version = 11 : i64} {
  func.func @decoder_kernel(%arg0: memref<2x8x32xf32, #tpu.memory_space<vmem>>, %arg1: memref<2x16x32xf32, #tpu.memory_space<vmem>>, %arg2: memref<2x8x32xf32, #tpu.memory_space<vmem>>, %arg3: memref<2x16x32xf32, #tpu.memory_space<vmem>>, %arg4: memref<2x32x96xf32, #tpu.memory_space<vmem>>, %arg5: memref<2x1x96xf32, #tpu.memory_space<vmem>>, %arg6: memref<2x32x32xf32, #tpu.memory_space<vmem>>, %arg7: memref<2x1x32xf32, #tpu.memory_space<vmem>>, %arg8: memref<2x1x32xf32, #tpu.memory_space<vmem>>, %arg9: memref<2x1x32xf32, #tpu.memory_space<vmem>>, %arg10: memref<2x32x96xf32, #tpu.memory_space<vmem>>, %arg11: memref<2x1x96xf32, #tpu.memory_space<vmem>>, %arg12: memref<2x32x32xf32, #tpu.memory_space<vmem>>, %arg13: memref<2x1x32xf32, #tpu.memory_space<vmem>>, %arg14: memref<2x1x32xf32, #tpu.memory_space<vmem>>, %arg15: memref<2x1x32xf32, #tpu.memory_space<vmem>>, %arg16: memref<2x32x64xf32, #tpu.memory_space<vmem>>, %arg17: memref<2x1x64xf32, #tpu.memory_space<vmem>>, %arg18: memref<2x64x32xf32, #tpu.memory_space<vmem>>, %arg19: memref<2x1x32xf32, #tpu.memory_space<vmem>>, %arg20: memref<2x1x32xf32, #tpu.memory_space<vmem>>, %arg21: memref<2x1x32xf32, #tpu.memory_space<vmem>>, %arg22: memref<1x32xf32, #tpu.memory_space<vmem>>, %arg23: memref<1x32xf32, #tpu.memory_space<vmem>>, %arg24: memref<2x8x32xf32, #tpu.memory_space<vmem>>) attributes {dimension_semantics = [], scalar_prefetch = 0 : i64, scratch_operands = 0 : i64, tpu.core_type = #tpu.core_type<tc>} {
    %c0 = arith.constant 0 : index
    %c0_0 = arith.constant 0 : index
    %c0_1 = arith.constant 0 : index
    %0 = vector.load %arg0[%c0, %c0_0, %c0_1] : memref<2x8x32xf32, #tpu.memory_space<vmem>>, vector<2x8x32xf32>
    %1 = vector.shape_cast %0 : vector<2x8x32xf32> to vector<16x32xf32>
    %c0_2 = arith.constant 0 : index
    %c0_3 = arith.constant 0 : index
    %c0_4 = arith.constant 0 : index
    %2 = vector.load %arg2[%c0_2, %c0_3, %c0_4] : memref<2x8x32xf32, #tpu.memory_space<vmem>>, vector<2x8x32xf32>
    %3 = vector.shape_cast %2 : vector<2x8x32xf32> to vector<16x32xf32>
    %c0_5 = arith.constant 0 : index
    %c0_6 = arith.constant 0 : index
    %c0_7 = arith.constant 0 : index
    %4 = vector.load %arg1[%c0_5, %c0_6, %c0_7] : memref<2x16x32xf32, #tpu.memory_space<vmem>>, vector<2x16x32xf32>
    %5 = vector.shape_cast %4 : vector<2x16x32xf32> to vector<32x32xf32>
    %c0_8 = arith.constant 0 : index
    %c0_9 = arith.constant 0 : index
    %c0_10 = arith.constant 0 : index
    %6 = vector.load %arg3[%c0_8, %c0_9, %c0_10] : memref<2x16x32xf32, #tpu.memory_space<vmem>>, vector<2x16x32xf32>
    %7 = vector.shape_cast %6 : vector<2x16x32xf32> to vector<32x32xf32>
    %8 = arith.addf %5, %7 : vector<32x32xf32>
    %9 = arith.addf %1, %3 : vector<16x32xf32>
    %10 = tpu.concatenate %9, %1 in 0 : vector<16x32xf32>, vector<16x32xf32> -> vector<32x32xf32>
    %c0_11 = arith.constant 0 : index
    %c0_12 = arith.constant 0 : index
    %c0_13 = arith.constant 0 : index
    %11 = vector.load %arg4[%c0_11, %c0_12, %c0_13] : memref<2x32x96xf32, #tpu.memory_space<vmem>>, vector<1x32x96xf32>
    %12 = vector.shape_cast %11 : vector<1x32x96xf32> to vector<32x96xf32>
    %cst = arith.constant dense<0.000000e+00> : vector<32x96xf32>
    %13 = tpu.matmul %10, %12, %cst {dimension_numbers = #tpu.dot_dimension_numbers<[1], [0], [0], [1], [0, 0, 1, 1], [], []>} : vector<32x32xf32>, vector<32x96xf32>, vector<32x96xf32> -> vector<32x96xf32>
    %c0_14 = arith.constant 0 : index
    %c0_15 = arith.constant 0 : index
    %c0_16 = arith.constant 0 : index
    %14 = vector.load %arg5[%c0_14, %c0_15, %c0_16] : memref<2x1x96xf32, #tpu.memory_space<vmem>>, vector<1x1x96xf32>
    %15 = vector.shape_cast %14 : vector<1x1x96xf32> to vector<1x96xf32>
    %16 = vector.broadcast %15 : vector<1x96xf32> to vector<32x96xf32>
    %17 = arith.addf %13, %16 : vector<32x96xf32>
    %18 = vector.extract_strided_slice %17 {offsets = [0, 0], sizes = [16, 32], strides = [1, 1]} : vector<32x96xf32> to vector<16x32xf32>
    %19 = vector.extract_strided_slice %17 {offsets = [0, 32], sizes = [16, 32], strides = [1, 1]} : vector<32x96xf32> to vector<16x32xf32>
    %20 = vector.extract_strided_slice %17 {offsets = [16, 64], sizes = [16, 32], strides = [1, 1]} : vector<32x96xf32> to vector<16x32xf32>
    %cst_17 = arith.constant 0.353553385 : f32
    %21 = vector.broadcast %cst_17 : f32 to vector<16x32xf32>
    %22 = arith.mulf %18, %21 : vector<16x32xf32>
    %23 = vector.shape_cast %22 : vector<16x32xf32> to vector<2x8x32xf32>
    %24 = vector.shape_cast %19 : vector<16x32xf32> to vector<2x8x32xf32>
    %25 = vector.shape_cast %20 : vector<16x32xf32> to vector<2x8x32xf32>
    %26 = vector.extract_strided_slice %23 {offsets = [0, 0, 0], sizes = [2, 8, 8], strides = [1, 1, 1]} : vector<2x8x32xf32> to vector<2x8x8xf32>
    %27 = vector.extract_strided_slice %23 {offsets = [0, 0, 8], sizes = [2, 8, 8], strides = [1, 1, 1]} : vector<2x8x32xf32> to vector<2x8x8xf32>
    %28 = vector.extract_strided_slice %23 {offsets = [0, 0, 16], sizes = [2, 8, 8], strides = [1, 1, 1]} : vector<2x8x32xf32> to vector<2x8x8xf32>
    %29 = vector.extract_strided_slice %23 {offsets = [0, 0, 24], sizes = [2, 8, 8], strides = [1, 1, 1]} : vector<2x8x32xf32> to vector<2x8x8xf32>
    %30 = tpu.concatenate %26, %27, %28, %29 in 0 : vector<2x8x8xf32>, vector<2x8x8xf32>, vector<2x8x8xf32>, vector<2x8x8xf32> -> vector<8x8x8xf32>
    %31 = vector.extract_strided_slice %24 {offsets = [0, 0, 0], sizes = [2, 8, 8], strides = [1, 1, 1]} : vector<2x8x32xf32> to vector<2x8x8xf32>
    %32 = vector.extract_strided_slice %24 {offsets = [0, 0, 8], sizes = [2, 8, 8], strides = [1, 1, 1]} : vector<2x8x32xf32> to vector<2x8x8xf32>
    %33 = vector.extract_strided_slice %24 {offsets = [0, 0, 16], sizes = [2, 8, 8], strides = [1, 1, 1]} : vector<2x8x32xf32> to vector<2x8x8xf32>
    %34 = vector.extract_strided_slice %24 {offsets = [0, 0, 24], sizes = [2, 8, 8], strides = [1, 1, 1]} : vector<2x8x32xf32> to vector<2x8x8xf32>
    %35 = tpu.concatenate %31, %32, %33, %34 in 0 : vector<2x8x8xf32>, vector<2x8x8xf32>, vector<2x8x8xf32>, vector<2x8x8xf32> -> vector<8x8x8xf32>
    %36 = vector.extract_strided_slice %25 {offsets = [0, 0, 0], sizes = [2, 8, 8], strides = [1, 1, 1]} : vector<2x8x32xf32> to vector<2x8x8xf32>
    %37 = vector.extract_strided_slice %25 {offsets = [0, 0, 8], sizes = [2, 8, 8], strides = [1, 1, 1]} : vector<2x8x32xf32> to vector<2x8x8xf32>
    %38 = vector.extract_strided_slice %25 {offsets = [0, 0, 16], sizes = [2, 8, 8], strides = [1, 1, 1]} : vector<2x8x32xf32> to vector<2x8x8xf32>
    %39 = vector.extract_strided_slice %25 {offsets = [0, 0, 24], sizes = [2, 8, 8], strides = [1, 1, 1]} : vector<2x8x32xf32> to vector<2x8x8xf32>
    %40 = tpu.concatenate %36, %37, %38, %39 in 0 : vector<2x8x8xf32>, vector<2x8x8xf32>, vector<2x8x8xf32>, vector<2x8x8xf32> -> vector<8x8x8xf32>
    "tpu.trace_start"() <{level = 10 : i32, message = "bqd,bkd->bqk"}> : () -> ()
    %cst_18 = arith.constant dense<0.000000e+00> : vector<8x8x8xf32>
    %41 = tpu.matmul %30, %35, %cst_18 {dimension_numbers = #tpu.dot_dimension_numbers<[2], [2], [1], [1], [0, 0, 0, 1, 1, 1], [0], [0]>} : vector<8x8x8xf32>, vector<8x8x8xf32>, vector<8x8x8xf32> -> vector<8x8x8xf32>
    "tpu.trace_stop"() : () -> ()
    %cst_19 = arith.constant dense<0xFF800000> : vector<8x8xf32>
    %42 = vector.multi_reduction <maximumf>, %41, %cst_19 [2] : vector<8x8x8xf32> to vector<8x8xf32>
    %cst_20 = arith.constant 0xFF800000 : f32
    %43 = vector.broadcast %cst_20 : f32 to vector<8x8xf32>
    %44 = arith.maximumf %43, %42 : vector<8x8xf32>
    %45 = vector.shape_cast %44 : vector<8x8xf32> to vector<8x8x1xf32>
    %46 = vector.broadcast %45 : vector<8x8x1xf32> to vector<8x8x8xf32>
    %47 = arith.subf %41, %46 : vector<8x8x8xf32>
    %48 = math.exp %47 : vector<8x8x8xf32>
    %cst_21 = arith.constant dense<0.000000e+00> : vector<8x8xf32>
    %49 = vector.multi_reduction <add>, %48, %cst_21 [2] : vector<8x8x8xf32> to vector<8x8xf32>
    %50 = vector.shape_cast %49 : vector<8x8xf32> to vector<8x8x1xf32>
    %51 = vector.broadcast %50 : vector<8x8x1xf32> to vector<8x8x8xf32>
    %52 = arith.divf %48, %51 : vector<8x8x8xf32>
    "tpu.trace_start"() <{level = 10 : i32, message = "bqk,bkd->bqd"}> : () -> ()
    %cst_22 = arith.constant dense<0.000000e+00> : vector<8x8x8xf32>
    %53 = tpu.matmul %52, %40, %cst_22 {dimension_numbers = #tpu.dot_dimension_numbers<[2], [1], [1], [2], [0, 0, 0, 1, 1, 2], [0], [0]>} : vector<8x8x8xf32>, vector<8x8x8xf32>, vector<8x8x8xf32> -> vector<8x8x8xf32>
    "tpu.trace_stop"() : () -> ()
    %54 = vector.extract_strided_slice %53 {offsets = [0, 0, 0], sizes = [2, 8, 8], strides = [1, 1, 1]} : vector<8x8x8xf32> to vector<2x8x8xf32>
    %55 = vector.extract_strided_slice %53 {offsets = [2, 0, 0], sizes = [2, 8, 8], strides = [1, 1, 1]} : vector<8x8x8xf32> to vector<2x8x8xf32>
    %56 = vector.extract_strided_slice %53 {offsets = [4, 0, 0], sizes = [2, 8, 8], strides = [1, 1, 1]} : vector<8x8x8xf32> to vector<2x8x8xf32>
    %57 = vector.extract_strided_slice %53 {offsets = [6, 0, 0], sizes = [2, 8, 8], strides = [1, 1, 1]} : vector<8x8x8xf32> to vector<2x8x8xf32>
    %58 = tpu.concatenate %54, %55, %56, %57 in 2 : vector<2x8x8xf32>, vector<2x8x8xf32>, vector<2x8x8xf32>, vector<2x8x8xf32> -> vector<2x8x32xf32>
    %59 = vector.shape_cast %58 : vector<2x8x32xf32> to vector<16x32xf32>
    %c0_23 = arith.constant 0 : index
    %c0_24 = arith.constant 0 : index
    %c0_25 = arith.constant 0 : index
    %60 = vector.load %arg6[%c0_23, %c0_24, %c0_25] : memref<2x32x32xf32, #tpu.memory_space<vmem>>, vector<1x32x32xf32>
    %61 = vector.shape_cast %60 : vector<1x32x32xf32> to vector<32x32xf32>
    %cst_26 = arith.constant dense<0.000000e+00> : vector<16x32xf32>
    %62 = tpu.matmul %59, %61, %cst_26 {dimension_numbers = #tpu.dot_dimension_numbers<[1], [0], [0], [1], [0, 0, 1, 1], [], []>} : vector<16x32xf32>, vector<32x32xf32>, vector<16x32xf32> -> vector<16x32xf32>
    %c0_27 = arith.constant 0 : index
    %c0_28 = arith.constant 0 : index
    %c0_29 = arith.constant 0 : index
    %63 = vector.load %arg7[%c0_27, %c0_28, %c0_29] : memref<2x1x32xf32, #tpu.memory_space<vmem>>, vector<1x1x32xf32>
    %64 = vector.shape_cast %63 : vector<1x1x32xf32> to vector<1x32xf32>
    %65 = vector.broadcast %64 : vector<1x32xf32> to vector<16x32xf32>
    %66 = arith.addf %62, %65 : vector<16x32xf32>
    %67 = arith.addf %1, %66 : vector<16x32xf32>
    %c0_30 = arith.constant 0 : index
    %c0_31 = arith.constant 0 : index
    %c0_32 = arith.constant 0 : index
    %68 = vector.load %arg8[%c0_30, %c0_31, %c0_32] : memref<2x1x32xf32, #tpu.memory_space<vmem>>, vector<1x1x32xf32>
    %69 = vector.shape_cast %68 : vector<1x1x32xf32> to vector<1x32xf32>
    %c0_33 = arith.constant 0 : index
    %c0_34 = arith.constant 0 : index
    %c0_35 = arith.constant 0 : index
    %70 = vector.load %arg9[%c0_33, %c0_34, %c0_35] : memref<2x1x32xf32, #tpu.memory_space<vmem>>, vector<1x1x32xf32>
    %71 = vector.shape_cast %70 : vector<1x1x32xf32> to vector<1x32xf32>
    %cst_36 = arith.constant dense<0.000000e+00> : vector<16xf32>
    %72 = vector.multi_reduction <add>, %67, %cst_36 [1] : vector<16x32xf32> to vector<16xf32>
    %73 = vector.shape_cast %72 : vector<16xf32> to vector<16x1xf32>
    %cst_37 = arith.constant 3.200000e+01 : f32
    %74 = vector.broadcast %cst_37 : f32 to vector<16x1xf32>
    %75 = arith.divf %73, %74 : vector<16x1xf32>
    %76 = vector.broadcast %75 : vector<16x1xf32> to vector<16x32xf32>
    %77 = arith.subf %67, %76 : vector<16x32xf32>
    %78 = arith.mulf %77, %77 : vector<16x32xf32>
    %cst_38 = arith.constant dense<0.000000e+00> : vector<16xf32>
    %79 = vector.multi_reduction <add>, %78, %cst_38 [1] : vector<16x32xf32> to vector<16xf32>
    %80 = vector.shape_cast %79 : vector<16xf32> to vector<16x1xf32>
    %cst_39 = arith.constant 3.200000e+01 : f32
    %81 = vector.broadcast %cst_39 : f32 to vector<16x1xf32>
    %82 = arith.divf %80, %81 : vector<16x1xf32>
    %83 = vector.broadcast %75 : vector<16x1xf32> to vector<16x32xf32>
    %84 = arith.subf %67, %83 : vector<16x32xf32>
    %cst_40 = arith.constant 9.99999974E-6 : f32
    %85 = vector.broadcast %cst_40 : f32 to vector<16x1xf32>
    %86 = arith.addf %82, %85 : vector<16x1xf32>
    %87 = math.rsqrt %86 : vector<16x1xf32>
    %88 = vector.broadcast %87 : vector<16x1xf32> to vector<16x32xf32>
    %89 = arith.mulf %84, %88 : vector<16x32xf32>
    %90 = vector.broadcast %69 : vector<1x32xf32> to vector<16x32xf32>
    %91 = arith.mulf %89, %90 : vector<16x32xf32>
    %92 = vector.broadcast %71 : vector<1x32xf32> to vector<16x32xf32>
    %93 = arith.addf %91, %92 : vector<16x32xf32>
    %94 = arith.addf %93, %3 : vector<16x32xf32>
    %95 = tpu.concatenate %94, %8, %5 in 0 : vector<16x32xf32>, vector<32x32xf32>, vector<32x32xf32> -> vector<80x32xf32>
    %c0_41 = arith.constant 0 : index
    %c0_42 = arith.constant 0 : index
    %c0_43 = arith.constant 0 : index
    %96 = vector.load %arg10[%c0_41, %c0_42, %c0_43] : memref<2x32x96xf32, #tpu.memory_space<vmem>>, vector<1x32x96xf32>
    %97 = vector.shape_cast %96 : vector<1x32x96xf32> to vector<32x96xf32>
    %cst_44 = arith.constant dense<0.000000e+00> : vector<80x96xf32>
    %98 = tpu.matmul %95, %97, %cst_44 {dimension_numbers = #tpu.dot_dimension_numbers<[1], [0], [0], [1], [0, 0, 1, 1], [], []>} : vector<80x32xf32>, vector<32x96xf32>, vector<80x96xf32> -> vector<80x96xf32>
    %c0_45 = arith.constant 0 : index
    %c0_46 = arith.constant 0 : index
    %c0_47 = arith.constant 0 : index
    %99 = vector.load %arg11[%c0_45, %c0_46, %c0_47] : memref<2x1x96xf32, #tpu.memory_space<vmem>>, vector<1x1x96xf32>
    %100 = vector.shape_cast %99 : vector<1x1x96xf32> to vector<1x96xf32>
    %101 = vector.broadcast %100 : vector<1x96xf32> to vector<80x96xf32>
    %102 = arith.addf %98, %101 : vector<80x96xf32>
    %103 = vector.extract_strided_slice %102 {offsets = [0, 0], sizes = [16, 32], strides = [1, 1]} : vector<80x96xf32> to vector<16x32xf32>
    %104 = vector.extract_strided_slice %102 {offsets = [16, 32], sizes = [32, 32], strides = [1, 1]} : vector<80x96xf32> to vector<32x32xf32>
    %105 = vector.extract_strided_slice %102 {offsets = [48, 64], sizes = [32, 32], strides = [1, 1]} : vector<80x96xf32> to vector<32x32xf32>
    %cst_48 = arith.constant 0.353553385 : f32
    %106 = vector.broadcast %cst_48 : f32 to vector<16x32xf32>
    %107 = arith.mulf %103, %106 : vector<16x32xf32>
    %108 = vector.shape_cast %107 : vector<16x32xf32> to vector<2x8x32xf32>
    %109 = vector.shape_cast %104 : vector<32x32xf32> to vector<2x16x32xf32>
    %110 = vector.shape_cast %105 : vector<32x32xf32> to vector<2x16x32xf32>
    %111 = vector.extract_strided_slice %108 {offsets = [0, 0, 0], sizes = [2, 8, 8], strides = [1, 1, 1]} : vector<2x8x32xf32> to vector<2x8x8xf32>
    %112 = vector.extract_strided_slice %108 {offsets = [0, 0, 8], sizes = [2, 8, 8], strides = [1, 1, 1]} : vector<2x8x32xf32> to vector<2x8x8xf32>
    %113 = vector.extract_strided_slice %108 {offsets = [0, 0, 16], sizes = [2, 8, 8], strides = [1, 1, 1]} : vector<2x8x32xf32> to vector<2x8x8xf32>
    %114 = vector.extract_strided_slice %108 {offsets = [0, 0, 24], sizes = [2, 8, 8], strides = [1, 1, 1]} : vector<2x8x32xf32> to vector<2x8x8xf32>
    %115 = tpu.concatenate %111, %112, %113, %114 in 0 : vector<2x8x8xf32>, vector<2x8x8xf32>, vector<2x8x8xf32>, vector<2x8x8xf32> -> vector<8x8x8xf32>
    %116 = vector.extract_strided_slice %109 {offsets = [0, 0, 0], sizes = [2, 16, 8], strides = [1, 1, 1]} : vector<2x16x32xf32> to vector<2x16x8xf32>
    %117 = vector.extract_strided_slice %109 {offsets = [0, 0, 8], sizes = [2, 16, 8], strides = [1, 1, 1]} : vector<2x16x32xf32> to vector<2x16x8xf32>
    %118 = vector.extract_strided_slice %109 {offsets = [0, 0, 16], sizes = [2, 16, 8], strides = [1, 1, 1]} : vector<2x16x32xf32> to vector<2x16x8xf32>
    %119 = vector.extract_strided_slice %109 {offsets = [0, 0, 24], sizes = [2, 16, 8], strides = [1, 1, 1]} : vector<2x16x32xf32> to vector<2x16x8xf32>
    %120 = tpu.concatenate %116, %117, %118, %119 in 0 : vector<2x16x8xf32>, vector<2x16x8xf32>, vector<2x16x8xf32>, vector<2x16x8xf32> -> vector<8x16x8xf32>
    %121 = vector.extract_strided_slice %110 {offsets = [0, 0, 0], sizes = [2, 16, 8], strides = [1, 1, 1]} : vector<2x16x32xf32> to vector<2x16x8xf32>
    %122 = vector.extract_strided_slice %110 {offsets = [0, 0, 8], sizes = [2, 16, 8], strides = [1, 1, 1]} : vector<2x16x32xf32> to vector<2x16x8xf32>
    %123 = vector.extract_strided_slice %110 {offsets = [0, 0, 16], sizes = [2, 16, 8], strides = [1, 1, 1]} : vector<2x16x32xf32> to vector<2x16x8xf32>
    %124 = vector.extract_strided_slice %110 {offsets = [0, 0, 24], sizes = [2, 16, 8], strides = [1, 1, 1]} : vector<2x16x32xf32> to vector<2x16x8xf32>
    %125 = tpu.concatenate %121, %122, %123, %124 in 0 : vector<2x16x8xf32>, vector<2x16x8xf32>, vector<2x16x8xf32>, vector<2x16x8xf32> -> vector<8x16x8xf32>
    "tpu.trace_start"() <{level = 10 : i32, message = "bqd,bkd->bqk"}> : () -> ()
    %cst_49 = arith.constant dense<0.000000e+00> : vector<8x8x16xf32>
    %126 = tpu.matmul %115, %120, %cst_49 {dimension_numbers = #tpu.dot_dimension_numbers<[2], [2], [1], [1], [0, 0, 0, 1, 1, 1], [0], [0]>} : vector<8x8x8xf32>, vector<8x16x8xf32>, vector<8x8x16xf32> -> vector<8x8x16xf32>
    "tpu.trace_stop"() : () -> ()
    %cst_50 = arith.constant dense<0xFF800000> : vector<8x8xf32>
    %127 = vector.multi_reduction <maximumf>, %126, %cst_50 [2] : vector<8x8x16xf32> to vector<8x8xf32>
    %cst_51 = arith.constant 0xFF800000 : f32
    %128 = vector.broadcast %cst_51 : f32 to vector<8x8xf32>
    %129 = arith.maximumf %128, %127 : vector<8x8xf32>
    %130 = vector.shape_cast %129 : vector<8x8xf32> to vector<8x8x1xf32>
    %131 = vector.broadcast %130 : vector<8x8x1xf32> to vector<8x8x16xf32>
    %132 = arith.subf %126, %131 : vector<8x8x16xf32>
    %133 = math.exp %132 : vector<8x8x16xf32>
    %cst_52 = arith.constant dense<0.000000e+00> : vector<8x8xf32>
    %134 = vector.multi_reduction <add>, %133, %cst_52 [2] : vector<8x8x16xf32> to vector<8x8xf32>
    %135 = vector.shape_cast %134 : vector<8x8xf32> to vector<8x8x1xf32>
    %136 = vector.broadcast %135 : vector<8x8x1xf32> to vector<8x8x16xf32>
    %137 = arith.divf %133, %136 : vector<8x8x16xf32>
    "tpu.trace_start"() <{level = 10 : i32, message = "bqk,bkd->bqd"}> : () -> ()
    %cst_53 = arith.constant dense<0.000000e+00> : vector<8x8x8xf32>
    %138 = tpu.matmul %137, %125, %cst_53 {dimension_numbers = #tpu.dot_dimension_numbers<[2], [1], [1], [2], [0, 0, 0, 1, 1, 2], [0], [0]>} : vector<8x8x16xf32>, vector<8x16x8xf32>, vector<8x8x8xf32> -> vector<8x8x8xf32>
    "tpu.trace_stop"() : () -> ()
    %139 = vector.extract_strided_slice %138 {offsets = [0, 0, 0], sizes = [2, 8, 8], strides = [1, 1, 1]} : vector<8x8x8xf32> to vector<2x8x8xf32>
    %140 = vector.extract_strided_slice %138 {offsets = [2, 0, 0], sizes = [2, 8, 8], strides = [1, 1, 1]} : vector<8x8x8xf32> to vector<2x8x8xf32>
    %141 = vector.extract_strided_slice %138 {offsets = [4, 0, 0], sizes = [2, 8, 8], strides = [1, 1, 1]} : vector<8x8x8xf32> to vector<2x8x8xf32>
    %142 = vector.extract_strided_slice %138 {offsets = [6, 0, 0], sizes = [2, 8, 8], strides = [1, 1, 1]} : vector<8x8x8xf32> to vector<2x8x8xf32>
    %143 = tpu.concatenate %139, %140, %141, %142 in 2 : vector<2x8x8xf32>, vector<2x8x8xf32>, vector<2x8x8xf32>, vector<2x8x8xf32> -> vector<2x8x32xf32>
    %144 = vector.shape_cast %143 : vector<2x8x32xf32> to vector<16x32xf32>
    %c0_54 = arith.constant 0 : index
    %c0_55 = arith.constant 0 : index
    %c0_56 = arith.constant 0 : index
    %145 = vector.load %arg12[%c0_54, %c0_55, %c0_56] : memref<2x32x32xf32, #tpu.memory_space<vmem>>, vector<1x32x32xf32>
    %146 = vector.shape_cast %145 : vector<1x32x32xf32> to vector<32x32xf32>
    %cst_57 = arith.constant dense<0.000000e+00> : vector<16x32xf32>
    %147 = tpu.matmul %144, %146, %cst_57 {dimension_numbers = #tpu.dot_dimension_numbers<[1], [0], [0], [1], [0, 0, 1, 1], [], []>} : vector<16x32xf32>, vector<32x32xf32>, vector<16x32xf32> -> vector<16x32xf32>
    %c0_58 = arith.constant 0 : index
    %c0_59 = arith.constant 0 : index
    %c0_60 = arith.constant 0 : index
    %148 = vector.load %arg13[%c0_58, %c0_59, %c0_60] : memref<2x1x32xf32, #tpu.memory_space<vmem>>, vector<1x1x32xf32>
    %149 = vector.shape_cast %148 : vector<1x1x32xf32> to vector<1x32xf32>
    %150 = vector.broadcast %149 : vector<1x32xf32> to vector<16x32xf32>
    %151 = arith.addf %147, %150 : vector<16x32xf32>
    %152 = arith.addf %93, %151 : vector<16x32xf32>
    %c0_61 = arith.constant 0 : index
    %c0_62 = arith.constant 0 : index
    %c0_63 = arith.constant 0 : index
    %153 = vector.load %arg14[%c0_61, %c0_62, %c0_63] : memref<2x1x32xf32, #tpu.memory_space<vmem>>, vector<1x1x32xf32>
    %154 = vector.shape_cast %153 : vector<1x1x32xf32> to vector<1x32xf32>
    %c0_64 = arith.constant 0 : index
    %c0_65 = arith.constant 0 : index
    %c0_66 = arith.constant 0 : index
    %155 = vector.load %arg15[%c0_64, %c0_65, %c0_66] : memref<2x1x32xf32, #tpu.memory_space<vmem>>, vector<1x1x32xf32>
    %156 = vector.shape_cast %155 : vector<1x1x32xf32> to vector<1x32xf32>
    %cst_67 = arith.constant dense<0.000000e+00> : vector<16xf32>
    %157 = vector.multi_reduction <add>, %152, %cst_67 [1] : vector<16x32xf32> to vector<16xf32>
    %158 = vector.shape_cast %157 : vector<16xf32> to vector<16x1xf32>
    %cst_68 = arith.constant 3.200000e+01 : f32
    %159 = vector.broadcast %cst_68 : f32 to vector<16x1xf32>
    %160 = arith.divf %158, %159 : vector<16x1xf32>
    %161 = vector.broadcast %160 : vector<16x1xf32> to vector<16x32xf32>
    %162 = arith.subf %152, %161 : vector<16x32xf32>
    %163 = arith.mulf %162, %162 : vector<16x32xf32>
    %cst_69 = arith.constant dense<0.000000e+00> : vector<16xf32>
    %164 = vector.multi_reduction <add>, %163, %cst_69 [1] : vector<16x32xf32> to vector<16xf32>
    %165 = vector.shape_cast %164 : vector<16xf32> to vector<16x1xf32>
    %cst_70 = arith.constant 3.200000e+01 : f32
    %166 = vector.broadcast %cst_70 : f32 to vector<16x1xf32>
    %167 = arith.divf %165, %166 : vector<16x1xf32>
    %168 = vector.broadcast %160 : vector<16x1xf32> to vector<16x32xf32>
    %169 = arith.subf %152, %168 : vector<16x32xf32>
    %cst_71 = arith.constant 9.99999974E-6 : f32
    %170 = vector.broadcast %cst_71 : f32 to vector<16x1xf32>
    %171 = arith.addf %167, %170 : vector<16x1xf32>
    %172 = math.rsqrt %171 : vector<16x1xf32>
    %173 = vector.broadcast %172 : vector<16x1xf32> to vector<16x32xf32>
    %174 = arith.mulf %169, %173 : vector<16x32xf32>
    %175 = vector.broadcast %154 : vector<1x32xf32> to vector<16x32xf32>
    %176 = arith.mulf %174, %175 : vector<16x32xf32>
    %177 = vector.broadcast %156 : vector<1x32xf32> to vector<16x32xf32>
    %178 = arith.addf %176, %177 : vector<16x32xf32>
    %c0_72 = arith.constant 0 : index
    %c0_73 = arith.constant 0 : index
    %c0_74 = arith.constant 0 : index
    %179 = vector.load %arg16[%c0_72, %c0_73, %c0_74] : memref<2x32x64xf32, #tpu.memory_space<vmem>>, vector<1x32x64xf32>
    %180 = vector.shape_cast %179 : vector<1x32x64xf32> to vector<32x64xf32>
    %cst_75 = arith.constant dense<0.000000e+00> : vector<16x64xf32>
    %181 = tpu.matmul %178, %180, %cst_75 {dimension_numbers = #tpu.dot_dimension_numbers<[1], [0], [0], [1], [0, 0, 1, 1], [], []>} : vector<16x32xf32>, vector<32x64xf32>, vector<16x64xf32> -> vector<16x64xf32>
    %c0_76 = arith.constant 0 : index
    %c0_77 = arith.constant 0 : index
    %c0_78 = arith.constant 0 : index
    %182 = vector.load %arg17[%c0_76, %c0_77, %c0_78] : memref<2x1x64xf32, #tpu.memory_space<vmem>>, vector<1x1x64xf32>
    %183 = vector.shape_cast %182 : vector<1x1x64xf32> to vector<1x64xf32>
    %184 = vector.broadcast %183 : vector<1x64xf32> to vector<16x64xf32>
    %185 = arith.addf %181, %184 : vector<16x64xf32>
    %cst_79 = arith.constant 0.000000e+00 : f32
    %186 = vector.broadcast %cst_79 : f32 to vector<16x64xf32>
    %187 = arith.maximumf %185, %186 : vector<16x64xf32>
    %c0_80 = arith.constant 0 : index
    %c0_81 = arith.constant 0 : index
    %c0_82 = arith.constant 0 : index
    %188 = vector.load %arg18[%c0_80, %c0_81, %c0_82] : memref<2x64x32xf32, #tpu.memory_space<vmem>>, vector<1x64x32xf32>
    %189 = vector.shape_cast %188 : vector<1x64x32xf32> to vector<64x32xf32>
    %cst_83 = arith.constant dense<0.000000e+00> : vector<16x32xf32>
    %190 = tpu.matmul %187, %189, %cst_83 {dimension_numbers = #tpu.dot_dimension_numbers<[1], [0], [0], [1], [0, 0, 1, 1], [], []>} : vector<16x64xf32>, vector<64x32xf32>, vector<16x32xf32> -> vector<16x32xf32>
    %c0_84 = arith.constant 0 : index
    %c0_85 = arith.constant 0 : index
    %c0_86 = arith.constant 0 : index
    %191 = vector.load %arg19[%c0_84, %c0_85, %c0_86] : memref<2x1x32xf32, #tpu.memory_space<vmem>>, vector<1x1x32xf32>
    %192 = vector.shape_cast %191 : vector<1x1x32xf32> to vector<1x32xf32>
    %193 = vector.broadcast %192 : vector<1x32xf32> to vector<16x32xf32>
    %194 = arith.addf %190, %193 : vector<16x32xf32>
    %195 = arith.addf %178, %194 : vector<16x32xf32>
    %c0_87 = arith.constant 0 : index
    %c0_88 = arith.constant 0 : index
    %c0_89 = arith.constant 0 : index
    %196 = vector.load %arg20[%c0_87, %c0_88, %c0_89] : memref<2x1x32xf32, #tpu.memory_space<vmem>>, vector<1x1x32xf32>
    %197 = vector.shape_cast %196 : vector<1x1x32xf32> to vector<1x32xf32>
    %c0_90 = arith.constant 0 : index
    %c0_91 = arith.constant 0 : index
    %c0_92 = arith.constant 0 : index
    %198 = vector.load %arg21[%c0_90, %c0_91, %c0_92] : memref<2x1x32xf32, #tpu.memory_space<vmem>>, vector<1x1x32xf32>
    %199 = vector.shape_cast %198 : vector<1x1x32xf32> to vector<1x32xf32>
    %cst_93 = arith.constant dense<0.000000e+00> : vector<16xf32>
    %200 = vector.multi_reduction <add>, %195, %cst_93 [1] : vector<16x32xf32> to vector<16xf32>
    %201 = vector.shape_cast %200 : vector<16xf32> to vector<16x1xf32>
    %cst_94 = arith.constant 3.200000e+01 : f32
    %202 = vector.broadcast %cst_94 : f32 to vector<16x1xf32>
    %203 = arith.divf %201, %202 : vector<16x1xf32>
    %204 = vector.broadcast %203 : vector<16x1xf32> to vector<16x32xf32>
    %205 = arith.subf %195, %204 : vector<16x32xf32>
    %206 = arith.mulf %205, %205 : vector<16x32xf32>
    %cst_95 = arith.constant dense<0.000000e+00> : vector<16xf32>
    %207 = vector.multi_reduction <add>, %206, %cst_95 [1] : vector<16x32xf32> to vector<16xf32>
    %208 = vector.shape_cast %207 : vector<16xf32> to vector<16x1xf32>
    %cst_96 = arith.constant 3.200000e+01 : f32
    %209 = vector.broadcast %cst_96 : f32 to vector<16x1xf32>
    %210 = arith.divf %208, %209 : vector<16x1xf32>
    %211 = vector.broadcast %203 : vector<16x1xf32> to vector<16x32xf32>
    %212 = arith.subf %195, %211 : vector<16x32xf32>
    %cst_97 = arith.constant 9.99999974E-6 : f32
    %213 = vector.broadcast %cst_97 : f32 to vector<16x1xf32>
    %214 = arith.addf %210, %213 : vector<16x1xf32>
    %215 = math.rsqrt %214 : vector<16x1xf32>
    %216 = vector.broadcast %215 : vector<16x1xf32> to vector<16x32xf32>
    %217 = arith.mulf %212, %216 : vector<16x32xf32>
    %218 = vector.broadcast %197 : vector<1x32xf32> to vector<16x32xf32>
    %219 = arith.mulf %217, %218 : vector<16x32xf32>
    %220 = vector.broadcast %199 : vector<1x32xf32> to vector<16x32xf32>
    %221 = arith.addf %219, %220 : vector<16x32xf32>
    %222 = arith.addf %221, %3 : vector<16x32xf32>
    %223 = tpu.concatenate %222, %221 in 0 : vector<16x32xf32>, vector<16x32xf32> -> vector<32x32xf32>
    %c1 = arith.constant 1 : index
    %c0_98 = arith.constant 0 : index
    %c0_99 = arith.constant 0 : index
    %224 = vector.load %arg4[%c1, %c0_98, %c0_99] : memref<2x32x96xf32, #tpu.memory_space<vmem>>, vector<1x32x96xf32>
    %225 = vector.shape_cast %224 : vector<1x32x96xf32> to vector<32x96xf32>
    %cst_100 = arith.constant dense<0.000000e+00> : vector<32x96xf32>
    %226 = tpu.matmul %223, %225, %cst_100 {dimension_numbers = #tpu.dot_dimension_numbers<[1], [0], [0], [1], [0, 0, 1, 1], [], []>} : vector<32x32xf32>, vector<32x96xf32>, vector<32x96xf32> -> vector<32x96xf32>
    %c1_101 = arith.constant 1 : index
    %c0_102 = arith.constant 0 : index
    %c0_103 = arith.constant 0 : index
    %227 = vector.load %arg5[%c1_101, %c0_102, %c0_103] : memref<2x1x96xf32, #tpu.memory_space<vmem>>, vector<1x1x96xf32>
    %228 = vector.shape_cast %227 : vector<1x1x96xf32> to vector<1x96xf32>
    %229 = vector.broadcast %228 : vector<1x96xf32> to vector<32x96xf32>
    %230 = arith.addf %226, %229 : vector<32x96xf32>
    %231 = vector.extract_strided_slice %230 {offsets = [0, 0], sizes = [16, 32], strides = [1, 1]} : vector<32x96xf32> to vector<16x32xf32>
    %232 = vector.extract_strided_slice %230 {offsets = [0, 32], sizes = [16, 32], strides = [1, 1]} : vector<32x96xf32> to vector<16x32xf32>
    %233 = vector.extract_strided_slice %230 {offsets = [16, 64], sizes = [16, 32], strides = [1, 1]} : vector<32x96xf32> to vector<16x32xf32>
    %cst_104 = arith.constant 0.353553385 : f32
    %234 = vector.broadcast %cst_104 : f32 to vector<16x32xf32>
    %235 = arith.mulf %231, %234 : vector<16x32xf32>
    %236 = vector.shape_cast %235 : vector<16x32xf32> to vector<2x8x32xf32>
    %237 = vector.shape_cast %232 : vector<16x32xf32> to vector<2x8x32xf32>
    %238 = vector.shape_cast %233 : vector<16x32xf32> to vector<2x8x32xf32>
    %239 = vector.extract_strided_slice %236 {offsets = [0, 0, 0], sizes = [2, 8, 8], strides = [1, 1, 1]} : vector<2x8x32xf32> to vector<2x8x8xf32>
    %240 = vector.extract_strided_slice %236 {offsets = [0, 0, 8], sizes = [2, 8, 8], strides = [1, 1, 1]} : vector<2x8x32xf32> to vector<2x8x8xf32>
    %241 = vector.extract_strided_slice %236 {offsets = [0, 0, 16], sizes = [2, 8, 8], strides = [1, 1, 1]} : vector<2x8x32xf32> to vector<2x8x8xf32>
    %242 = vector.extract_strided_slice %236 {offsets = [0, 0, 24], sizes = [2, 8, 8], strides = [1, 1, 1]} : vector<2x8x32xf32> to vector<2x8x8xf32>
    %243 = tpu.concatenate %239, %240, %241, %242 in 0 : vector<2x8x8xf32>, vector<2x8x8xf32>, vector<2x8x8xf32>, vector<2x8x8xf32> -> vector<8x8x8xf32>
    %244 = vector.extract_strided_slice %237 {offsets = [0, 0, 0], sizes = [2, 8, 8], strides = [1, 1, 1]} : vector<2x8x32xf32> to vector<2x8x8xf32>
    %245 = vector.extract_strided_slice %237 {offsets = [0, 0, 8], sizes = [2, 8, 8], strides = [1, 1, 1]} : vector<2x8x32xf32> to vector<2x8x8xf32>
    %246 = vector.extract_strided_slice %237 {offsets = [0, 0, 16], sizes = [2, 8, 8], strides = [1, 1, 1]} : vector<2x8x32xf32> to vector<2x8x8xf32>
    %247 = vector.extract_strided_slice %237 {offsets = [0, 0, 24], sizes = [2, 8, 8], strides = [1, 1, 1]} : vector<2x8x32xf32> to vector<2x8x8xf32>
    %248 = tpu.concatenate %244, %245, %246, %247 in 0 : vector<2x8x8xf32>, vector<2x8x8xf32>, vector<2x8x8xf32>, vector<2x8x8xf32> -> vector<8x8x8xf32>
    %249 = vector.extract_strided_slice %238 {offsets = [0, 0, 0], sizes = [2, 8, 8], strides = [1, 1, 1]} : vector<2x8x32xf32> to vector<2x8x8xf32>
    %250 = vector.extract_strided_slice %238 {offsets = [0, 0, 8], sizes = [2, 8, 8], strides = [1, 1, 1]} : vector<2x8x32xf32> to vector<2x8x8xf32>
    %251 = vector.extract_strided_slice %238 {offsets = [0, 0, 16], sizes = [2, 8, 8], strides = [1, 1, 1]} : vector<2x8x32xf32> to vector<2x8x8xf32>
    %252 = vector.extract_strided_slice %238 {offsets = [0, 0, 24], sizes = [2, 8, 8], strides = [1, 1, 1]} : vector<2x8x32xf32> to vector<2x8x8xf32>
    %253 = tpu.concatenate %249, %250, %251, %252 in 0 : vector<2x8x8xf32>, vector<2x8x8xf32>, vector<2x8x8xf32>, vector<2x8x8xf32> -> vector<8x8x8xf32>
    "tpu.trace_start"() <{level = 10 : i32, message = "bqd,bkd->bqk"}> : () -> ()
    %cst_105 = arith.constant dense<0.000000e+00> : vector<8x8x8xf32>
    %254 = tpu.matmul %243, %248, %cst_105 {dimension_numbers = #tpu.dot_dimension_numbers<[2], [2], [1], [1], [0, 0, 0, 1, 1, 1], [0], [0]>} : vector<8x8x8xf32>, vector<8x8x8xf32>, vector<8x8x8xf32> -> vector<8x8x8xf32>
    "tpu.trace_stop"() : () -> ()
    %cst_106 = arith.constant dense<0xFF800000> : vector<8x8xf32>
    %255 = vector.multi_reduction <maximumf>, %254, %cst_106 [2] : vector<8x8x8xf32> to vector<8x8xf32>
    %cst_107 = arith.constant 0xFF800000 : f32
    %256 = vector.broadcast %cst_107 : f32 to vector<8x8xf32>
    %257 = arith.maximumf %256, %255 : vector<8x8xf32>
    %258 = vector.shape_cast %257 : vector<8x8xf32> to vector<8x8x1xf32>
    %259 = vector.broadcast %258 : vector<8x8x1xf32> to vector<8x8x8xf32>
    %260 = arith.subf %254, %259 : vector<8x8x8xf32>
    %261 = math.exp %260 : vector<8x8x8xf32>
    %cst_108 = arith.constant dense<0.000000e+00> : vector<8x8xf32>
    %262 = vector.multi_reduction <add>, %261, %cst_108 [2] : vector<8x8x8xf32> to vector<8x8xf32>
    %263 = vector.shape_cast %262 : vector<8x8xf32> to vector<8x8x1xf32>
    %264 = vector.broadcast %263 : vector<8x8x1xf32> to vector<8x8x8xf32>
    %265 = arith.divf %261, %264 : vector<8x8x8xf32>
    "tpu.trace_start"() <{level = 10 : i32, message = "bqk,bkd->bqd"}> : () -> ()
    %cst_109 = arith.constant dense<0.000000e+00> : vector<8x8x8xf32>
    %266 = tpu.matmul %265, %253, %cst_109 {dimension_numbers = #tpu.dot_dimension_numbers<[2], [1], [1], [2], [0, 0, 0, 1, 1, 2], [0], [0]>} : vector<8x8x8xf32>, vector<8x8x8xf32>, vector<8x8x8xf32> -> vector<8x8x8xf32>
    "tpu.trace_stop"() : () -> ()
    %267 = vector.extract_strided_slice %266 {offsets = [0, 0, 0], sizes = [2, 8, 8], strides = [1, 1, 1]} : vector<8x8x8xf32> to vector<2x8x8xf32>
    %268 = vector.extract_strided_slice %266 {offsets = [2, 0, 0], sizes = [2, 8, 8], strides = [1, 1, 1]} : vector<8x8x8xf32> to vector<2x8x8xf32>
    %269 = vector.extract_strided_slice %266 {offsets = [4, 0, 0], sizes = [2, 8, 8], strides = [1, 1, 1]} : vector<8x8x8xf32> to vector<2x8x8xf32>
    %270 = vector.extract_strided_slice %266 {offsets = [6, 0, 0], sizes = [2, 8, 8], strides = [1, 1, 1]} : vector<8x8x8xf32> to vector<2x8x8xf32>
    %271 = tpu.concatenate %267, %268, %269, %270 in 2 : vector<2x8x8xf32>, vector<2x8x8xf32>, vector<2x8x8xf32>, vector<2x8x8xf32> -> vector<2x8x32xf32>
    %272 = vector.shape_cast %271 : vector<2x8x32xf32> to vector<16x32xf32>
    %c1_110 = arith.constant 1 : index
    %c0_111 = arith.constant 0 : index
    %c0_112 = arith.constant 0 : index
    %273 = vector.load %arg6[%c1_110, %c0_111, %c0_112] : memref<2x32x32xf32, #tpu.memory_space<vmem>>, vector<1x32x32xf32>
    %274 = vector.shape_cast %273 : vector<1x32x32xf32> to vector<32x32xf32>
    %cst_113 = arith.constant dense<0.000000e+00> : vector<16x32xf32>
    %275 = tpu.matmul %272, %274, %cst_113 {dimension_numbers = #tpu.dot_dimension_numbers<[1], [0], [0], [1], [0, 0, 1, 1], [], []>} : vector<16x32xf32>, vector<32x32xf32>, vector<16x32xf32> -> vector<16x32xf32>
    %c1_114 = arith.constant 1 : index
    %c0_115 = arith.constant 0 : index
    %c0_116 = arith.constant 0 : index
    %276 = vector.load %arg7[%c1_114, %c0_115, %c0_116] : memref<2x1x32xf32, #tpu.memory_space<vmem>>, vector<1x1x32xf32>
    %277 = vector.shape_cast %276 : vector<1x1x32xf32> to vector<1x32xf32>
    %278 = vector.broadcast %277 : vector<1x32xf32> to vector<16x32xf32>
    %279 = arith.addf %275, %278 : vector<16x32xf32>
    %280 = arith.addf %221, %279 : vector<16x32xf32>
    %c1_117 = arith.constant 1 : index
    %c0_118 = arith.constant 0 : index
    %c0_119 = arith.constant 0 : index
    %281 = vector.load %arg8[%c1_117, %c0_118, %c0_119] : memref<2x1x32xf32, #tpu.memory_space<vmem>>, vector<1x1x32xf32>
    %282 = vector.shape_cast %281 : vector<1x1x32xf32> to vector<1x32xf32>
    %c1_120 = arith.constant 1 : index
    %c0_121 = arith.constant 0 : index
    %c0_122 = arith.constant 0 : index
    %283 = vector.load %arg9[%c1_120, %c0_121, %c0_122] : memref<2x1x32xf32, #tpu.memory_space<vmem>>, vector<1x1x32xf32>
    %284 = vector.shape_cast %283 : vector<1x1x32xf32> to vector<1x32xf32>
    %cst_123 = arith.constant dense<0.000000e+00> : vector<16xf32>
    %285 = vector.multi_reduction <add>, %280, %cst_123 [1] : vector<16x32xf32> to vector<16xf32>
    %286 = vector.shape_cast %285 : vector<16xf32> to vector<16x1xf32>
    %cst_124 = arith.constant 3.200000e+01 : f32
    %287 = vector.broadcast %cst_124 : f32 to vector<16x1xf32>
    %288 = arith.divf %286, %287 : vector<16x1xf32>
    %289 = vector.broadcast %288 : vector<16x1xf32> to vector<16x32xf32>
    %290 = arith.subf %280, %289 : vector<16x32xf32>
    %291 = arith.mulf %290, %290 : vector<16x32xf32>
    %cst_125 = arith.constant dense<0.000000e+00> : vector<16xf32>
    %292 = vector.multi_reduction <add>, %291, %cst_125 [1] : vector<16x32xf32> to vector<16xf32>
    %293 = vector.shape_cast %292 : vector<16xf32> to vector<16x1xf32>
    %cst_126 = arith.constant 3.200000e+01 : f32
    %294 = vector.broadcast %cst_126 : f32 to vector<16x1xf32>
    %295 = arith.divf %293, %294 : vector<16x1xf32>
    %296 = vector.broadcast %288 : vector<16x1xf32> to vector<16x32xf32>
    %297 = arith.subf %280, %296 : vector<16x32xf32>
    %cst_127 = arith.constant 9.99999974E-6 : f32
    %298 = vector.broadcast %cst_127 : f32 to vector<16x1xf32>
    %299 = arith.addf %295, %298 : vector<16x1xf32>
    %300 = math.rsqrt %299 : vector<16x1xf32>
    %301 = vector.broadcast %300 : vector<16x1xf32> to vector<16x32xf32>
    %302 = arith.mulf %297, %301 : vector<16x32xf32>
    %303 = vector.broadcast %282 : vector<1x32xf32> to vector<16x32xf32>
    %304 = arith.mulf %302, %303 : vector<16x32xf32>
    %305 = vector.broadcast %284 : vector<1x32xf32> to vector<16x32xf32>
    %306 = arith.addf %304, %305 : vector<16x32xf32>
    %307 = arith.addf %306, %3 : vector<16x32xf32>
    %308 = tpu.concatenate %307, %8, %5 in 0 : vector<16x32xf32>, vector<32x32xf32>, vector<32x32xf32> -> vector<80x32xf32>
    %c1_128 = arith.constant 1 : index
    %c0_129 = arith.constant 0 : index
    %c0_130 = arith.constant 0 : index
    %309 = vector.load %arg10[%c1_128, %c0_129, %c0_130] : memref<2x32x96xf32, #tpu.memory_space<vmem>>, vector<1x32x96xf32>
    %310 = vector.shape_cast %309 : vector<1x32x96xf32> to vector<32x96xf32>
    %cst_131 = arith.constant dense<0.000000e+00> : vector<80x96xf32>
    %311 = tpu.matmul %308, %310, %cst_131 {dimension_numbers = #tpu.dot_dimension_numbers<[1], [0], [0], [1], [0, 0, 1, 1], [], []>} : vector<80x32xf32>, vector<32x96xf32>, vector<80x96xf32> -> vector<80x96xf32>
    %c1_132 = arith.constant 1 : index
    %c0_133 = arith.constant 0 : index
    %c0_134 = arith.constant 0 : index
    %312 = vector.load %arg11[%c1_132, %c0_133, %c0_134] : memref<2x1x96xf32, #tpu.memory_space<vmem>>, vector<1x1x96xf32>
    %313 = vector.shape_cast %312 : vector<1x1x96xf32> to vector<1x96xf32>
    %314 = vector.broadcast %313 : vector<1x96xf32> to vector<80x96xf32>
    %315 = arith.addf %311, %314 : vector<80x96xf32>
    %316 = vector.extract_strided_slice %315 {offsets = [0, 0], sizes = [16, 32], strides = [1, 1]} : vector<80x96xf32> to vector<16x32xf32>
    %317 = vector.extract_strided_slice %315 {offsets = [16, 32], sizes = [32, 32], strides = [1, 1]} : vector<80x96xf32> to vector<32x32xf32>
    %318 = vector.extract_strided_slice %315 {offsets = [48, 64], sizes = [32, 32], strides = [1, 1]} : vector<80x96xf32> to vector<32x32xf32>
    %cst_135 = arith.constant 0.353553385 : f32
    %319 = vector.broadcast %cst_135 : f32 to vector<16x32xf32>
    %320 = arith.mulf %316, %319 : vector<16x32xf32>
    %321 = vector.shape_cast %320 : vector<16x32xf32> to vector<2x8x32xf32>
    %322 = vector.shape_cast %317 : vector<32x32xf32> to vector<2x16x32xf32>
    %323 = vector.shape_cast %318 : vector<32x32xf32> to vector<2x16x32xf32>
    %324 = vector.extract_strided_slice %321 {offsets = [0, 0, 0], sizes = [2, 8, 8], strides = [1, 1, 1]} : vector<2x8x32xf32> to vector<2x8x8xf32>
    %325 = vector.extract_strided_slice %321 {offsets = [0, 0, 8], sizes = [2, 8, 8], strides = [1, 1, 1]} : vector<2x8x32xf32> to vector<2x8x8xf32>
    %326 = vector.extract_strided_slice %321 {offsets = [0, 0, 16], sizes = [2, 8, 8], strides = [1, 1, 1]} : vector<2x8x32xf32> to vector<2x8x8xf32>
    %327 = vector.extract_strided_slice %321 {offsets = [0, 0, 24], sizes = [2, 8, 8], strides = [1, 1, 1]} : vector<2x8x32xf32> to vector<2x8x8xf32>
    %328 = tpu.concatenate %324, %325, %326, %327 in 0 : vector<2x8x8xf32>, vector<2x8x8xf32>, vector<2x8x8xf32>, vector<2x8x8xf32> -> vector<8x8x8xf32>
    %329 = vector.extract_strided_slice %322 {offsets = [0, 0, 0], sizes = [2, 16, 8], strides = [1, 1, 1]} : vector<2x16x32xf32> to vector<2x16x8xf32>
    %330 = vector.extract_strided_slice %322 {offsets = [0, 0, 8], sizes = [2, 16, 8], strides = [1, 1, 1]} : vector<2x16x32xf32> to vector<2x16x8xf32>
    %331 = vector.extract_strided_slice %322 {offsets = [0, 0, 16], sizes = [2, 16, 8], strides = [1, 1, 1]} : vector<2x16x32xf32> to vector<2x16x8xf32>
    %332 = vector.extract_strided_slice %322 {offsets = [0, 0, 24], sizes = [2, 16, 8], strides = [1, 1, 1]} : vector<2x16x32xf32> to vector<2x16x8xf32>
    %333 = tpu.concatenate %329, %330, %331, %332 in 0 : vector<2x16x8xf32>, vector<2x16x8xf32>, vector<2x16x8xf32>, vector<2x16x8xf32> -> vector<8x16x8xf32>
    %334 = vector.extract_strided_slice %323 {offsets = [0, 0, 0], sizes = [2, 16, 8], strides = [1, 1, 1]} : vector<2x16x32xf32> to vector<2x16x8xf32>
    %335 = vector.extract_strided_slice %323 {offsets = [0, 0, 8], sizes = [2, 16, 8], strides = [1, 1, 1]} : vector<2x16x32xf32> to vector<2x16x8xf32>
    %336 = vector.extract_strided_slice %323 {offsets = [0, 0, 16], sizes = [2, 16, 8], strides = [1, 1, 1]} : vector<2x16x32xf32> to vector<2x16x8xf32>
    %337 = vector.extract_strided_slice %323 {offsets = [0, 0, 24], sizes = [2, 16, 8], strides = [1, 1, 1]} : vector<2x16x32xf32> to vector<2x16x8xf32>
    %338 = tpu.concatenate %334, %335, %336, %337 in 0 : vector<2x16x8xf32>, vector<2x16x8xf32>, vector<2x16x8xf32>, vector<2x16x8xf32> -> vector<8x16x8xf32>
    "tpu.trace_start"() <{level = 10 : i32, message = "bqd,bkd->bqk"}> : () -> ()
    %cst_136 = arith.constant dense<0.000000e+00> : vector<8x8x16xf32>
    %339 = tpu.matmul %328, %333, %cst_136 {dimension_numbers = #tpu.dot_dimension_numbers<[2], [2], [1], [1], [0, 0, 0, 1, 1, 1], [0], [0]>} : vector<8x8x8xf32>, vector<8x16x8xf32>, vector<8x8x16xf32> -> vector<8x8x16xf32>
    "tpu.trace_stop"() : () -> ()
    %cst_137 = arith.constant dense<0xFF800000> : vector<8x8xf32>
    %340 = vector.multi_reduction <maximumf>, %339, %cst_137 [2] : vector<8x8x16xf32> to vector<8x8xf32>
    %cst_138 = arith.constant 0xFF800000 : f32
    %341 = vector.broadcast %cst_138 : f32 to vector<8x8xf32>
    %342 = arith.maximumf %341, %340 : vector<8x8xf32>
    %343 = vector.shape_cast %342 : vector<8x8xf32> to vector<8x8x1xf32>
    %344 = vector.broadcast %343 : vector<8x8x1xf32> to vector<8x8x16xf32>
    %345 = arith.subf %339, %344 : vector<8x8x16xf32>
    %346 = math.exp %345 : vector<8x8x16xf32>
    %cst_139 = arith.constant dense<0.000000e+00> : vector<8x8xf32>
    %347 = vector.multi_reduction <add>, %346, %cst_139 [2] : vector<8x8x16xf32> to vector<8x8xf32>
    %348 = vector.shape_cast %347 : vector<8x8xf32> to vector<8x8x1xf32>
    %349 = vector.broadcast %348 : vector<8x8x1xf32> to vector<8x8x16xf32>
    %350 = arith.divf %346, %349 : vector<8x8x16xf32>
    "tpu.trace_start"() <{level = 10 : i32, message = "bqk,bkd->bqd"}> : () -> ()
    %cst_140 = arith.constant dense<0.000000e+00> : vector<8x8x8xf32>
    %351 = tpu.matmul %350, %338, %cst_140 {dimension_numbers = #tpu.dot_dimension_numbers<[2], [1], [1], [2], [0, 0, 0, 1, 1, 2], [0], [0]>} : vector<8x8x16xf32>, vector<8x16x8xf32>, vector<8x8x8xf32> -> vector<8x8x8xf32>
    "tpu.trace_stop"() : () -> ()
    %352 = vector.extract_strided_slice %351 {offsets = [0, 0, 0], sizes = [2, 8, 8], strides = [1, 1, 1]} : vector<8x8x8xf32> to vector<2x8x8xf32>
    %353 = vector.extract_strided_slice %351 {offsets = [2, 0, 0], sizes = [2, 8, 8], strides = [1, 1, 1]} : vector<8x8x8xf32> to vector<2x8x8xf32>
    %354 = vector.extract_strided_slice %351 {offsets = [4, 0, 0], sizes = [2, 8, 8], strides = [1, 1, 1]} : vector<8x8x8xf32> to vector<2x8x8xf32>
    %355 = vector.extract_strided_slice %351 {offsets = [6, 0, 0], sizes = [2, 8, 8], strides = [1, 1, 1]} : vector<8x8x8xf32> to vector<2x8x8xf32>
    %356 = tpu.concatenate %352, %353, %354, %355 in 2 : vector<2x8x8xf32>, vector<2x8x8xf32>, vector<2x8x8xf32>, vector<2x8x8xf32> -> vector<2x8x32xf32>
    %357 = vector.shape_cast %356 : vector<2x8x32xf32> to vector<16x32xf32>
    %c1_141 = arith.constant 1 : index
    %c0_142 = arith.constant 0 : index
    %c0_143 = arith.constant 0 : index
    %358 = vector.load %arg12[%c1_141, %c0_142, %c0_143] : memref<2x32x32xf32, #tpu.memory_space<vmem>>, vector<1x32x32xf32>
    %359 = vector.shape_cast %358 : vector<1x32x32xf32> to vector<32x32xf32>
    %cst_144 = arith.constant dense<0.000000e+00> : vector<16x32xf32>
    %360 = tpu.matmul %357, %359, %cst_144 {dimension_numbers = #tpu.dot_dimension_numbers<[1], [0], [0], [1], [0, 0, 1, 1], [], []>} : vector<16x32xf32>, vector<32x32xf32>, vector<16x32xf32> -> vector<16x32xf32>
    %c1_145 = arith.constant 1 : index
    %c0_146 = arith.constant 0 : index
    %c0_147 = arith.constant 0 : index
    %361 = vector.load %arg13[%c1_145, %c0_146, %c0_147] : memref<2x1x32xf32, #tpu.memory_space<vmem>>, vector<1x1x32xf32>
    %362 = vector.shape_cast %361 : vector<1x1x32xf32> to vector<1x32xf32>
    %363 = vector.broadcast %362 : vector<1x32xf32> to vector<16x32xf32>
    %364 = arith.addf %360, %363 : vector<16x32xf32>
    %365 = arith.addf %306, %364 : vector<16x32xf32>
    %c1_148 = arith.constant 1 : index
    %c0_149 = arith.constant 0 : index
    %c0_150 = arith.constant 0 : index
    %366 = vector.load %arg14[%c1_148, %c0_149, %c0_150] : memref<2x1x32xf32, #tpu.memory_space<vmem>>, vector<1x1x32xf32>
    %367 = vector.shape_cast %366 : vector<1x1x32xf32> to vector<1x32xf32>
    %c1_151 = arith.constant 1 : index
    %c0_152 = arith.constant 0 : index
    %c0_153 = arith.constant 0 : index
    %368 = vector.load %arg15[%c1_151, %c0_152, %c0_153] : memref<2x1x32xf32, #tpu.memory_space<vmem>>, vector<1x1x32xf32>
    %369 = vector.shape_cast %368 : vector<1x1x32xf32> to vector<1x32xf32>
    %cst_154 = arith.constant dense<0.000000e+00> : vector<16xf32>
    %370 = vector.multi_reduction <add>, %365, %cst_154 [1] : vector<16x32xf32> to vector<16xf32>
    %371 = vector.shape_cast %370 : vector<16xf32> to vector<16x1xf32>
    %cst_155 = arith.constant 3.200000e+01 : f32
    %372 = vector.broadcast %cst_155 : f32 to vector<16x1xf32>
    %373 = arith.divf %371, %372 : vector<16x1xf32>
    %374 = vector.broadcast %373 : vector<16x1xf32> to vector<16x32xf32>
    %375 = arith.subf %365, %374 : vector<16x32xf32>
    %376 = arith.mulf %375, %375 : vector<16x32xf32>
    %cst_156 = arith.constant dense<0.000000e+00> : vector<16xf32>
    %377 = vector.multi_reduction <add>, %376, %cst_156 [1] : vector<16x32xf32> to vector<16xf32>
    %378 = vector.shape_cast %377 : vector<16xf32> to vector<16x1xf32>
    %cst_157 = arith.constant 3.200000e+01 : f32
    %379 = vector.broadcast %cst_157 : f32 to vector<16x1xf32>
    %380 = arith.divf %378, %379 : vector<16x1xf32>
    %381 = vector.broadcast %373 : vector<16x1xf32> to vector<16x32xf32>
    %382 = arith.subf %365, %381 : vector<16x32xf32>
    %cst_158 = arith.constant 9.99999974E-6 : f32
    %383 = vector.broadcast %cst_158 : f32 to vector<16x1xf32>
    %384 = arith.addf %380, %383 : vector<16x1xf32>
    %385 = math.rsqrt %384 : vector<16x1xf32>
    %386 = vector.broadcast %385 : vector<16x1xf32> to vector<16x32xf32>
    %387 = arith.mulf %382, %386 : vector<16x32xf32>
    %388 = vector.broadcast %367 : vector<1x32xf32> to vector<16x32xf32>
    %389 = arith.mulf %387, %388 : vector<16x32xf32>
    %390 = vector.broadcast %369 : vector<1x32xf32> to vector<16x32xf32>
    %391 = arith.addf %389, %390 : vector<16x32xf32>
    %c1_159 = arith.constant 1 : index
    %c0_160 = arith.constant 0 : index
    %c0_161 = arith.constant 0 : index
    %392 = vector.load %arg16[%c1_159, %c0_160, %c0_161] : memref<2x32x64xf32, #tpu.memory_space<vmem>>, vector<1x32x64xf32>
    %393 = vector.shape_cast %392 : vector<1x32x64xf32> to vector<32x64xf32>
    %cst_162 = arith.constant dense<0.000000e+00> : vector<16x64xf32>
    %394 = tpu.matmul %391, %393, %cst_162 {dimension_numbers = #tpu.dot_dimension_numbers<[1], [0], [0], [1], [0, 0, 1, 1], [], []>} : vector<16x32xf32>, vector<32x64xf32>, vector<16x64xf32> -> vector<16x64xf32>
    %c1_163 = arith.constant 1 : index
    %c0_164 = arith.constant 0 : index
    %c0_165 = arith.constant 0 : index
    %395 = vector.load %arg17[%c1_163, %c0_164, %c0_165] : memref<2x1x64xf32, #tpu.memory_space<vmem>>, vector<1x1x64xf32>
    %396 = vector.shape_cast %395 : vector<1x1x64xf32> to vector<1x64xf32>
    %397 = vector.broadcast %396 : vector<1x64xf32> to vector<16x64xf32>
    %398 = arith.addf %394, %397 : vector<16x64xf32>
    %cst_166 = arith.constant 0.000000e+00 : f32
    %399 = vector.broadcast %cst_166 : f32 to vector<16x64xf32>
    %400 = arith.maximumf %398, %399 : vector<16x64xf32>
    %c1_167 = arith.constant 1 : index
    %c0_168 = arith.constant 0 : index
    %c0_169 = arith.constant 0 : index
    %401 = vector.load %arg18[%c1_167, %c0_168, %c0_169] : memref<2x64x32xf32, #tpu.memory_space<vmem>>, vector<1x64x32xf32>
    %402 = vector.shape_cast %401 : vector<1x64x32xf32> to vector<64x32xf32>
    %cst_170 = arith.constant dense<0.000000e+00> : vector<16x32xf32>
    %403 = tpu.matmul %400, %402, %cst_170 {dimension_numbers = #tpu.dot_dimension_numbers<[1], [0], [0], [1], [0, 0, 1, 1], [], []>} : vector<16x64xf32>, vector<64x32xf32>, vector<16x32xf32> -> vector<16x32xf32>
    %c1_171 = arith.constant 1 : index
    %c0_172 = arith.constant 0 : index
    %c0_173 = arith.constant 0 : index
    %404 = vector.load %arg19[%c1_171, %c0_172, %c0_173] : memref<2x1x32xf32, #tpu.memory_space<vmem>>, vector<1x1x32xf32>
    %405 = vector.shape_cast %404 : vector<1x1x32xf32> to vector<1x32xf32>
    %406 = vector.broadcast %405 : vector<1x32xf32> to vector<16x32xf32>
    %407 = arith.addf %403, %406 : vector<16x32xf32>
    %408 = arith.addf %391, %407 : vector<16x32xf32>
    %c1_174 = arith.constant 1 : index
    %c0_175 = arith.constant 0 : index
    %c0_176 = arith.constant 0 : index
    %409 = vector.load %arg20[%c1_174, %c0_175, %c0_176] : memref<2x1x32xf32, #tpu.memory_space<vmem>>, vector<1x1x32xf32>
    %410 = vector.shape_cast %409 : vector<1x1x32xf32> to vector<1x32xf32>
    %c1_177 = arith.constant 1 : index
    %c0_178 = arith.constant 0 : index
    %c0_179 = arith.constant 0 : index
    %411 = vector.load %arg21[%c1_177, %c0_178, %c0_179] : memref<2x1x32xf32, #tpu.memory_space<vmem>>, vector<1x1x32xf32>
    %412 = vector.shape_cast %411 : vector<1x1x32xf32> to vector<1x32xf32>
    %cst_180 = arith.constant dense<0.000000e+00> : vector<16xf32>
    %413 = vector.multi_reduction <add>, %408, %cst_180 [1] : vector<16x32xf32> to vector<16xf32>
    %414 = vector.shape_cast %413 : vector<16xf32> to vector<16x1xf32>
    %cst_181 = arith.constant 3.200000e+01 : f32
    %415 = vector.broadcast %cst_181 : f32 to vector<16x1xf32>
    %416 = arith.divf %414, %415 : vector<16x1xf32>
    %417 = vector.broadcast %416 : vector<16x1xf32> to vector<16x32xf32>
    %418 = arith.subf %408, %417 : vector<16x32xf32>
    %419 = arith.mulf %418, %418 : vector<16x32xf32>
    %cst_182 = arith.constant dense<0.000000e+00> : vector<16xf32>
    %420 = vector.multi_reduction <add>, %419, %cst_182 [1] : vector<16x32xf32> to vector<16xf32>
    %421 = vector.shape_cast %420 : vector<16xf32> to vector<16x1xf32>
    %cst_183 = arith.constant 3.200000e+01 : f32
    %422 = vector.broadcast %cst_183 : f32 to vector<16x1xf32>
    %423 = arith.divf %421, %422 : vector<16x1xf32>
    %424 = vector.broadcast %416 : vector<16x1xf32> to vector<16x32xf32>
    %425 = arith.subf %408, %424 : vector<16x32xf32>
    %cst_184 = arith.constant 9.99999974E-6 : f32
    %426 = vector.broadcast %cst_184 : f32 to vector<16x1xf32>
    %427 = arith.addf %423, %426 : vector<16x1xf32>
    %428 = math.rsqrt %427 : vector<16x1xf32>
    %429 = vector.broadcast %428 : vector<16x1xf32> to vector<16x32xf32>
    %430 = arith.mulf %425, %429 : vector<16x32xf32>
    %431 = vector.broadcast %410 : vector<1x32xf32> to vector<16x32xf32>
    %432 = arith.mulf %430, %431 : vector<16x32xf32>
    %433 = vector.broadcast %412 : vector<1x32xf32> to vector<16x32xf32>
    %434 = arith.addf %432, %433 : vector<16x32xf32>
    %c0_185 = arith.constant 0 : index
    %c0_186 = arith.constant 0 : index
    %435 = vector.load %arg22[%c0_185, %c0_186] : memref<1x32xf32, #tpu.memory_space<vmem>>, vector<1x32xf32>
    %c0_187 = arith.constant 0 : index
    %c0_188 = arith.constant 0 : index
    %436 = vector.load %arg23[%c0_187, %c0_188] : memref<1x32xf32, #tpu.memory_space<vmem>>, vector<1x32xf32>
    %cst_189 = arith.constant dense<0.000000e+00> : vector<16xf32>
    %437 = vector.multi_reduction <add>, %434, %cst_189 [1] : vector<16x32xf32> to vector<16xf32>
    %438 = vector.shape_cast %437 : vector<16xf32> to vector<16x1xf32>
    %cst_190 = arith.constant 3.200000e+01 : f32
    %439 = vector.broadcast %cst_190 : f32 to vector<16x1xf32>
    %440 = arith.divf %438, %439 : vector<16x1xf32>
    %441 = vector.broadcast %440 : vector<16x1xf32> to vector<16x32xf32>
    %442 = arith.subf %434, %441 : vector<16x32xf32>
    %443 = arith.mulf %442, %442 : vector<16x32xf32>
    %cst_191 = arith.constant dense<0.000000e+00> : vector<16xf32>
    %444 = vector.multi_reduction <add>, %443, %cst_191 [1] : vector<16x32xf32> to vector<16xf32>
    %445 = vector.shape_cast %444 : vector<16xf32> to vector<16x1xf32>
    %cst_192 = arith.constant 3.200000e+01 : f32
    %446 = vector.broadcast %cst_192 : f32 to vector<16x1xf32>
    %447 = arith.divf %445, %446 : vector<16x1xf32>
    %448 = vector.broadcast %440 : vector<16x1xf32> to vector<16x32xf32>
    %449 = arith.subf %434, %448 : vector<16x32xf32>
    %cst_193 = arith.constant 9.99999974E-6 : f32
    %450 = vector.broadcast %cst_193 : f32 to vector<16x1xf32>
    %451 = arith.addf %447, %450 : vector<16x1xf32>
    %452 = math.rsqrt %451 : vector<16x1xf32>
    %453 = vector.broadcast %452 : vector<16x1xf32> to vector<16x32xf32>
    %454 = arith.mulf %449, %453 : vector<16x32xf32>
    %455 = vector.broadcast %435 : vector<1x32xf32> to vector<16x32xf32>
    %456 = arith.mulf %454, %455 : vector<16x32xf32>
    %457 = vector.broadcast %436 : vector<1x32xf32> to vector<16x32xf32>
    %458 = arith.addf %456, %457 : vector<16x32xf32>
    %459 = vector.shape_cast %458 : vector<16x32xf32> to vector<2x8x32xf32>
    %c0_194 = arith.constant 0 : index
    %c0_195 = arith.constant 0 : index
    %c0_196 = arith.constant 0 : index
    %460 = vector.load %arg24[%c0_194, %c0_195, %c0_196] : memref<2x8x32xf32, #tpu.memory_space<vmem>>, vector<2x8x32xf32>
    tpu.vector_store %arg24[%c0_194, %c0_195, %c0_196], %459 {strides = array<i32>} : memref<2x8x32xf32, #tpu.memory_space<vmem>>, vector<2x8x32xf32>,
    return
  }
}

</mosaic_0001>

<llo_original>
// kernel: tpu_custom_call.1
$region0: #{tpu_custom_call.1}
  #allocation0 [shape = 'u32[]', space=smem, size = 0x4, offset = 0x4, fixed_abs, tag = 'smem constant byte address 0x4 - core index']
  #allocation1 [shape = 'u32[144,128]{1,0:T(1,128)}', space=vmem, size = 0x12000, scoped, tag = 'internal scratch']
  %s0 = inlined_call_operand.hbm [shape: f32[2,8,32], index: 0, kind: input, shape index: {}]
  %s1 = inlined_call_operand.hbm [shape: f32[2,16,32], index: 1, kind: input, shape index: {}]
  %s2 = inlined_call_operand.hbm [shape: f32[2,8,32], index: 2, kind: input, shape index: {}]
  %s3 = inlined_call_operand.hbm [shape: f32[2,16,32], index: 3, kind: input, shape index: {}]
  %s4 = inlined_call_operand.vmem [shape: f32[2,32,96], index: 4, kind: input, shape index: {}]
  %s5 = inlined_call_operand.vmem [shape: f32[2,1,96], index: 5, kind: input, shape index: {}]
  %s6 = inlined_call_operand.vmem [shape: f32[2,32,32], index: 6, kind: input, shape index: {}]
  %s7 = inlined_call_operand.vmem [shape: f32[2,1,32], index: 7, kind: input, shape index: {}]
  %s8 = inlined_call_operand.hbm [shape: f32[2,1,32], index: 8, kind: input, shape index: {}]
  %s9 = inlined_call_operand.hbm [shape: f32[2,1,32], index: 9, kind: input, shape index: {}]
  %s10 = inlined_call_operand.vmem [shape: f32[2,32,96], index: 10, kind: input, shape index: {}]
  %s11 = inlined_call_operand.hbm [shape: f32[2,1,96], index: 11, kind: input, shape index: {}]
  %s12 = inlined_call_operand.hbm [shape: f32[2,32,32], index: 12, kind: input, shape index: {}]
  %s13 = inlined_call_operand.hbm [shape: f32[2,1,32], index: 13, kind: input, shape index: {}]
  %s14 = inlined_call_operand.hbm [shape: f32[2,1,32], index: 14, kind: input, shape index: {}]
  %s15 = inlined_call_operand.hbm [shape: f32[2,1,32], index: 15, kind: input, shape index: {}]
  %s16 = inlined_call_operand.hbm [shape: f32[2,32,64], index: 16, kind: input, shape index: {}]
  %s17 = inlined_call_operand.hbm [shape: f32[2,1,64], index: 17, kind: input, shape index: {}]
  %s18 = inlined_call_operand.vmem [shape: f32[2,64,32], index: 18, kind: input, shape index: {}]
  %s19 = inlined_call_operand.vmem [shape: f32[2,1,32], index: 19, kind: input, shape index: {}]
  %s20 = inlined_call_operand.vmem [shape: f32[2,1,32], index: 20, kind: input, shape index: {}]
  %s21 = inlined_call_operand.vmem [shape: f32[2,1,32], index: 21, kind: input, shape index: {}]
  %s22 = inlined_call_operand.vmem [shape: f32[1,32], index: 22, kind: input, shape index: {}]
  %s23 = inlined_call_operand.vmem [shape: f32[1,32], index: 23, kind: input, shape index: {}]
  %s24 = inlined_call_operand.hbm [shape: f32[2,8,32], index: 24, kind: output, shape index: {}]
  %s25 = sld [smem:[#allocation0]]
  $region158: #{tpu_custom_call.1} parent=0
    _
  %s27 = ssub.s32 1, %s25
  %s28 = scalar_select 0, %s27, %s25
  $region1: #{tpu_custom_call.1} parent=0
    #allocation2 [shape = 'u8[8192]{0}', space=vmem, size = 0x2000, scoped, tag = 'input window, operand 0, single buffered']
    #allocation3 [shape = 's32[1]{0}', space=sflag, size = 0x4, scoped, tag = 'scoped memory for tpu_custom_call.1']
    #allocation4 [shape = 's32[1]{0}', space=sflag, size = 0x4, scoped, tag = 'scoped memory for tpu_custom_call.1']
    #allocation5 [shape = 'u8[16384]{0}', space=vmem, size = 0x4000, scoped, tag = 'input window, operand 1, single buffered']
    #allocation6 [shape = 's32[1]{0}', space=sflag, size = 0x4, scoped, tag = 'scoped memory for tpu_custom_call.1']
    #allocation7 [shape = 'u8[8192]{0}', space=vmem, size = 0x2000, scoped, tag = 'input window, operand 2, single buffered']
    #allocation8 [shape = 'u8[16384]{0}', space=vmem, size = 0x4000, scoped, tag = 'input window, operand 3, single buffered']
    #allocation9 [shape = 's32[1]{0}', space=sflag, size = 0x4, scoped, tag = 'scoped memory for tpu_custom_call.1']
    #allocation10 [shape = 'u8[1024]{0}', space=vmem, size = 0x400, scoped, tag = 'input window, operand 8, single buffered']
    #allocation11 [shape = 'u8[1024]{0}', space=vmem, size = 0x400, scoped, tag = 'input window, operand 9, single buffered']
    #allocation12 [shape = 's32[1]{0}', space=sflag, size = 0x4, scoped, tag = 'scoped memory for tpu_custom_call.1']
    #allocation13 [shape = 'u8[1024]{0}', space=vmem, size = 0x400, scoped, tag = 'input window, operand 11, single buffered']
    #allocation14 [shape = 'u8[32768]{0}', space=vmem, size = 0x8000, scoped, tag = 'input window, operand 12, single buffered']
    #allocation15 [shape = 's32[1]{0}', space=sflag, size = 0x4, scoped, tag = 'scoped memory for tpu_custom_call.1']
    #allocation16 [shape = 'u8[1024]{0}', space=vmem, size = 0x400, scoped, tag = 'input window, operand 13, single buffered']
    #allocation17 [shape = 'u8[1024]{0}', space=vmem, size = 0x400, scoped, tag = 'input window, operand 14, single buffered']
    #allocation18 [shape = 's32[1]{0}', space=sflag, size = 0x4, scoped, tag = 'scoped memory for tpu_custom_call.1']
    #allocation19 [shape = 'u8[1024]{0}', space=vmem, size = 0x400, scoped, tag = 'input window, operand 15, single buffered']
    #allocation20 [shape = 'u8[32768]{0}', space=vmem, size = 0x8000, scoped, tag = 'input window, operand 16, single buffered']
    #allocation21 [shape = 's32[1]{0}', space=sflag, size = 0x4, scoped, tag = 'scoped memory for tpu_custom_call.1']
    #allocation22 [shape = 'u8[1024]{0}', space=vmem, size = 0x400, scoped, tag = 'input window, operand 17, single buffered']
    #allocation23 [shape = 'u8[8192]{0}', space=vmem, size = 0x2000, scoped, tag = 'output window, operand 0, single buffered']
    %29 = vsyncpa [#allocation3], 0
    %30 = vsyncpa [#allocation6], 0
    %31 = vsyncpa [#allocation9], 0
    %32 = vsyncpa [#allocation12], 0
    %33 = vsyncpa [#allocation15], 0
    %34 = vsyncpa [#allocation18], 0
    %35 = vsyncpa [#allocation21], 0
    %36 = vsyncpa [#allocation4], 0
    // Predicated region
    $region2: #{tpu_custom_call.1} parent=1 // pred_check
      _
    $region3: #{tpu_custom_call.1} parent=1 // pred_check_branch
      %38 = sbr.rel (0) target = $region5
    $region4: #{tpu_custom_call.1} parent=1 // pred_region
      %s40 = ssub.s32 256, 256
      %41 = vsyncadd [#allocation3], %s40
      %s42 = sshll.u32 [#allocation2], 4
      %s43 = int_to_ptr.vmem [resolvable:$true] %s42
      %48 = dma.hbm_to_vmem [thread:$0]  %s0, 256, %s43, [#allocation3], 128, 128, 8
    $region5: #{tpu_custom_call.1} parent=1 // pred_fallthru
      _
    // Predicated region
    $region6: #{tpu_custom_call.1} parent=1 // pred_check
      _
    $region7: #{tpu_custom_call.1} parent=1 // pred_check_branch
      %50 = sbr.rel (0) target = $region9
    $region8: #{tpu_custom_call.1} parent=1 // pred_region
      %s52 = ssub.s32 512, 512
      %53 = vsyncadd [#allocation6], %s52
      %s54 = sshll.u32 [#allocation5], 4
      %s55 = int_to_ptr.vmem [resolvable:$true] %s54
      %60 = dma.hbm_to_vmem [thread:$0]  %s1, 512, %s55, [#allocation6], 128, 128, 8
    $region9: #{tpu_custom_call.1} parent=1 // pred_fallthru
      _
    // Predicated region
    $region10: #{tpu_custom_call.1} parent=1 // pred_check
      _
    $region11: #{tpu_custom_call.1} parent=1 // pred_check_branch
      %62 = sbr.rel (0) target = $region13
    $region12: #{tpu_custom_call.1} parent=1 // pred_region
      %s64 = ssub.s32 256, 256
      %65 = vsyncadd [#allocation6], %s64
      %s66 = sshll.u32 [#allocation7], 4
      %s67 = int_to_ptr.vmem [resolvable:$true] %s66
      %72 = dma.hbm_to_vmem [thread:$0]  %s2, 256, %s67, [#allocation6], 128, 128, 8
    $region13: #{tpu_custom_call.1} parent=1 // pred_fallthru
      _
    // Predicated region
    $region14: #{tpu_custom_call.1} parent=1 // pred_check
      _
    $region15: #{tpu_custom_call.1} parent=1 // pred_check_branch
      %74 = sbr.rel (0) target = $region17
    $region16: #{tpu_custom_call.1} parent=1 // pred_region
      %s76 = ssub.s32 512, 512
      %77 = vsyncadd [#allocation9], %s76
      %s78 = sshll.u32 [#allocation8], 4
      %s79 = int_to_ptr.vmem [resolvable:$true] %s78
      %84 = dma.hbm_to_vmem [thread:$0]  %s3, 512, %s79, [#allocation9], 128, 128, 8
    $region17: #{tpu_custom_call.1} parent=1 // pred_fallthru
      _
    // Predicated region
    $region18: #{tpu_custom_call.1} parent=1 // pred_check
      _
    $region19: #{tpu_custom_call.1} parent=1 // pred_check_branch
      %86 = sbr.rel (0) target = $region21
    $region20: #{tpu_custom_call.1} parent=1 // pred_region
      _
    $region21: #{tpu_custom_call.1} parent=1 // pred_fallthru
      _
    // Predicated region
    $region22: #{tpu_custom_call.1} parent=1 // pred_check
      _
    $region23: #{tpu_custom_call.1} parent=1 // pred_check_branch
      %88 = sbr.rel (0) target = $region25
    $region24: #{tpu_custom_call.1} parent=1 // pred_region
      _
    $region25: #{tpu_custom_call.1} parent=1 // pred_fallthru
      _
    // Predicated region
    $region26: #{tpu_custom_call.1} parent=1 // pred_check
      _
    $region27: #{tpu_custom_call.1} parent=1 // pred_check_branch
      %90 = sbr.rel (0) target = $region29
    $region28: #{tpu_custom_call.1} parent=1 // pred_region
      _
    $region29: #{tpu_custom_call.1} parent=1 // pred_fallthru
      _
    // Predicated region
    $region30: #{tpu_custom_call.1} parent=1 // pred_check
      _
    $region31: #{tpu_custom_call.1} parent=1 // pred_check_branch
      %92 = sbr.rel (0) target = $region33
    $region32: #{tpu_custom_call.1} parent=1 // pred_region
      _
    $region33: #{tpu_custom_call.1} parent=1 // pred_fallthru
      _
    // Predicated region
    $region34: #{tpu_custom_call.1} parent=1 // pred_check
      _
    $region35: #{tpu_custom_call.1} parent=1 // pred_check_branch
      %94 = sbr.rel (0) target = $region37
    $region36: #{tpu_custom_call.1} parent=1 // pred_region
      %s96 = ssub.s32 32, 32
      %97 = vsyncadd [#allocation9], %s96
      %s98 = sshll.u32 [#allocation10], 4
      %s99 = int_to_ptr.vmem [resolvable:$true] %s98
      %104 = dma.hbm_to_vmem [thread:$0]  %s8, 32, %s99, [#allocation9], 16, 16, 1
    $region37: #{tpu_custom_call.1} parent=1 // pred_fallthru
      _
    // Predicated region
    $region38: #{tpu_custom_call.1} parent=1 // pred_check
      _
    $region39: #{tpu_custom_call.1} parent=1 // pred_check_branch
      %106 = sbr.rel (0) target = $region41
    $region40: #{tpu_custom_call.1} parent=1 // pred_region
      %s108 = ssub.s32 32, 32
      %109 = vsyncadd [#allocation12], %s108
      %s110 = sshll.u32 [#allocation11], 4
      %s111 = int_to_ptr.vmem [resolvable:$true] %s110
      %116 = dma.hbm_to_vmem [thread:$0]  %s9, 32, %s111, [#allocation12], 16, 16, 1
    $region41: #{tpu_custom_call.1} parent=1 // pred_fallthru
      _
    // Predicated region
    $region42: #{tpu_custom_call.1} parent=1 // pred_check
      _
    $region43: #{tpu_custom_call.1} parent=1 // pred_check_branch
      %118 = sbr.rel (0) target = $region45
    $region44: #{tpu_custom_call.1} parent=1 // pred_region
      _
    $region45: #{tpu_custom_call.1} parent=1 // pred_fallthru
      _
    // Predicated region
    $region46: #{tpu_custom_call.1} parent=1 // pred_check
      _
    $region47: #{tpu_custom_call.1} parent=1 // pred_check_branch
      %120 = sbr.rel (0) target = $region49
    $region48: #{tpu_custom_call.1} parent=1 // pred_region
      %s122 = ssub.s32 32, 32
      %123 = vsyncadd [#allocation12], %s122
      %s124 = sshll.u32 [#allocation13], 4
      %s125 = int_to_ptr.vmem [resolvable:$true] %s124
      %130 = dma.hbm_to_vmem [thread:$0]  %s11, 32, %s125, [#allocation12], 16, 16, 1
    $region49: #{tpu_custom_call.1} parent=1 // pred_fallthru
      _
    // Predicated region
    $region50: #{tpu_custom_call.1} parent=1 // pred_check
      _
    $region51: #{tpu_custom_call.1} parent=1 // pred_check_branch
      %132 = sbr.rel (0) target = $region53
    $region52: #{tpu_custom_call.1} parent=1 // pred_region
      %s134 = ssub.s32 1024, 1024
      %135 = vsyncadd [#allocation15], %s134
      %s136 = sshll.u32 [#allocation14], 4
      %s137 = int_to_ptr.vmem [resolvable:$true] %s136
      %142 = dma.hbm_to_vmem [thread:$0]  %s12, 1024, %s137, [#allocation15], 128, 128, 8
    $region53: #{tpu_custom_call.1} parent=1 // pred_fallthru
      _
    // Predicated region
    $region54: #{tpu_custom_call.1} parent=1 // pred_check
      _
    $region55: #{tpu_custom_call.1} parent=1 // pred_check_branch
      %144 = sbr.rel (0) target = $region57
    $region56: #{tpu_custom_call.1} parent=1 // pred_region
      %s146 = ssub.s32 32, 32
      %147 = vsyncadd [#allocation15], %s146
      %s148 = sshll.u32 [#allocation16], 4
      %s149 = int_to_ptr.vmem [resolvable:$true] %s148
      %154 = dma.hbm_to_vmem [thread:$0]  %s13, 32, %s149, [#allocation15], 16, 16, 1
    $region57: #{tpu_custom_call.1} parent=1 // pred_fallthru
      _
    // Predicated region
    $region58: #{tpu_custom_call.1} parent=1 // pred_check
      _
    $region59: #{tpu_custom_call.1} parent=1 // pred_check_branch
      %156 = sbr.rel (0) target = $region61
    $region60: #{tpu_custom_call.1} parent=1 // pred_region
      %s158 = ssub.s32 32, 32
      %159 = vsyncadd [#allocation18], %s158
      %s160 = sshll.u32 [#allocation17], 4
      %s161 = int_to_ptr.vmem [resolvable:$true] %s160
      %166 = dma.hbm_to_vmem [thread:$0]  %s14, 32, %s161, [#allocation18], 16, 16, 1
    $region61: #{tpu_custom_call.1} parent=1 // pred_fallthru
      _
    // Predicated region
    $region62: #{tpu_custom_call.1} parent=1 // pred_check
      _
    $region63: #{tpu_custom_call.1} parent=1 // pred_check_branch
      %168 = sbr.rel (0) target = $region65
    $region64: #{tpu_custom_call.1} parent=1 // pred_region
      %s170 = ssub.s32 32, 32
      %171 = vsyncadd [#allocation18], %s170
      %s172 = sshll.u32 [#allocation19], 4
      %s173 = int_to_ptr.vmem [resolvable:$true] %s172
      %178 = dma.hbm_to_vmem [thread:$0]  %s15, 32, %s173, [#allocation18], 16, 16, 1
    $region65: #{tpu_custom_call.1} parent=1 // pred_fallthru
      _
    // Predicated region
    $region66: #{tpu_custom_call.1} parent=1 // pred_check
      _
    $region67: #{tpu_custom_call.1} parent=1 // pred_check_branch
      %180 = sbr.rel (0) target = $region69
    $region68: #{tpu_custom_call.1} parent=1 // pred_region
      %s182 = ssub.s32 1024, 1024
      %183 = vsyncadd [#allocation21], %s182
      %s184 = sshll.u32 [#allocation20], 4
      %s185 = int_to_ptr.vmem [resolvable:$true] %s184
      %190 = dma.hbm_to_vmem [thread:$0]  %s16, 1024, %s185, [#allocation21], 128, 128, 8
    $region69: #{tpu_custom_call.1} parent=1 // pred_fallthru
      _
    // Predicated region
    $region70: #{tpu_custom_call.1} parent=1 // pred_check
      _
    $region71: #{tpu_custom_call.1} parent=1 // pred_check_branch
      %192 = sbr.rel (0) target = $region73
    $region72: #{tpu_custom_call.1} parent=1 // pred_region
      %s194 = ssub.s32 32, 32
      %195 = vsyncadd [#allocation21], %s194
      %s196 = sshll.u32 [#allocation22], 4
      %s197 = int_to_ptr.vmem [resolvable:$true] %s196
      %202 = dma.hbm_to_vmem [thread:$0]  %s17, 32, %s197, [#allocation21], 16, 16, 1
    $region73: #{tpu_custom_call.1} parent=1 // pred_fallthru
      _
    // Predicated region
    $region74: #{tpu_custom_call.1} parent=1 // pred_check
      _
    $region75: #{tpu_custom_call.1} parent=1 // pred_check_branch
      %204 = sbr.rel (0) target = $region77
    $region76: #{tpu_custom_call.1} parent=1 // pred_region
      _
    $region77: #{tpu_custom_call.1} parent=1 // pred_fallthru
      _
    // Predicated region
    $region78: #{tpu_custom_call.1} parent=1 // pred_check
      _
    $region79: #{tpu_custom_call.1} parent=1 // pred_check_branch
      %206 = sbr.rel (0) target = $region81
    $region80: #{tpu_custom_call.1} parent=1 // pred_region
      _
    $region81: #{tpu_custom_call.1} parent=1 // pred_fallthru
      _
    // Predicated region
    $region82: #{tpu_custom_call.1} parent=1 // pred_check
      _
    $region83: #{tpu_custom_call.1} parent=1 // pred_check_branch
      %208 = sbr.rel (0) target = $region85
    $region84: #{tpu_custom_call.1} parent=1 // pred_region
      _
    $region85: #{tpu_custom_call.1} parent=1 // pred_fallthru
      _
    // Predicated region
    $region86: #{tpu_custom_call.1} parent=1 // pred_check
      _
    $region87: #{tpu_custom_call.1} parent=1 // pred_check_branch
      %210 = sbr.rel (0) target = $region89
    $region88: #{tpu_custom_call.1} parent=1 // pred_region
      _
    $region89: #{tpu_custom_call.1} parent=1 // pred_fallthru
      _
    // Predicated region
    $region90: #{tpu_custom_call.1} parent=1 // pred_check
      _
    $region91: #{tpu_custom_call.1} parent=1 // pred_check_branch
      %212 = sbr.rel (0) target = $region93
    $region92: #{tpu_custom_call.1} parent=1 // pred_region
      _
    $region93: #{tpu_custom_call.1} parent=1 // pred_fallthru
      _
    // Predicated region
    $region94: #{tpu_custom_call.1} parent=1 // pred_check
      _
    $region95: #{tpu_custom_call.1} parent=1 // pred_check_branch
      %214 = sbr.rel (0) target = $region97
    $region96: #{tpu_custom_call.1} parent=1 // pred_region
      _
    $region97: #{tpu_custom_call.1} parent=1 // pred_fallthru
      _
    // Predicated region
    $region98: #{tpu_custom_call.1} parent=1 // pred_check
      _
    $region99: #{tpu_custom_call.1} parent=1 // pred_check_branch
      %216 = sbr.rel (0) target = $region101
    $region100: #{tpu_custom_call.1} parent=1 // pred_region
      %217 = dma.done [#allocation3], 256
    $region101: #{tpu_custom_call.1} parent=1 // pred_fallthru
      _
    // Predicated region
    $region102: #{tpu_custom_call.1} parent=1 // pred_check
      _
    $region103: #{tpu_custom_call.1} parent=1 // pred_check_branch
      %219 = sbr.rel (0) target = $region105
    $region104: #{tpu_custom_call.1} parent=1 // pred_region
      %220 = dma.done [#allocation6], 512
    $region105: #{tpu_custom_call.1} parent=1 // pred_fallthru
      _
    // Predicated region
    $region106: #{tpu_custom_call.1} parent=1 // pred_check
      _
    $region107: #{tpu_custom_call.1} parent=1 // pred_check_branch
      %222 = sbr.rel (0) target = $region109
    $region108: #{tpu_custom_call.1} parent=1 // pred_region
      %223 = dma.done [#allocation6], 256
    $region109: #{tpu_custom_call.1} parent=1 // pred_fallthru
      _
    // Predicated region
    $region110: #{tpu_custom_call.1} parent=1 // pred_check
      _
    $region111: #{tpu_custom_call.1} parent=1 // pred_check_branch
      %225 = sbr.rel (0) target = $region113
    $region112: #{tpu_custom_call.1} parent=1 // pred_region
      %226 = dma.done [#allocation9], 512
    $region113: #{tpu_custom_call.1} parent=1 // pred_fallthru
      _
    // Predicated region
    $region114: #{tpu_custom_call.1} parent=1 // pred_check
      _
    $region115: #{tpu_custom_call.1} parent=1 // pred_check_branch
      %228 = sbr.rel (0) target = $region117
    $region116: #{tpu_custom_call.1} parent=1 // pred_region
      %229 = dma.done [#allocation9], 32
    $region117: #{tpu_custom_call.1} parent=1 // pred_fallthru
      _
    // Predicated region
    $region118: #{tpu_custom_call.1} parent=1 // pred_check
      _
    $region119: #{tpu_custom_call.1} parent=1 // pred_check_branch
      %231 = sbr.rel (0) target = $region121
    $region120: #{tpu_custom_call.1} parent=1 // pred_region
      %232 = dma.done [#allocation12], 32
    $region121: #{tpu_custom_call.1} parent=1 // pred_fallthru
      _
    // Predicated region
    $region122: #{tpu_custom_call.1} parent=1 // pred_check
      _
    $region123: #{tpu_custom_call.1} parent=1 // pred_check_branch
      %234 = sbr.rel (0) target = $region125
    $region124: #{tpu_custom_call.1} parent=1 // pred_region
      %235 = dma.done [#allocation12], 32
    $region125: #{tpu_custom_call.1} parent=1 // pred_fallthru
      _
    // Predicated region
    $region126: #{tpu_custom_call.1} parent=1 // pred_check
      _
    $region127: #{tpu_custom_call.1} parent=1 // pred_check_branch
      %237 = sbr.rel (0) target = $region129
    $region128: #{tpu_custom_call.1} parent=1 // pred_region
      %238 = dma.done [#allocation15], 1024
    $region129: #{tpu_custom_call.1} parent=1 // pred_fallthru
      _
    // Predicated region
    $region130: #{tpu_custom_call.1} parent=1 // pred_check
      _
    $region131: #{tpu_custom_call.1} parent=1 // pred_check_branch
      %240 = sbr.rel (0) target = $region133
    $region132: #{tpu_custom_call.1} parent=1 // pred_region
      %241 = dma.done [#allocation15], 32
    $region133: #{tpu_custom_call.1} parent=1 // pred_fallthru
      _
    // Predicated region
    $region134: #{tpu_custom_call.1} parent=1 // pred_check
      _
    $region135: #{tpu_custom_call.1} parent=1 // pred_check_branch
      %243 = sbr.rel (0) target = $region137
    $region136: #{tpu_custom_call.1} parent=1 // pred_region
      %244 = dma.done [#allocation18], 32
    $region137: #{tpu_custom_call.1} parent=1 // pred_fallthru
      _
    // Predicated region
    $region138: #{tpu_custom_call.1} parent=1 // pred_check
      _
    $region139: #{tpu_custom_call.1} parent=1 // pred_check_branch
      %246 = sbr.rel (0) target = $region141
    $region140: #{tpu_custom_call.1} parent=1 // pred_region
      %247 = dma.done [#allocation18], 32
    $region141: #{tpu_custom_call.1} parent=1 // pred_fallthru
      _
    // Predicated region
    $region142: #{tpu_custom_call.1} parent=1 // pred_check
      _
    $region143: #{tpu_custom_call.1} parent=1 // pred_check_branch
      %249 = sbr.rel (0) target = $region145
    $region144: #{tpu_custom_call.1} parent=1 // pred_region
      %250 = dma.done [#allocation21], 1024
    $region145: #{tpu_custom_call.1} parent=1 // pred_fallthru
      _
    // Predicated region
    $region146: #{tpu_custom_call.1} parent=1 // pred_check
      _
    $region147: #{tpu_custom_call.1} parent=1 // pred_check_branch
      %252 = sbr.rel (0) target = $region149
    $region148: #{tpu_custom_call.1} parent=1 // pred_region
      %253 = dma.done [#allocation21], 32
    $region149: #{tpu_custom_call.1} parent=1 // pred_fallthru
      _
    %v254 = vld [vmem:[#allocation2] sm:$0xff]
    %v255 = vld [vmem:[#allocation2 + $0x8] sm:$0xff]
    %v256 = vld [vmem:[#allocation7] sm:$0xff]
    %v257 = vld [vmem:[#allocation7 + $0x8] sm:$0xff]
    %v258 = vld [vmem:[#allocation5] sm:$0xff]
    %v259 = vld [vmem:[#allocation5 + $0x8] sm:$0xff]
    %v260 = vld [vmem:[#allocation5 + $0x10] sm:$0xff]
    %v261 = vld [vmem:[#allocation5 + $0x18] sm:$0xff]
    %v262 = vld [vmem:[#allocation8] sm:$0xff]
    %v263 = vld [vmem:[#allocation8 + $0x8] sm:$0xff]
    %v264 = vld [vmem:[#allocation8 + $0x10] sm:$0xff]
    %v265 = vld [vmem:[#allocation8 + $0x18] sm:$0xff]
    %v266 = vadd.f32 %v258, %v262
    %v267 = vadd.f32 %v259, %v263
    %v268 = vadd.f32 %v260, %v264
    %v269 = vadd.f32 %v261, %v265
    %v270 = vadd.f32 %v254, %v256
    %v271 = vadd.f32 %v255, %v257
    %v272 = vld [vmem:[%s4] sm:$0xff]
    %v273 = vld [vmem:[%s4 + $0x8] sm:$0xff]
    %v274 = vld [vmem:[%s4 + $0x10] sm:$0xff]
    %v275 = vld [vmem:[%s4 + $0x18] sm:$0xff]
    %v276 = vld [vmem:[%s5] sm:$0x1]
    %v278 = vlaneseq
    %v279 = vshrl.u32 %v278, 7
    %v280 = vsub.s32 0, %v279
    %v281 = vrot.slane %v276, %v280
    %vm283 = vcmask 261120
    %v285 = vsel %vm283, %v270, 0
    %v288 = vsel %vm283, %v271, 0
    %v291 = vsel %vm283, %v254, 0
    %v294 = vsel %vm283, %v255, 0
    %296 = vmatprep.subr.mxu0 0.0
    %297 = vmatpush1.msra.mxu0 %v272
    %298 = vmatprep.subr.mxu0 0.0
    %299 = vmatpush1.msra.mxu0 %v273
    %300 = vmatprep.subr.mxu0 0.0
    %301 = vmatpush1.msra.mxu0 %v274
    %302 = vmatprep.subr.mxu0 0.0
    %303 = vmatpush1.msra.mxu0 %v275
    %304 = vmatprep.subr.mxu0 0.0
    %305 = vmatpush1.msra.mxu0 0.0
    %306 = vmatprep.subr.mxu0 0.0
    %307 = vmatpush1.msra.mxu0 0.0
    %308 = vmatprep.subr.mxu0 0.0
    %309 = vmatpush1.msra.mxu0 0.0
    %310 = vmatprep.subr.mxu0 0.0
    %311 = vmatpush1.msra.mxu0 0.0
    %312 = vmatprep.subr.mxu0 0.0
    %313 = vmatpush1.msra.mxu0 0.0
    %314 = vmatprep.subr.mxu0 0.0
    %315 = vmatpush1.msra.mxu0 0.0
    %316 = vmatprep.subr.mxu0 0.0
    %317 = vmatpush1.msra.mxu0 0.0
    %318 = vmatprep.subr.mxu0 0.0
    %319 = vmatpush1.msra.mxu0 0.0
    %320 = vmatprep.subr.mxu0 0.0
    %321 = vmatpush1.msra.mxu0 0.0
    %322 = vmatprep.subr.mxu0 0.0
    %323 = vmatpush1.msra.mxu0 0.0
    %324 = vmatprep.subr.mxu0 0.0
    %325 = vmatpush1.msra.mxu0 0.0
    %326 = vmatprep.subr.mxu0 0.0
    %327 = vmatpush1.msra.mxu0 0.0
    %328 = vmatprep.subr.mxu0 0.0
    %329 = vmatpush1.msra.mxu0 0.0
    %330 = vmatprep.subr.mxu0 0.0
    %331 = vmatpush1.msra.mxu0 0.0
    %332 = vmatprep.subr.mxu0 0.0
    %333 = vmatpush1.msra.mxu0 0.0
    %334 = vmatprep.subr.mxu0 0.0
    %335 = vmatpush1.msra.mxu0 0.0
    %336 = vmatprep.subr.mxu0 0.0
    %337 = vmatpush1.msra.mxu0 0.0
    %338 = vmatprep.subr.mxu0 0.0
    %339 = vmatpush1.msra.mxu0 0.0
    %340 = vmatprep.subr.mxu0 0.0
    %341 = vmatpush1.msra.mxu0 0.0
    %342 = vmatprep.subr.mxu0 0.0
    %343 = vmatpush1.msra.mxu0 0.0
    %344 = vmatprep.subr.mxu0 0.0
    %345 = vmatpush1.msra.mxu0 0.0
    %346 = vmatprep.subr.mxu0 0.0
    %347 = vmatpush1.msra.mxu0 0.0
    %348 = vmatprep.subr.mxu0 0.0
    %349 = vmatpush1.msra.mxu0 0.0
    %350 = vmatprep.subr.mxu0 0.0
    %351 = vmatpush1.msra.mxu0 0.0
    %352 = vmatprep.subr.mxu0 0.0
    %353 = vmatpush1.msra.mxu0 0.0
    %354 = vmatprep.subr.mxu0 0.0
    %355 = vmatpush1.msra.mxu0 0.0
    %356 = vmatprep.subr.mxu0 0.0
    %357 = vmatpush1.msra.mxu0 0.0
    %358 = vmatprep.subr.mxu0 0.0
    %359 = vmatpush1.msra.mxu0 0.0
    %360 = vmatprep.mubr.f32.mxu0 0.0
    %361 = vmatmul.mubr.f32.gmra.mrb[0].mxu0 %v285
    %v362 = vpop.f32.mrb[0].mxu0
    %v363 = vadd.f32 %v281, %v362
    %v364 = vpop.f32.mrb[0].mxu0
    %365 = vmatprep.mubr.f32.mxu0 0.0
    %366 = vmatmul.mubr.f32.gmra.mrb[0].mxu0 %v288
    %v367 = vpop.f32.mrb[0].mxu0
    %v368 = vadd.f32 %v281, %v367
    %v369 = vpop.f32.mrb[0].mxu0
    %370 = vmatprep.mubr.f32.mxu0 0.0
    %371 = vmatmul.mubr.f32.gmra.mrb[0].mxu0 %v291
    %v372 = vpop.f32.mrb[0].mxu0
    %v373 = vadd.f32 %v281, %v372
    %v374 = vpop.f32.mrb[0].mxu0
    %375 = vmatprep.mubr.f32.mxu0 0.0
    %376 = vmatmul.mubr.f32.gmra.mrb[0].mxu0 %v294
    %v377 = vpop.f32.mrb[0].mxu0
    %v378 = vadd.f32 %v281, %v377
    %v379 = vpop.f32.mrb[0].mxu0
    %380 = vdwg.mxu0
    %v381 = vmul.f32 %v363, 0.35355338
    %v382 = vmul.f32 %v368, 0.35355338
    %385 = vrot.lane.b32.xlu0 %v381, 120
    %v386 = vpop.permute.xlu0 %385
    %387 = vrot.lane.b32.xlu0 %v382, 120
    %v388 = vpop.permute.xlu0 %387
    %389 = vrot.lane.b32.xlu0 %v381, 112
    %v390 = vpop.permute.xlu0 %389
    %391 = vrot.lane.b32.xlu0 %v382, 112
    %v392 = vpop.permute.xlu0 %391
    %393 = vrot.lane.b32.xlu0 %v381, 104
    %v394 = vpop.permute.xlu0 %393
    %395 = vrot.lane.b32.xlu0 %v382, 104
    %v396 = vpop.permute.xlu0 %395
    %399 = vrot.lane.b32.xlu0 %v363, 120
    %v400 = vpop.permute.xlu0 %399
    %401 = vrot.lane.b32.xlu0 %v368, 120
    %v402 = vpop.permute.xlu0 %401
    %403 = vrot.lane.b32.xlu0 %v363, 112
    %v404 = vpop.permute.xlu0 %403
    %405 = vrot.lane.b32.xlu0 %v368, 112
    %v406 = vpop.permute.xlu0 %405
    %407 = vrot.lane.b32.xlu0 %v363, 104
    %v408 = vpop.permute.xlu0 %407
    %409 = vrot.lane.b32.xlu0 %v368, 104
    %v410 = vpop.permute.xlu0 %409
    %413 = vrot.lane.b32.xlu0 %v373, 120
    %v414 = vpop.permute.xlu0 %413
    %415 = vrot.lane.b32.xlu0 %v378, 120
    %v416 = vpop.permute.xlu0 %415
    %417 = vrot.lane.b32.xlu0 %v373, 112
    %v418 = vpop.permute.xlu0 %417
    %419 = vrot.lane.b32.xlu0 %v378, 112
    %v420 = vpop.permute.xlu0 %419
    %421 = vrot.lane.b32.xlu0 %v373, 104
    %v422 = vpop.permute.xlu0 %421
    %423 = vrot.lane.b32.xlu0 %v378, 104
    %v424 = vpop.permute.xlu0 %423
    %425 = vrot.lane.b32.xlu0 %v363, 96
    %v426 = vpop.permute.xlu0 %425
    %vm427 = vcmask 64512
    %v428 = vsel %vm427, %v381, 0
    %v430 = vsel %vm427, %v426, 0
    %432 = vmatprep.subr.mxu0 0.0
    %433 = vmatpush1.xpose.msra.mxu0 %v430
    %434 = vmatprep.subr.mxu0 0.0
    %435 = vmatpush1.xpose.msra.mxu0 0.0
    %436 = vmatprep.subr.mxu0 0.0
    %437 = vmatpush1.xpose.msra.mxu0 0.0
    %438 = vmatprep.subr.mxu0 0.0
    %439 = vmatpush1.xpose.msra.mxu0 0.0
    %440 = vmatprep.subr.mxu0 0.0
    %441 = vmatpush1.xpose.msra.mxu0 0.0
    %442 = vmatprep.subr.mxu0 0.0
    %443 = vmatpush1.xpose.msra.mxu0 0.0
    %444 = vmatprep.subr.mxu0 0.0
    %445 = vmatpush1.xpose.msra.mxu0 0.0
    %446 = vmatprep.subr.mxu0 0.0
    %447 = vmatpush1.xpose.msra.mxu0 0.0
    %448 = vmatprep.subr.mxu0 0.0
    %449 = vmatpush1.xpose.msra.mxu0 0.0
    %450 = vmatprep.subr.mxu0 0.0
    %451 = vmatpush1.xpose.msra.mxu0 0.0
    %452 = vmatprep.subr.mxu0 0.0
    %453 = vmatpush1.xpose.msra.mxu0 0.0
    %454 = vmatprep.subr.mxu0 0.0
    %455 = vmatpush1.xpose.msra.mxu0 0.0
    %456 = vmatprep.subr.mxu0 0.0
    %457 = vmatpush1.xpose.msra.mxu0 0.0
    %458 = vmatprep.subr.mxu0 0.0
    %459 = vmatpush1.xpose.msra.mxu0 0.0
    %460 = vmatprep.subr.mxu0 0.0
    %461 = vmatpush1.xpose.msra.mxu0 0.0
    %462 = vmatprep.subr.mxu0 0.0
    %463 = vmatpush1.xpose.msra.mxu0 0.0
    %464 = vmatprep.subr.mxu0 0.0
    %465 = vmatpush1.xpose.msra.mxu0 0.0
    %466 = vmatprep.subr.mxu0 0.0
    %467 = vmatpush1.xpose.msra.mxu0 0.0
    %468 = vmatprep.subr.mxu0 0.0
    %469 = vmatpush1.xpose.msra.mxu0 0.0
    %470 = vmatprep.subr.mxu0 0.0
    %471 = vmatpush1.xpose.msra.mxu0 0.0
    %472 = vmatprep.subr.mxu0 0.0
    %473 = vmatpush1.xpose.msra.mxu0 0.0
    %474 = vmatprep.subr.mxu0 0.0
    %475 = vmatpush1.xpose.msra.mxu0 0.0
    %476 = vmatprep.subr.mxu0 0.0
    %477 = vmatpush1.xpose.msra.mxu0 0.0
    %478 = vmatprep.subr.mxu0 0.0
    %479 = vmatpush1.xpose.msra.mxu0 0.0
    %480 = vmatprep.subr.mxu0 0.0
    %481 = vmatpush1.xpose.msra.mxu0 0.0
    %482 = vmatprep.subr.mxu0 0.0
    %483 = vmatpush1.xpose.msra.mxu0 0.0
    %484 = vmatprep.subr.mxu0 0.0
    %485 = vmatpush1.xpose.msra.mxu0 0.0
    %486 = vmatprep.subr.mxu0 0.0
    %487 = vmatpush1.xpose.msra.mxu0 0.0
    %488 = vmatprep.subr.mxu0 0.0
    %489 = vmatpush1.xpose.msra.mxu0 0.0
    %490 = vmatprep.subr.mxu0 0.0
    %491 = vmatpush1.xpose.msra.mxu0 0.0
    %492 = vmatprep.subr.mxu0 0.0
    %493 = vmatpush1.xpose.msra.mxu0 0.0
    %494 = vmatprep.subr.mxu0 0.0
    %495 = vmatpush1.xpose.msra.mxu0 0.0
    %496 = vmatprep.mubr.f32.mxu0 0.0
    %497 = vmatmul.mubr.f32.gmra.mrb[0].mxu0 %v428
    %v498 = vpop.f32.mrb[0].mxu0
    %v499 = vadd.f32 0.0, %v498
    %v500 = vpop.f32.mrb[0].mxu0
    %501 = vdwg.mxu0
    %502 = vrot.lane.b32.xlu0 %v368, 96
    %v503 = vpop.permute.xlu0 %502
    %v504 = vsel %vm427, %v382, 0
    %v506 = vsel %vm427, %v503, 0
    %508 = vmatprep.subr.mxu0 0.0
    %509 = vmatpush1.xpose.msra.mxu0 %v506
    %510 = vmatprep.subr.mxu0 0.0
    %511 = vmatpush1.xpose.msra.mxu0 0.0
    %512 = vmatprep.subr.mxu0 0.0
    %513 = vmatpush1.xpose.msra.mxu0 0.0
    %514 = vmatprep.subr.mxu0 0.0
    %515 = vmatpush1.xpose.msra.mxu0 0.0
    %516 = vmatprep.subr.mxu0 0.0
    %517 = vmatpush1.xpose.msra.mxu0 0.0
    %518 = vmatprep.subr.mxu0 0.0
    %519 = vmatpush1.xpose.msra.mxu0 0.0
    %520 = vmatprep.subr.mxu0 0.0
    %521 = vmatpush1.xpose.msra.mxu0 0.0
    %522 = vmatprep.subr.mxu0 0.0
    %523 = vmatpush1.xpose.msra.mxu0 0.0
    %524 = vmatprep.subr.mxu0 0.0
    %525 = vmatpush1.xpose.msra.mxu0 0.0
    %526 = vmatprep.subr.mxu0 0.0
    %527 = vmatpush1.xpose.msra.mxu0 0.0
    %528 = vmatprep.subr.mxu0 0.0
    %529 = vmatpush1.xpose.msra.mxu0 0.0
    %530 = vmatprep.subr.mxu0 0.0
    %531 = vmatpush1.xpose.msra.mxu0 0.0
    %532 = vmatprep.subr.mxu0 0.0
    %533 = vmatpush1.xpose.msra.mxu0 0.0
    %534 = vmatprep.subr.mxu0 0.0
    %535 = vmatpush1.xpose.msra.mxu0 0.0
    %536 = vmatprep.subr.mxu0 0.0
    %537 = vmatpush1.xpose.msra.mxu0 0.0
    %538 = vmatprep.subr.mxu0 0.0
    %539 = vmatpush1.xpose.msra.mxu0 0.0
    %540 = vmatprep.subr.mxu0 0.0
    %541 = vmatpush1.xpose.msra.mxu0 0.0
    %542 = vmatprep.subr.mxu0 0.0
    %543 = vmatpush1.xpose.msra.mxu0 0.0
    %544 = vmatprep.subr.mxu0 0.0
    %545 = vmatpush1.xpose.msra.mxu0 0.0
    %546 = vmatprep.subr.mxu0 0.0
    %547 = vmatpush1.xpose.msra.mxu0 0.0
    %548 = vmatprep.subr.mxu0 0.0
    %549 = vmatpush1.xpose.msra.mxu0 0.0
    %550 = vmatprep.subr.mxu0 0.0
    %551 = vmatpush1.xpose.msra.mxu0 0.0
    %552 = vmatprep.subr.mxu0 0.0
    %553 = vmatpush1.xpose.msra.mxu0 0.0
    %554 = vmatprep.subr.mxu0 0.0
    %555 = vmatpush1.xpose.msra.mxu0 0.0
    %556 = vmatprep.subr.mxu0 0.0
    %557 = vmatpush1.xpose.msra.mxu0 0.0
    %558 = vmatprep.subr.mxu0 0.0
    %559 = vmatpush1.xpose.msra.mxu0 0.0
    %560 = vmatprep.subr.mxu0 0.0
    %561 = vmatpush1.xpose.msra.mxu0 0.0
    %562 = vmatprep.subr.mxu0 0.0
    %563 = vmatpush1.xpose.msra.mxu0 0.0
    %564 = vmatprep.subr.mxu0 0.0
    %565 = vmatpush1.xpose.msra.mxu0 0.0
    %566 = vmatprep.subr.mxu0 0.0
    %567 = vmatpush1.xpose.msra.mxu0 0.0
    %568 = vmatprep.subr.mxu0 0.0
    %569 = vmatpush1.xpose.msra.mxu0 0.0
    %570 = vmatprep.subr.mxu0 0.0
    %571 = vmatpush1.xpose.msra.mxu0 0.0
    %572 = vmatprep.mubr.f32.mxu0 0.0
    %573 = vmatmul.mubr.f32.gmra.mrb[0].mxu0 %v504
    %v574 = vpop.f32.mrb[0].mxu0
    %v575 = vadd.f32 0.0, %v574
    %v576 = vpop.f32.mrb[0].mxu0
    %577 = vdwg.mxu0
    %578 = vrot.lane.b32.xlu0 %v400, 96
    %v579 = vpop.permute.xlu0 %578
    %v580 = vsel %vm427, %v386, 0
    %v582 = vsel %vm427, %v579, 0
    %584 = vmatprep.subr.mxu0 0.0
    %585 = vmatpush1.xpose.msra.mxu0 %v582
    %586 = vmatprep.subr.mxu0 0.0
    %587 = vmatpush1.xpose.msra.mxu0 0.0
    %588 = vmatprep.subr.mxu0 0.0
    %589 = vmatpush1.xpose.msra.mxu0 0.0
    %590 = vmatprep.subr.mxu0 0.0
    %591 = vmatpush1.xpose.msra.mxu0 0.0
    %592 = vmatprep.subr.mxu0 0.0
    %593 = vmatpush1.xpose.msra.mxu0 0.0
    %594 = vmatprep.subr.mxu0 0.0
    %595 = vmatpush1.xpose.msra.mxu0 0.0
    %596 = vmatprep.subr.mxu0 0.0
    %597 = vmatpush1.xpose.msra.mxu0 0.0
    %598 = vmatprep.subr.mxu0 0.0
    %599 = vmatpush1.xpose.msra.mxu0 0.0
    %600 = vmatprep.subr.mxu0 0.0
    %601 = vmatpush1.xpose.msra.mxu0 0.0
    %602 = vmatprep.subr.mxu0 0.0
    %603 = vmatpush1.xpose.msra.mxu0 0.0
    %604 = vmatprep.subr.mxu0 0.0
    %605 = vmatpush1.xpose.msra.mxu0 0.0
    %606 = vmatprep.subr.mxu0 0.0
    %607 = vmatpush1.xpose.msra.mxu0 0.0
    %608 = vmatprep.subr.mxu0 0.0
    %609 = vmatpush1.xpose.msra.mxu0 0.0
    %610 = vmatprep.subr.mxu0 0.0
    %611 = vmatpush1.xpose.msra.mxu0 0.0
    %612 = vmatprep.subr.mxu0 0.0
    %613 = vmatpush1.xpose.msra.mxu0 0.0
    %614 = vmatprep.subr.mxu0 0.0
    %615 = vmatpush1.xpose.msra.mxu0 0.0
    %616 = vmatprep.subr.mxu0 0.0
    %617 = vmatpush1.xpose.msra.mxu0 0.0
    %618 = vmatprep.subr.mxu0 0.0
    %619 = vmatpush1.xpose.msra.mxu0 0.0
    %620 = vmatprep.subr.mxu0 0.0
    %621 = vmatpush1.xpose.msra.mxu0 0.0
    %622 = vmatprep.subr.mxu0 0.0
    %623 = vmatpush1.xpose.msra.mxu0 0.0
    %624 = vmatprep.subr.mxu0 0.0
    %625 = vmatpush1.xpose.msra.mxu0 0.0
    %626 = vmatprep.subr.mxu0 0.0
    %627 = vmatpush1.xpose.msra.mxu0 0.0
    %628 = vmatprep.subr.mxu0 0.0
    %629 = vmatpush1.xpose.msra.mxu0 0.0
    %630 = vmatprep.subr.mxu0 0.0
    %631 = vmatpush1.xpose.msra.mxu0 0.0
    %632 = vmatprep.subr.mxu0 0.0
    %633 = vmatpush1.xpose.msra.mxu0 0.0
    %634 = vmatprep.subr.mxu0 0.0
    %635 = vmatpush1.xpose.msra.mxu0 0.0
    %636 = vmatprep.subr.mxu0 0.0
    %637 = vmatpush1.xpose.msra.mxu0 0.0
    %638 = vmatprep.subr.mxu0 0.0
    %639 = vmatpush1.xpose.msra.mxu0 0.0
    %640 = vmatprep.subr.mxu0 0.0
    %641 = vmatpush1.xpose.msra.mxu0 0.0
    %642 = vmatprep.subr.mxu0 0.0
    %643 = vmatpush1.xpose.msra.mxu0 0.0
    %644 = vmatprep.subr.mxu0 0.0
    %645 = vmatpush1.xpose.msra.mxu0 0.0
    %646 = vmatprep.subr.mxu0 0.0
    %647 = vmatpush1.xpose.msra.mxu0 0.0
    %648 = vmatprep.mubr.f32.mxu0 0.0
    %649 = vmatmul.mubr.f32.gmra.mrb[0].mxu0 %v580
    %v650 = vpop.f32.mrb[0].mxu0
    %v651 = vadd.f32 0.0, %v650
    %v652 = vpop.f32.mrb[0].mxu0
    %653 = vdwg.mxu0
    %654 = vrot.lane.b32.xlu0 %v402, 96
    %v655 = vpop.permute.xlu0 %654
    %v656 = vsel %vm427, %v388, 0
    %v658 = vsel %vm427, %v655, 0
    %660 = vmatprep.subr.mxu0 0.0
    %661 = vmatpush1.xpose.msra.mxu0 %v658
    %662 = vmatprep.subr.mxu0 0.0
    %663 = vmatpush1.xpose.msra.mxu0 0.0
    %664 = vmatprep.subr.mxu0 0.0
    %665 = vmatpush1.xpose.msra.mxu0 0.0
    %666 = vmatprep.subr.mxu0 0.0
    %667 = vmatpush1.xpose.msra.mxu0 0.0
    %668 = vmatprep.subr.mxu0 0.0
    %669 = vmatpush1.xpose.msra.mxu0 0.0
    %670 = vmatprep.subr.mxu0 0.0
    %671 = vmatpush1.xpose.msra.mxu0 0.0
    %672 = vmatprep.subr.mxu0 0.0
    %673 = vmatpush1.xpose.msra.mxu0 0.0
    %674 = vmatprep.subr.mxu0 0.0
    %675 = vmatpush1.xpose.msra.mxu0 0.0
    %676 = vmatprep.subr.mxu0 0.0
    %677 = vmatpush1.xpose.msra.mxu0 0.0
    %678 = vmatprep.subr.mxu0 0.0
    %679 = vmatpush1.xpose.msra.mxu0 0.0
    %680 = vmatprep.subr.mxu0 0.0
    %681 = vmatpush1.xpose.msra.mxu0 0.0
    %682 = vmatprep.subr.mxu0 0.0
    %683 = vmatpush1.xpose.msra.mxu0 0.0
    %684 = vmatprep.subr.mxu0 0.0
    %685 = vmatpush1.xpose.msra.mxu0 0.0
    %686 = vmatprep.subr.mxu0 0.0
    %687 = vmatpush1.xpose.msra.mxu0 0.0
    %688 = vmatprep.subr.mxu0 0.0
    %689 = vmatpush1.xpose.msra.mxu0 0.0
    %690 = vmatprep.subr.mxu0 0.0
    %691 = vmatpush1.xpose.msra.mxu0 0.0
    %692 = vmatprep.subr.mxu0 0.0
    %693 = vmatpush1.xpose.msra.mxu0 0.0
    %694 = vmatprep.subr.mxu0 0.0
    %695 = vmatpush1.xpose.msra.mxu0 0.0
    %696 = vmatprep.subr.mxu0 0.0
    %697 = vmatpush1.xpose.msra.mxu0 0.0
    %698 = vmatprep.subr.mxu0 0.0
    %699 = vmatpush1.xpose.msra.mxu0 0.0
    %700 = vmatprep.subr.mxu0 0.0
    %701 = vmatpush1.xpose.msra.mxu0 0.0
    %702 = vmatprep.subr.mxu0 0.0
    %703 = vmatpush1.xpose.msra.mxu0 0.0
    %704 = vmatprep.subr.mxu0 0.0
    %705 = vmatpush1.xpose.msra.mxu0 0.0
    %706 = vmatprep.subr.mxu0 0.0
    %707 = vmatpush1.xpose.msra.mxu0 0.0
    %708 = vmatprep.subr.mxu0 0.0
    %709 = vmatpush1.xpose.msra.mxu0 0.0
    %710 = vmatprep.subr.mxu0 0.0
    %711 = vmatpush1.xpose.msra.mxu0 0.0
    %712 = vmatprep.subr.mxu0 0.0
    %713 = vmatpush1.xpose.msra.mxu0 0.0
    %714 = vmatprep.subr.mxu0 0.0
    %715 = vmatpush1.xpose.msra.mxu0 0.0
    %716 = vmatprep.subr.mxu0 0.0
    %717 = vmatpush1.xpose.msra.mxu0 0.0
    %718 = vmatprep.subr.mxu0 0.0
    %719 = vmatpush1.xpose.msra.mxu0 0.0
    %720 = vmatprep.subr.mxu0 0.0
    %721 = vmatpush1.xpose.msra.mxu0 0.0
    %722 = vmatprep.subr.mxu0 0.0
    %723 = vmatpush1.xpose.msra.mxu0 0.0
    %724 = vmatprep.mubr.f32.mxu0 0.0
    %725 = vmatmul.mubr.f32.gmra.mrb[0].mxu0 %v656
    %v726 = vpop.f32.mrb[0].mxu0
    %v727 = vadd.f32 0.0, %v726
    %v728 = vpop.f32.mrb[0].mxu0
    %729 = vdwg.mxu0
    %730 = vrot.lane.b32.xlu0 %v404, 96
    %v731 = vpop.permute.xlu0 %730
    %v732 = vsel %vm427, %v390, 0
    %v734 = vsel %vm427, %v731, 0
    %736 = vmatprep.subr.mxu0 0.0
    %737 = vmatpush1.xpose.msra.mxu0 %v734
    %738 = vmatprep.subr.mxu0 0.0
    %739 = vmatpush1.xpose.msra.mxu0 0.0
    %740 = vmatprep.subr.mxu0 0.0
    %741 = vmatpush1.xpose.msra.mxu0 0.0
    %742 = vmatprep.subr.mxu0 0.0
    %743 = vmatpush1.xpose.msra.mxu0 0.0
    %744 = vmatprep.subr.mxu0 0.0
    %745 = vmatpush1.xpose.msra.mxu0 0.0
    %746 = vmatprep.subr.mxu0 0.0
    %747 = vmatpush1.xpose.msra.mxu0 0.0
    %748 = vmatprep.subr.mxu0 0.0
    %749 = vmatpush1.xpose.msra.mxu0 0.0
    %750 = vmatprep.subr.mxu0 0.0
    %751 = vmatpush1.xpose.msra.mxu0 0.0
    %752 = vmatprep.subr.mxu0 0.0
    %753 = vmatpush1.xpose.msra.mxu0 0.0
    %754 = vmatprep.subr.mxu0 0.0
    %755 = vmatpush1.xpose.msra.mxu0 0.0
    %756 = vmatprep.subr.mxu0 0.0
    %757 = vmatpush1.xpose.msra.mxu0 0.0
    %758 = vmatprep.subr.mxu0 0.0
    %759 = vmatpush1.xpose.msra.mxu0 0.0
    %760 = vmatprep.subr.mxu0 0.0
    %761 = vmatpush1.xpose.msra.mxu0 0.0
    %762 = vmatprep.subr.mxu0 0.0
    %763 = vmatpush1.xpose.msra.mxu0 0.0
    %764 = vmatprep.subr.mxu0 0.0
    %765 = vmatpush1.xpose.msra.mxu0 0.0
    %766 = vmatprep.subr.mxu0 0.0
    %767 = vmatpush1.xpose.msra.mxu0 0.0
    %768 = vmatprep.subr.mxu0 0.0
    %769 = vmatpush1.xpose.msra.mxu0 0.0
    %770 = vmatprep.subr.mxu0 0.0
    %771 = vmatpush1.xpose.msra.mxu0 0.0
    %772 = vmatprep.subr.mxu0 0.0
    %773 = vmatpush1.xpose.msra.mxu0 0.0
    %774 = vmatprep.subr.mxu0 0.0
    %775 = vmatpush1.xpose.msra.mxu0 0.0
    %776 = vmatprep.subr.mxu0 0.0
    %777 = vmatpush1.xpose.msra.mxu0 0.0
    %778 = vmatprep.subr.mxu0 0.0
    %779 = vmatpush1.xpose.msra.mxu0 0.0
    %780 = vmatprep.subr.mxu0 0.0
    %781 = vmatpush1.xpose.msra.mxu0 0.0
    %782 = vmatprep.subr.mxu0 0.0
    %783 = vmatpush1.xpose.msra.mxu0 0.0
    %784 = vmatprep.subr.mxu0 0.0
    %785 = vmatpush1.xpose.msra.mxu0 0.0
    %786 = vmatprep.subr.mxu0 0.0
    %787 = vmatpush1.xpose.msra.mxu0 0.0
    %788 = vmatprep.subr.mxu0 0.0
    %789 = vmatpush1.xpose.msra.mxu0 0.0
    %790 = vmatprep.subr.mxu0 0.0
    %791 = vmatpush1.xpose.msra.mxu0 0.0
    %792 = vmatprep.subr.mxu0 0.0
    %793 = vmatpush1.xpose.msra.mxu0 0.0
    %794 = vmatprep.subr.mxu0 0.0
    %795 = vmatpush1.xpose.msra.mxu0 0.0
    %796 = vmatprep.subr.mxu0 0.0
    %797 = vmatpush1.xpose.msra.mxu0 0.0
    %798 = vmatprep.subr.mxu0 0.0
    %799 = vmatpush1.xpose.msra.mxu0 0.0
    %800 = vmatprep.mubr.f32.mxu0 0.0
    %801 = vmatmul.mubr.f32.gmra.mrb[0].mxu0 %v732
    %v802 = vpop.f32.mrb[0].mxu0
    %v803 = vadd.f32 0.0, %v802
    %v804 = vpop.f32.mrb[0].mxu0
    %805 = vdwg.mxu0
    %806 = vrot.lane.b32.xlu0 %v406, 96
    %v807 = vpop.permute.xlu0 %806
    %v808 = vsel %vm427, %v392, 0
    %v810 = vsel %vm427, %v807, 0
    %812 = vmatprep.subr.mxu0 0.0
    %813 = vmatpush1.xpose.msra.mxu0 %v810
    %814 = vmatprep.subr.mxu0 0.0
    %815 = vmatpush1.xpose.msra.mxu0 0.0
    %816 = vmatprep.subr.mxu0 0.0
    %817 = vmatpush1.xpose.msra.mxu0 0.0
    %818 = vmatprep.subr.mxu0 0.0
    %819 = vmatpush1.xpose.msra.mxu0 0.0
    %820 = vmatprep.subr.mxu0 0.0
    %821 = vmatpush1.xpose.msra.mxu0 0.0
    %822 = vmatprep.subr.mxu0 0.0
    %823 = vmatpush1.xpose.msra.mxu0 0.0
    %824 = vmatprep.subr.mxu0 0.0
    %825 = vmatpush1.xpose.msra.mxu0 0.0
    %826 = vmatprep.subr.mxu0 0.0
    %827 = vmatpush1.xpose.msra.mxu0 0.0
    %828 = vmatprep.subr.mxu0 0.0
    %829 = vmatpush1.xpose.msra.mxu0 0.0
    %830 = vmatprep.subr.mxu0 0.0
    %831 = vmatpush1.xpose.msra.mxu0 0.0
    %832 = vmatprep.subr.mxu0 0.0
    %833 = vmatpush1.xpose.msra.mxu0 0.0
    %834 = vmatprep.subr.mxu0 0.0
    %835 = vmatpush1.xpose.msra.mxu0 0.0
    %836 = vmatprep.subr.mxu0 0.0
    %837 = vmatpush1.xpose.msra.mxu0 0.0
    %838 = vmatprep.subr.mxu0 0.0
    %839 = vmatpush1.xpose.msra.mxu0 0.0
    %840 = vmatprep.subr.mxu0 0.0
    %841 = vmatpush1.xpose.msra.mxu0 0.0
    %842 = vmatprep.subr.mxu0 0.0
    %843 = vmatpush1.xpose.msra.mxu0 0.0
    %844 = vmatprep.subr.mxu0 0.0
    %845 = vmatpush1.xpose.msra.mxu0 0.0
    %846 = vmatprep.subr.mxu0 0.0
    %847 = vmatpush1.xpose.msra.mxu0 0.0
    %848 = vmatprep.subr.mxu0 0.0
    %849 = vmatpush1.xpose.msra.mxu0 0.0
    %850 = vmatprep.subr.mxu0 0.0
    %851 = vmatpush1.xpose.msra.mxu0 0.0
    %852 = vmatprep.subr.mxu0 0.0
    %853 = vmatpush1.xpose.msra.mxu0 0.0
    %854 = vmatprep.subr.mxu0 0.0
    %855 = vmatpush1.xpose.msra.mxu0 0.0
    %856 = vmatprep.subr.mxu0 0.0
    %857 = vmatpush1.xpose.msra.mxu0 0.0
    %858 = vmatprep.subr.mxu0 0.0
    %859 = vmatpush1.xpose.msra.mxu0 0.0
    %860 = vmatprep.subr.mxu0 0.0
    %861 = vmatpush1.xpose.msra.mxu0 0.0
    %862 = vmatprep.subr.mxu0 0.0
    %863 = vmatpush1.xpose.msra.mxu0 0.0
    %864 = vmatprep.subr.mxu0 0.0
    %865 = vmatpush1.xpose.msra.mxu0 0.0
    %866 = vmatprep.subr.mxu0 0.0
    %867 = vmatpush1.xpose.msra.mxu0 0.0
    %868 = vmatprep.subr.mxu0 0.0
    %869 = vmatpush1.xpose.msra.mxu0 0.0
    %870 = vmatprep.subr.mxu0 0.0
    %871 = vmatpush1.xpose.msra.mxu0 0.0
    %872 = vmatprep.subr.mxu0 0.0
    %873 = vmatpush1.xpose.msra.mxu0 0.0
    %874 = vmatprep.subr.mxu0 0.0
    %875 = vmatpush1.xpose.msra.mxu0 0.0
    %876 = vmatprep.mubr.f32.mxu0 0.0
    %877 = vmatmul.mubr.f32.gmra.mrb[0].mxu0 %v808
    %v878 = vpop.f32.mrb[0].mxu0
    %v879 = vadd.f32 0.0, %v878
    %v880 = vpop.f32.mrb[0].mxu0
    %881 = vdwg.mxu0
    %882 = vrot.lane.b32.xlu0 %v408, 96
    %v883 = vpop.permute.xlu0 %882
    %v884 = vsel %vm427, %v394, 0
    %v886 = vsel %vm427, %v883, 0
    %888 = vmatprep.subr.mxu0 0.0
    %889 = vmatpush1.xpose.msra.mxu0 %v886
    %890 = vmatprep.subr.mxu0 0.0
    %891 = vmatpush1.xpose.msra.mxu0 0.0
    %892 = vmatprep.subr.mxu0 0.0
    %893 = vmatpush1.xpose.msra.mxu0 0.0
    %894 = vmatprep.subr.mxu0 0.0
    %895 = vmatpush1.xpose.msra.mxu0 0.0
    %896 = vmatprep.subr.mxu0 0.0
    %897 = vmatpush1.xpose.msra.mxu0 0.0
    %898 = vmatprep.subr.mxu0 0.0
    %899 = vmatpush1.xpose.msra.mxu0 0.0
    %900 = vmatprep.subr.mxu0 0.0
    %901 = vmatpush1.xpose.msra.mxu0 0.0
    %902 = vmatprep.subr.mxu0 0.0
    %903 = vmatpush1.xpose.msra.mxu0 0.0
    %904 = vmatprep.subr.mxu0 0.0
    %905 = vmatpush1.xpose.msra.mxu0 0.0
    %906 = vmatprep.subr.mxu0 0.0
    %907 = vmatpush1.xpose.msra.mxu0 0.0
    %908 = vmatprep.subr.mxu0 0.0
    %909 = vmatpush1.xpose.msra.mxu0 0.0
    %910 = vmatprep.subr.mxu0 0.0
    %911 = vmatpush1.xpose.msra.mxu0 0.0
    %912 = vmatprep.subr.mxu0 0.0
    %913 = vmatpush1.xpose.msra.mxu0 0.0
    %914 = vmatprep.subr.mxu0 0.0
    %915 = vmatpush1.xpose.msra.mxu0 0.0
    %916 = vmatprep.subr.mxu0 0.0
    %917 = vmatpush1.xpose.msra.mxu0 0.0
    %918 = vmatprep.subr.mxu0 0.0
    %919 = vmatpush1.xpose.msra.mxu0 0.0
    %920 = vmatprep.subr.mxu0 0.0
    %921 = vmatpush1.xpose.msra.mxu0 0.0
    %922 = vmatprep.subr.mxu0 0.0
    %923 = vmatpush1.xpose.msra.mxu0 0.0
    %924 = vmatprep.subr.mxu0 0.0
    %925 = vmatpush1.xpose.msra.mxu0 0.0
    %926 = vmatprep.subr.mxu0 0.0
    %927 = vmatpush1.xpose.msra.mxu0 0.0
    %928 = vmatprep.subr.mxu0 0.0
    %929 = vmatpush1.xpose.msra.mxu0 0.0
    %930 = vmatprep.subr.mxu0 0.0
    %931 = vmatpush1.xpose.msra.mxu0 0.0
    %932 = vmatprep.subr.mxu0 0.0
    %933 = vmatpush1.xpose.msra.mxu0 0.0
    %934 = vmatprep.subr.mxu0 0.0
    %935 = vmatpush1.xpose.msra.mxu0 0.0
    %936 = vmatprep.subr.mxu0 0.0
    %937 = vmatpush1.xpose.msra.mxu0 0.0
    %938 = vmatprep.subr.mxu0 0.0
    %939 = vmatpush1.xpose.msra.mxu0 0.0
    %940 = vmatprep.subr.mxu0 0.0
    %941 = vmatpush1.xpose.msra.mxu0 0.0
    %942 = vmatprep.subr.mxu0 0.0
    %943 = vmatpush1.xpose.msra.mxu0 0.0
    %944 = vmatprep.subr.mxu0 0.0
    %945 = vmatpush1.xpose.msra.mxu0 0.0
    %946 = vmatprep.subr.mxu0 0.0
    %947 = vmatpush1.xpose.msra.mxu0 0.0
    %948 = vmatprep.subr.mxu0 0.0
    %949 = vmatpush1.xpose.msra.mxu0 0.0
    %950 = vmatprep.subr.mxu0 0.0
    %951 = vmatpush1.xpose.msra.mxu0 0.0
    %952 = vmatprep.mubr.f32.mxu0 0.0
    %953 = vmatmul.mubr.f32.gmra.mrb[0].mxu0 %v884
    %v954 = vpop.f32.mrb[0].mxu0
    %v955 = vadd.f32 0.0, %v954
    %v956 = vpop.f32.mrb[0].mxu0
    %957 = vdwg.mxu0
    %958 = vrot.lane.b32.xlu0 %v410, 96
    %v959 = vpop.permute.xlu0 %958
    %v960 = vsel %vm427, %v396, 0
    %v962 = vsel %vm427, %v959, 0
    %964 = vmatprep.subr.mxu0 0.0
    %965 = vmatpush1.xpose.msra.mxu0 %v962
    %966 = vmatprep.subr.mxu0 0.0
    %967 = vmatpush1.xpose.msra.mxu0 0.0
    %968 = vmatprep.subr.mxu0 0.0
    %969 = vmatpush1.xpose.msra.mxu0 0.0
    %970 = vmatprep.subr.mxu0 0.0
    %971 = vmatpush1.xpose.msra.mxu0 0.0
    %972 = vmatprep.subr.mxu0 0.0
    %973 = vmatpush1.xpose.msra.mxu0 0.0
    %974 = vmatprep.subr.mxu0 0.0
    %975 = vmatpush1.xpose.msra.mxu0 0.0
    %976 = vmatprep.subr.mxu0 0.0
    %977 = vmatpush1.xpose.msra.mxu0 0.0
    %978 = vmatprep.subr.mxu0 0.0
    %979 = vmatpush1.xpose.msra.mxu0 0.0
    %980 = vmatprep.subr.mxu0 0.0
    %981 = vmatpush1.xpose.msra.mxu0 0.0
    %982 = vmatprep.subr.mxu0 0.0
    %983 = vmatpush1.xpose.msra.mxu0 0.0
    %984 = vmatprep.subr.mxu0 0.0
    %985 = vmatpush1.xpose.msra.mxu0 0.0
    %986 = vmatprep.subr.mxu0 0.0
    %987 = vmatpush1.xpose.msra.mxu0 0.0
    %988 = vmatprep.subr.mxu0 0.0
    %989 = vmatpush1.xpose.msra.mxu0 0.0
    %990 = vmatprep.subr.mxu0 0.0
    %991 = vmatpush1.xpose.msra.mxu0 0.0
    %992 = vmatprep.subr.mxu0 0.0
    %993 = vmatpush1.xpose.msra.mxu0 0.0
    %994 = vmatprep.subr.mxu0 0.0
    %995 = vmatpush1.xpose.msra.mxu0 0.0
    %996 = vmatprep.subr.mxu0 0.0
    %997 = vmatpush1.xpose.msra.mxu0 0.0
    %998 = vmatprep.subr.mxu0 0.0
    %999 = vmatpush1.xpose.msra.mxu0 0.0
    %1000 = vmatprep.subr.mxu0 0.0
    %1001 = vmatpush1.xpose.msra.mxu0 0.0
    %1002 = vmatprep.subr.mxu0 0.0
    %1003 = vmatpush1.xpose.msra.mxu0 0.0
    %1004 = vmatprep.subr.mxu0 0.0
    %1005 = vmatpush1.xpose.msra.mxu0 0.0
    %1006 = vmatprep.subr.mxu0 0.0
    %1007 = vmatpush1.xpose.msra.mxu0 0.0
    %1008 = vmatprep.subr.mxu0 0.0
    %1009 = vmatpush1.xpose.msra.mxu0 0.0
    %1010 = vmatprep.subr.mxu0 0.0
    %1011 = vmatpush1.xpose.msra.mxu0 0.0
    %1012 = vmatprep.subr.mxu0 0.0
    %1013 = vmatpush1.xpose.msra.mxu0 0.0
    %1014 = vmatprep.subr.mxu0 0.0
    %1015 = vmatpush1.xpose.msra.mxu0 0.0
    %1016 = vmatprep.subr.mxu0 0.0
    %1017 = vmatpush1.xpose.msra.mxu0 0.0
    %1018 = vmatprep.subr.mxu0 0.0
    %1019 = vmatpush1.xpose.msra.mxu0 0.0
    %1020 = vmatprep.subr.mxu0 0.0
    %1021 = vmatpush1.xpose.msra.mxu0 0.0
    %1022 = vmatprep.subr.mxu0 0.0
    %1023 = vmatpush1.xpose.msra.mxu0 0.0
    %1024 = vmatprep.subr.mxu0 0.0
    %1025 = vmatpush1.xpose.msra.mxu0 0.0
    %1026 = vmatprep.subr.mxu0 0.0
    %1027 = vmatpush1.xpose.msra.mxu0 0.0
    %1028 = vmatprep.mubr.f32.mxu0 0.0
    %1029 = vmatmul.mubr.f32.gmra.mrb[0].mxu0 %v960
    %v1030 = vpop.f32.mrb[0].mxu0
    %v1031 = vadd.f32 0.0, %v1030
    %v1032 = vpop.f32.mrb[0].mxu0
    %1033 = vdwg.mxu0
    %v1034 = vsel %vm427, %v499, -inf
    %1035 = vmax.xlane.f32.xlu0 %v1034
    %v1036 = vpop.xlane.xlu0 %1035
    %v1037 = vsel %vm427, %v575, -inf
    %1038 = vmax.xlane.f32.xlu0 %v1037
    %v1039 = vpop.xlane.xlu0 %1038
    %v1040 = vsel %vm427, %v651, -inf
    %1041 = vmax.xlane.f32.xlu0 %v1040
    %v1042 = vpop.xlane.xlu0 %1041
    %v1043 = vsel %vm427, %v727, -inf
    %1044 = vmax.xlane.f32.xlu0 %v1043
    %v1045 = vpop.xlane.xlu0 %1044
    %v1046 = vsel %vm427, %v803, -inf
    %1047 = vmax.xlane.f32.xlu0 %v1046
    %v1048 = vpop.xlane.xlu0 %1047
    %v1049 = vsel %vm427, %v879, -inf
    %1050 = vmax.xlane.f32.xlu0 %v1049
    %v1051 = vpop.xlane.xlu0 %1050
    %v1052 = vsel %vm427, %v955, -inf
    %1053 = vmax.xlane.f32.xlu0 %v1052
    %v1054 = vpop.xlane.xlu0 %1053
    %v1055 = vsel %vm427, %v1031, -inf
    %1056 = vmax.xlane.f32.xlu0 %v1055
    %v1057 = vpop.xlane.xlu0 %1056
    %v1058 = vsub.f32 %v499, %v1036
    %v1059 = vsub.f32 %v575, %v1039
    %v1060 = vsub.f32 %v651, %v1042
    %v1061 = vsub.f32 %v727, %v1045
    %v1062 = vsub.f32 %v803, %v1048
    %v1063 = vsub.f32 %v879, %v1051
    %v1064 = vsub.f32 %v955, %v1054
    %v1065 = vsub.f32 %v1031, %v1057
    %v1066 = vmul.f32 %v1058, 1.442695
    %v1067 = vpow.pop %v1066
    %v1068 = vmul.f32 %v1059, 1.442695
    %v1069 = vpow.pop %v1068
    %v1070 = vmul.f32 %v1060, 1.442695
    %v1071 = vpow.pop %v1070
    %v1072 = vmul.f32 %v1061, 1.442695
    %v1073 = vpow.pop %v1072
    %v1074 = vmul.f32 %v1062, 1.442695
    %v1075 = vpow.pop %v1074
    %v1076 = vmul.f32 %v1063, 1.442695
    %v1077 = vpow.pop %v1076
    %v1078 = vmul.f32 %v1064, 1.442695
    %v1079 = vpow.pop %v1078
    %v1080 = vmul.f32 %v1065, 1.442695
    %v1081 = vpow.pop %v1080
    %v1082 = vsel %vm427, %v1067, 0.0
    %1083 = vadd.xlane.f32.xlu0 %v1082
    %v1084 = vpop.xlane.xlu0 %1083
    %v1085 = vsel %vm427, %v1069, 0.0
    %1086 = vadd.xlane.f32.xlu0 %v1085
    %v1087 = vpop.xlane.xlu0 %1086
    %v1088 = vsel %vm427, %v1071, 0.0
    %1089 = vadd.xlane.f32.xlu0 %v1088
    %v1090 = vpop.xlane.xlu0 %1089
    %v1091 = vsel %vm427, %v1073, 0.0
    %1092 = vadd.xlane.f32.xlu0 %v1091
    %v1093 = vpop.xlane.xlu0 %1092
    %v1094 = vsel %vm427, %v1075, 0.0
    %1095 = vadd.xlane.f32.xlu0 %v1094
    %v1096 = vpop.xlane.xlu0 %1095
    %v1097 = vsel %vm427, %v1077, 0.0
    %1098 = vadd.xlane.f32.xlu0 %v1097
    %v1099 = vpop.xlane.xlu0 %1098
    %v1100 = vsel %vm427, %v1079, 0.0
    %1101 = vadd.xlane.f32.xlu0 %v1100
    %v1102 = vpop.xlane.xlu0 %1101
    %v1103 = vsel %vm427, %v1081, 0.0
    %1104 = vadd.xlane.f32.xlu0 %v1103
    %v1105 = vpop.xlane.xlu0 %1104
    %v1106 = vrcp.pop %v1084
    %v1107 = vmul.f32 %v1067, %v1106
    %v1108 = vrcp.pop %v1087
    %v1109 = vmul.f32 %v1069, %v1108
    %v1110 = vrcp.pop %v1090
    %v1111 = vmul.f32 %v1071, %v1110
    %v1112 = vrcp.pop %v1093
    %v1113 = vmul.f32 %v1073, %v1112
    %v1114 = vrcp.pop %v1096
    %v1115 = vmul.f32 %v1075, %v1114
    %v1116 = vrcp.pop %v1099
    %v1117 = vmul.f32 %v1077, %v1116
    %v1118 = vrcp.pop %v1102
    %v1119 = vmul.f32 %v1079, %v1118
    %v1120 = vrcp.pop %v1105
    %v1121 = vmul.f32 %v1081, %v1120
    %1122 = vrot.lane.b32.xlu0 %v373, 64
    %v1123 = vpop.permute.xlu0 %1122
    %v1126 = vsel %vm427, %v1107, 0
    %1128 = vmatprep.subr.mxu0 0.0
    %1129 = vmatpush1.msra.mxu0 %v1123
    %1130 = vmatprep.subr.mxu0 0.0
    %1131 = vmatpush1.msra.mxu0 0.0
    %1132 = vmatprep.subr.mxu0 0.0
    %1133 = vmatpush1.msra.mxu0 0.0
    %1134 = vmatprep.subr.mxu0 0.0
    %1135 = vmatpush1.msra.mxu0 0.0
    %1136 = vmatprep.subr.mxu0 0.0
    %1137 = vmatpush1.msra.mxu0 0.0
    %1138 = vmatprep.subr.mxu0 0.0
    %1139 = vmatpush1.msra.mxu0 0.0
    %1140 = vmatprep.subr.mxu0 0.0
    %1141 = vmatpush1.msra.mxu0 0.0
    %1142 = vmatprep.subr.mxu0 0.0
    %1143 = vmatpush1.msra.mxu0 0.0
    %1144 = vmatprep.subr.mxu0 0.0
    %1145 = vmatpush1.msra.mxu0 0.0
    %1146 = vmatprep.subr.mxu0 0.0
    %1147 = vmatpush1.msra.mxu0 0.0
    %1148 = vmatprep.subr.mxu0 0.0
    %1149 = vmatpush1.msra.mxu0 0.0
    %1150 = vmatprep.subr.mxu0 0.0
    %1151 = vmatpush1.msra.mxu0 0.0
    %1152 = vmatprep.subr.mxu0 0.0
    %1153 = vmatpush1.msra.mxu0 0.0
    %1154 = vmatprep.subr.mxu0 0.0
    %1155 = vmatpush1.msra.mxu0 0.0
    %1156 = vmatprep.subr.mxu0 0.0
    %1157 = vmatpush1.msra.mxu0 0.0
    %1158 = vmatprep.subr.mxu0 0.0
    %1159 = vmatpush1.msra.mxu0 0.0
    %1160 = vmatprep.subr.mxu0 0.0
    %1161 = vmatpush1.msra.mxu0 0.0
    %1162 = vmatprep.subr.mxu0 0.0
    %1163 = vmatpush1.msra.mxu0 0.0
    %1164 = vmatprep.subr.mxu0 0.0
    %1165 = vmatpush1.msra.mxu0 0.0
    %1166 = vmatprep.subr.mxu0 0.0
    %1167 = vmatpush1.msra.mxu0 0.0
    %1168 = vmatprep.subr.mxu0 0.0
    %1169 = vmatpush1.msra.mxu0 0.0
    %1170 = vmatprep.subr.mxu0 0.0
    %1171 = vmatpush1.msra.mxu0 0.0
    %1172 = vmatprep.subr.mxu0 0.0
    %1173 = vmatpush1.msra.mxu0 0.0
    %1174 = vmatprep.subr.mxu0 0.0
    %1175 = vmatpush1.msra.mxu0 0.0
    %1176 = vmatprep.subr.mxu0 0.0
    %1177 = vmatpush1.msra.mxu0 0.0
    %1178 = vmatprep.subr.mxu0 0.0
    %1179 = vmatpush1.msra.mxu0 0.0
    %1180 = vmatprep.subr.mxu0 0.0
    %1181 = vmatpush1.msra.mxu0 0.0
    %1182 = vmatprep.subr.mxu0 0.0
    %1183 = vmatpush1.msra.mxu0 0.0
    %1184 = vmatprep.subr.mxu0 0.0
    %1185 = vmatpush1.msra.mxu0 0.0
    %1186 = vmatprep.subr.mxu0 0.0
    %1187 = vmatpush1.msra.mxu0 0.0
    %1188 = vmatprep.subr.mxu0 0.0
    %1189 = vmatpush1.msra.mxu0 0.0
    %1190 = vmatprep.subr.mxu0 0.0
    %1191 = vmatpush1.msra.mxu0 0.0
    %1192 = vmatprep.mubr.f32.mxu0 0.0
    %1193 = vmatmul.mubr.f32.gmra.mrb[0].mxu0 %v1126
    %v1194 = vpop.f32.mrb[0].mxu0
    %v1195 = vadd.f32 0.0, %v1194
    %v1196 = vpop.f32.mrb[0].mxu0
    %1197 = vdwg.mxu0
    %1198 = vrot.lane.b32.xlu0 %v378, 64
    %v1199 = vpop.permute.xlu0 %1198
    %v1202 = vsel %vm427, %v1109, 0
    %1204 = vmatprep.subr.mxu0 0.0
    %1205 = vmatpush1.msra.mxu0 %v1199
    %1206 = vmatprep.subr.mxu0 0.0
    %1207 = vmatpush1.msra.mxu0 0.0
    %1208 = vmatprep.subr.mxu0 0.0
    %1209 = vmatpush1.msra.mxu0 0.0
    %1210 = vmatprep.subr.mxu0 0.0
    %1211 = vmatpush1.msra.mxu0 0.0
    %1212 = vmatprep.subr.mxu0 0.0
    %1213 = vmatpush1.msra.mxu0 0.0
    %1214 = vmatprep.subr.mxu0 0.0
    %1215 = vmatpush1.msra.mxu0 0.0
    %1216 = vmatprep.subr.mxu0 0.0
    %1217 = vmatpush1.msra.mxu0 0.0
    %1218 = vmatprep.subr.mxu0 0.0
    %1219 = vmatpush1.msra.mxu0 0.0
    %1220 = vmatprep.subr.mxu0 0.0
    %1221 = vmatpush1.msra.mxu0 0.0
    %1222 = vmatprep.subr.mxu0 0.0
    %1223 = vmatpush1.msra.mxu0 0.0
    %1224 = vmatprep.subr.mxu0 0.0
    %1225 = vmatpush1.msra.mxu0 0.0
    %1226 = vmatprep.subr.mxu0 0.0
    %1227 = vmatpush1.msra.mxu0 0.0
    %1228 = vmatprep.subr.mxu0 0.0
    %1229 = vmatpush1.msra.mxu0 0.0
    %1230 = vmatprep.subr.mxu0 0.0
    %1231 = vmatpush1.msra.mxu0 0.0
    %1232 = vmatprep.subr.mxu0 0.0
    %1233 = vmatpush1.msra.mxu0 0.0
    %1234 = vmatprep.subr.mxu0 0.0
    %1235 = vmatpush1.msra.mxu0 0.0
    %1236 = vmatprep.subr.mxu0 0.0
    %1237 = vmatpush1.msra.mxu0 0.0
    %1238 = vmatprep.subr.mxu0 0.0
    %1239 = vmatpush1.msra.mxu0 0.0
    %1240 = vmatprep.subr.mxu0 0.0
    %1241 = vmatpush1.msra.mxu0 0.0
    %1242 = vmatprep.subr.mxu0 0.0
    %1243 = vmatpush1.msra.mxu0 0.0
    %1244 = vmatprep.subr.mxu0 0.0
    %1245 = vmatpush1.msra.mxu0 0.0
    %1246 = vmatprep.subr.mxu0 0.0
    %1247 = vmatpush1.msra.mxu0 0.0
    %1248 = vmatprep.subr.mxu0 0.0
    %1249 = vmatpush1.msra.mxu0 0.0
    %1250 = vmatprep.subr.mxu0 0.0
    %1251 = vmatpush1.msra.mxu0 0.0
    %1252 = vmatprep.subr.mxu0 0.0
    %1253 = vmatpush1.msra.mxu0 0.0
    %1254 = vmatprep.subr.mxu0 0.0
    %1255 = vmatpush1.msra.mxu0 0.0
    %1256 = vmatprep.subr.mxu0 0.0
    %1257 = vmatpush1.msra.mxu0 0.0
    %1258 = vmatprep.subr.mxu0 0.0
    %1259 = vmatpush1.msra.mxu0 0.0
    %1260 = vmatprep.subr.mxu0 0.0
    %1261 = vmatpush1.msra.mxu0 0.0
    %1262 = vmatprep.subr.mxu0 0.0
    %1263 = vmatpush1.msra.mxu0 0.0
    %1264 = vmatprep.subr.mxu0 0.0
    %1265 = vmatpush1.msra.mxu0 0.0
    %1266 = vmatprep.subr.mxu0 0.0
    %1267 = vmatpush1.msra.mxu0 0.0
    %1268 = vmatprep.mubr.f32.mxu0 0.0
    %1269 = vmatmul.mubr.f32.gmra.mrb[0].mxu0 %v1202
    %v1270 = vpop.f32.mrb[0].mxu0
    %v1271 = vadd.f32 0.0, %v1270
    %v1272 = vpop.f32.mrb[0].mxu0
    %1273 = vdwg.mxu0
    %1274 = vrot.lane.b32.xlu0 %v414, 64
    %v1275 = vpop.permute.xlu0 %1274
    %v1278 = vsel %vm427, %v1111, 0
    %1280 = vmatprep.subr.mxu0 0.0
    %1281 = vmatpush1.msra.mxu0 %v1275
    %1282 = vmatprep.subr.mxu0 0.0
    %1283 = vmatpush1.msra.mxu0 0.0
    %1284 = vmatprep.subr.mxu0 0.0
    %1285 = vmatpush1.msra.mxu0 0.0
    %1286 = vmatprep.subr.mxu0 0.0
    %1287 = vmatpush1.msra.mxu0 0.0
    %1288 = vmatprep.subr.mxu0 0.0
    %1289 = vmatpush1.msra.mxu0 0.0
    %1290 = vmatprep.subr.mxu0 0.0
    %1291 = vmatpush1.msra.mxu0 0.0
    %1292 = vmatprep.subr.mxu0 0.0
    %1293 = vmatpush1.msra.mxu0 0.0
    %1294 = vmatprep.subr.mxu0 0.0
    %1295 = vmatpush1.msra.mxu0 0.0
    %1296 = vmatprep.subr.mxu0 0.0
    %1297 = vmatpush1.msra.mxu0 0.0
    %1298 = vmatprep.subr.mxu0 0.0
    %1299 = vmatpush1.msra.mxu0 0.0
    %1300 = vmatprep.subr.mxu0 0.0
    %1301 = vmatpush1.msra.mxu0 0.0
    %1302 = vmatprep.subr.mxu0 0.0
    %1303 = vmatpush1.msra.mxu0 0.0
    %1304 = vmatprep.subr.mxu0 0.0
    %1305 = vmatpush1.msra.mxu0 0.0
    %1306 = vmatprep.subr.mxu0 0.0
    %1307 = vmatpush1.msra.mxu0 0.0
    %1308 = vmatprep.subr.mxu0 0.0
    %1309 = vmatpush1.msra.mxu0 0.0
    %1310 = vmatprep.subr.mxu0 0.0
    %1311 = vmatpush1.msra.mxu0 0.0
    %1312 = vmatprep.subr.mxu0 0.0
    %1313 = vmatpush1.msra.mxu0 0.0
    %1314 = vmatprep.subr.mxu0 0.0
    %1315 = vmatpush1.msra.mxu0 0.0
    %1316 = vmatprep.subr.mxu0 0.0
    %1317 = vmatpush1.msra.mxu0 0.0
    %1318 = vmatprep.subr.mxu0 0.0
    %1319 = vmatpush1.msra.mxu0 0.0
    %1320 = vmatprep.subr.mxu0 0.0
    %1321 = vmatpush1.msra.mxu0 0.0
    %1322 = vmatprep.subr.mxu0 0.0
    %1323 = vmatpush1.msra.mxu0 0.0
    %1324 = vmatprep.subr.mxu0 0.0
    %1325 = vmatpush1.msra.mxu0 0.0
    %1326 = vmatprep.subr.mxu0 0.0
    %1327 = vmatpush1.msra.mxu0 0.0
    %1328 = vmatprep.subr.mxu0 0.0
    %1329 = vmatpush1.msra.mxu0 0.0
    %1330 = vmatprep.subr.mxu0 0.0
    %1331 = vmatpush1.msra.mxu0 0.0
    %1332 = vmatprep.subr.mxu0 0.0
    %1333 = vmatpush1.msra.mxu0 0.0
    %1334 = vmatprep.subr.mxu0 0.0
    %1335 = vmatpush1.msra.mxu0 0.0
    %1336 = vmatprep.subr.mxu0 0.0
    %1337 = vmatpush1.msra.mxu0 0.0
    %1338 = vmatprep.subr.mxu0 0.0
    %1339 = vmatpush1.msra.mxu0 0.0
    %1340 = vmatprep.subr.mxu0 0.0
    %1341 = vmatpush1.msra.mxu0 0.0
    %1342 = vmatprep.subr.mxu0 0.0
    %1343 = vmatpush1.msra.mxu0 0.0
    %1344 = vmatprep.mubr.f32.mxu0 0.0
    %1345 = vmatmul.mubr.f32.gmra.mrb[0].mxu0 %v1278
    %v1346 = vpop.f32.mrb[0].mxu0
    %v1347 = vadd.f32 0.0, %v1346
    %v1348 = vpop.f32.mrb[0].mxu0
    %1349 = vdwg.mxu0
    %1350 = vrot.lane.b32.xlu0 %v416, 64
    %v1351 = vpop.permute.xlu0 %1350
    %v1354 = vsel %vm427, %v1113, 0
    %1356 = vmatprep.subr.mxu0 0.0
    %1357 = vmatpush1.msra.mxu0 %v1351
    %1358 = vmatprep.subr.mxu0 0.0
    %1359 = vmatpush1.msra.mxu0 0.0
    %1360 = vmatprep.subr.mxu0 0.0
    %1361 = vmatpush1.msra.mxu0 0.0
    %1362 = vmatprep.subr.mxu0 0.0
    %1363 = vmatpush1.msra.mxu0 0.0
    %1364 = vmatprep.subr.mxu0 0.0
    %1365 = vmatpush1.msra.mxu0 0.0
    %1366 = vmatprep.subr.mxu0 0.0
    %1367 = vmatpush1.msra.mxu0 0.0
    %1368 = vmatprep.subr.mxu0 0.0
    %1369 = vmatpush1.msra.mxu0 0.0
    %1370 = vmatprep.subr.mxu0 0.0
    %1371 = vmatpush1.msra.mxu0 0.0
    %1372 = vmatprep.subr.mxu0 0.0
    %1373 = vmatpush1.msra.mxu0 0.0
    %1374 = vmatprep.subr.mxu0 0.0
    %1375 = vmatpush1.msra.mxu0 0.0
    %1376 = vmatprep.subr.mxu0 0.0
    %1377 = vmatpush1.msra.mxu0 0.0
    %1378 = vmatprep.subr.mxu0 0.0
    %1379 = vmatpush1.msra.mxu0 0.0
    %1380 = vmatprep.subr.mxu0 0.0
    %1381 = vmatpush1.msra.mxu0 0.0
    %1382 = vmatprep.subr.mxu0 0.0
    %1383 = vmatpush1.msra.mxu0 0.0
    %1384 = vmatprep.subr.mxu0 0.0
    %1385 = vmatpush1.msra.mxu0 0.0
    %1386 = vmatprep.subr.mxu0 0.0
    %1387 = vmatpush1.msra.mxu0 0.0
    %1388 = vmatprep.subr.mxu0 0.0
    %1389 = vmatpush1.msra.mxu0 0.0
    %1390 = vmatprep.subr.mxu0 0.0
    %1391 = vmatpush1.msra.mxu0 0.0
    %1392 = vmatprep.subr.mxu0 0.0
    %1393 = vmatpush1.msra.mxu0 0.0
    %1394 = vmatprep.subr.mxu0 0.0
    %1395 = vmatpush1.msra.mxu0 0.0
    %1396 = vmatprep.subr.mxu0 0.0
    %1397 = vmatpush1.msra.mxu0 0.0
    %1398 = vmatprep.subr.mxu0 0.0
    %1399 = vmatpush1.msra.mxu0 0.0
    %1400 = vmatprep.subr.mxu0 0.0
    %1401 = vmatpush1.msra.mxu0 0.0
    %1402 = vmatprep.subr.mxu0 0.0
    %1403 = vmatpush1.msra.mxu0 0.0
    %1404 = vmatprep.subr.mxu0 0.0
    %1405 = vmatpush1.msra.mxu0 0.0
    %1406 = vmatprep.subr.mxu0 0.0
    %1407 = vmatpush1.msra.mxu0 0.0
    %1408 = vmatprep.subr.mxu0 0.0
    %1409 = vmatpush1.msra.mxu0 0.0
    %1410 = vmatprep.subr.mxu0 0.0
    %1411 = vmatpush1.msra.mxu0 0.0
    %1412 = vmatprep.subr.mxu0 0.0
    %1413 = vmatpush1.msra.mxu0 0.0
    %1414 = vmatprep.subr.mxu0 0.0
    %1415 = vmatpush1.msra.mxu0 0.0
    %1416 = vmatprep.subr.mxu0 0.0
    %1417 = vmatpush1.msra.mxu0 0.0
    %1418 = vmatprep.subr.mxu0 0.0
    %1419 = vmatpush1.msra.mxu0 0.0
    %1420 = vmatprep.mubr.f32.mxu0 0.0
    %1421 = vmatmul.mubr.f32.gmra.mrb[0].mxu0 %v1354
    %v1422 = vpop.f32.mrb[0].mxu0
    %v1423 = vadd.f32 0.0, %v1422
    %v1424 = vpop.f32.mrb[0].mxu0
    %1425 = vdwg.mxu0
    %1426 = vrot.lane.b32.xlu0 %v418, 64
    %v1427 = vpop.permute.xlu0 %1426
    %v1430 = vsel %vm427, %v1115, 0
    %1432 = vmatprep.subr.mxu0 0.0
    %1433 = vmatpush1.msra.mxu0 %v1427
    %1434 = vmatprep.subr.mxu0 0.0
    %1435 = vmatpush1.msra.mxu0 0.0
    %1436 = vmatprep.subr.mxu0 0.0
    %1437 = vmatpush1.msra.mxu0 0.0
    %1438 = vmatprep.subr.mxu0 0.0
    %1439 = vmatpush1.msra.mxu0 0.0
    %1440 = vmatprep.subr.mxu0 0.0
    %1441 = vmatpush1.msra.mxu0 0.0
    %1442 = vmatprep.subr.mxu0 0.0
    %1443 = vmatpush1.msra.mxu0 0.0
    %1444 = vmatprep.subr.mxu0 0.0
    %1445 = vmatpush1.msra.mxu0 0.0
    %1446 = vmatprep.subr.mxu0 0.0
    %1447 = vmatpush1.msra.mxu0 0.0
    %1448 = vmatprep.subr.mxu0 0.0
    %1449 = vmatpush1.msra.mxu0 0.0
    %1450 = vmatprep.subr.mxu0 0.0
    %1451 = vmatpush1.msra.mxu0 0.0
    %1452 = vmatprep.subr.mxu0 0.0
    %1453 = vmatpush1.msra.mxu0 0.0
    %1454 = vmatprep.subr.mxu0 0.0
    %1455 = vmatpush1.msra.mxu0 0.0
    %1456 = vmatprep.subr.mxu0 0.0
    %1457 = vmatpush1.msra.mxu0 0.0
    %1458 = vmatprep.subr.mxu0 0.0
    %1459 = vmatpush1.msra.mxu0 0.0
    %1460 = vmatprep.subr.mxu0 0.0
    %1461 = vmatpush1.msra.mxu0 0.0
    %1462 = vmatprep.subr.mxu0 0.0
    %1463 = vmatpush1.msra.mxu0 0.0
    %1464 = vmatprep.subr.mxu0 0.0
    %1465 = vmatpush1.msra.mxu0 0.0
    %1466 = vmatprep.subr.mxu0 0.0
    %1467 = vmatpush1.msra.mxu0 0.0
    %1468 = vmatprep.subr.mxu0 0.0
    %1469 = vmatpush1.msra.mxu0 0.0
    %1470 = vmatprep.subr.mxu0 0.0
    %1471 = vmatpush1.msra.mxu0 0.0
    %1472 = vmatprep.subr.mxu0 0.0
    %1473 = vmatpush1.msra.mxu0 0.0
    %1474 = vmatprep.subr.mxu0 0.0
    %1475 = vmatpush1.msra.mxu0 0.0
    %1476 = vmatprep.subr.mxu0 0.0
    %1477 = vmatpush1.msra.mxu0 0.0
    %1478 = vmatprep.subr.mxu0 0.0
    %1479 = vmatpush1.msra.mxu0 0.0
    %1480 = vmatprep.subr.mxu0 0.0
    %1481 = vmatpush1.msra.mxu0 0.0
    %1482 = vmatprep.subr.mxu0 0.0
    %1483 = vmatpush1.msra.mxu0 0.0
    %1484 = vmatprep.subr.mxu0 0.0
    %1485 = vmatpush1.msra.mxu0 0.0
    %1486 = vmatprep.subr.mxu0 0.0
    %1487 = vmatpush1.msra.mxu0 0.0
    %1488 = vmatprep.subr.mxu0 0.0
    %1489 = vmatpush1.msra.mxu0 0.0
    %1490 = vmatprep.subr.mxu0 0.0
    %1491 = vmatpush1.msra.mxu0 0.0
    %1492 = vmatprep.subr.mxu0 0.0
    %1493 = vmatpush1.msra.mxu0 0.0
    %1494 = vmatprep.subr.mxu0 0.0
    %1495 = vmatpush1.msra.mxu0 0.0
    %1496 = vmatprep.mubr.f32.mxu0 0.0
    %1497 = vmatmul.mubr.f32.gmra.mrb[0].mxu0 %v1430
    %v1498 = vpop.f32.mrb[0].mxu0
    %v1499 = vadd.f32 0.0, %v1498
    %v1500 = vpop.f32.mrb[0].mxu0
    %1501 = vdwg.mxu0
    %1502 = vrot.lane.b32.xlu0 %v420, 64
    %v1503 = vpop.permute.xlu0 %1502
    %v1506 = vsel %vm427, %v1117, 0
    %1508 = vmatprep.subr.mxu0 0.0
    %1509 = vmatpush1.msra.mxu0 %v1503
    %1510 = vmatprep.subr.mxu0 0.0
    %1511 = vmatpush1.msra.mxu0 0.0
    %1512 = vmatprep.subr.mxu0 0.0
    %1513 = vmatpush1.msra.mxu0 0.0
    %1514 = vmatprep.subr.mxu0 0.0
    %1515 = vmatpush1.msra.mxu0 0.0
    %1516 = vmatprep.subr.mxu0 0.0
    %1517 = vmatpush1.msra.mxu0 0.0
    %1518 = vmatprep.subr.mxu0 0.0
    %1519 = vmatpush1.msra.mxu0 0.0
    %1520 = vmatprep.subr.mxu0 0.0
    %1521 = vmatpush1.msra.mxu0 0.0
    %1522 = vmatprep.subr.mxu0 0.0
    %1523 = vmatpush1.msra.mxu0 0.0
    %1524 = vmatprep.subr.mxu0 0.0
    %1525 = vmatpush1.msra.mxu0 0.0
    %1526 = vmatprep.subr.mxu0 0.0
    %1527 = vmatpush1.msra.mxu0 0.0
    %1528 = vmatprep.subr.mxu0 0.0
    %1529 = vmatpush1.msra.mxu0 0.0
    %1530 = vmatprep.subr.mxu0 0.0
    %1531 = vmatpush1.msra.mxu0 0.0
    %1532 = vmatprep.subr.mxu0 0.0
    %1533 = vmatpush1.msra.mxu0 0.0
    %1534 = vmatprep.subr.mxu0 0.0
    %1535 = vmatpush1.msra.mxu0 0.0
    %1536 = vmatprep.subr.mxu0 0.0
    %1537 = vmatpush1.msra.mxu0 0.0
    %1538 = vmatprep.subr.mxu0 0.0
    %1539 = vmatpush1.msra.mxu0 0.0
    %1540 = vmatprep.subr.mxu0 0.0
    %1541 = vmatpush1.msra.mxu0 0.0
    %1542 = vmatprep.subr.mxu0 0.0
    %1543 = vmatpush1.msra.mxu0 0.0
    %1544 = vmatprep.subr.mxu0 0.0
    %1545 = vmatpush1.msra.mxu0 0.0
    %1546 = vmatprep.subr.mxu0 0.0
    %1547 = vmatpush1.msra.mxu0 0.0
    %1548 = vmatprep.subr.mxu0 0.0
    %1549 = vmatpush1.msra.mxu0 0.0
    %1550 = vmatprep.subr.mxu0 0.0
    %1551 = vmatpush1.msra.mxu0 0.0
    %1552 = vmatprep.subr.mxu0 0.0
    %1553 = vmatpush1.msra.mxu0 0.0
    %1554 = vmatprep.subr.mxu0 0.0
    %1555 = vmatpush1.msra.mxu0 0.0
    %1556 = vmatprep.subr.mxu0 0.0
    %1557 = vmatpush1.msra.mxu0 0.0
    %1558 = vmatprep.subr.mxu0 0.0
    %1559 = vmatpush1.msra.mxu0 0.0
    %1560 = vmatprep.subr.mxu0 0.0
    %1561 = vmatpush1.msra.mxu0 0.0
    %1562 = vmatprep.subr.mxu0 0.0
    %1563 = vmatpush1.msra.mxu0 0.0
    %1564 = vmatprep.subr.mxu0 0.0
    %1565 = vmatpush1.msra.mxu0 0.0
    %1566 = vmatprep.subr.mxu0 0.0
    %1567 = vmatpush1.msra.mxu0 0.0
    %1568 = vmatprep.subr.mxu0 0.0
    %1569 = vmatpush1.msra.mxu0 0.0
    %1570 = vmatprep.subr.mxu0 0.0
    %1571 = vmatpush1.msra.mxu0 0.0
    %1572 = vmatprep.mubr.f32.mxu0 0.0
    %1573 = vmatmul.mubr.f32.gmra.mrb[0].mxu0 %v1506
    %v1574 = vpop.f32.mrb[0].mxu0
    %v1575 = vadd.f32 0.0, %v1574
    %v1576 = vpop.f32.mrb[0].mxu0
    %1577 = vdwg.mxu0
    %1578 = vrot.lane.b32.xlu0 %v422, 64
    %v1579 = vpop.permute.xlu0 %1578
    %v1582 = vsel %vm427, %v1119, 0
    %1584 = vmatprep.subr.mxu0 0.0
    %1585 = vmatpush1.msra.mxu0 %v1579
    %1586 = vmatprep.subr.mxu0 0.0
    %1587 = vmatpush1.msra.mxu0 0.0
    %1588 = vmatprep.subr.mxu0 0.0
    %1589 = vmatpush1.msra.mxu0 0.0
    %1590 = vmatprep.subr.mxu0 0.0
    %1591 = vmatpush1.msra.mxu0 0.0
    %1592 = vmatprep.subr.mxu0 0.0
    %1593 = vmatpush1.msra.mxu0 0.0
    %1594 = vmatprep.subr.mxu0 0.0
    %1595 = vmatpush1.msra.mxu0 0.0
    %1596 = vmatprep.subr.mxu0 0.0
    %1597 = vmatpush1.msra.mxu0 0.0
    %1598 = vmatprep.subr.mxu0 0.0
    %1599 = vmatpush1.msra.mxu0 0.0
    %1600 = vmatprep.subr.mxu0 0.0
    %1601 = vmatpush1.msra.mxu0 0.0
    %1602 = vmatprep.subr.mxu0 0.0
    %1603 = vmatpush1.msra.mxu0 0.0
    %1604 = vmatprep.subr.mxu0 0.0
    %1605 = vmatpush1.msra.mxu0 0.0
    %1606 = vmatprep.subr.mxu0 0.0
    %1607 = vmatpush1.msra.mxu0 0.0
    %1608 = vmatprep.subr.mxu0 0.0
    %1609 = vmatpush1.msra.mxu0 0.0
    %1610 = vmatprep.subr.mxu0 0.0
    %1611 = vmatpush1.msra.mxu0 0.0
    %1612 = vmatprep.subr.mxu0 0.0
    %1613 = vmatpush1.msra.mxu0 0.0
    %1614 = vmatprep.subr.mxu0 0.0
    %1615 = vmatpush1.msra.mxu0 0.0
    %1616 = vmatprep.subr.mxu0 0.0
    %1617 = vmatpush1.msra.mxu0 0.0
    %1618 = vmatprep.subr.mxu0 0.0
    %1619 = vmatpush1.msra.mxu0 0.0
    %1620 = vmatprep.subr.mxu0 0.0
    %1621 = vmatpush1.msra.mxu0 0.0
    %1622 = vmatprep.subr.mxu0 0.0
    %1623 = vmatpush1.msra.mxu0 0.0
    %1624 = vmatprep.subr.mxu0 0.0
    %1625 = vmatpush1.msra.mxu0 0.0
    %1626 = vmatprep.subr.mxu0 0.0
    %1627 = vmatpush1.msra.mxu0 0.0
    %1628 = vmatprep.subr.mxu0 0.0
    %1629 = vmatpush1.msra.mxu0 0.0
    %1630 = vmatprep.subr.mxu0 0.0
    %1631 = vmatpush1.msra.mxu0 0.0
    %1632 = vmatprep.subr.mxu0 0.0
    %1633 = vmatpush1.msra.mxu0 0.0
    %1634 = vmatprep.subr.mxu0 0.0
    %1635 = vmatpush1.msra.mxu0 0.0
    %1636 = vmatprep.subr.mxu0 0.0
    %1637 = vmatpush1.msra.mxu0 0.0
    %1638 = vmatprep.subr.mxu0 0.0
    %1639 = vmatpush1.msra.mxu0 0.0
    %1640 = vmatprep.subr.mxu0 0.0
    %1641 = vmatpush1.msra.mxu0 0.0
    %1642 = vmatprep.subr.mxu0 0.0
    %1643 = vmatpush1.msra.mxu0 0.0
    %1644 = vmatprep.subr.mxu0 0.0
    %1645 = vmatpush1.msra.mxu0 0.0
    %1646 = vmatprep.subr.mxu0 0.0
    %1647 = vmatpush1.msra.mxu0 0.0
    %1648 = vmatprep.mubr.f32.mxu0 0.0
    %1649 = vmatmul.mubr.f32.gmra.mrb[0].mxu0 %v1582
    %v1650 = vpop.f32.mrb[0].mxu0
    %v1651 = vadd.f32 0.0, %v1650
    %v1652 = vpop.f32.mrb[0].mxu0
    %1653 = vdwg.mxu0
    %1654 = vrot.lane.b32.xlu0 %v424, 64
    %v1655 = vpop.permute.xlu0 %1654
    %v1658 = vsel %vm427, %v1121, 0
    %1660 = vmatprep.subr.mxu0 0.0
    %1661 = vmatpush1.msra.mxu0 %v1655
    %1662 = vmatprep.subr.mxu0 0.0
    %1663 = vmatpush1.msra.mxu0 0.0
    %1664 = vmatprep.subr.mxu0 0.0
    %1665 = vmatpush1.msra.mxu0 0.0
    %1666 = vmatprep.subr.mxu0 0.0
    %1667 = vmatpush1.msra.mxu0 0.0
    %1668 = vmatprep.subr.mxu0 0.0
    %1669 = vmatpush1.msra.mxu0 0.0
    %1670 = vmatprep.subr.mxu0 0.0
    %1671 = vmatpush1.msra.mxu0 0.0
    %1672 = vmatprep.subr.mxu0 0.0
    %1673 = vmatpush1.msra.mxu0 0.0
    %1674 = vmatprep.subr.mxu0 0.0
    %1675 = vmatpush1.msra.mxu0 0.0
    %1676 = vmatprep.subr.mxu0 0.0
    %1677 = vmatpush1.msra.mxu0 0.0
    %1678 = vmatprep.subr.mxu0 0.0
    %1679 = vmatpush1.msra.mxu0 0.0
    %1680 = vmatprep.subr.mxu0 0.0
    %1681 = vmatpush1.msra.mxu0 0.0
    %1682 = vmatprep.subr.mxu0 0.0
    %1683 = vmatpush1.msra.mxu0 0.0
    %1684 = vmatprep.subr.mxu0 0.0
    %1685 = vmatpush1.msra.mxu0 0.0
    %1686 = vmatprep.subr.mxu0 0.0
    %1687 = vmatpush1.msra.mxu0 0.0
    %1688 = vmatprep.subr.mxu0 0.0
    %1689 = vmatpush1.msra.mxu0 0.0
    %1690 = vmatprep.subr.mxu0 0.0
    %1691 = vmatpush1.msra.mxu0 0.0
    %1692 = vmatprep.subr.mxu0 0.0
    %1693 = vmatpush1.msra.mxu0 0.0
    %1694 = vmatprep.subr.mxu0 0.0
    %1695 = vmatpush1.msra.mxu0 0.0
    %1696 = vmatprep.subr.mxu0 0.0
    %1697 = vmatpush1.msra.mxu0 0.0
    %1698 = vmatprep.subr.mxu0 0.0
    %1699 = vmatpush1.msra.mxu0 0.0
    %1700 = vmatprep.subr.mxu0 0.0
    %1701 = vmatpush1.msra.mxu0 0.0
    %1702 = vmatprep.subr.mxu0 0.0
    %1703 = vmatpush1.msra.mxu0 0.0
    %1704 = vmatprep.subr.mxu0 0.0
    %1705 = vmatpush1.msra.mxu0 0.0
    %1706 = vmatprep.subr.mxu0 0.0
    %1707 = vmatpush1.msra.mxu0 0.0
    %1708 = vmatprep.subr.mxu0 0.0
    %1709 = vmatpush1.msra.mxu0 0.0
    %1710 = vmatprep.subr.mxu0 0.0
    %1711 = vmatpush1.msra.mxu0 0.0
    %1712 = vmatprep.subr.mxu0 0.0
    %1713 = vmatpush1.msra.mxu0 0.0
    %1714 = vmatprep.subr.mxu0 0.0
    %1715 = vmatpush1.msra.mxu0 0.0
    %1716 = vmatprep.subr.mxu0 0.0
    %1717 = vmatpush1.msra.mxu0 0.0
    %1718 = vmatprep.subr.mxu0 0.0
    %1719 = vmatpush1.msra.mxu0 0.0
    %1720 = vmatprep.subr.mxu0 0.0
    %1721 = vmatpush1.msra.mxu0 0.0
    %1722 = vmatprep.subr.mxu0 0.0
    %1723 = vmatpush1.msra.mxu0 0.0
    %1724 = vmatprep.mubr.f32.mxu0 0.0
    %1725 = vmatmul.mubr.f32.gmra.mrb[0].mxu0 %v1658
    %v1726 = vpop.f32.mrb[0].mxu0
    %v1727 = vadd.f32 0.0, %v1726
    %v1728 = vpop.f32.mrb[0].mxu0
    %1729 = vdwg.mxu0
    %1732 = vrot.lane.b32.xlu0 %v1347, 8
    %v1733 = vpop.permute.xlu0 %1732
    %1734 = vrot.lane.b32.xlu0 %v1423, 8
    %v1735 = vpop.permute.xlu0 %1734
    %1740 = vrot.lane.b32.xlu0 %v1499, 16
    %v1741 = vpop.permute.xlu0 %1740
    %1742 = vrot.lane.b32.xlu0 %v1575, 16
    %v1743 = vpop.permute.xlu0 %1742
    %1748 = vrot.lane.b32.xlu0 %v1651, 24
    %v1749 = vpop.permute.xlu0 %1748
    %1750 = vrot.lane.b32.xlu0 %v1727, 24
    %v1751 = vpop.permute.xlu0 %1750
    %v1754 = vsel %vm427, %v1195, %v1733
    %v1755 = vsel %vm427, %v1271, %v1735
    %vm1756 = vcmask 130048
    %v1757 = vsel %vm1756, %v1754, %v1741
    %v1758 = vsel %vm1756, %v1755, %v1743
    %vm1759 = vcmask 195584
    %v1760 = vsel %vm1759, %v1757, %v1749
    %v1761 = vsel %vm1759, %v1758, %v1751
    %v1762 = vld [vmem:[%s6] sm:$0xff]
    %v1763 = vld [vmem:[%s6 + $0x8] sm:$0xff]
    %v1764 = vld [vmem:[%s6 + $0x10] sm:$0xff]
    %v1765 = vld [vmem:[%s6 + $0x18] sm:$0xff]
    %v1766 = vld [vmem:[%s7] sm:$0x1]
    %v1768 = vlaneseq
    %v1769 = vshrl.u32 %v1768, 7
    %v1770 = vsub.s32 0, %v1769
    %v1771 = vrot.slane %v1766, %v1770
    %v1774 = vsel %vm283, %v1760, 0
    %v1777 = vsel %vm283, %v1761, 0
    %1779 = vmatprep.subr.mxu0 0.0
    %1780 = vmatpush1.msra.mxu0 %v1762
    %1781 = vmatprep.subr.mxu0 0.0
    %1782 = vmatpush1.msra.mxu0 %v1763
    %1783 = vmatprep.subr.mxu0 0.0
    %1784 = vmatpush1.msra.mxu0 %v1764
    %1785 = vmatprep.subr.mxu0 0.0
    %1786 = vmatpush1.msra.mxu0 %v1765
    %1787 = vmatprep.subr.mxu0 0.0
    %1788 = vmatpush1.msra.mxu0 0.0
    %1789 = vmatprep.subr.mxu0 0.0
    %1790 = vmatpush1.msra.mxu0 0.0
    %1791 = vmatprep.subr.mxu0 0.0
    %1792 = vmatpush1.msra.mxu0 0.0
    %1793 = vmatprep.subr.mxu0 0.0
    %1794 = vmatpush1.msra.mxu0 0.0
    %1795 = vmatprep.subr.mxu0 0.0
    %1796 = vmatpush1.msra.mxu0 0.0
    %1797 = vmatprep.subr.mxu0 0.0
    %1798 = vmatpush1.msra.mxu0 0.0
    %1799 = vmatprep.subr.mxu0 0.0
    %1800 = vmatpush1.msra.mxu0 0.0
    %1801 = vmatprep.subr.mxu0 0.0
    %1802 = vmatpush1.msra.mxu0 0.0
    %1803 = vmatprep.subr.mxu0 0.0
    %1804 = vmatpush1.msra.mxu0 0.0
    %1805 = vmatprep.subr.mxu0 0.0
    %1806 = vmatpush1.msra.mxu0 0.0
    %1807 = vmatprep.subr.mxu0 0.0
    %1808 = vmatpush1.msra.mxu0 0.0
    %1809 = vmatprep.subr.mxu0 0.0
    %1810 = vmatpush1.msra.mxu0 0.0
    %1811 = vmatprep.subr.mxu0 0.0
    %1812 = vmatpush1.msra.mxu0 0.0
    %1813 = vmatprep.subr.mxu0 0.0
    %1814 = vmatpush1.msra.mxu0 0.0
    %1815 = vmatprep.subr.mxu0 0.0
    %1816 = vmatpush1.msra.mxu0 0.0
    %1817 = vmatprep.subr.mxu0 0.0
    %1818 = vmatpush1.msra.mxu0 0.0
    %1819 = vmatprep.subr.mxu0 0.0
    %1820 = vmatpush1.msra.mxu0 0.0
    %1821 = vmatprep.subr.mxu0 0.0
    %1822 = vmatpush1.msra.mxu0 0.0
    %1823 = vmatprep.subr.mxu0 0.0
    %1824 = vmatpush1.msra.mxu0 0.0
    %1825 = vmatprep.subr.mxu0 0.0
    %1826 = vmatpush1.msra.mxu0 0.0
    %1827 = vmatprep.subr.mxu0 0.0
    %1828 = vmatpush1.msra.mxu0 0.0
    %1829 = vmatprep.subr.mxu0 0.0
    %1830 = vmatpush1.msra.mxu0 0.0
    %1831 = vmatprep.subr.mxu0 0.0
    %1832 = vmatpush1.msra.mxu0 0.0
    %1833 = vmatprep.subr.mxu0 0.0
    %1834 = vmatpush1.msra.mxu0 0.0
    %1835 = vmatprep.subr.mxu0 0.0
    %1836 = vmatpush1.msra.mxu0 0.0
    %1837 = vmatprep.subr.mxu0 0.0
    %1838 = vmatpush1.msra.mxu0 0.0
    %1839 = vmatprep.subr.mxu0 0.0
    %1840 = vmatpush1.msra.mxu0 0.0
    %1841 = vmatprep.subr.mxu0 0.0
    %1842 = vmatpush1.msra.mxu0 0.0
    %1843 = vmatprep.mubr.f32.mxu0 0.0
    %1844 = vmatmul.mubr.f32.gmra.mrb[0].mxu0 %v1774
    %v1845 = vpop.f32.mrb[0].mxu0
    %v1846 = vadd.f32 %v1771, %v1845
    %v1847 = vpop.f32.mrb[0].mxu0
    %1848 = vmatprep.mubr.f32.mxu0 0.0
    %1849 = vmatmul.mubr.f32.gmra.mrb[0].mxu0 %v1777
    %v1850 = vpop.f32.mrb[0].mxu0
    %v1851 = vadd.f32 %v1771, %v1850
    %v1852 = vpop.f32.mrb[0].mxu0
    %1853 = vdwg.mxu0
    %v1854 = vadd.f32 %v254, %v1846
    %v1855 = vadd.f32 %v255, %v1851
    %v1856 = vld [vmem:[#allocation10] sm:$0x1]
    %v1857 = vld [vmem:[#allocation11] sm:$0x1]
    %v1858 = vsel %vm283, %v1854, 0.0
    %1859 = vadd.xlane.f32.xlu0 %v1858
    %v1860 = vpop.xlane.xlu0 %1859
    %v1861 = vsel %vm283, %v1855, 0.0
    %1862 = vadd.xlane.f32.xlu0 %v1861
    %v1863 = vpop.xlane.xlu0 %1862
    %v1864 = vrcp.pop 32.0
    %v1865 = vmul.f32 %v1860, %v1864
    %v1866 = vmul.f32 %v1863, %v1864
    %v1867 = vsub.f32 %v1854, %v1865
    %v1868 = vsub.f32 %v1855, %v1866
    %v1869 = vmul.f32 %v1867, %v1867
    %v1870 = vmul.f32 %v1868, %v1868
    %v1871 = vsel %vm283, %v1869, 0.0
    %1872 = vadd.xlane.f32.xlu0 %v1871
    %v1873 = vpop.xlane.xlu0 %1872
    %v1874 = vsel %vm283, %v1870, 0.0
    %1875 = vadd.xlane.f32.xlu0 %v1874
    %v1876 = vpop.xlane.xlu0 %1875
    %v1877 = vmul.f32 %v1873, %v1864
    %v1878 = vmul.f32 %v1876, %v1864
    %v1879 = vadd.f32 %v1877, 1e-05
    %v1880 = vadd.f32 %v1878, 1e-05
    %v1881 = vrsqrt.pop %v1879
    %v1882 = vrsqrt.pop %v1880
    %v1883 = vmul.f32 %v1867, %v1881
    %v1884 = vmul.f32 %v1868, %v1882
    %v1886 = vlaneseq
    %v1887 = vshrl.u32 %v1886, 7
    %v1888 = vsub.s32 0, %v1887
    %v1889 = vrot.slane %v1856, %v1888
    %v1891 = vmul.f32 %v1883, %v1889
    %v1892 = vmul.f32 %v1884, %v1889
    %v1894 = vlaneseq
    %v1895 = vshrl.u32 %v1894, 7
    %v1896 = vsub.s32 0, %v1895
    %v1897 = vrot.slane %v1857, %v1896
    %v1899 = vadd.f32 %v1891, %v1897
    %v1900 = vadd.f32 %v1892, %v1897
    %v1901 = vadd.f32 %v1899, %v256
    %v1902 = vadd.f32 %v1900, %v257
    %v1903 = vld [vmem:[%s10] sm:$0xff]
    %v1904 = vld [vmem:[%s10 + $0x8] sm:$0xff]
    %v1905 = vld [vmem:[%s10 + $0x10] sm:$0xff]
    %v1906 = vld [vmem:[%s10 + $0x18] sm:$0xff]
    %v1907 = vld [vmem:[#allocation13] sm:$0x1]
    %v1909 = vlaneseq
    %v1910 = vshrl.u32 %v1909, 7
    %v1911 = vsub.s32 0, %v1910
    %v1912 = vrot.slane %v1907, %v1911
    %v1915 = vsel %vm283, %v1901, 0
    %v1918 = vsel %vm283, %v1902, 0
    %v1921 = vsel %vm283, %v266, 0
    %v1924 = vsel %vm283, %v267, 0
    %v1927 = vsel %vm283, %v268, 0
    %v1930 = vsel %vm283, %v269, 0
    %v1933 = vsel %vm283, %v258, 0
    %v1936 = vsel %vm283, %v259, 0
    %v1939 = vsel %vm283, %v260, 0
    %v1942 = vsel %vm283, %v261, 0
    %1944 = vmatprep.subr.mxu0 0.0
    %1945 = vmatpush1.msra.mxu0 %v1903
    %1946 = vmatprep.subr.mxu0 0.0
    %1947 = vmatpush1.msra.mxu0 %v1904
    %1948 = vmatprep.subr.mxu0 0.0
    %1949 = vmatpush1.msra.mxu0 %v1905
    %1950 = vmatprep.subr.mxu0 0.0
    %1951 = vmatpush1.msra.mxu0 %v1906
    %1952 = vmatprep.subr.mxu0 0.0
    %1953 = vmatpush1.msra.mxu0 0.0
    %1954 = vmatprep.subr.mxu0 0.0
    %1955 = vmatpush1.msra.mxu0 0.0
    %1956 = vmatprep.subr.mxu0 0.0
    %1957 = vmatpush1.msra.mxu0 0.0
    %1958 = vmatprep.subr.mxu0 0.0
    %1959 = vmatpush1.msra.mxu0 0.0
    %1960 = vmatprep.subr.mxu0 0.0
    %1961 = vmatpush1.msra.mxu0 0.0
    %1962 = vmatprep.subr.mxu0 0.0
    %1963 = vmatpush1.msra.mxu0 0.0
    %1964 = vmatprep.subr.mxu0 0.0
    %1965 = vmatpush1.msra.mxu0 0.0
    %1966 = vmatprep.subr.mxu0 0.0
    %1967 = vmatpush1.msra.mxu0 0.0
    %1968 = vmatprep.subr.mxu0 0.0
    %1969 = vmatpush1.msra.mxu0 0.0
    %1970 = vmatprep.subr.mxu0 0.0
    %1971 = vmatpush1.msra.mxu0 0.0
    %1972 = vmatprep.subr.mxu0 0.0
    %1973 = vmatpush1.msra.mxu0 0.0
    %1974 = vmatprep.subr.mxu0 0.0
    %1975 = vmatpush1.msra.mxu0 0.0
    %1976 = vmatprep.subr.mxu0 0.0
    %1977 = vmatpush1.msra.mxu0 0.0
    %1978 = vmatprep.subr.mxu0 0.0
    %1979 = vmatpush1.msra.mxu0 0.0
    %1980 = vmatprep.subr.mxu0 0.0
    %1981 = vmatpush1.msra.mxu0 0.0
    %1982 = vmatprep.subr.mxu0 0.0
    %1983 = vmatpush1.msra.mxu0 0.0
    %1984 = vmatprep.subr.mxu0 0.0
    %1985 = vmatpush1.msra.mxu0 0.0
    %1986 = vmatprep.subr.mxu0 0.0
    %1987 = vmatpush1.msra.mxu0 0.0
    %1988 = vmatprep.subr.mxu0 0.0
    %1989 = vmatpush1.msra.mxu0 0.0
    %1990 = vmatprep.subr.mxu0 0.0
    %1991 = vmatpush1.msra.mxu0 0.0
    %1992 = vmatprep.subr.mxu0 0.0
    %1993 = vmatpush1.msra.mxu0 0.0
    %1994 = vmatprep.subr.mxu0 0.0
    %1995 = vmatpush1.msra.mxu0 0.0
    %1996 = vmatprep.subr.mxu0 0.0
    %1997 = vmatpush1.msra.mxu0 0.0
    %1998 = vmatprep.subr.mxu0 0.0
    %1999 = vmatpush1.msra.mxu0 0.0
    %2000 = vmatprep.subr.mxu0 0.0
    %2001 = vmatpush1.msra.mxu0 0.0
    %2002 = vmatprep.subr.mxu0 0.0
    %2003 = vmatpush1.msra.mxu0 0.0
    %2004 = vmatprep.subr.mxu0 0.0
    %2005 = vmatpush1.msra.mxu0 0.0
    %2006 = vmatprep.subr.mxu0 0.0
    %2007 = vmatpush1.msra.mxu0 0.0
    %2008 = vmatprep.mubr.f32.mxu0 0.0
    %2009 = vmatmul.mubr.f32.gmra.mrb[0].mxu0 %v1915
    %v2010 = vpop.f32.mrb[0].mxu0
    %v2011 = vadd.f32 %v1912, %v2010
    %v2012 = vpop.f32.mrb[0].mxu0
    %2013 = vmatprep.mubr.f32.mxu0 0.0
    %2014 = vmatmul.mubr.f32.gmra.mrb[0].mxu0 %v1918
    %v2015 = vpop.f32.mrb[0].mxu0
    %v2016 = vadd.f32 %v1912, %v2015
    %v2017 = vpop.f32.mrb[0].mxu0
    %2018 = vmatprep.mubr.f32.mxu0 0.0
    %2019 = vmatmul.mubr.f32.gmra.mrb[0].mxu0 %v1921
    %v2020 = vpop.f32.mrb[0].mxu0
    %v2021 = vadd.f32 %v1912, %v2020
    %v2022 = vpop.f32.mrb[0].mxu0
    %2023 = vmatprep.mubr.f32.mxu0 0.0
    %2024 = vmatmul.mubr.f32.gmra.mrb[0].mxu0 %v1924
    %v2025 = vpop.f32.mrb[0].mxu0
    %v2026 = vadd.f32 %v1912, %v2025
    %v2027 = vpop.f32.mrb[0].mxu0
    %2028 = vmatprep.mubr.f32.mxu0 0.0
    %2029 = vmatmul.mubr.f32.gmra.mrb[0].mxu0 %v1927
    %v2030 = vpop.f32.mrb[0].mxu0
    %v2031 = vadd.f32 %v1912, %v2030
    %v2032 = vpop.f32.mrb[0].mxu0
    %2033 = vmatprep.mubr.f32.mxu0 0.0
    %2034 = vmatmul.mubr.f32.gmra.mrb[0].mxu0 %v1930
    %v2035 = vpop.f32.mrb[0].mxu0
    %v2036 = vadd.f32 %v1912, %v2035
    %v2037 = vpop.f32.mrb[0].mxu0
    %2038 = vmatprep.mubr.f32.mxu0 0.0
    %2039 = vmatmul.mubr.f32.gmra.mrb[0].mxu0 %v1933
    %v2040 = vpop.f32.mrb[0].mxu0
    %v2041 = vadd.f32 %v1912, %v2040
    %v2042 = vpop.f32.mrb[0].mxu0
    %2043 = vmatprep.mubr.f32.mxu0 0.0
    %2044 = vmatmul.mubr.f32.gmra.mrb[0].mxu0 %v1936
    %v2045 = vpop.f32.mrb[0].mxu0
    %v2046 = vadd.f32 %v1912, %v2045
    %v2047 = vpop.f32.mrb[0].mxu0
    %2048 = vmatprep.mubr.f32.mxu0 0.0
    %2049 = vmatmul.mubr.f32.gmra.mrb[0].mxu0 %v1939
    %v2050 = vpop.f32.mrb[0].mxu0
    %v2051 = vadd.f32 %v1912, %v2050
    %v2052 = vpop.f32.mrb[0].mxu0
    %2053 = vmatprep.mubr.f32.mxu0 0.0
    %2054 = vmatmul.mubr.f32.gmra.mrb[0].mxu0 %v1942
    %v2055 = vpop.f32.mrb[0].mxu0
    %v2056 = vadd.f32 %v1912, %v2055
    %v2057 = vpop.f32.mrb[0].mxu0
    %2058 = vdwg.mxu0
    %v2059 = vmul.f32 %v2011, 0.35355338
    %v2060 = vmul.f32 %v2016, 0.35355338
    %2063 = vrot.lane.b32.xlu0 %v2059, 120
    %v2064 = vpop.permute.xlu0 %2063
    %2065 = vrot.lane.b32.xlu0 %v2060, 120
    %v2066 = vpop.permute.xlu0 %2065
    %2067 = vrot.lane.b32.xlu0 %v2059, 112
    %v2068 = vpop.permute.xlu0 %2067
    %2069 = vrot.lane.b32.xlu0 %v2060, 112
    %v2070 = vpop.permute.xlu0 %2069
    %2071 = vrot.lane.b32.xlu0 %v2059, 104
    %v2072 = vpop.permute.xlu0 %2071
    %2073 = vrot.lane.b32.xlu0 %v2060, 104
    %v2074 = vpop.permute.xlu0 %2073
    %2079 = vrot.lane.b32.xlu0 %v2021, 120
    %v2080 = vpop.permute.xlu0 %2079
    %2081 = vrot.lane.b32.xlu0 %v2026, 120
    %v2082 = vpop.permute.xlu0 %2081
    %2083 = vrot.lane.b32.xlu0 %v2031, 120
    %v2084 = vpop.permute.xlu0 %2083
    %2085 = vrot.lane.b32.xlu0 %v2036, 120
    %v2086 = vpop.permute.xlu0 %2085
    %2087 = vrot.lane.b32.xlu0 %v2021, 112
    %v2088 = vpop.permute.xlu0 %2087
    %2089 = vrot.lane.b32.xlu0 %v2026, 112
    %v2090 = vpop.permute.xlu0 %2089
    %2091 = vrot.lane.b32.xlu0 %v2031, 112
    %v2092 = vpop.permute.xlu0 %2091
    %2093 = vrot.lane.b32.xlu0 %v2036, 112
    %v2094 = vpop.permute.xlu0 %2093
    %2095 = vrot.lane.b32.xlu0 %v2021, 104
    %v2096 = vpop.permute.xlu0 %2095
    %2097 = vrot.lane.b32.xlu0 %v2026, 104
    %v2098 = vpop.permute.xlu0 %2097
    %2099 = vrot.lane.b32.xlu0 %v2031, 104
    %v2100 = vpop.permute.xlu0 %2099
    %2101 = vrot.lane.b32.xlu0 %v2036, 104
    %v2102 = vpop.permute.xlu0 %2101
    %2107 = vrot.lane.b32.xlu0 %v2041, 120
    %v2108 = vpop.permute.xlu0 %2107
    %2109 = vrot.lane.b32.xlu0 %v2046, 120
    %v2110 = vpop.permute.xlu0 %2109
    %2111 = vrot.lane.b32.xlu0 %v2051, 120
    %v2112 = vpop.permute.xlu0 %2111
    %2113 = vrot.lane.b32.xlu0 %v2056, 120
    %v2114 = vpop.permute.xlu0 %2113
    %2115 = vrot.lane.b32.xlu0 %v2041, 112
    %v2116 = vpop.permute.xlu0 %2115
    %2117 = vrot.lane.b32.xlu0 %v2046, 112
    %v2118 = vpop.permute.xlu0 %2117
    %2119 = vrot.lane.b32.xlu0 %v2051, 112
    %v2120 = vpop.permute.xlu0 %2119
    %2121 = vrot.lane.b32.xlu0 %v2056, 112
    %v2122 = vpop.permute.xlu0 %2121
    %2123 = vrot.lane.b32.xlu0 %v2041, 104
    %v2124 = vpop.permute.xlu0 %2123
    %2125 = vrot.lane.b32.xlu0 %v2046, 104
    %v2126 = vpop.permute.xlu0 %2125
    %2127 = vrot.lane.b32.xlu0 %v2051, 104
    %v2128 = vpop.permute.xlu0 %2127
    %2129 = vrot.lane.b32.xlu0 %v2056, 104
    %v2130 = vpop.permute.xlu0 %2129
    %2131 = vrot.lane.b32.xlu0 %v2021, 96
    %v2132 = vpop.permute.xlu0 %2131
    %2133 = vrot.lane.b32.xlu0 %v2026, 96
    %v2134 = vpop.permute.xlu0 %2133
    %v2135 = vsel %vm427, %v2059, 0
    %v2137 = vsel %vm427, %v2132, 0
    %v2139 = vsel %vm427, %v2134, 0
    %2141 = vmatprep.subr.mxu0 0.0
    %2142 = vmatpush1.xpose.msra.mxu0 %v2137
    %2143 = vmatprep.subr.mxu0 0.0
    %2144 = vmatpush1.xpose.msra.mxu0 %v2139
    %2145 = vmatprep.subr.mxu0 0.0
    %2146 = vmatpush1.xpose.msra.mxu0 0.0
    %2147 = vmatprep.subr.mxu0 0.0
    %2148 = vmatpush1.xpose.msra.mxu0 0.0
    %2149 = vmatprep.subr.mxu0 0.0
    %2150 = vmatpush1.xpose.msra.mxu0 0.0
    %2151 = vmatprep.subr.mxu0 0.0
    %2152 = vmatpush1.xpose.msra.mxu0 0.0
    %2153 = vmatprep.subr.mxu0 0.0
    %2154 = vmatpush1.xpose.msra.mxu0 0.0
    %2155 = vmatprep.subr.mxu0 0.0
    %2156 = vmatpush1.xpose.msra.mxu0 0.0
    %2157 = vmatprep.subr.mxu0 0.0
    %2158 = vmatpush1.xpose.msra.mxu0 0.0
    %2159 = vmatprep.subr.mxu0 0.0
    %2160 = vmatpush1.xpose.msra.mxu0 0.0
    %2161 = vmatprep.subr.mxu0 0.0
    %2162 = vmatpush1.xpose.msra.mxu0 0.0
    %2163 = vmatprep.subr.mxu0 0.0
    %2164 = vmatpush1.xpose.msra.mxu0 0.0
    %2165 = vmatprep.subr.mxu0 0.0
    %2166 = vmatpush1.xpose.msra.mxu0 0.0
    %2167 = vmatprep.subr.mxu0 0.0
    %2168 = vmatpush1.xpose.msra.mxu0 0.0
    %2169 = vmatprep.subr.mxu0 0.0
    %2170 = vmatpush1.xpose.msra.mxu0 0.0
    %2171 = vmatprep.subr.mxu0 0.0
    %2172 = vmatpush1.xpose.msra.mxu0 0.0
    %2173 = vmatprep.subr.mxu0 0.0
    %2174 = vmatpush1.xpose.msra.mxu0 0.0
    %2175 = vmatprep.subr.mxu0 0.0
    %2176 = vmatpush1.xpose.msra.mxu0 0.0
    %2177 = vmatprep.subr.mxu0 0.0
    %2178 = vmatpush1.xpose.msra.mxu0 0.0
    %2179 = vmatprep.subr.mxu0 0.0
    %2180 = vmatpush1.xpose.msra.mxu0 0.0
    %2181 = vmatprep.subr.mxu0 0.0
    %2182 = vmatpush1.xpose.msra.mxu0 0.0
    %2183 = vmatprep.subr.mxu0 0.0
    %2184 = vmatpush1.xpose.msra.mxu0 0.0
    %2185 = vmatprep.subr.mxu0 0.0
    %2186 = vmatpush1.xpose.msra.mxu0 0.0
    %2187 = vmatprep.subr.mxu0 0.0
    %2188 = vmatpush1.xpose.msra.mxu0 0.0
    %2189 = vmatprep.subr.mxu0 0.0
    %2190 = vmatpush1.xpose.msra.mxu0 0.0
    %2191 = vmatprep.subr.mxu0 0.0
    %2192 = vmatpush1.xpose.msra.mxu0 0.0
    %2193 = vmatprep.subr.mxu0 0.0
    %2194 = vmatpush1.xpose.msra.mxu0 0.0
    %2195 = vmatprep.subr.mxu0 0.0
    %2196 = vmatpush1.xpose.msra.mxu0 0.0
    %2197 = vmatprep.subr.mxu0 0.0
    %2198 = vmatpush1.xpose.msra.mxu0 0.0
    %2199 = vmatprep.subr.mxu0 0.0
    %2200 = vmatpush1.xpose.msra.mxu0 0.0
    %2201 = vmatprep.subr.mxu0 0.0
    %2202 = vmatpush1.xpose.msra.mxu0 0.0
    %2203 = vmatprep.subr.mxu0 0.0
    %2204 = vmatpush1.xpose.msra.mxu0 0.0
    %2205 = vmatprep.mubr.f32.mxu0 0.0
    %2206 = vmatmul.mubr.f32.gmra.mrb[0].mxu0 %v2135
    %v2207 = vpop.f32.mrb[0].mxu0
    %v2208 = vadd.f32 0.0, %v2207
    %v2209 = vpop.f32.mrb[0].mxu0
    %2210 = vdwg.mxu0
    %2211 = vrot.lane.b32.xlu0 %v2031, 96
    %v2212 = vpop.permute.xlu0 %2211
    %2213 = vrot.lane.b32.xlu0 %v2036, 96
    %v2214 = vpop.permute.xlu0 %2213
    %v2215 = vsel %vm427, %v2060, 0
    %v2217 = vsel %vm427, %v2212, 0
    %v2219 = vsel %vm427, %v2214, 0
    %2221 = vmatprep.subr.mxu0 0.0
    %2222 = vmatpush1.xpose.msra.mxu0 %v2217
    %2223 = vmatprep.subr.mxu0 0.0
    %2224 = vmatpush1.xpose.msra.mxu0 %v2219
    %2225 = vmatprep.subr.mxu0 0.0
    %2226 = vmatpush1.xpose.msra.mxu0 0.0
    %2227 = vmatprep.subr.mxu0 0.0
    %2228 = vmatpush1.xpose.msra.mxu0 0.0
    %2229 = vmatprep.subr.mxu0 0.0
    %2230 = vmatpush1.xpose.msra.mxu0 0.0
    %2231 = vmatprep.subr.mxu0 0.0
    %2232 = vmatpush1.xpose.msra.mxu0 0.0
    %2233 = vmatprep.subr.mxu0 0.0
    %2234 = vmatpush1.xpose.msra.mxu0 0.0
    %2235 = vmatprep.subr.mxu0 0.0
    %2236 = vmatpush1.xpose.msra.mxu0 0.0
    %2237 = vmatprep.subr.mxu0 0.0
    %2238 = vmatpush1.xpose.msra.mxu0 0.0
    %2239 = vmatprep.subr.mxu0 0.0
    %2240 = vmatpush1.xpose.msra.mxu0 0.0
    %2241 = vmatprep.subr.mxu0 0.0
    %2242 = vmatpush1.xpose.msra.mxu0 0.0
    %2243 = vmatprep.subr.mxu0 0.0
    %2244 = vmatpush1.xpose.msra.mxu0 0.0
    %2245 = vmatprep.subr.mxu0 0.0
    %2246 = vmatpush1.xpose.msra.mxu0 0.0
    %2247 = vmatprep.subr.mxu0 0.0
    %2248 = vmatpush1.xpose.msra.mxu0 0.0
    %2249 = vmatprep.subr.mxu0 0.0
    %2250 = vmatpush1.xpose.msra.mxu0 0.0
    %2251 = vmatprep.subr.mxu0 0.0
    %2252 = vmatpush1.xpose.msra.mxu0 0.0
    %2253 = vmatprep.subr.mxu0 0.0
    %2254 = vmatpush1.xpose.msra.mxu0 0.0
    %2255 = vmatprep.subr.mxu0 0.0
    %2256 = vmatpush1.xpose.msra.mxu0 0.0
    %2257 = vmatprep.subr.mxu0 0.0
    %2258 = vmatpush1.xpose.msra.mxu0 0.0
    %2259 = vmatprep.subr.mxu0 0.0
    %2260 = vmatpush1.xpose.msra.mxu0 0.0
    %2261 = vmatprep.subr.mxu0 0.0
    %2262 = vmatpush1.xpose.msra.mxu0 0.0
    %2263 = vmatprep.subr.mxu0 0.0
    %2264 = vmatpush1.xpose.msra.mxu0 0.0
    %2265 = vmatprep.subr.mxu0 0.0
    %2266 = vmatpush1.xpose.msra.mxu0 0.0
    %2267 = vmatprep.subr.mxu0 0.0
    %2268 = vmatpush1.xpose.msra.mxu0 0.0
    %2269 = vmatprep.subr.mxu0 0.0
    %2270 = vmatpush1.xpose.msra.mxu0 0.0
    %2271 = vmatprep.subr.mxu0 0.0
    %2272 = vmatpush1.xpose.msra.mxu0 0.0
    %2273 = vmatprep.subr.mxu0 0.0
    %2274 = vmatpush1.xpose.msra.mxu0 0.0
    %2275 = vmatprep.subr.mxu0 0.0
    %2276 = vmatpush1.xpose.msra.mxu0 0.0
    %2277 = vmatprep.subr.mxu0 0.0
    %2278 = vmatpush1.xpose.msra.mxu0 0.0
    %2279 = vmatprep.subr.mxu0 0.0
    %2280 = vmatpush1.xpose.msra.mxu0 0.0
    %2281 = vmatprep.subr.mxu0 0.0
    %2282 = vmatpush1.xpose.msra.mxu0 0.0
    %2283 = vmatprep.subr.mxu0 0.0
    %2284 = vmatpush1.xpose.msra.mxu0 0.0
    %2285 = vmatprep.mubr.f32.mxu0 0.0
    %2286 = vmatmul.mubr.f32.gmra.mrb[0].mxu0 %v2215
    %v2287 = vpop.f32.mrb[0].mxu0
    %v2288 = vadd.f32 0.0, %v2287
    %v2289 = vpop.f32.mrb[0].mxu0
    %2290 = vdwg.mxu0
    %2291 = vrot.lane.b32.xlu0 %v2080, 96
    %v2292 = vpop.permute.xlu0 %2291
    %2293 = vrot.lane.b32.xlu0 %v2082, 96
    %v2294 = vpop.permute.xlu0 %2293
    %v2295 = vsel %vm427, %v2064, 0
    %v2297 = vsel %vm427, %v2292, 0
    %v2299 = vsel %vm427, %v2294, 0
    %2301 = vmatprep.subr.mxu0 0.0
    %2302 = vmatpush1.xpose.msra.mxu0 %v2297
    %2303 = vmatprep.subr.mxu0 0.0
    %2304 = vmatpush1.xpose.msra.mxu0 %v2299
    %2305 = vmatprep.subr.mxu0 0.0
    %2306 = vmatpush1.xpose.msra.mxu0 0.0
    %2307 = vmatprep.subr.mxu0 0.0
    %2308 = vmatpush1.xpose.msra.mxu0 0.0
    %2309 = vmatprep.subr.mxu0 0.0
    %2310 = vmatpush1.xpose.msra.mxu0 0.0
    %2311 = vmatprep.subr.mxu0 0.0
    %2312 = vmatpush1.xpose.msra.mxu0 0.0
    %2313 = vmatprep.subr.mxu0 0.0
    %2314 = vmatpush1.xpose.msra.mxu0 0.0
    %2315 = vmatprep.subr.mxu0 0.0
    %2316 = vmatpush1.xpose.msra.mxu0 0.0
    %2317 = vmatprep.subr.mxu0 0.0
    %2318 = vmatpush1.xpose.msra.mxu0 0.0
    %2319 = vmatprep.subr.mxu0 0.0
    %2320 = vmatpush1.xpose.msra.mxu0 0.0
    %2321 = vmatprep.subr.mxu0 0.0
    %2322 = vmatpush1.xpose.msra.mxu0 0.0
    %2323 = vmatprep.subr.mxu0 0.0
    %2324 = vmatpush1.xpose.msra.mxu0 0.0
    %2325 = vmatprep.subr.mxu0 0.0
    %2326 = vmatpush1.xpose.msra.mxu0 0.0
    %2327 = vmatprep.subr.mxu0 0.0
    %2328 = vmatpush1.xpose.msra.mxu0 0.0
    %2329 = vmatprep.subr.mxu0 0.0
    %2330 = vmatpush1.xpose.msra.mxu0 0.0
    %2331 = vmatprep.subr.mxu0 0.0
    %2332 = vmatpush1.xpose.msra.mxu0 0.0
    %2333 = vmatprep.subr.mxu0 0.0
    %2334 = vmatpush1.xpose.msra.mxu0 0.0
    %2335 = vmatprep.subr.mxu0 0.0
    %2336 = vmatpush1.xpose.msra.mxu0 0.0
    %2337 = vmatprep.subr.mxu0 0.0
    %2338 = vmatpush1.xpose.msra.mxu0 0.0
    %2339 = vmatprep.subr.mxu0 0.0
    %2340 = vmatpush1.xpose.msra.mxu0 0.0
    %2341 = vmatprep.subr.mxu0 0.0
    %2342 = vmatpush1.xpose.msra.mxu0 0.0
    %2343 = vmatprep.subr.mxu0 0.0
    %2344 = vmatpush1.xpose.msra.mxu0 0.0
    %2345 = vmatprep.subr.mxu0 0.0
    %2346 = vmatpush1.xpose.msra.mxu0 0.0
    %2347 = vmatprep.subr.mxu0 0.0
    %2348 = vmatpush1.xpose.msra.mxu0 0.0
    %2349 = vmatprep.subr.mxu0 0.0
    %2350 = vmatpush1.xpose.msra.mxu0 0.0
    %2351 = vmatprep.subr.mxu0 0.0
    %2352 = vmatpush1.xpose.msra.mxu0 0.0
    %2353 = vmatprep.subr.mxu0 0.0
    %2354 = vmatpush1.xpose.msra.mxu0 0.0
    %2355 = vmatprep.subr.mxu0 0.0
    %2356 = vmatpush1.xpose.msra.mxu0 0.0
    %2357 = vmatprep.subr.mxu0 0.0
    %2358 = vmatpush1.xpose.msra.mxu0 0.0
    %2359 = vmatprep.subr.mxu0 0.0
    %2360 = vmatpush1.xpose.msra.mxu0 0.0
    %2361 = vmatprep.subr.mxu0 0.0
    %2362 = vmatpush1.xpose.msra.mxu0 0.0
    %2363 = vmatprep.subr.mxu0 0.0
    %2364 = vmatpush1.xpose.msra.mxu0 0.0
    %2365 = vmatprep.mubr.f32.mxu0 0.0
    %2366 = vmatmul.mubr.f32.gmra.mrb[0].mxu0 %v2295
    %v2367 = vpop.f32.mrb[0].mxu0
    %v2368 = vadd.f32 0.0, %v2367
    %v2369 = vpop.f32.mrb[0].mxu0
    %2370 = vdwg.mxu0
    %2371 = vrot.lane.b32.xlu0 %v2084, 96
    %v2372 = vpop.permute.xlu0 %2371
    %2373 = vrot.lane.b32.xlu0 %v2086, 96
    %v2374 = vpop.permute.xlu0 %2373
    %v2375 = vsel %vm427, %v2066, 0
    %v2377 = vsel %vm427, %v2372, 0
    %v2379 = vsel %vm427, %v2374, 0
    %2381 = vmatprep.subr.mxu0 0.0
    %2382 = vmatpush1.xpose.msra.mxu0 %v2377
    %2383 = vmatprep.subr.mxu0 0.0
    %2384 = vmatpush1.xpose.msra.mxu0 %v2379
    %2385 = vmatprep.subr.mxu0 0.0
    %2386 = vmatpush1.xpose.msra.mxu0 0.0
    %2387 = vmatprep.subr.mxu0 0.0
    %2388 = vmatpush1.xpose.msra.mxu0 0.0
    %2389 = vmatprep.subr.mxu0 0.0
    %2390 = vmatpush1.xpose.msra.mxu0 0.0
    %2391 = vmatprep.subr.mxu0 0.0
    %2392 = vmatpush1.xpose.msra.mxu0 0.0
    %2393 = vmatprep.subr.mxu0 0.0
    %2394 = vmatpush1.xpose.msra.mxu0 0.0
    %2395 = vmatprep.subr.mxu0 0.0
    %2396 = vmatpush1.xpose.msra.mxu0 0.0
    %2397 = vmatprep.subr.mxu0 0.0
    %2398 = vmatpush1.xpose.msra.mxu0 0.0
    %2399 = vmatprep.subr.mxu0 0.0
    %2400 = vmatpush1.xpose.msra.mxu0 0.0
    %2401 = vmatprep.subr.mxu0 0.0
    %2402 = vmatpush1.xpose.msra.mxu0 0.0
    %2403 = vmatprep.subr.mxu0 0.0
    %2404 = vmatpush1.xpose.msra.mxu0 0.0
    %2405 = vmatprep.subr.mxu0 0.0
    %2406 = vmatpush1.xpose.msra.mxu0 0.0
    %2407 = vmatprep.subr.mxu0 0.0
    %2408 = vmatpush1.xpose.msra.mxu0 0.0
    %2409 = vmatprep.subr.mxu0 0.0
    %2410 = vmatpush1.xpose.msra.mxu0 0.0
    %2411 = vmatprep.subr.mxu0 0.0
    %2412 = vmatpush1.xpose.msra.mxu0 0.0
    %2413 = vmatprep.subr.mxu0 0.0
    %2414 = vmatpush1.xpose.msra.mxu0 0.0
    %2415 = vmatprep.subr.mxu0 0.0
    %2416 = vmatpush1.xpose.msra.mxu0 0.0
    %2417 = vmatprep.subr.mxu0 0.0
    %2418 = vmatpush1.xpose.msra.mxu0 0.0
    %2419 = vmatprep.subr.mxu0 0.0
    %2420 = vmatpush1.xpose.msra.mxu0 0.0
    %2421 = vmatprep.subr.mxu0 0.0
    %2422 = vmatpush1.xpose.msra.mxu0 0.0
    %2423 = vmatprep.subr.mxu0 0.0
    %2424 = vmatpush1.xpose.msra.mxu0 0.0
    %2425 = vmatprep.subr.mxu0 0.0
    %2426 = vmatpush1.xpose.msra.mxu0 0.0
    %2427 = vmatprep.subr.mxu0 0.0
    %2428 = vmatpush1.xpose.msra.mxu0 0.0
    %2429 = vmatprep.subr.mxu0 0.0
    %2430 = vmatpush1.xpose.msra.mxu0 0.0
    %2431 = vmatprep.subr.mxu0 0.0
    %2432 = vmatpush1.xpose.msra.mxu0 0.0
    %2433 = vmatprep.subr.mxu0 0.0
    %2434 = vmatpush1.xpose.msra.mxu0 0.0
    %2435 = vmatprep.subr.mxu0 0.0
    %2436 = vmatpush1.xpose.msra.mxu0 0.0
    %2437 = vmatprep.subr.mxu0 0.0
    %2438 = vmatpush1.xpose.msra.mxu0 0.0
    %2439 = vmatprep.subr.mxu0 0.0
    %2440 = vmatpush1.xpose.msra.mxu0 0.0
    %2441 = vmatprep.subr.mxu0 0.0
    %2442 = vmatpush1.xpose.msra.mxu0 0.0
    %2443 = vmatprep.subr.mxu0 0.0
    %2444 = vmatpush1.xpose.msra.mxu0 0.0
    %2445 = vmatprep.mubr.f32.mxu0 0.0
    %2446 = vmatmul.mubr.f32.gmra.mrb[0].mxu0 %v2375
    %v2447 = vpop.f32.mrb[0].mxu0
    %v2448 = vadd.f32 0.0, %v2447
    %v2449 = vpop.f32.mrb[0].mxu0
    %2450 = vdwg.mxu0
    %2451 = vrot.lane.b32.xlu0 %v2088, 96
    %v2452 = vpop.permute.xlu0 %2451
    %2453 = vrot.lane.b32.xlu0 %v2090, 96
    %v2454 = vpop.permute.xlu0 %2453
    %v2455 = vsel %vm427, %v2068, 0
    %v2457 = vsel %vm427, %v2452, 0
    %v2459 = vsel %vm427, %v2454, 0
    %2461 = vmatprep.subr.mxu0 0.0
    %2462 = vmatpush1.xpose.msra.mxu0 %v2457
    %2463 = vmatprep.subr.mxu0 0.0
    %2464 = vmatpush1.xpose.msra.mxu0 %v2459
    %2465 = vmatprep.subr.mxu0 0.0
    %2466 = vmatpush1.xpose.msra.mxu0 0.0
    %2467 = vmatprep.subr.mxu0 0.0
    %2468 = vmatpush1.xpose.msra.mxu0 0.0
    %2469 = vmatprep.subr.mxu0 0.0
    %2470 = vmatpush1.xpose.msra.mxu0 0.0
    %2471 = vmatprep.subr.mxu0 0.0
    %2472 = vmatpush1.xpose.msra.mxu0 0.0
    %2473 = vmatprep.subr.mxu0 0.0
    %2474 = vmatpush1.xpose.msra.mxu0 0.0
    %2475 = vmatprep.subr.mxu0 0.0
    %2476 = vmatpush1.xpose.msra.mxu0 0.0
    %2477 = vmatprep.subr.mxu0 0.0
    %2478 = vmatpush1.xpose.msra.mxu0 0.0
    %2479 = vmatprep.subr.mxu0 0.0
    %2480 = vmatpush1.xpose.msra.mxu0 0.0
    %2481 = vmatprep.subr.mxu0 0.0
    %2482 = vmatpush1.xpose.msra.mxu0 0.0
    %2483 = vmatprep.subr.mxu0 0.0
    %2484 = vmatpush1.xpose.msra.mxu0 0.0
    %2485 = vmatprep.subr.mxu0 0.0
    %2486 = vmatpush1.xpose.msra.mxu0 0.0
    %2487 = vmatprep.subr.mxu0 0.0
    %2488 = vmatpush1.xpose.msra.mxu0 0.0
    %2489 = vmatprep.subr.mxu0 0.0
    %2490 = vmatpush1.xpose.msra.mxu0 0.0
    %2491 = vmatprep.subr.mxu0 0.0
    %2492 = vmatpush1.xpose.msra.mxu0 0.0
    %2493 = vmatprep.subr.mxu0 0.0
    %2494 = vmatpush1.xpose.msra.mxu0 0.0
    %2495 = vmatprep.subr.mxu0 0.0
    %2496 = vmatpush1.xpose.msra.mxu0 0.0
    %2497 = vmatprep.subr.mxu0 0.0
    %2498 = vmatpush1.xpose.msra.mxu0 0.0
    %2499 = vmatprep.subr.mxu0 0.0
    %2500 = vmatpush1.xpose.msra.mxu0 0.0
    %2501 = vmatprep.subr.mxu0 0.0
    %2502 = vmatpush1.xpose.msra.mxu0 0.0
    %2503 = vmatprep.subr.mxu0 0.0
    %2504 = vmatpush1.xpose.msra.mxu0 0.0
    %2505 = vmatprep.subr.mxu0 0.0
    %2506 = vmatpush1.xpose.msra.mxu0 0.0
    %2507 = vmatprep.subr.mxu0 0.0
    %2508 = vmatpush1.xpose.msra.mxu0 0.0
    %2509 = vmatprep.subr.mxu0 0.0
    %2510 = vmatpush1.xpose.msra.mxu0 0.0
    %2511 = vmatprep.subr.mxu0 0.0
    %2512 = vmatpush1.xpose.msra.mxu0 0.0
    %2513 = vmatprep.subr.mxu0 0.0
    %2514 = vmatpush1.xpose.msra.mxu0 0.0
    %2515 = vmatprep.subr.mxu0 0.0
    %2516 = vmatpush1.xpose.msra.mxu0 0.0
    %2517 = vmatprep.subr.mxu0 0.0
    %2518 = vmatpush1.xpose.msra.mxu0 0.0
    %2519 = vmatprep.subr.mxu0 0.0
    %2520 = vmatpush1.xpose.msra.mxu0 0.0
    %2521 = vmatprep.subr.mxu0 0.0
    %2522 = vmatpush1.xpose.msra.mxu0 0.0
    %2523 = vmatprep.subr.mxu0 0.0
    %2524 = vmatpush1.xpose.msra.mxu0 0.0
    %2525 = vmatprep.mubr.f32.mxu0 0.0
    %2526 = vmatmul.mubr.f32.gmra.mrb[0].mxu0 %v2455
    %v2527 = vpop.f32.mrb[0].mxu0
    %v2528 = vadd.f32 0.0, %v2527
    %v2529 = vpop.f32.mrb[0].mxu0
    %2530 = vdwg.mxu0
    %2531 = vrot.lane.b32.xlu0 %v2092, 96
    %v2532 = vpop.permute.xlu0 %2531
    %2533 = vrot.lane.b32.xlu0 %v2094, 96
    %v2534 = vpop.permute.xlu0 %2533
    %v2535 = vsel %vm427, %v2070, 0
    %v2537 = vsel %vm427, %v2532, 0
    %v2539 = vsel %vm427, %v2534, 0
    %2541 = vmatprep.subr.mxu0 0.0
    %2542 = vmatpush1.xpose.msra.mxu0 %v2537
    %2543 = vmatprep.subr.mxu0 0.0
    %2544 = vmatpush1.xpose.msra.mxu0 %v2539
    %2545 = vmatprep.subr.mxu0 0.0
    %2546 = vmatpush1.xpose.msra.mxu0 0.0
    %2547 = vmatprep.subr.mxu0 0.0
    %2548 = vmatpush1.xpose.msra.mxu0 0.0
    %2549 = vmatprep.subr.mxu0 0.0
    %2550 = vmatpush1.xpose.msra.mxu0 0.0
    %2551 = vmatprep.subr.mxu0 0.0
    %2552 = vmatpush1.xpose.msra.mxu0 0.0
    %2553 = vmatprep.subr.mxu0 0.0
    %2554 = vmatpush1.xpose.msra.mxu0 0.0
    %2555 = vmatprep.subr.mxu0 0.0
    %2556 = vmatpush1.xpose.msra.mxu0 0.0
    %2557 = vmatprep.subr.mxu0 0.0
    %2558 = vmatpush1.xpose.msra.mxu0 0.0
    %2559 = vmatprep.subr.mxu0 0.0
    %2560 = vmatpush1.xpose.msra.mxu0 0.0
    %2561 = vmatprep.subr.mxu0 0.0
    %2562 = vmatpush1.xpose.msra.mxu0 0.0
    %2563 = vmatprep.subr.mxu0 0.0
    %2564 = vmatpush1.xpose.msra.mxu0 0.0
    %2565 = vmatprep.subr.mxu0 0.0
    %2566 = vmatpush1.xpose.msra.mxu0 0.0
    %2567 = vmatprep.subr.mxu0 0.0
    %2568 = vmatpush1.xpose.msra.mxu0 0.0
    %2569 = vmatprep.subr.mxu0 0.0
    %2570 = vmatpush1.xpose.msra.mxu0 0.0
    %2571 = vmatprep.subr.mxu0 0.0
    %2572 = vmatpush1.xpose.msra.mxu0 0.0
    %2573 = vmatprep.subr.mxu0 0.0
    %2574 = vmatpush1.xpose.msra.mxu0 0.0
    %2575 = vmatprep.subr.mxu0 0.0
    %2576 = vmatpush1.xpose.msra.mxu0 0.0
    %2577 = vmatprep.subr.mxu0 0.0
    %2578 = vmatpush1.xpose.msra.mxu0 0.0
    %2579 = vmatprep.subr.mxu0 0.0
    %2580 = vmatpush1.xpose.msra.mxu0 0.0
    %2581 = vmatprep.subr.mxu0 0.0
    %2582 = vmatpush1.xpose.msra.mxu0 0.0
    %2583 = vmatprep.subr.mxu0 0.0
    %2584 = vmatpush1.xpose.msra.mxu0 0.0
    %2585 = vmatprep.subr.mxu0 0.0
    %2586 = vmatpush1.xpose.msra.mxu0 0.0
    %2587 = vmatprep.subr.mxu0 0.0
    %2588 = vmatpush1.xpose.msra.mxu0 0.0
    %2589 = vmatprep.subr.mxu0 0.0
    %2590 = vmatpush1.xpose.msra.mxu0 0.0
    %2591 = vmatprep.subr.mxu0 0.0
    %2592 = vmatpush1.xpose.msra.mxu0 0.0
    %2593 = vmatprep.subr.mxu0 0.0
    %2594 = vmatpush1.xpose.msra.mxu0 0.0
    %2595 = vmatprep.subr.mxu0 0.0
    %2596 = vmatpush1.xpose.msra.mxu0 0.0
    %2597 = vmatprep.subr.mxu0 0.0
    %2598 = vmatpush1.xpose.msra.mxu0 0.0
    %2599 = vmatprep.subr.mxu0 0.0
    %2600 = vmatpush1.xpose.msra.mxu0 0.0
    %2601 = vmatprep.subr.mxu0 0.0
    %2602 = vmatpush1.xpose.msra.mxu0 0.0
    %2603 = vmatprep.subr.mxu0 0.0
    %2604 = vmatpush1.xpose.msra.mxu0 0.0
    %2605 = vmatprep.mubr.f32.mxu0 0.0
    %2606 = vmatmul.mubr.f32.gmra.mrb[0].mxu0 %v2535
    %v2607 = vpop.f32.mrb[0].mxu0
    %v2608 = vadd.f32 0.0, %v2607
    %v2609 = vpop.f32.mrb[0].mxu0
    %2610 = vdwg.mxu0
    %2611 = vrot.lane.b32.xlu0 %v2096, 96
    %v2612 = vpop.permute.xlu0 %2611
    %2613 = vrot.lane.b32.xlu0 %v2098, 96
    %v2614 = vpop.permute.xlu0 %2613
    %v2615 = vsel %vm427, %v2072, 0
    %v2617 = vsel %vm427, %v2612, 0
    %v2619 = vsel %vm427, %v2614, 0
    %2621 = vmatprep.subr.mxu0 0.0
    %2622 = vmatpush1.xpose.msra.mxu0 %v2617
    %2623 = vmatprep.subr.mxu0 0.0
    %2624 = vmatpush1.xpose.msra.mxu0 %v2619
    %2625 = vmatprep.subr.mxu0 0.0
    %2626 = vmatpush1.xpose.msra.mxu0 0.0
    %2627 = vmatprep.subr.mxu0 0.0
    %2628 = vmatpush1.xpose.msra.mxu0 0.0
    %2629 = vmatprep.subr.mxu0 0.0
    %2630 = vmatpush1.xpose.msra.mxu0 0.0
    %2631 = vmatprep.subr.mxu0 0.0
    %2632 = vmatpush1.xpose.msra.mxu0 0.0
    %2633 = vmatprep.subr.mxu0 0.0
    %2634 = vmatpush1.xpose.msra.mxu0 0.0
    %2635 = vmatprep.subr.mxu0 0.0
    %2636 = vmatpush1.xpose.msra.mxu0 0.0
    %2637 = vmatprep.subr.mxu0 0.0
    %2638 = vmatpush1.xpose.msra.mxu0 0.0
    %2639 = vmatprep.subr.mxu0 0.0
    %2640 = vmatpush1.xpose.msra.mxu0 0.0
    %2641 = vmatprep.subr.mxu0 0.0
    %2642 = vmatpush1.xpose.msra.mxu0 0.0
    %2643 = vmatprep.subr.mxu0 0.0
    %2644 = vmatpush1.xpose.msra.mxu0 0.0
    %2645 = vmatprep.subr.mxu0 0.0
    %2646 = vmatpush1.xpose.msra.mxu0 0.0
    %2647 = vmatprep.subr.mxu0 0.0
    %2648 = vmatpush1.xpose.msra.mxu0 0.0
    %2649 = vmatprep.subr.mxu0 0.0
    %2650 = vmatpush1.xpose.msra.mxu0 0.0
    %2651 = vmatprep.subr.mxu0 0.0
    %2652 = vmatpush1.xpose.msra.mxu0 0.0
    %2653 = vmatprep.subr.mxu0 0.0
    %2654 = vmatpush1.xpose.msra.mxu0 0.0
    %2655 = vmatprep.subr.mxu0 0.0
    %2656 = vmatpush1.xpose.msra.mxu0 0.0
    %2657 = vmatprep.subr.mxu0 0.0
    %2658 = vmatpush1.xpose.msra.mxu0 0.0
    %2659 = vmatprep.subr.mxu0 0.0
    %2660 = vmatpush1.xpose.msra.mxu0 0.0
    %2661 = vmatprep.subr.mxu0 0.0
    %2662 = vmatpush1.xpose.msra.mxu0 0.0
    %2663 = vmatprep.subr.mxu0 0.0
    %2664 = vmatpush1.xpose.msra.mxu0 0.0
    %2665 = vmatprep.subr.mxu0 0.0
    %2666 = vmatpush1.xpose.msra.mxu0 0.0
    %2667 = vmatprep.subr.mxu0 0.0
    %2668 = vmatpush1.xpose.msra.mxu0 0.0
    %2669 = vmatprep.subr.mxu0 0.0
    %2670 = vmatpush1.xpose.msra.mxu0 0.0
    %2671 = vmatprep.subr.mxu0 0.0
    %2672 = vmatpush1.xpose.msra.mxu0 0.0
    %2673 = vmatprep.subr.mxu0 0.0
    %2674 = vmatpush1.xpose.msra.mxu0 0.0
    %2675 = vmatprep.subr.mxu0 0.0
    %2676 = vmatpush1.xpose.msra.mxu0 0.0
    %2677 = vmatprep.subr.mxu0 0.0
    %2678 = vmatpush1.xpose.msra.mxu0 0.0
    %2679 = vmatprep.subr.mxu0 0.0
    %2680 = vmatpush1.xpose.msra.mxu0 0.0
    %2681 = vmatprep.subr.mxu0 0.0
    %2682 = vmatpush1.xpose.msra.mxu0 0.0
    %2683 = vmatprep.subr.mxu0 0.0
    %2684 = vmatpush1.xpose.msra.mxu0 0.0
    %2685 = vmatprep.mubr.f32.mxu0 0.0
    %2686 = vmatmul.mubr.f32.gmra.mrb[0].mxu0 %v2615
    %v2687 = vpop.f32.mrb[0].mxu0
    %v2688 = vadd.f32 0.0, %v2687
    %v2689 = vpop.f32.mrb[0].mxu0
    %2690 = vdwg.mxu0
    %2691 = vrot.lane.b32.xlu0 %v2100, 96
    %v2692 = vpop.permute.xlu0 %2691
    %2693 = vrot.lane.b32.xlu0 %v2102, 96
    %v2694 = vpop.permute.xlu0 %2693
    %v2695 = vsel %vm427, %v2074, 0
    %v2697 = vsel %vm427, %v2692, 0
    %v2699 = vsel %vm427, %v2694, 0
    %2701 = vmatprep.subr.mxu0 0.0
    %2702 = vmatpush1.xpose.msra.mxu0 %v2697
    %2703 = vmatprep.subr.mxu0 0.0
    %2704 = vmatpush1.xpose.msra.mxu0 %v2699
    %2705 = vmatprep.subr.mxu0 0.0
    %2706 = vmatpush1.xpose.msra.mxu0 0.0
    %2707 = vmatprep.subr.mxu0 0.0
    %2708 = vmatpush1.xpose.msra.mxu0 0.0
    %2709 = vmatprep.subr.mxu0 0.0
    %2710 = vmatpush1.xpose.msra.mxu0 0.0
    %2711 = vmatprep.subr.mxu0 0.0
    %2712 = vmatpush1.xpose.msra.mxu0 0.0
    %2713 = vmatprep.subr.mxu0 0.0
    %2714 = vmatpush1.xpose.msra.mxu0 0.0
    %2715 = vmatprep.subr.mxu0 0.0
    %2716 = vmatpush1.xpose.msra.mxu0 0.0
    %2717 = vmatprep.subr.mxu0 0.0
    %2718 = vmatpush1.xpose.msra.mxu0 0.0
    %2719 = vmatprep.subr.mxu0 0.0
    %2720 = vmatpush1.xpose.msra.mxu0 0.0
    %2721 = vmatprep.subr.mxu0 0.0
    %2722 = vmatpush1.xpose.msra.mxu0 0.0
    %2723 = vmatprep.subr.mxu0 0.0
    %2724 = vmatpush1.xpose.msra.mxu0 0.0
    %2725 = vmatprep.subr.mxu0 0.0
    %2726 = vmatpush1.xpose.msra.mxu0 0.0
    %2727 = vmatprep.subr.mxu0 0.0
    %2728 = vmatpush1.xpose.msra.mxu0 0.0
    %2729 = vmatprep.subr.mxu0 0.0
    %2730 = vmatpush1.xpose.msra.mxu0 0.0
    %2731 = vmatprep.subr.mxu0 0.0
    %2732 = vmatpush1.xpose.msra.mxu0 0.0
    %2733 = vmatprep.subr.mxu0 0.0
    %2734 = vmatpush1.xpose.msra.mxu0 0.0
    %2735 = vmatprep.subr.mxu0 0.0
    %2736 = vmatpush1.xpose.msra.mxu0 0.0
    %2737 = vmatprep.subr.mxu0 0.0
    %2738 = vmatpush1.xpose.msra.mxu0 0.0
    %2739 = vmatprep.subr.mxu0 0.0
    %2740 = vmatpush1.xpose.msra.mxu0 0.0
    %2741 = vmatprep.subr.mxu0 0.0
    %2742 = vmatpush1.xpose.msra.mxu0 0.0
    %2743 = vmatprep.subr.mxu0 0.0
    %2744 = vmatpush1.xpose.msra.mxu0 0.0
    %2745 = vmatprep.subr.mxu0 0.0
    %2746 = vmatpush1.xpose.msra.mxu0 0.0
    %2747 = vmatprep.subr.mxu0 0.0
    %2748 = vmatpush1.xpose.msra.mxu0 0.0
    %2749 = vmatprep.subr.mxu0 0.0
    %2750 = vmatpush1.xpose.msra.mxu0 0.0
    %2751 = vmatprep.subr.mxu0 0.0
    %2752 = vmatpush1.xpose.msra.mxu0 0.0
    %2753 = vmatprep.subr.mxu0 0.0
    %2754 = vmatpush1.xpose.msra.mxu0 0.0
    %2755 = vmatprep.subr.mxu0 0.0
    %2756 = vmatpush1.xpose.msra.mxu0 0.0
    %2757 = vmatprep.subr.mxu0 0.0
    %2758 = vmatpush1.xpose.msra.mxu0 0.0
    %2759 = vmatprep.subr.mxu0 0.0
    %2760 = vmatpush1.xpose.msra.mxu0 0.0
    %2761 = vmatprep.subr.mxu0 0.0
    %2762 = vmatpush1.xpose.msra.mxu0 0.0
    %2763 = vmatprep.subr.mxu0 0.0
    %2764 = vmatpush1.xpose.msra.mxu0 0.0
    %2765 = vmatprep.mubr.f32.mxu0 0.0
    %2766 = vmatmul.mubr.f32.gmra.mrb[0].mxu0 %v2695
    %v2767 = vpop.f32.mrb[0].mxu0
    %v2768 = vadd.f32 0.0, %v2767
    %v2769 = vpop.f32.mrb[0].mxu0
    %2770 = vdwg.mxu0
    %v2771 = vsel %vm1756, %v2208, -inf
    %2772 = vmax.xlane.f32.xlu0 %v2771
    %v2773 = vpop.xlane.xlu0 %2772
    %v2774 = vsel %vm1756, %v2288, -inf
    %2775 = vmax.xlane.f32.xlu0 %v2774
    %v2776 = vpop.xlane.xlu0 %2775
    %v2777 = vsel %vm1756, %v2368, -inf
    %2778 = vmax.xlane.f32.xlu0 %v2777
    %v2779 = vpop.xlane.xlu0 %2778
    %v2780 = vsel %vm1756, %v2448, -inf
    %2781 = vmax.xlane.f32.xlu0 %v2780
    %v2782 = vpop.xlane.xlu0 %2781
    %v2783 = vsel %vm1756, %v2528, -inf
    %2784 = vmax.xlane.f32.xlu0 %v2783
    %v2785 = vpop.xlane.xlu0 %2784
    %v2786 = vsel %vm1756, %v2608, -inf
    %2787 = vmax.xlane.f32.xlu0 %v2786
    %v2788 = vpop.xlane.xlu0 %2787
    %v2789 = vsel %vm1756, %v2688, -inf
    %2790 = vmax.xlane.f32.xlu0 %v2789
    %v2791 = vpop.xlane.xlu0 %2790
    %v2792 = vsel %vm1756, %v2768, -inf
    %2793 = vmax.xlane.f32.xlu0 %v2792
    %v2794 = vpop.xlane.xlu0 %2793
    %v2795 = vsub.f32 %v2208, %v2773
    %v2796 = vsub.f32 %v2288, %v2776
    %v2797 = vsub.f32 %v2368, %v2779
    %v2798 = vsub.f32 %v2448, %v2782
    %v2799 = vsub.f32 %v2528, %v2785
    %v2800 = vsub.f32 %v2608, %v2788
    %v2801 = vsub.f32 %v2688, %v2791
    %v2802 = vsub.f32 %v2768, %v2794
    %v2803 = vmul.f32 %v2795, 1.442695
    %v2804 = vpow.pop %v2803
    %v2805 = vmul.f32 %v2796, 1.442695
    %v2806 = vpow.pop %v2805
    %v2807 = vmul.f32 %v2797, 1.442695
    %v2808 = vpow.pop %v2807
    %v2809 = vmul.f32 %v2798, 1.442695
    %v2810 = vpow.pop %v2809
    %v2811 = vmul.f32 %v2799, 1.442695
    %v2812 = vpow.pop %v2811
    %v2813 = vmul.f32 %v2800, 1.442695
    %v2814 = vpow.pop %v2813
    %v2815 = vmul.f32 %v2801, 1.442695
    %v2816 = vpow.pop %v2815
    %v2817 = vmul.f32 %v2802, 1.442695
    %v2818 = vpow.pop %v2817
    %v2819 = vsel %vm1756, %v2804, 0.0
    %2820 = vadd.xlane.f32.xlu0 %v2819
    %v2821 = vpop.xlane.xlu0 %2820
    %v2822 = vsel %vm1756, %v2806, 0.0
    %2823 = vadd.xlane.f32.xlu0 %v2822
    %v2824 = vpop.xlane.xlu0 %2823
    %v2825 = vsel %vm1756, %v2808, 0.0
    %2826 = vadd.xlane.f32.xlu0 %v2825
    %v2827 = vpop.xlane.xlu0 %2826
    %v2828 = vsel %vm1756, %v2810, 0.0
    %2829 = vadd.xlane.f32.xlu0 %v2828
    %v2830 = vpop.xlane.xlu0 %2829
    %v2831 = vsel %vm1756, %v2812, 0.0
    %2832 = vadd.xlane.f32.xlu0 %v2831
    %v2833 = vpop.xlane.xlu0 %2832
    %v2834 = vsel %vm1756, %v2814, 0.0
    %2835 = vadd.xlane.f32.xlu0 %v2834
    %v2836 = vpop.xlane.xlu0 %2835
    %v2837 = vsel %vm1756, %v2816, 0.0
    %2838 = vadd.xlane.f32.xlu0 %v2837
    %v2839 = vpop.xlane.xlu0 %2838
    %v2840 = vsel %vm1756, %v2818, 0.0
    %2841 = vadd.xlane.f32.xlu0 %v2840
    %v2842 = vpop.xlane.xlu0 %2841
    %v2843 = vrcp.pop %v2821
    %v2844 = vmul.f32 %v2804, %v2843
    %v2845 = vrcp.pop %v2824
    %v2846 = vmul.f32 %v2806, %v2845
    %v2847 = vrcp.pop %v2827
    %v2848 = vmul.f32 %v2808, %v2847
    %v2849 = vrcp.pop %v2830
    %v2850 = vmul.f32 %v2810, %v2849
    %v2851 = vrcp.pop %v2833
    %v2852 = vmul.f32 %v2812, %v2851
    %v2853 = vrcp.pop %v2836
    %v2854 = vmul.f32 %v2814, %v2853
    %v2855 = vrcp.pop %v2839
    %v2856 = vmul.f32 %v2816, %v2855
    %v2857 = vrcp.pop %v2842
    %v2858 = vmul.f32 %v2818, %v2857
    %2859 = vrot.lane.b32.xlu0 %v2041, 64
    %v2860 = vpop.permute.xlu0 %2859
    %2861 = vrot.lane.b32.xlu0 %v2046, 64
    %v2862 = vpop.permute.xlu0 %2861
    %v2866 = vsel %vm1756, %v2844, 0
    %2868 = vmatprep.subr.mxu0 0.0
    %2869 = vmatpush1.msra.mxu0 %v2860
    %2870 = vmatprep.subr.mxu0 0.0
    %2871 = vmatpush1.msra.mxu0 %v2862
    %2872 = vmatprep.subr.mxu0 0.0
    %2873 = vmatpush1.msra.mxu0 0.0
    %2874 = vmatprep.subr.mxu0 0.0
    %2875 = vmatpush1.msra.mxu0 0.0
    %2876 = vmatprep.subr.mxu0 0.0
    %2877 = vmatpush1.msra.mxu0 0.0
    %2878 = vmatprep.subr.mxu0 0.0
    %2879 = vmatpush1.msra.mxu0 0.0
    %2880 = vmatprep.subr.mxu0 0.0
    %2881 = vmatpush1.msra.mxu0 0.0
    %2882 = vmatprep.subr.mxu0 0.0
    %2883 = vmatpush1.msra.mxu0 0.0
    %2884 = vmatprep.subr.mxu0 0.0
    %2885 = vmatpush1.msra.mxu0 0.0
    %2886 = vmatprep.subr.mxu0 0.0
    %2887 = vmatpush1.msra.mxu0 0.0
    %2888 = vmatprep.subr.mxu0 0.0
    %2889 = vmatpush1.msra.mxu0 0.0
    %2890 = vmatprep.subr.mxu0 0.0
    %2891 = vmatpush1.msra.mxu0 0.0
    %2892 = vmatprep.subr.mxu0 0.0
    %2893 = vmatpush1.msra.mxu0 0.0
    %2894 = vmatprep.subr.mxu0 0.0
    %2895 = vmatpush1.msra.mxu0 0.0
    %2896 = vmatprep.subr.mxu0 0.0
    %2897 = vmatpush1.msra.mxu0 0.0
    %2898 = vmatprep.subr.mxu0 0.0
    %2899 = vmatpush1.msra.mxu0 0.0
    %2900 = vmatprep.subr.mxu0 0.0
    %2901 = vmatpush1.msra.mxu0 0.0
    %2902 = vmatprep.subr.mxu0 0.0
    %2903 = vmatpush1.msra.mxu0 0.0
    %2904 = vmatprep.subr.mxu0 0.0
    %2905 = vmatpush1.msra.mxu0 0.0
    %2906 = vmatprep.subr.mxu0 0.0
    %2907 = vmatpush1.msra.mxu0 0.0
    %2908 = vmatprep.subr.mxu0 0.0
    %2909 = vmatpush1.msra.mxu0 0.0
    %2910 = vmatprep.subr.mxu0 0.0
    %2911 = vmatpush1.msra.mxu0 0.0
    %2912 = vmatprep.subr.mxu0 0.0
    %2913 = vmatpush1.msra.mxu0 0.0
    %2914 = vmatprep.subr.mxu0 0.0
    %2915 = vmatpush1.msra.mxu0 0.0
    %2916 = vmatprep.subr.mxu0 0.0
    %2917 = vmatpush1.msra.mxu0 0.0
    %2918 = vmatprep.subr.mxu0 0.0
    %2919 = vmatpush1.msra.mxu0 0.0
    %2920 = vmatprep.subr.mxu0 0.0
    %2921 = vmatpush1.msra.mxu0 0.0
    %2922 = vmatprep.subr.mxu0 0.0
    %2923 = vmatpush1.msra.mxu0 0.0
    %2924 = vmatprep.subr.mxu0 0.0
    %2925 = vmatpush1.msra.mxu0 0.0
    %2926 = vmatprep.subr.mxu0 0.0
    %2927 = vmatpush1.msra.mxu0 0.0
    %2928 = vmatprep.subr.mxu0 0.0
    %2929 = vmatpush1.msra.mxu0 0.0
    %2930 = vmatprep.subr.mxu0 0.0
    %2931 = vmatpush1.msra.mxu0 0.0
    %2932 = vmatprep.mubr.f32.mxu0 0.0
    %2933 = vmatmul.mubr.f32.gmra.mrb[0].mxu0 %v2866
    %v2934 = vpop.f32.mrb[0].mxu0
    %v2935 = vadd.f32 0.0, %v2934
    %v2936 = vpop.f32.mrb[0].mxu0
    %2937 = vdwg.mxu0
    %2938 = vrot.lane.b32.xlu0 %v2051, 64
    %v2939 = vpop.permute.xlu0 %2938
    %2940 = vrot.lane.b32.xlu0 %v2056, 64
    %v2941 = vpop.permute.xlu0 %2940
    %v2945 = vsel %vm1756, %v2846, 0
    %2947 = vmatprep.subr.mxu0 0.0
    %2948 = vmatpush1.msra.mxu0 %v2939
    %2949 = vmatprep.subr.mxu0 0.0
    %2950 = vmatpush1.msra.mxu0 %v2941
    %2951 = vmatprep.subr.mxu0 0.0
    %2952 = vmatpush1.msra.mxu0 0.0
    %2953 = vmatprep.subr.mxu0 0.0
    %2954 = vmatpush1.msra.mxu0 0.0
    %2955 = vmatprep.subr.mxu0 0.0
    %2956 = vmatpush1.msra.mxu0 0.0
    %2957 = vmatprep.subr.mxu0 0.0
    %2958 = vmatpush1.msra.mxu0 0.0
    %2959 = vmatprep.subr.mxu0 0.0
    %2960 = vmatpush1.msra.mxu0 0.0
    %2961 = vmatprep.subr.mxu0 0.0
    %2962 = vmatpush1.msra.mxu0 0.0
    %2963 = vmatprep.subr.mxu0 0.0
    %2964 = vmatpush1.msra.mxu0 0.0
    %2965 = vmatprep.subr.mxu0 0.0
    %2966 = vmatpush1.msra.mxu0 0.0
    %2967 = vmatprep.subr.mxu0 0.0
    %2968 = vmatpush1.msra.mxu0 0.0
    %2969 = vmatprep.subr.mxu0 0.0
    %2970 = vmatpush1.msra.mxu0 0.0
    %2971 = vmatprep.subr.mxu0 0.0
    %2972 = vmatpush1.msra.mxu0 0.0
    %2973 = vmatprep.subr.mxu0 0.0
    %2974 = vmatpush1.msra.mxu0 0.0
    %2975 = vmatprep.subr.mxu0 0.0
    %2976 = vmatpush1.msra.mxu0 0.0
    %2977 = vmatprep.subr.mxu0 0.0
    %2978 = vmatpush1.msra.mxu0 0.0
    %2979 = vmatprep.subr.mxu0 0.0
    %2980 = vmatpush1.msra.mxu0 0.0
    %2981 = vmatprep.subr.mxu0 0.0
    %2982 = vmatpush1.msra.mxu0 0.0
    %2983 = vmatprep.subr.mxu0 0.0
    %2984 = vmatpush1.msra.mxu0 0.0
    %2985 = vmatprep.subr.mxu0 0.0
    %2986 = vmatpush1.msra.mxu0 0.0
    %2987 = vmatprep.subr.mxu0 0.0
    %2988 = vmatpush1.msra.mxu0 0.0
    %2989 = vmatprep.subr.mxu0 0.0
    %2990 = vmatpush1.msra.mxu0 0.0
    %2991 = vmatprep.subr.mxu0 0.0
    %2992 = vmatpush1.msra.mxu0 0.0
    %2993 = vmatprep.subr.mxu0 0.0
    %2994 = vmatpush1.msra.mxu0 0.0
    %2995 = vmatprep.subr.mxu0 0.0
    %2996 = vmatpush1.msra.mxu0 0.0
    %2997 = vmatprep.subr.mxu0 0.0
    %2998 = vmatpush1.msra.mxu0 0.0
    %2999 = vmatprep.subr.mxu0 0.0
    %3000 = vmatpush1.msra.mxu0 0.0
    %3001 = vmatprep.subr.mxu0 0.0
    %3002 = vmatpush1.msra.mxu0 0.0
    %3003 = vmatprep.subr.mxu0 0.0
    %3004 = vmatpush1.msra.mxu0 0.0
    %3005 = vmatprep.subr.mxu0 0.0
    %3006 = vmatpush1.msra.mxu0 0.0
    %3007 = vmatprep.subr.mxu0 0.0
    %3008 = vmatpush1.msra.mxu0 0.0
    %3009 = vmatprep.subr.mxu0 0.0
    %3010 = vmatpush1.msra.mxu0 0.0
    %3011 = vmatprep.mubr.f32.mxu0 0.0
    %3012 = vmatmul.mubr.f32.gmra.mrb[0].mxu0 %v2945
    %v3013 = vpop.f32.mrb[0].mxu0
    %v3014 = vadd.f32 0.0, %v3013
    %v3015 = vpop.f32.mrb[0].mxu0
    %3016 = vdwg.mxu0
    %3017 = vrot.lane.b32.xlu0 %v2108, 64
    %v3018 = vpop.permute.xlu0 %3017
    %3019 = vrot.lane.b32.xlu0 %v2110, 64
    %v3020 = vpop.permute.xlu0 %3019
    %v3024 = vsel %vm1756, %v2848, 0
    %3026 = vmatprep.subr.mxu0 0.0
    %3027 = vmatpush1.msra.mxu0 %v3018
    %3028 = vmatprep.subr.mxu0 0.0
    %3029 = vmatpush1.msra.mxu0 %v3020
    %3030 = vmatprep.subr.mxu0 0.0
    %3031 = vmatpush1.msra.mxu0 0.0
    %3032 = vmatprep.subr.mxu0 0.0
    %3033 = vmatpush1.msra.mxu0 0.0
    %3034 = vmatprep.subr.mxu0 0.0
    %3035 = vmatpush1.msra.mxu0 0.0
    %3036 = vmatprep.subr.mxu0 0.0
    %3037 = vmatpush1.msra.mxu0 0.0
    %3038 = vmatprep.subr.mxu0 0.0
    %3039 = vmatpush1.msra.mxu0 0.0
    %3040 = vmatprep.subr.mxu0 0.0
    %3041 = vmatpush1.msra.mxu0 0.0
    %3042 = vmatprep.subr.mxu0 0.0
    %3043 = vmatpush1.msra.mxu0 0.0
    %3044 = vmatprep.subr.mxu0 0.0
    %3045 = vmatpush1.msra.mxu0 0.0
    %3046 = vmatprep.subr.mxu0 0.0
    %3047 = vmatpush1.msra.mxu0 0.0
    %3048 = vmatprep.subr.mxu0 0.0
    %3049 = vmatpush1.msra.mxu0 0.0
    %3050 = vmatprep.subr.mxu0 0.0
    %3051 = vmatpush1.msra.mxu0 0.0
    %3052 = vmatprep.subr.mxu0 0.0
    %3053 = vmatpush1.msra.mxu0 0.0
    %3054 = vmatprep.subr.mxu0 0.0
    %3055 = vmatpush1.msra.mxu0 0.0
    %3056 = vmatprep.subr.mxu0 0.0
    %3057 = vmatpush1.msra.mxu0 0.0
    %3058 = vmatprep.subr.mxu0 0.0
    %3059 = vmatpush1.msra.mxu0 0.0
    %3060 = vmatprep.subr.mxu0 0.0
    %3061 = vmatpush1.msra.mxu0 0.0
    %3062 = vmatprep.subr.mxu0 0.0
    %3063 = vmatpush1.msra.mxu0 0.0
    %3064 = vmatprep.subr.mxu0 0.0
    %3065 = vmatpush1.msra.mxu0 0.0
    %3066 = vmatprep.subr.mxu0 0.0
    %3067 = vmatpush1.msra.mxu0 0.0
    %3068 = vmatprep.subr.mxu0 0.0
    %3069 = vmatpush1.msra.mxu0 0.0
    %3070 = vmatprep.subr.mxu0 0.0
    %3071 = vmatpush1.msra.mxu0 0.0
    %3072 = vmatprep.subr.mxu0 0.0
    %3073 = vmatpush1.msra.mxu0 0.0
    %3074 = vmatprep.subr.mxu0 0.0
    %3075 = vmatpush1.msra.mxu0 0.0
    %3076 = vmatprep.subr.mxu0 0.0
    %3077 = vmatpush1.msra.mxu0 0.0
    %3078 = vmatprep.subr.mxu0 0.0
    %3079 = vmatpush1.msra.mxu0 0.0
    %3080 = vmatprep.subr.mxu0 0.0
    %3081 = vmatpush1.msra.mxu0 0.0
    %3082 = vmatprep.subr.mxu0 0.0
    %3083 = vmatpush1.msra.mxu0 0.0
    %3084 = vmatprep.subr.mxu0 0.0
    %3085 = vmatpush1.msra.mxu0 0.0
    %3086 = vmatprep.subr.mxu0 0.0
    %3087 = vmatpush1.msra.mxu0 0.0
    %3088 = vmatprep.subr.mxu0 0.0
    %3089 = vmatpush1.msra.mxu0 0.0
    %3090 = vmatprep.mubr.f32.mxu0 0.0
    %3091 = vmatmul.mubr.f32.gmra.mrb[0].mxu0 %v3024
    %v3092 = vpop.f32.mrb[0].mxu0
    %v3093 = vadd.f32 0.0, %v3092
    %v3094 = vpop.f32.mrb[0].mxu0
    %3095 = vdwg.mxu0
    %3096 = vrot.lane.b32.xlu0 %v2112, 64
    %v3097 = vpop.permute.xlu0 %3096
    %3098 = vrot.lane.b32.xlu0 %v2114, 64
    %v3099 = vpop.permute.xlu0 %3098
    %v3103 = vsel %vm1756, %v2850, 0
    %3105 = vmatprep.subr.mxu0 0.0
    %3106 = vmatpush1.msra.mxu0 %v3097
    %3107 = vmatprep.subr.mxu0 0.0
    %3108 = vmatpush1.msra.mxu0 %v3099
    %3109 = vmatprep.subr.mxu0 0.0
    %3110 = vmatpush1.msra.mxu0 0.0
    %3111 = vmatprep.subr.mxu0 0.0
    %3112 = vmatpush1.msra.mxu0 0.0
    %3113 = vmatprep.subr.mxu0 0.0
    %3114 = vmatpush1.msra.mxu0 0.0
    %3115 = vmatprep.subr.mxu0 0.0
    %3116 = vmatpush1.msra.mxu0 0.0
    %3117 = vmatprep.subr.mxu0 0.0
    %3118 = vmatpush1.msra.mxu0 0.0
    %3119 = vmatprep.subr.mxu0 0.0
    %3120 = vmatpush1.msra.mxu0 0.0
    %3121 = vmatprep.subr.mxu0 0.0
    %3122 = vmatpush1.msra.mxu0 0.0
    %3123 = vmatprep.subr.mxu0 0.0
    %3124 = vmatpush1.msra.mxu0 0.0
    %3125 = vmatprep.subr.mxu0 0.0
    %3126 = vmatpush1.msra.mxu0 0.0
    %3127 = vmatprep.subr.mxu0 0.0
    %3128 = vmatpush1.msra.mxu0 0.0
    %3129 = vmatprep.subr.mxu0 0.0
    %3130 = vmatpush1.msra.mxu0 0.0
    %3131 = vmatprep.subr.mxu0 0.0
    %3132 = vmatpush1.msra.mxu0 0.0
    %3133 = vmatprep.subr.mxu0 0.0
    %3134 = vmatpush1.msra.mxu0 0.0
    %3135 = vmatprep.subr.mxu0 0.0
    %3136 = vmatpush1.msra.mxu0 0.0
    %3137 = vmatprep.subr.mxu0 0.0
    %3138 = vmatpush1.msra.mxu0 0.0
    %3139 = vmatprep.subr.mxu0 0.0
    %3140 = vmatpush1.msra.mxu0 0.0
    %3141 = vmatprep.subr.mxu0 0.0
    %3142 = vmatpush1.msra.mxu0 0.0
    %3143 = vmatprep.subr.mxu0 0.0
    %3144 = vmatpush1.msra.mxu0 0.0
    %3145 = vmatprep.subr.mxu0 0.0
    %3146 = vmatpush1.msra.mxu0 0.0
    %3147 = vmatprep.subr.mxu0 0.0
    %3148 = vmatpush1.msra.mxu0 0.0
    %3149 = vmatprep.subr.mxu0 0.0
    %3150 = vmatpush1.msra.mxu0 0.0
    %3151 = vmatprep.subr.mxu0 0.0
    %3152 = vmatpush1.msra.mxu0 0.0
    %3153 = vmatprep.subr.mxu0 0.0
    %3154 = vmatpush1.msra.mxu0 0.0
    %3155 = vmatprep.subr.mxu0 0.0
    %3156 = vmatpush1.msra.mxu0 0.0
    %3157 = vmatprep.subr.mxu0 0.0
    %3158 = vmatpush1.msra.mxu0 0.0
    %3159 = vmatprep.subr.mxu0 0.0
    %3160 = vmatpush1.msra.mxu0 0.0
    %3161 = vmatprep.subr.mxu0 0.0
    %3162 = vmatpush1.msra.mxu0 0.0
    %3163 = vmatprep.subr.mxu0 0.0
    %3164 = vmatpush1.msra.mxu0 0.0
    %3165 = vmatprep.subr.mxu0 0.0
    %3166 = vmatpush1.msra.mxu0 0.0
    %3167 = vmatprep.subr.mxu0 0.0
    %3168 = vmatpush1.msra.mxu0 0.0
    %3169 = vmatprep.mubr.f32.mxu0 0.0
    %3170 = vmatmul.mubr.f32.gmra.mrb[0].mxu0 %v3103
    %v3171 = vpop.f32.mrb[0].mxu0
    %v3172 = vadd.f32 0.0, %v3171
    %v3173 = vpop.f32.mrb[0].mxu0
    %3174 = vdwg.mxu0
    %3175 = vrot.lane.b32.xlu0 %v2116, 64
    %v3176 = vpop.permute.xlu0 %3175
    %3177 = vrot.lane.b32.xlu0 %v2118, 64
    %v3178 = vpop.permute.xlu0 %3177
    %v3182 = vsel %vm1756, %v2852, 0
    %3184 = vmatprep.subr.mxu0 0.0
    %3185 = vmatpush1.msra.mxu0 %v3176
    %3186 = vmatprep.subr.mxu0 0.0
    %3187 = vmatpush1.msra.mxu0 %v3178
    %3188 = vmatprep.subr.mxu0 0.0
    %3189 = vmatpush1.msra.mxu0 0.0
    %3190 = vmatprep.subr.mxu0 0.0
    %3191 = vmatpush1.msra.mxu0 0.0
    %3192 = vmatprep.subr.mxu0 0.0
    %3193 = vmatpush1.msra.mxu0 0.0
    %3194 = vmatprep.subr.mxu0 0.0
    %3195 = vmatpush1.msra.mxu0 0.0
    %3196 = vmatprep.subr.mxu0 0.0
    %3197 = vmatpush1.msra.mxu0 0.0
    %3198 = vmatprep.subr.mxu0 0.0
    %3199 = vmatpush1.msra.mxu0 0.0
    %3200 = vmatprep.subr.mxu0 0.0
    %3201 = vmatpush1.msra.mxu0 0.0
    %3202 = vmatprep.subr.mxu0 0.0
    %3203 = vmatpush1.msra.mxu0 0.0
    %3204 = vmatprep.subr.mxu0 0.0
    %3205 = vmatpush1.msra.mxu0 0.0
    %3206 = vmatprep.subr.mxu0 0.0
    %3207 = vmatpush1.msra.mxu0 0.0
    %3208 = vmatprep.subr.mxu0 0.0
    %3209 = vmatpush1.msra.mxu0 0.0
    %3210 = vmatprep.subr.mxu0 0.0
    %3211 = vmatpush1.msra.mxu0 0.0
    %3212 = vmatprep.subr.mxu0 0.0
    %3213 = vmatpush1.msra.mxu0 0.0
    %3214 = vmatprep.subr.mxu0 0.0
    %3215 = vmatpush1.msra.mxu0 0.0
    %3216 = vmatprep.subr.mxu0 0.0
    %3217 = vmatpush1.msra.mxu0 0.0
    %3218 = vmatprep.subr.mxu0 0.0
    %3219 = vmatpush1.msra.mxu0 0.0
    %3220 = vmatprep.subr.mxu0 0.0
    %3221 = vmatpush1.msra.mxu0 0.0
    %3222 = vmatprep.subr.mxu0 0.0
    %3223 = vmatpush1.msra.mxu0 0.0
    %3224 = vmatprep.subr.mxu0 0.0
    %3225 = vmatpush1.msra.mxu0 0.0
    %3226 = vmatprep.subr.mxu0 0.0
    %3227 = vmatpush1.msra.mxu0 0.0
    %3228 = vmatprep.subr.mxu0 0.0
    %3229 = vmatpush1.msra.mxu0 0.0
    %3230 = vmatprep.subr.mxu0 0.0
    %3231 = vmatpush1.msra.mxu0 0.0
    %3232 = vmatprep.subr.mxu0 0.0
    %3233 = vmatpush1.msra.mxu0 0.0
    %3234 = vmatprep.subr.mxu0 0.0
    %3235 = vmatpush1.msra.mxu0 0.0
    %3236 = vmatprep.subr.mxu0 0.0
    %3237 = vmatpush1.msra.mxu0 0.0
    %3238 = vmatprep.subr.mxu0 0.0
    %3239 = vmatpush1.msra.mxu0 0.0
    %3240 = vmatprep.subr.mxu0 0.0
    %3241 = vmatpush1.msra.mxu0 0.0
    %3242 = vmatprep.subr.mxu0 0.0
    %3243 = vmatpush1.msra.mxu0 0.0
    %3244 = vmatprep.subr.mxu0 0.0
    %3245 = vmatpush1.msra.mxu0 0.0
    %3246 = vmatprep.subr.mxu0 0.0
    %3247 = vmatpush1.msra.mxu0 0.0
    %3248 = vmatprep.mubr.f32.mxu0 0.0
    %3249 = vmatmul.mubr.f32.gmra.mrb[0].mxu0 %v3182
    %v3250 = vpop.f32.mrb[0].mxu0
    %v3251 = vadd.f32 0.0, %v3250
    %v3252 = vpop.f32.mrb[0].mxu0
    %3253 = vdwg.mxu0
    %3254 = vrot.lane.b32.xlu0 %v2120, 64
    %v3255 = vpop.permute.xlu0 %3254
    %3256 = vrot.lane.b32.xlu0 %v2122, 64
    %v3257 = vpop.permute.xlu0 %3256
    %v3261 = vsel %vm1756, %v2854, 0
    %3263 = vmatprep.subr.mxu0 0.0
    %3264 = vmatpush1.msra.mxu0 %v3255
    %3265 = vmatprep.subr.mxu0 0.0
    %3266 = vmatpush1.msra.mxu0 %v3257
    %3267 = vmatprep.subr.mxu0 0.0
    %3268 = vmatpush1.msra.mxu0 0.0
    %3269 = vmatprep.subr.mxu0 0.0
    %3270 = vmatpush1.msra.mxu0 0.0
    %3271 = vmatprep.subr.mxu0 0.0
    %3272 = vmatpush1.msra.mxu0 0.0
    %3273 = vmatprep.subr.mxu0 0.0
    %3274 = vmatpush1.msra.mxu0 0.0
    %3275 = vmatprep.subr.mxu0 0.0
    %3276 = vmatpush1.msra.mxu0 0.0
    %3277 = vmatprep.subr.mxu0 0.0
    %3278 = vmatpush1.msra.mxu0 0.0
    %3279 = vmatprep.subr.mxu0 0.0
    %3280 = vmatpush1.msra.mxu0 0.0
    %3281 = vmatprep.subr.mxu0 0.0
    %3282 = vmatpush1.msra.mxu0 0.0
    %3283 = vmatprep.subr.mxu0 0.0
    %3284 = vmatpush1.msra.mxu0 0.0
    %3285 = vmatprep.subr.mxu0 0.0
    %3286 = vmatpush1.msra.mxu0 0.0
    %3287 = vmatprep.subr.mxu0 0.0
    %3288 = vmatpush1.msra.mxu0 0.0
    %3289 = vmatprep.subr.mxu0 0.0
    %3290 = vmatpush1.msra.mxu0 0.0
    %3291 = vmatprep.subr.mxu0 0.0
    %3292 = vmatpush1.msra.mxu0 0.0
    %3293 = vmatprep.subr.mxu0 0.0
    %3294 = vmatpush1.msra.mxu0 0.0
    %3295 = vmatprep.subr.mxu0 0.0
    %3296 = vmatpush1.msra.mxu0 0.0
    %3297 = vmatprep.subr.mxu0 0.0
    %3298 = vmatpush1.msra.mxu0 0.0
    %3299 = vmatprep.subr.mxu0 0.0
    %3300 = vmatpush1.msra.mxu0 0.0
    %3301 = vmatprep.subr.mxu0 0.0
    %3302 = vmatpush1.msra.mxu0 0.0
    %3303 = vmatprep.subr.mxu0 0.0
    %3304 = vmatpush1.msra.mxu0 0.0
    %3305 = vmatprep.subr.mxu0 0.0
    %3306 = vmatpush1.msra.mxu0 0.0
    %3307 = vmatprep.subr.mxu0 0.0
    %3308 = vmatpush1.msra.mxu0 0.0
    %3309 = vmatprep.subr.mxu0 0.0
    %3310 = vmatpush1.msra.mxu0 0.0
    %3311 = vmatprep.subr.mxu0 0.0
    %3312 = vmatpush1.msra.mxu0 0.0
    %3313 = vmatprep.subr.mxu0 0.0
    %3314 = vmatpush1.msra.mxu0 0.0
    %3315 = vmatprep.subr.mxu0 0.0
    %3316 = vmatpush1.msra.mxu0 0.0
    %3317 = vmatprep.subr.mxu0 0.0
    %3318 = vmatpush1.msra.mxu0 0.0
    %3319 = vmatprep.subr.mxu0 0.0
    %3320 = vmatpush1.msra.mxu0 0.0
    %3321 = vmatprep.subr.mxu0 0.0
    %3322 = vmatpush1.msra.mxu0 0.0
    %3323 = vmatprep.subr.mxu0 0.0
    %3324 = vmatpush1.msra.mxu0 0.0
    %3325 = vmatprep.subr.mxu0 0.0
    %3326 = vmatpush1.msra.mxu0 0.0
    %3327 = vmatprep.mubr.f32.mxu0 0.0
    %3328 = vmatmul.mubr.f32.gmra.mrb[0].mxu0 %v3261
    %v3329 = vpop.f32.mrb[0].mxu0
    %v3330 = vadd.f32 0.0, %v3329
    %v3331 = vpop.f32.mrb[0].mxu0
    %3332 = vdwg.mxu0
    %3333 = vrot.lane.b32.xlu0 %v2124, 64
    %v3334 = vpop.permute.xlu0 %3333
    %3335 = vrot.lane.b32.xlu0 %v2126, 64
    %v3336 = vpop.permute.xlu0 %3335
    %v3340 = vsel %vm1756, %v2856, 0
    %3342 = vmatprep.subr.mxu0 0.0
    %3343 = vmatpush1.msra.mxu0 %v3334
    %3344 = vmatprep.subr.mxu0 0.0
    %3345 = vmatpush1.msra.mxu0 %v3336
    %3346 = vmatprep.subr.mxu0 0.0
    %3347 = vmatpush1.msra.mxu0 0.0
    %3348 = vmatprep.subr.mxu0 0.0
    %3349 = vmatpush1.msra.mxu0 0.0
    %3350 = vmatprep.subr.mxu0 0.0
    %3351 = vmatpush1.msra.mxu0 0.0
    %3352 = vmatprep.subr.mxu0 0.0
    %3353 = vmatpush1.msra.mxu0 0.0
    %3354 = vmatprep.subr.mxu0 0.0
    %3355 = vmatpush1.msra.mxu0 0.0
    %3356 = vmatprep.subr.mxu0 0.0
    %3357 = vmatpush1.msra.mxu0 0.0
    %3358 = vmatprep.subr.mxu0 0.0
    %3359 = vmatpush1.msra.mxu0 0.0
    %3360 = vmatprep.subr.mxu0 0.0
    %3361 = vmatpush1.msra.mxu0 0.0
    %3362 = vmatprep.subr.mxu0 0.0
    %3363 = vmatpush1.msra.mxu0 0.0
    %3364 = vmatprep.subr.mxu0 0.0
    %3365 = vmatpush1.msra.mxu0 0.0
    %3366 = vmatprep.subr.mxu0 0.0
    %3367 = vmatpush1.msra.mxu0 0.0
    %3368 = vmatprep.subr.mxu0 0.0
    %3369 = vmatpush1.msra.mxu0 0.0
    %3370 = vmatprep.subr.mxu0 0.0
    %3371 = vmatpush1.msra.mxu0 0.0
    %3372 = vmatprep.subr.mxu0 0.0
    %3373 = vmatpush1.msra.mxu0 0.0
    %3374 = vmatprep.subr.mxu0 0.0
    %3375 = vmatpush1.msra.mxu0 0.0
    %3376 = vmatprep.subr.mxu0 0.0
    %3377 = vmatpush1.msra.mxu0 0.0
    %3378 = vmatprep.subr.mxu0 0.0
    %3379 = vmatpush1.msra.mxu0 0.0
    %3380 = vmatprep.subr.mxu0 0.0
    %3381 = vmatpush1.msra.mxu0 0.0
    %3382 = vmatprep.subr.mxu0 0.0
    %3383 = vmatpush1.msra.mxu0 0.0
    %3384 = vmatprep.subr.mxu0 0.0
    %3385 = vmatpush1.msra.mxu0 0.0
    %3386 = vmatprep.subr.mxu0 0.0
    %3387 = vmatpush1.msra.mxu0 0.0
    %3388 = vmatprep.subr.mxu0 0.0
    %3389 = vmatpush1.msra.mxu0 0.0
    %3390 = vmatprep.subr.mxu0 0.0
    %3391 = vmatpush1.msra.mxu0 0.0
    %3392 = vmatprep.subr.mxu0 0.0
    %3393 = vmatpush1.msra.mxu0 0.0
    %3394 = vmatprep.subr.mxu0 0.0
    %3395 = vmatpush1.msra.mxu0 0.0
    %3396 = vmatprep.subr.mxu0 0.0
    %3397 = vmatpush1.msra.mxu0 0.0
    %3398 = vmatprep.subr.mxu0 0.0
    %3399 = vmatpush1.msra.mxu0 0.0
    %3400 = vmatprep.subr.mxu0 0.0
    %3401 = vmatpush1.msra.mxu0 0.0
    %3402 = vmatprep.subr.mxu0 0.0
    %3403 = vmatpush1.msra.mxu0 0.0
    %3404 = vmatprep.subr.mxu0 0.0
    %3405 = vmatpush1.msra.mxu0 0.0
    %3406 = vmatprep.mubr.f32.mxu0 0.0
    %3407 = vmatmul.mubr.f32.gmra.mrb[0].mxu0 %v3340
    %v3408 = vpop.f32.mrb[0].mxu0
    %v3409 = vadd.f32 0.0, %v3408
    %v3410 = vpop.f32.mrb[0].mxu0
    %3411 = vdwg.mxu0
    %3412 = vrot.lane.b32.xlu0 %v2128, 64
    %v3413 = vpop.permute.xlu0 %3412
    %3414 = vrot.lane.b32.xlu0 %v2130, 64
    %v3415 = vpop.permute.xlu0 %3414
    %v3419 = vsel %vm1756, %v2858, 0
    %3421 = vmatprep.subr.mxu0 0.0
    %3422 = vmatpush1.msra.mxu0 %v3413
    %3423 = vmatprep.subr.mxu0 0.0
    %3424 = vmatpush1.msra.mxu0 %v3415
    %3425 = vmatprep.subr.mxu0 0.0
    %3426 = vmatpush1.msra.mxu0 0.0
    %3427 = vmatprep.subr.mxu0 0.0
    %3428 = vmatpush1.msra.mxu0 0.0
    %3429 = vmatprep.subr.mxu0 0.0
    %3430 = vmatpush1.msra.mxu0 0.0
    %3431 = vmatprep.subr.mxu0 0.0
    %3432 = vmatpush1.msra.mxu0 0.0
    %3433 = vmatprep.subr.mxu0 0.0
    %3434 = vmatpush1.msra.mxu0 0.0
    %3435 = vmatprep.subr.mxu0 0.0
    %3436 = vmatpush1.msra.mxu0 0.0
    %3437 = vmatprep.subr.mxu0 0.0
    %3438 = vmatpush1.msra.mxu0 0.0
    %3439 = vmatprep.subr.mxu0 0.0
    %3440 = vmatpush1.msra.mxu0 0.0
    %3441 = vmatprep.subr.mxu0 0.0
    %3442 = vmatpush1.msra.mxu0 0.0
    %3443 = vmatprep.subr.mxu0 0.0
    %3444 = vmatpush1.msra.mxu0 0.0
    %3445 = vmatprep.subr.mxu0 0.0
    %3446 = vmatpush1.msra.mxu0 0.0
    %3447 = vmatprep.subr.mxu0 0.0
    %3448 = vmatpush1.msra.mxu0 0.0
    %3449 = vmatprep.subr.mxu0 0.0
    %3450 = vmatpush1.msra.mxu0 0.0
    %3451 = vmatprep.subr.mxu0 0.0
    %3452 = vmatpush1.msra.mxu0 0.0
    %3453 = vmatprep.subr.mxu0 0.0
    %3454 = vmatpush1.msra.mxu0 0.0
    %3455 = vmatprep.subr.mxu0 0.0
    %3456 = vmatpush1.msra.mxu0 0.0
    %3457 = vmatprep.subr.mxu0 0.0
    %3458 = vmatpush1.msra.mxu0 0.0
    %3459 = vmatprep.subr.mxu0 0.0
    %3460 = vmatpush1.msra.mxu0 0.0
    %3461 = vmatprep.subr.mxu0 0.0
    %3462 = vmatpush1.msra.mxu0 0.0
    %3463 = vmatprep.subr.mxu0 0.0
    %3464 = vmatpush1.msra.mxu0 0.0
    %3465 = vmatprep.subr.mxu0 0.0
    %3466 = vmatpush1.msra.mxu0 0.0
    %3467 = vmatprep.subr.mxu0 0.0
    %3468 = vmatpush1.msra.mxu0 0.0
    %3469 = vmatprep.subr.mxu0 0.0
    %3470 = vmatpush1.msra.mxu0 0.0
    %3471 = vmatprep.subr.mxu0 0.0
    %3472 = vmatpush1.msra.mxu0 0.0
    %3473 = vmatprep.subr.mxu0 0.0
    %3474 = vmatpush1.msra.mxu0 0.0
    %3475 = vmatprep.subr.mxu0 0.0
    %3476 = vmatpush1.msra.mxu0 0.0
    %3477 = vmatprep.subr.mxu0 0.0
    %3478 = vmatpush1.msra.mxu0 0.0
    %3479 = vmatprep.subr.mxu0 0.0
    %3480 = vmatpush1.msra.mxu0 0.0
    %3481 = vmatprep.subr.mxu0 0.0
    %3482 = vmatpush1.msra.mxu0 0.0
    %3483 = vmatprep.subr.mxu0 0.0
    %3484 = vmatpush1.msra.mxu0 0.0
    %3485 = vmatprep.mubr.f32.mxu0 0.0
    %3486 = vmatmul.mubr.f32.gmra.mrb[0].mxu0 %v3419
    %v3487 = vpop.f32.mrb[0].mxu0
    %v3488 = vadd.f32 0.0, %v3487
    %v3489 = vpop.f32.mrb[0].mxu0
    %3490 = vdwg.mxu0
    %3493 = vrot.lane.b32.xlu0 %v3093, 8
    %v3494 = vpop.permute.xlu0 %3493
    %3495 = vrot.lane.b32.xlu0 %v3172, 8
    %v3496 = vpop.permute.xlu0 %3495
    %3501 = vrot.lane.b32.xlu0 %v3251, 16
    %v3502 = vpop.permute.xlu0 %3501
    %3503 = vrot.lane.b32.xlu0 %v3330, 16
    %v3504 = vpop.permute.xlu0 %3503
    %3509 = vrot.lane.b32.xlu0 %v3409, 24
    %v3510 = vpop.permute.xlu0 %3509
    %3511 = vrot.lane.b32.xlu0 %v3488, 24
    %v3512 = vpop.permute.xlu0 %3511
    %v3515 = vsel %vm427, %v2935, %v3494
    %v3516 = vsel %vm427, %v3014, %v3496
    %v3517 = vsel %vm1756, %v3515, %v3502
    %v3518 = vsel %vm1756, %v3516, %v3504
    %v3519 = vsel %vm1759, %v3517, %v3510
    %v3520 = vsel %vm1759, %v3518, %v3512
    %v3521 = vld [vmem:[#allocation14] sm:$0xff]
    %v3522 = vld [vmem:[#allocation14 + $0x8] sm:$0xff]
    %v3523 = vld [vmem:[#allocation14 + $0x10] sm:$0xff]
    %v3524 = vld [vmem:[#allocation14 + $0x18] sm:$0xff]
    %v3525 = vld [vmem:[#allocation16] sm:$0x1]
    %v3527 = vlaneseq
    %v3528 = vshrl.u32 %v3527, 7
    %v3529 = vsub.s32 0, %v3528
    %v3530 = vrot.slane %v3525, %v3529
    %v3533 = vsel %vm283, %v3519, 0
    %v3536 = vsel %vm283, %v3520, 0
    %3538 = vmatprep.subr.mxu0 0.0
    %3539 = vmatpush1.msra.mxu0 %v3521
    %3540 = vmatprep.subr.mxu0 0.0
    %3541 = vmatpush1.msra.mxu0 %v3522
    %3542 = vmatprep.subr.mxu0 0.0
    %3543 = vmatpush1.msra.mxu0 %v3523
    %3544 = vmatprep.subr.mxu0 0.0
    %3545 = vmatpush1.msra.mxu0 %v3524
    %3546 = vmatprep.subr.mxu0 0.0
    %3547 = vmatpush1.msra.mxu0 0.0
    %3548 = vmatprep.subr.mxu0 0.0
    %3549 = vmatpush1.msra.mxu0 0.0
    %3550 = vmatprep.subr.mxu0 0.0
    %3551 = vmatpush1.msra.mxu0 0.0
    %3552 = vmatprep.subr.mxu0 0.0
    %3553 = vmatpush1.msra.mxu0 0.0
    %3554 = vmatprep.subr.mxu0 0.0
    %3555 = vmatpush1.msra.mxu0 0.0
    %3556 = vmatprep.subr.mxu0 0.0
    %3557 = vmatpush1.msra.mxu0 0.0
    %3558 = vmatprep.subr.mxu0 0.0
    %3559 = vmatpush1.msra.mxu0 0.0
    %3560 = vmatprep.subr.mxu0 0.0
    %3561 = vmatpush1.msra.mxu0 0.0
    %3562 = vmatprep.subr.mxu0 0.0
    %3563 = vmatpush1.msra.mxu0 0.0
    %3564 = vmatprep.subr.mxu0 0.0
    %3565 = vmatpush1.msra.mxu0 0.0
    %3566 = vmatprep.subr.mxu0 0.0
    %3567 = vmatpush1.msra.mxu0 0.0
    %3568 = vmatprep.subr.mxu0 0.0
    %3569 = vmatpush1.msra.mxu0 0.0
    %3570 = vmatprep.subr.mxu0 0.0
    %3571 = vmatpush1.msra.mxu0 0.0
    %3572 = vmatprep.subr.mxu0 0.0
    %3573 = vmatpush1.msra.mxu0 0.0
    %3574 = vmatprep.subr.mxu0 0.0
    %3575 = vmatpush1.msra.mxu0 0.0
    %3576 = vmatprep.subr.mxu0 0.0
    %3577 = vmatpush1.msra.mxu0 0.0
    %3578 = vmatprep.subr.mxu0 0.0
    %3579 = vmatpush1.msra.mxu0 0.0
    %3580 = vmatprep.subr.mxu0 0.0
    %3581 = vmatpush1.msra.mxu0 0.0
    %3582 = vmatprep.subr.mxu0 0.0
    %3583 = vmatpush1.msra.mxu0 0.0
    %3584 = vmatprep.subr.mxu0 0.0
    %3585 = vmatpush1.msra.mxu0 0.0
    %3586 = vmatprep.subr.mxu0 0.0
    %3587 = vmatpush1.msra.mxu0 0.0
    %3588 = vmatprep.subr.mxu0 0.0
    %3589 = vmatpush1.msra.mxu0 0.0
    %3590 = vmatprep.subr.mxu0 0.0
    %3591 = vmatpush1.msra.mxu0 0.0
    %3592 = vmatprep.subr.mxu0 0.0
    %3593 = vmatpush1.msra.mxu0 0.0
    %3594 = vmatprep.subr.mxu0 0.0
    %3595 = vmatpush1.msra.mxu0 0.0
    %3596 = vmatprep.subr.mxu0 0.0
    %3597 = vmatpush1.msra.mxu0 0.0
    %3598 = vmatprep.subr.mxu0 0.0
    %3599 = vmatpush1.msra.mxu0 0.0
    %3600 = vmatprep.subr.mxu0 0.0
    %3601 = vmatpush1.msra.mxu0 0.0
    %3602 = vmatprep.mubr.f32.mxu0 0.0
    %3603 = vmatmul.mubr.f32.gmra.mrb[0].mxu0 %v3533
    %v3604 = vpop.f32.mrb[0].mxu0
    %v3605 = vadd.f32 %v3530, %v3604
    %v3606 = vpop.f32.mrb[0].mxu0
    %3607 = vmatprep.mubr.f32.mxu0 0.0
    %3608 = vmatmul.mubr.f32.gmra.mrb[0].mxu0 %v3536
    %v3609 = vpop.f32.mrb[0].mxu0
    %v3610 = vadd.f32 %v3530, %v3609
    %v3611 = vpop.f32.mrb[0].mxu0
    %3612 = vdwg.mxu0
    %v3613 = vadd.f32 %v1899, %v3605
    %v3614 = vadd.f32 %v1900, %v3610
    %v3615 = vld [vmem:[#allocation17] sm:$0x1]
    %v3616 = vld [vmem:[#allocation19] sm:$0x1]
    %v3617 = vsel %vm283, %v3613, 0.0
    %3618 = vadd.xlane.f32.xlu0 %v3617
    %v3619 = vpop.xlane.xlu0 %3618
    %v3620 = vsel %vm283, %v3614, 0.0
    %3621 = vadd.xlane.f32.xlu0 %v3620
    %v3622 = vpop.xlane.xlu0 %3621
    %v3623 = vmul.f32 %v3619, %v1864
    %v3624 = vmul.f32 %v3622, %v1864
    %v3625 = vsub.f32 %v3613, %v3623
    %v3626 = vsub.f32 %v3614, %v3624
    %v3627 = vmul.f32 %v3625, %v3625
    %v3628 = vmul.f32 %v3626, %v3626
    %v3629 = vsel %vm283, %v3627, 0.0
    %3630 = vadd.xlane.f32.xlu0 %v3629
    %v3631 = vpop.xlane.xlu0 %3630
    %v3632 = vsel %vm283, %v3628, 0.0
    %3633 = vadd.xlane.f32.xlu0 %v3632
    %v3634 = vpop.xlane.xlu0 %3633
    %v3635 = vmul.f32 %v3631, %v1864
    %v3636 = vmul.f32 %v3634, %v1864
    %v3637 = vadd.f32 %v3635, 1e-05
    %v3638 = vadd.f32 %v3636, 1e-05
    %v3639 = vrsqrt.pop %v3637
    %v3640 = vrsqrt.pop %v3638
    %v3641 = vmul.f32 %v3625, %v3639
    %v3642 = vmul.f32 %v3626, %v3640
    %v3644 = vlaneseq
    %v3645 = vshrl.u32 %v3644, 7
    %v3646 = vsub.s32 0, %v3645
    %v3647 = vrot.slane %v3615, %v3646
    %v3649 = vmul.f32 %v3641, %v3647
    %v3650 = vmul.f32 %v3642, %v3647
    %v3652 = vlaneseq
    %v3653 = vshrl.u32 %v3652, 7
    %v3654 = vsub.s32 0, %v3653
    %v3655 = vrot.slane %v3616, %v3654
    %v3657 = vadd.f32 %v3649, %v3655
    %v3658 = vadd.f32 %v3650, %v3655
    %v3659 = vld [vmem:[#allocation20] sm:$0xff]
    %v3660 = vld [vmem:[#allocation20 + $0x8] sm:$0xff]
    %v3661 = vld [vmem:[#allocation20 + $0x10] sm:$0xff]
    %v3662 = vld [vmem:[#allocation20 + $0x18] sm:$0xff]
    %v3663 = vld [vmem:[#allocation22] sm:$0x1]
    %v3665 = vlaneseq
    %v3666 = vshrl.u32 %v3665, 7
    %v3667 = vsub.s32 0, %v3666
    %v3668 = vrot.slane %v3663, %v3667
    %v3671 = vsel %vm283, %v3657, 0
    %v3674 = vsel %vm283, %v3658, 0
    %3676 = vmatprep.subr.mxu0 0.0
    %3677 = vmatpush1.msra.mxu0 %v3659
    %3678 = vmatprep.subr.mxu0 0.0
    %3679 = vmatpush1.msra.mxu0 %v3660
    %3680 = vmatprep.subr.mxu0 0.0
    %3681 = vmatpush1.msra.mxu0 %v3661
    %3682 = vmatprep.subr.mxu0 0.0
    %3683 = vmatpush1.msra.mxu0 %v3662
    %3684 = vmatprep.subr.mxu0 0.0
    %3685 = vmatpush1.msra.mxu0 0.0
    %3686 = vmatprep.subr.mxu0 0.0
    %3687 = vmatpush1.msra.mxu0 0.0
    %3688 = vmatprep.subr.mxu0 0.0
    %3689 = vmatpush1.msra.mxu0 0.0
    %3690 = vmatprep.subr.mxu0 0.0
    %3691 = vmatpush1.msra.mxu0 0.0
    %3692 = vmatprep.subr.mxu0 0.0
    %3693 = vmatpush1.msra.mxu0 0.0
    %3694 = vmatprep.subr.mxu0 0.0
    %3695 = vmatpush1.msra.mxu0 0.0
    %3696 = vmatprep.subr.mxu0 0.0
    %3697 = vmatpush1.msra.mxu0 0.0
    %3698 = vmatprep.subr.mxu0 0.0
    %3699 = vmatpush1.msra.mxu0 0.0
    %3700 = vmatprep.subr.mxu0 0.0
    %3701 = vmatpush1.msra.mxu0 0.0
    %3702 = vmatprep.subr.mxu0 0.0
    %3703 = vmatpush1.msra.mxu0 0.0
    %3704 = vmatprep.subr.mxu0 0.0
    %3705 = vmatpush1.msra.mxu0 0.0
    %3706 = vmatprep.subr.mxu0 0.0
    %3707 = vmatpush1.msra.mxu0 0.0
    %3708 = vmatprep.subr.mxu0 0.0
    %3709 = vmatpush1.msra.mxu0 0.0
    %3710 = vmatprep.subr.mxu0 0.0
    %3711 = vmatpush1.msra.mxu0 0.0
    %3712 = vmatprep.subr.mxu0 0.0
    %3713 = vmatpush1.msra.mxu0 0.0
    %3714 = vmatprep.subr.mxu0 0.0
    %3715 = vmatpush1.msra.mxu0 0.0
    %3716 = vmatprep.subr.mxu0 0.0
    %3717 = vmatpush1.msra.mxu0 0.0
    %3718 = vmatprep.subr.mxu0 0.0
    %3719 = vmatpush1.msra.mxu0 0.0
    %3720 = vmatprep.subr.mxu0 0.0
    %3721 = vmatpush1.msra.mxu0 0.0
    %3722 = vmatprep.subr.mxu0 0.0
    %3723 = vmatpush1.msra.mxu0 0.0
    %3724 = vmatprep.subr.mxu0 0.0
    %3725 = vmatpush1.msra.mxu0 0.0
    %3726 = vmatprep.subr.mxu0 0.0
    %3727 = vmatpush1.msra.mxu0 0.0
    %3728 = vmatprep.subr.mxu0 0.0
    %3729 = vmatpush1.msra.mxu0 0.0
    %3730 = vmatprep.subr.mxu0 0.0
    %3731 = vmatpush1.msra.mxu0 0.0
    %3732 = vmatprep.subr.mxu0 0.0
    %3733 = vmatpush1.msra.mxu0 0.0
    %3734 = vmatprep.subr.mxu0 0.0
    %3735 = vmatpush1.msra.mxu0 0.0
    %3736 = vmatprep.subr.mxu0 0.0
    %3737 = vmatpush1.msra.mxu0 0.0
    %3738 = vmatprep.subr.mxu0 0.0
    %3739 = vmatpush1.msra.mxu0 0.0
    %3740 = vmatprep.mubr.f32.mxu0 0.0
    %3741 = vmatmul.mubr.f32.gmra.mrb[0].mxu0 %v3671
    %v3742 = vpop.f32.mrb[0].mxu0
    %v3743 = vadd.f32 %v3668, %v3742
    %v3744 = vpop.f32.mrb[0].mxu0
    %3745 = vmatprep.mubr.f32.mxu0 0.0
    %3746 = vmatmul.mubr.f32.gmra.mrb[0].mxu0 %v3674
    %v3747 = vpop.f32.mrb[0].mxu0
    %v3748 = vadd.f32 %v3668, %v3747
    %v3749 = vpop.f32.mrb[0].mxu0
    %3750 = vdwg.mxu0
    %v3751 = vmax.f32 %v3743, 0.0
    %v3752 = vmax.f32 %v3748, 0.0
    %v3753 = vld [vmem:[%s18] sm:$0xff]
    %v3754 = vld [vmem:[%s18 + $0x8] sm:$0xff]
    %v3755 = vld [vmem:[%s18 + $0x10] sm:$0xff]
    %v3756 = vld [vmem:[%s18 + $0x18] sm:$0xff]
    %v3757 = vld [vmem:[%s18 + $0x20] sm:$0xff]
    %v3758 = vld [vmem:[%s18 + $0x28] sm:$0xff]
    %v3759 = vld [vmem:[%s18 + $0x30] sm:$0xff]
    %v3760 = vld [vmem:[%s18 + $0x38] sm:$0xff]
    %v3761 = vld [vmem:[%s19] sm:$0x1]
    %v3763 = vlaneseq
    %v3764 = vshrl.u32 %v3763, 7
    %v3765 = vsub.s32 0, %v3764
    %v3766 = vrot.slane %v3761, %v3765
    %vm3768 = vcmask 523264
    %v3770 = vsel %vm3768, %v3751, 0
    %v3773 = vsel %vm3768, %v3752, 0
    %3775 = vmatprep.subr.mxu0 0.0
    %3776 = vmatpush1.msra.mxu0 %v3753
    %3777 = vmatprep.subr.mxu0 0.0
    %3778 = vmatpush1.msra.mxu0 %v3754
    %3779 = vmatprep.subr.mxu0 0.0
    %3780 = vmatpush1.msra.mxu0 %v3755
    %3781 = vmatprep.subr.mxu0 0.0
    %3782 = vmatpush1.msra.mxu0 %v3756
    %3783 = vmatprep.subr.mxu0 0.0
    %3784 = vmatpush1.msra.mxu0 %v3757
    %3785 = vmatprep.subr.mxu0 0.0
    %3786 = vmatpush1.msra.mxu0 %v3758
    %3787 = vmatprep.subr.mxu0 0.0
    %3788 = vmatpush1.msra.mxu0 %v3759
    %3789 = vmatprep.subr.mxu0 0.0
    %3790 = vmatpush1.msra.mxu0 %v3760
    %3791 = vmatprep.subr.mxu0 0.0
    %3792 = vmatpush1.msra.mxu0 0.0
    %3793 = vmatprep.subr.mxu0 0.0
    %3794 = vmatpush1.msra.mxu0 0.0
    %3795 = vmatprep.subr.mxu0 0.0
    %3796 = vmatpush1.msra.mxu0 0.0
    %3797 = vmatprep.subr.mxu0 0.0
    %3798 = vmatpush1.msra.mxu0 0.0
    %3799 = vmatprep.subr.mxu0 0.0
    %3800 = vmatpush1.msra.mxu0 0.0
    %3801 = vmatprep.subr.mxu0 0.0
    %3802 = vmatpush1.msra.mxu0 0.0
    %3803 = vmatprep.subr.mxu0 0.0
    %3804 = vmatpush1.msra.mxu0 0.0
    %3805 = vmatprep.subr.mxu0 0.0
    %3806 = vmatpush1.msra.mxu0 0.0
    %3807 = vmatprep.subr.mxu0 0.0
    %3808 = vmatpush1.msra.mxu0 0.0
    %3809 = vmatprep.subr.mxu0 0.0
    %3810 = vmatpush1.msra.mxu0 0.0
    %3811 = vmatprep.subr.mxu0 0.0
    %3812 = vmatpush1.msra.mxu0 0.0
    %3813 = vmatprep.subr.mxu0 0.0
    %3814 = vmatpush1.msra.mxu0 0.0
    %3815 = vmatprep.subr.mxu0 0.0
    %3816 = vmatpush1.msra.mxu0 0.0
    %3817 = vmatprep.subr.mxu0 0.0
    %3818 = vmatpush1.msra.mxu0 0.0
    %3819 = vmatprep.subr.mxu0 0.0
    %3820 = vmatpush1.msra.mxu0 0.0
    %3821 = vmatprep.subr.mxu0 0.0
    %3822 = vmatpush1.msra.mxu0 0.0
    %3823 = vmatprep.subr.mxu0 0.0
    %3824 = vmatpush1.msra.mxu0 0.0
    %3825 = vmatprep.subr.mxu0 0.0
    %3826 = vmatpush1.msra.mxu0 0.0
    %3827 = vmatprep.subr.mxu0 0.0
    %3828 = vmatpush1.msra.mxu0 0.0
    %3829 = vmatprep.subr.mxu0 0.0
    %3830 = vmatpush1.msra.mxu0 0.0
    %3831 = vmatprep.subr.mxu0 0.0
    %3832 = vmatpush1.msra.mxu0 0.0
    %3833 = vmatprep.subr.mxu0 0.0
    %3834 = vmatpush1.msra.mxu0 0.0
    %3835 = vmatprep.subr.mxu0 0.0
    %3836 = vmatpush1.msra.mxu0 0.0
    %3837 = vmatprep.subr.mxu0 0.0
    %3838 = vmatpush1.msra.mxu0 0.0
    %3839 = vmatprep.mubr.f32.mxu0 0.0
    %3840 = vmatmul.mubr.f32.gmra.mrb[0].mxu0 %v3770
    %v3841 = vpop.f32.mrb[0].mxu0
    %v3842 = vadd.f32 %v3766, %v3841
    %v3843 = vpop.f32.mrb[0].mxu0
    %3844 = vmatprep.mubr.f32.mxu0 0.0
    %3845 = vmatmul.mubr.f32.gmra.mrb[0].mxu0 %v3773
    %v3846 = vpop.f32.mrb[0].mxu0
    %v3847 = vadd.f32 %v3766, %v3846
    %v3848 = vpop.f32.mrb[0].mxu0
    %3849 = vdwg.mxu0
    %v3850 = vadd.f32 %v3657, %v3842
    %v3851 = vadd.f32 %v3658, %v3847
    %v3852 = vld [vmem:[%s20] sm:$0x1]
    %v3853 = vld [vmem:[%s21] sm:$0x1]
    %v3854 = vsel %vm283, %v3850, 0.0
    %3855 = vadd.xlane.f32.xlu0 %v3854
    %v3856 = vpop.xlane.xlu0 %3855
    %v3857 = vsel %vm283, %v3851, 0.0
    %3858 = vadd.xlane.f32.xlu0 %v3857
    %v3859 = vpop.xlane.xlu0 %3858
    %v3860 = vmul.f32 %v3856, %v1864
    %v3861 = vmul.f32 %v3859, %v1864
    %v3862 = vsub.f32 %v3850, %v3860
    %v3863 = vsub.f32 %v3851, %v3861
    %v3864 = vmul.f32 %v3862, %v3862
    %v3865 = vmul.f32 %v3863, %v3863
    %v3866 = vsel %vm283, %v3864, 0.0
    %3867 = vadd.xlane.f32.xlu0 %v3866
    %v3868 = vpop.xlane.xlu0 %3867
    %v3869 = vsel %vm283, %v3865, 0.0
    %3870 = vadd.xlane.f32.xlu0 %v3869
    %v3871 = vpop.xlane.xlu0 %3870
    %v3872 = vmul.f32 %v3868, %v1864
    %v3873 = vmul.f32 %v3871, %v1864
    %v3874 = vadd.f32 %v3872, 1e-05
    %v3875 = vadd.f32 %v3873, 1e-05
    %v3876 = vrsqrt.pop %v3874
    %v3877 = vrsqrt.pop %v3875
    %v3878 = vmul.f32 %v3862, %v3876
    %v3879 = vmul.f32 %v3863, %v3877
    %v3881 = vlaneseq
    %v3882 = vshrl.u32 %v3881, 7
    %v3883 = vsub.s32 0, %v3882
    %v3884 = vrot.slane %v3852, %v3883
    %v3886 = vmul.f32 %v3878, %v3884
    %v3887 = vmul.f32 %v3879, %v3884
    %v3889 = vlaneseq
    %v3890 = vshrl.u32 %v3889, 7
    %v3891 = vsub.s32 0, %v3890
    %v3892 = vrot.slane %v3853, %v3891
    %v3894 = vadd.f32 %v3886, %v3892
    %v3895 = vadd.f32 %v3887, %v3892
    %v3896 = vadd.f32 %v3894, %v256
    %v3897 = vadd.f32 %v3895, %v257
    %s3898 = scalar_lea.vmem %s4, 32
    %v3899 = vld [vmem:[%s3898] sm:$0xff]
    %v3900 = vld [vmem:[%s3898 + $0x8] sm:$0xff]
    %v3901 = vld [vmem:[%s3898 + $0x10] sm:$0xff]
    %v3902 = vld [vmem:[%s3898 + $0x18] sm:$0xff]
    %s3903 = scalar_lea.vmem %s5, 1
    %v3904 = vld [vmem:[%s3903] sm:$0x1]
    %v3906 = vlaneseq
    %v3907 = vshrl.u32 %v3906, 7
    %v3908 = vsub.s32 0, %v3907
    %v3909 = vrot.slane %v3904, %v3908
    %v3912 = vsel %vm283, %v3896, 0
    %v3915 = vsel %vm283, %v3897, 0
    %v3918 = vsel %vm283, %v3894, 0
    %v3921 = vsel %vm283, %v3895, 0
    %3923 = vmatprep.subr.mxu0 0.0
    %3924 = vmatpush1.msra.mxu0 %v3899
    %3925 = vmatprep.subr.mxu0 0.0
    %3926 = vmatpush1.msra.mxu0 %v3900
    %3927 = vmatprep.subr.mxu0 0.0
    %3928 = vmatpush1.msra.mxu0 %v3901
    %3929 = vmatprep.subr.mxu0 0.0
    %3930 = vmatpush1.msra.mxu0 %v3902
    %3931 = vmatprep.subr.mxu0 0.0
    %3932 = vmatpush1.msra.mxu0 0.0
    %3933 = vmatprep.subr.mxu0 0.0
    %3934 = vmatpush1.msra.mxu0 0.0
    %3935 = vmatprep.subr.mxu0 0.0
    %3936 = vmatpush1.msra.mxu0 0.0
    %3937 = vmatprep.subr.mxu0 0.0
    %3938 = vmatpush1.msra.mxu0 0.0
    %3939 = vmatprep.subr.mxu0 0.0
    %3940 = vmatpush1.msra.mxu0 0.0
    %3941 = vmatprep.subr.mxu0 0.0
    %3942 = vmatpush1.msra.mxu0 0.0
    %3943 = vmatprep.subr.mxu0 0.0
    %3944 = vmatpush1.msra.mxu0 0.0
    %3945 = vmatprep.subr.mxu0 0.0
    %3946 = vmatpush1.msra.mxu0 0.0
    %3947 = vmatprep.subr.mxu0 0.0
    %3948 = vmatpush1.msra.mxu0 0.0
    %3949 = vmatprep.subr.mxu0 0.0
    %3950 = vmatpush1.msra.mxu0 0.0
    %3951 = vmatprep.subr.mxu0 0.0
    %3952 = vmatpush1.msra.mxu0 0.0
    %3953 = vmatprep.subr.mxu0 0.0
    %3954 = vmatpush1.msra.mxu0 0.0
    %3955 = vmatprep.subr.mxu0 0.0
    %3956 = vmatpush1.msra.mxu0 0.0
    %3957 = vmatprep.subr.mxu0 0.0
    %3958 = vmatpush1.msra.mxu0 0.0
    %3959 = vmatprep.subr.mxu0 0.0
    %3960 = vmatpush1.msra.mxu0 0.0
    %3961 = vmatprep.subr.mxu0 0.0
    %3962 = vmatpush1.msra.mxu0 0.0
    %3963 = vmatprep.subr.mxu0 0.0
    %3964 = vmatpush1.msra.mxu0 0.0
    %3965 = vmatprep.subr.mxu0 0.0
    %3966 = vmatpush1.msra.mxu0 0.0
    %3967 = vmatprep.subr.mxu0 0.0
    %3968 = vmatpush1.msra.mxu0 0.0
    %3969 = vmatprep.subr.mxu0 0.0
    %3970 = vmatpush1.msra.mxu0 0.0
    %3971 = vmatprep.subr.mxu0 0.0
    %3972 = vmatpush1.msra.mxu0 0.0
    %3973 = vmatprep.subr.mxu0 0.0
    %3974 = vmatpush1.msra.mxu0 0.0
    %3975 = vmatprep.subr.mxu0 0.0
    %3976 = vmatpush1.msra.mxu0 0.0
    %3977 = vmatprep.subr.mxu0 0.0
    %3978 = vmatpush1.msra.mxu0 0.0
    %3979 = vmatprep.subr.mxu0 0.0
    %3980 = vmatpush1.msra.mxu0 0.0
    %3981 = vmatprep.subr.mxu0 0.0
    %3982 = vmatpush1.msra.mxu0 0.0
    %3983 = vmatprep.subr.mxu0 0.0
    %3984 = vmatpush1.msra.mxu0 0.0
    %3985 = vmatprep.subr.mxu0 0.0
    %3986 = vmatpush1.msra.mxu0 0.0
    %3987 = vmatprep.mubr.f32.mxu0 0.0
    %3988 = vmatmul.mubr.f32.gmra.mrb[0].mxu0 %v3912
    %v3989 = vpop.f32.mrb[0].mxu0
    %v3990 = vadd.f32 %v3909, %v3989
    %v3991 = vpop.f32.mrb[0].mxu0
    %3992 = vmatprep.mubr.f32.mxu0 0.0
    %3993 = vmatmul.mubr.f32.gmra.mrb[0].mxu0 %v3915
    %v3994 = vpop.f32.mrb[0].mxu0
    %v3995 = vadd.f32 %v3909, %v3994
    %v3996 = vpop.f32.mrb[0].mxu0
    %3997 = vmatprep.mubr.f32.mxu0 0.0
    %3998 = vmatmul.mubr.f32.gmra.mrb[0].mxu0 %v3918
    %v3999 = vpop.f32.mrb[0].mxu0
    %v4000 = vadd.f32 %v3909, %v3999
    %v4001 = vpop.f32.mrb[0].mxu0
    %4002 = vmatprep.mubr.f32.mxu0 0.0
    %4003 = vmatmul.mubr.f32.gmra.mrb[0].mxu0 %v3921
    %v4004 = vpop.f32.mrb[0].mxu0
    %v4005 = vadd.f32 %v3909, %v4004
    %v4006 = vpop.f32.mrb[0].mxu0
    %4007 = vdwg.mxu0
    %v4008 = vmul.f32 %v3990, 0.35355338
    %v4009 = vmul.f32 %v3995, 0.35355338
    %4012 = vrot.lane.b32.xlu0 %v4008, 120
    %v4013 = vpop.permute.xlu0 %4012
    %4014 = vrot.lane.b32.xlu0 %v4009, 120
    %v4015 = vpop.permute.xlu0 %4014
    %4016 = vrot.lane.b32.xlu0 %v4008, 112
    %v4017 = vpop.permute.xlu0 %4016
    %4018 = vrot.lane.b32.xlu0 %v4009, 112
    %v4019 = vpop.permute.xlu0 %4018
    %4020 = vrot.lane.b32.xlu0 %v4008, 104
    %v4021 = vpop.permute.xlu0 %4020
    %4022 = vrot.lane.b32.xlu0 %v4009, 104
    %v4023 = vpop.permute.xlu0 %4022
    %4026 = vrot.lane.b32.xlu0 %v3990, 120
    %v4027 = vpop.permute.xlu0 %4026
    %4028 = vrot.lane.b32.xlu0 %v3995, 120
    %v4029 = vpop.permute.xlu0 %4028
    %4030 = vrot.lane.b32.xlu0 %v3990, 112
    %v4031 = vpop.permute.xlu0 %4030
    %4032 = vrot.lane.b32.xlu0 %v3995, 112
    %v4033 = vpop.permute.xlu0 %4032
    %4034 = vrot.lane.b32.xlu0 %v3990, 104
    %v4035 = vpop.permute.xlu0 %4034
    %4036 = vrot.lane.b32.xlu0 %v3995, 104
    %v4037 = vpop.permute.xlu0 %4036
    %4040 = vrot.lane.b32.xlu0 %v4000, 120
    %v4041 = vpop.permute.xlu0 %4040
    %4042 = vrot.lane.b32.xlu0 %v4005, 120
    %v4043 = vpop.permute.xlu0 %4042
    %4044 = vrot.lane.b32.xlu0 %v4000, 112
    %v4045 = vpop.permute.xlu0 %4044
    %4046 = vrot.lane.b32.xlu0 %v4005, 112
    %v4047 = vpop.permute.xlu0 %4046
    %4048 = vrot.lane.b32.xlu0 %v4000, 104
    %v4049 = vpop.permute.xlu0 %4048
    %4050 = vrot.lane.b32.xlu0 %v4005, 104
    %v4051 = vpop.permute.xlu0 %4050
    %4052 = vrot.lane.b32.xlu0 %v3990, 96
    %v4053 = vpop.permute.xlu0 %4052
    %v4054 = vsel %vm427, %v4008, 0
    %v4056 = vsel %vm427, %v4053, 0
    %4058 = vmatprep.subr.mxu0 0.0
    %4059 = vmatpush1.xpose.msra.mxu0 %v4056
    %4060 = vmatprep.subr.mxu0 0.0
    %4061 = vmatpush1.xpose.msra.mxu0 0.0
    %4062 = vmatprep.subr.mxu0 0.0
    %4063 = vmatpush1.xpose.msra.mxu0 0.0
    %4064 = vmatprep.subr.mxu0 0.0
    %4065 = vmatpush1.xpose.msra.mxu0 0.0
    %4066 = vmatprep.subr.mxu0 0.0
    %4067 = vmatpush1.xpose.msra.mxu0 0.0
    %4068 = vmatprep.subr.mxu0 0.0
    %4069 = vmatpush1.xpose.msra.mxu0 0.0
    %4070 = vmatprep.subr.mxu0 0.0
    %4071 = vmatpush1.xpose.msra.mxu0 0.0
    %4072 = vmatprep.subr.mxu0 0.0
    %4073 = vmatpush1.xpose.msra.mxu0 0.0
    %4074 = vmatprep.subr.mxu0 0.0
    %4075 = vmatpush1.xpose.msra.mxu0 0.0
    %4076 = vmatprep.subr.mxu0 0.0
    %4077 = vmatpush1.xpose.msra.mxu0 0.0
    %4078 = vmatprep.subr.mxu0 0.0
    %4079 = vmatpush1.xpose.msra.mxu0 0.0
    %4080 = vmatprep.subr.mxu0 0.0
    %4081 = vmatpush1.xpose.msra.mxu0 0.0
    %4082 = vmatprep.subr.mxu0 0.0
    %4083 = vmatpush1.xpose.msra.mxu0 0.0
    %4084 = vmatprep.subr.mxu0 0.0
    %4085 = vmatpush1.xpose.msra.mxu0 0.0
    %4086 = vmatprep.subr.mxu0 0.0
    %4087 = vmatpush1.xpose.msra.mxu0 0.0
    %4088 = vmatprep.subr.mxu0 0.0
    %4089 = vmatpush1.xpose.msra.mxu0 0.0
    %4090 = vmatprep.subr.mxu0 0.0
    %4091 = vmatpush1.xpose.msra.mxu0 0.0
    %4092 = vmatprep.subr.mxu0 0.0
    %4093 = vmatpush1.xpose.msra.mxu0 0.0
    %4094 = vmatprep.subr.mxu0 0.0
    %4095 = vmatpush1.xpose.msra.mxu0 0.0
    %4096 = vmatprep.subr.mxu0 0.0
    %4097 = vmatpush1.xpose.msra.mxu0 0.0
    %4098 = vmatprep.subr.mxu0 0.0
    %4099 = vmatpush1.xpose.msra.mxu0 0.0
    %4100 = vmatprep.subr.mxu0 0.0
    %4101 = vmatpush1.xpose.msra.mxu0 0.0
    %4102 = vmatprep.subr.mxu0 0.0
    %4103 = vmatpush1.xpose.msra.mxu0 0.0
    %4104 = vmatprep.subr.mxu0 0.0
    %4105 = vmatpush1.xpose.msra.mxu0 0.0
    %4106 = vmatprep.subr.mxu0 0.0
    %4107 = vmatpush1.xpose.msra.mxu0 0.0
    %4108 = vmatprep.subr.mxu0 0.0
    %4109 = vmatpush1.xpose.msra.mxu0 0.0
    %4110 = vmatprep.subr.mxu0 0.0
    %4111 = vmatpush1.xpose.msra.mxu0 0.0
    %4112 = vmatprep.subr.mxu0 0.0
    %4113 = vmatpush1.xpose.msra.mxu0 0.0
    %4114 = vmatprep.subr.mxu0 0.0
    %4115 = vmatpush1.xpose.msra.mxu0 0.0
    %4116 = vmatprep.subr.mxu0 0.0
    %4117 = vmatpush1.xpose.msra.mxu0 0.0
    %4118 = vmatprep.subr.mxu0 0.0
    %4119 = vmatpush1.xpose.msra.mxu0 0.0
    %4120 = vmatprep.subr.mxu0 0.0
    %4121 = vmatpush1.xpose.msra.mxu0 0.0
    %4122 = vmatprep.mubr.f32.mxu0 0.0
    %4123 = vmatmul.mubr.f32.gmra.mrb[0].mxu0 %v4054
    %v4124 = vpop.f32.mrb[0].mxu0
    %v4125 = vadd.f32 0.0, %v4124
    %v4126 = vpop.f32.mrb[0].mxu0
    %4127 = vdwg.mxu0
    %4128 = vrot.lane.b32.xlu0 %v3995, 96
    %v4129 = vpop.permute.xlu0 %4128
    %v4130 = vsel %vm427, %v4009, 0
    %v4132 = vsel %vm427, %v4129, 0
    %4134 = vmatprep.subr.mxu0 0.0
    %4135 = vmatpush1.xpose.msra.mxu0 %v4132
    %4136 = vmatprep.subr.mxu0 0.0
    %4137 = vmatpush1.xpose.msra.mxu0 0.0
    %4138 = vmatprep.subr.mxu0 0.0
    %4139 = vmatpush1.xpose.msra.mxu0 0.0
    %4140 = vmatprep.subr.mxu0 0.0
    %4141 = vmatpush1.xpose.msra.mxu0 0.0
    %4142 = vmatprep.subr.mxu0 0.0
    %4143 = vmatpush1.xpose.msra.mxu0 0.0
    %4144 = vmatprep.subr.mxu0 0.0
    %4145 = vmatpush1.xpose.msra.mxu0 0.0
    %4146 = vmatprep.subr.mxu0 0.0
    %4147 = vmatpush1.xpose.msra.mxu0 0.0
    %4148 = vmatprep.subr.mxu0 0.0
    %4149 = vmatpush1.xpose.msra.mxu0 0.0
    %4150 = vmatprep.subr.mxu0 0.0
    %4151 = vmatpush1.xpose.msra.mxu0 0.0
    %4152 = vmatprep.subr.mxu0 0.0
    %4153 = vmatpush1.xpose.msra.mxu0 0.0
    %4154 = vmatprep.subr.mxu0 0.0
    %4155 = vmatpush1.xpose.msra.mxu0 0.0
    %4156 = vmatprep.subr.mxu0 0.0
    %4157 = vmatpush1.xpose.msra.mxu0 0.0
    %4158 = vmatprep.subr.mxu0 0.0
    %4159 = vmatpush1.xpose.msra.mxu0 0.0
    %4160 = vmatprep.subr.mxu0 0.0
    %4161 = vmatpush1.xpose.msra.mxu0 0.0
    %4162 = vmatprep.subr.mxu0 0.0
    %4163 = vmatpush1.xpose.msra.mxu0 0.0
    %4164 = vmatprep.subr.mxu0 0.0
    %4165 = vmatpush1.xpose.msra.mxu0 0.0
    %4166 = vmatprep.subr.mxu0 0.0
    %4167 = vmatpush1.xpose.msra.mxu0 0.0
    %4168 = vmatprep.subr.mxu0 0.0
    %4169 = vmatpush1.xpose.msra.mxu0 0.0
    %4170 = vmatprep.subr.mxu0 0.0
    %4171 = vmatpush1.xpose.msra.mxu0 0.0
    %4172 = vmatprep.subr.mxu0 0.0
    %4173 = vmatpush1.xpose.msra.mxu0 0.0
    %4174 = vmatprep.subr.mxu0 0.0
    %4175 = vmatpush1.xpose.msra.mxu0 0.0
    %4176 = vmatprep.subr.mxu0 0.0
    %4177 = vmatpush1.xpose.msra.mxu0 0.0
    %4178 = vmatprep.subr.mxu0 0.0
    %4179 = vmatpush1.xpose.msra.mxu0 0.0
    %4180 = vmatprep.subr.mxu0 0.0
    %4181 = vmatpush1.xpose.msra.mxu0 0.0
    %4182 = vmatprep.subr.mxu0 0.0
    %4183 = vmatpush1.xpose.msra.mxu0 0.0
    %4184 = vmatprep.subr.mxu0 0.0
    %4185 = vmatpush1.xpose.msra.mxu0 0.0
    %4186 = vmatprep.subr.mxu0 0.0
    %4187 = vmatpush1.xpose.msra.mxu0 0.0
    %4188 = vmatprep.subr.mxu0 0.0
    %4189 = vmatpush1.xpose.msra.mxu0 0.0
    %4190 = vmatprep.subr.mxu0 0.0
    %4191 = vmatpush1.xpose.msra.mxu0 0.0
    %4192 = vmatprep.subr.mxu0 0.0
    %4193 = vmatpush1.xpose.msra.mxu0 0.0
    %4194 = vmatprep.subr.mxu0 0.0
    %4195 = vmatpush1.xpose.msra.mxu0 0.0
    %4196 = vmatprep.subr.mxu0 0.0
    %4197 = vmatpush1.xpose.msra.mxu0 0.0
    %4198 = vmatprep.mubr.f32.mxu0 0.0
    %4199 = vmatmul.mubr.f32.gmra.mrb[0].mxu0 %v4130
    %v4200 = vpop.f32.mrb[0].mxu0
    %v4201 = vadd.f32 0.0, %v4200
    %v4202 = vpop.f32.mrb[0].mxu0
    %4203 = vdwg.mxu0
    %4204 = vrot.lane.b32.xlu0 %v4027, 96
    %v4205 = vpop.permute.xlu0 %4204
    %v4206 = vsel %vm427, %v4013, 0
    %v4208 = vsel %vm427, %v4205, 0
    %4210 = vmatprep.subr.mxu0 0.0
    %4211 = vmatpush1.xpose.msra.mxu0 %v4208
    %4212 = vmatprep.subr.mxu0 0.0
    %4213 = vmatpush1.xpose.msra.mxu0 0.0
    %4214 = vmatprep.subr.mxu0 0.0
    %4215 = vmatpush1.xpose.msra.mxu0 0.0
    %4216 = vmatprep.subr.mxu0 0.0
    %4217 = vmatpush1.xpose.msra.mxu0 0.0
    %4218 = vmatprep.subr.mxu0 0.0
    %4219 = vmatpush1.xpose.msra.mxu0 0.0
    %4220 = vmatprep.subr.mxu0 0.0
    %4221 = vmatpush1.xpose.msra.mxu0 0.0
    %4222 = vmatprep.subr.mxu0 0.0
    %4223 = vmatpush1.xpose.msra.mxu0 0.0
    %4224 = vmatprep.subr.mxu0 0.0
    %4225 = vmatpush1.xpose.msra.mxu0 0.0
    %4226 = vmatprep.subr.mxu0 0.0
    %4227 = vmatpush1.xpose.msra.mxu0 0.0
    %4228 = vmatprep.subr.mxu0 0.0
    %4229 = vmatpush1.xpose.msra.mxu0 0.0
    %4230 = vmatprep.subr.mxu0 0.0
    %4231 = vmatpush1.xpose.msra.mxu0 0.0
    %4232 = vmatprep.subr.mxu0 0.0
    %4233 = vmatpush1.xpose.msra.mxu0 0.0
    %4234 = vmatprep.subr.mxu0 0.0
    %4235 = vmatpush1.xpose.msra.mxu0 0.0
    %4236 = vmatprep.subr.mxu0 0.0
    %4237 = vmatpush1.xpose.msra.mxu0 0.0
    %4238 = vmatprep.subr.mxu0 0.0
    %4239 = vmatpush1.xpose.msra.mxu0 0.0
    %4240 = vmatprep.subr.mxu0 0.0
    %4241 = vmatpush1.xpose.msra.mxu0 0.0
    %4242 = vmatprep.subr.mxu0 0.0
    %4243 = vmatpush1.xpose.msra.mxu0 0.0
    %4244 = vmatprep.subr.mxu0 0.0
    %4245 = vmatpush1.xpose.msra.mxu0 0.0
    %4246 = vmatprep.subr.mxu0 0.0
    %4247 = vmatpush1.xpose.msra.mxu0 0.0
    %4248 = vmatprep.subr.mxu0 0.0
    %4249 = vmatpush1.xpose.msra.mxu0 0.0
    %4250 = vmatprep.subr.mxu0 0.0
    %4251 = vmatpush1.xpose.msra.mxu0 0.0
    %4252 = vmatprep.subr.mxu0 0.0
    %4253 = vmatpush1.xpose.msra.mxu0 0.0
    %4254 = vmatprep.subr.mxu0 0.0
    %4255 = vmatpush1.xpose.msra.mxu0 0.0
    %4256 = vmatprep.subr.mxu0 0.0
    %4257 = vmatpush1.xpose.msra.mxu0 0.0
    %4258 = vmatprep.subr.mxu0 0.0
    %4259 = vmatpush1.xpose.msra.mxu0 0.0
    %4260 = vmatprep.subr.mxu0 0.0
    %4261 = vmatpush1.xpose.msra.mxu0 0.0
    %4262 = vmatprep.subr.mxu0 0.0
    %4263 = vmatpush1.xpose.msra.mxu0 0.0
    %4264 = vmatprep.subr.mxu0 0.0
    %4265 = vmatpush1.xpose.msra.mxu0 0.0
    %4266 = vmatprep.subr.mxu0 0.0
    %4267 = vmatpush1.xpose.msra.mxu0 0.0
    %4268 = vmatprep.subr.mxu0 0.0
    %4269 = vmatpush1.xpose.msra.mxu0 0.0
    %4270 = vmatprep.subr.mxu0 0.0
    %4271 = vmatpush1.xpose.msra.mxu0 0.0
    %4272 = vmatprep.subr.mxu0 0.0
    %4273 = vmatpush1.xpose.msra.mxu0 0.0
    %4274 = vmatprep.mubr.f32.mxu0 0.0
    %4275 = vmatmul.mubr.f32.gmra.mrb[0].mxu0 %v4206
    %v4276 = vpop.f32.mrb[0].mxu0
    %v4277 = vadd.f32 0.0, %v4276
    %v4278 = vpop.f32.mrb[0].mxu0
    %4279 = vdwg.mxu0
    %4280 = vrot.lane.b32.xlu0 %v4029, 96
    %v4281 = vpop.permute.xlu0 %4280
    %v4282 = vsel %vm427, %v4015, 0
    %v4284 = vsel %vm427, %v4281, 0
    %4286 = vmatprep.subr.mxu0 0.0
    %4287 = vmatpush1.xpose.msra.mxu0 %v4284
    %4288 = vmatprep.subr.mxu0 0.0
    %4289 = vmatpush1.xpose.msra.mxu0 0.0
    %4290 = vmatprep.subr.mxu0 0.0
    %4291 = vmatpush1.xpose.msra.mxu0 0.0
    %4292 = vmatprep.subr.mxu0 0.0
    %4293 = vmatpush1.xpose.msra.mxu0 0.0
    %4294 = vmatprep.subr.mxu0 0.0
    %4295 = vmatpush1.xpose.msra.mxu0 0.0
    %4296 = vmatprep.subr.mxu0 0.0
    %4297 = vmatpush1.xpose.msra.mxu0 0.0
    %4298 = vmatprep.subr.mxu0 0.0
    %4299 = vmatpush1.xpose.msra.mxu0 0.0
    %4300 = vmatprep.subr.mxu0 0.0
    %4301 = vmatpush1.xpose.msra.mxu0 0.0
    %4302 = vmatprep.subr.mxu0 0.0
    %4303 = vmatpush1.xpose.msra.mxu0 0.0
    %4304 = vmatprep.subr.mxu0 0.0
    %4305 = vmatpush1.xpose.msra.mxu0 0.0
    %4306 = vmatprep.subr.mxu0 0.0
    %4307 = vmatpush1.xpose.msra.mxu0 0.0
    %4308 = vmatprep.subr.mxu0 0.0
    %4309 = vmatpush1.xpose.msra.mxu0 0.0
    %4310 = vmatprep.subr.mxu0 0.0
    %4311 = vmatpush1.xpose.msra.mxu0 0.0
    %4312 = vmatprep.subr.mxu0 0.0
    %4313 = vmatpush1.xpose.msra.mxu0 0.0
    %4314 = vmatprep.subr.mxu0 0.0
    %4315 = vmatpush1.xpose.msra.mxu0 0.0
    %4316 = vmatprep.subr.mxu0 0.0
    %4317 = vmatpush1.xpose.msra.mxu0 0.0
    %4318 = vmatprep.subr.mxu0 0.0
    %4319 = vmatpush1.xpose.msra.mxu0 0.0
    %4320 = vmatprep.subr.mxu0 0.0
    %4321 = vmatpush1.xpose.msra.mxu0 0.0
    %4322 = vmatprep.subr.mxu0 0.0
    %4323 = vmatpush1.xpose.msra.mxu0 0.0
    %4324 = vmatprep.subr.mxu0 0.0
    %4325 = vmatpush1.xpose.msra.mxu0 0.0
    %4326 = vmatprep.subr.mxu0 0.0
    %4327 = vmatpush1.xpose.msra.mxu0 0.0
    %4328 = vmatprep.subr.mxu0 0.0
    %4329 = vmatpush1.xpose.msra.mxu0 0.0
    %4330 = vmatprep.subr.mxu0 0.0
    %4331 = vmatpush1.xpose.msra.mxu0 0.0
    %4332 = vmatprep.subr.mxu0 0.0
    %4333 = vmatpush1.xpose.msra.mxu0 0.0
    %4334 = vmatprep.subr.mxu0 0.0
    %4335 = vmatpush1.xpose.msra.mxu0 0.0
    %4336 = vmatprep.subr.mxu0 0.0
    %4337 = vmatpush1.xpose.msra.mxu0 0.0
    %4338 = vmatprep.subr.mxu0 0.0
    %4339 = vmatpush1.xpose.msra.mxu0 0.0
    %4340 = vmatprep.subr.mxu0 0.0
    %4341 = vmatpush1.xpose.msra.mxu0 0.0
    %4342 = vmatprep.subr.mxu0 0.0
    %4343 = vmatpush1.xpose.msra.mxu0 0.0
    %4344 = vmatprep.subr.mxu0 0.0
    %4345 = vmatpush1.xpose.msra.mxu0 0.0
    %4346 = vmatprep.subr.mxu0 0.0
    %4347 = vmatpush1.xpose.msra.mxu0 0.0
    %4348 = vmatprep.subr.mxu0 0.0
    %4349 = vmatpush1.xpose.msra.mxu0 0.0
    %4350 = vmatprep.mubr.f32.mxu0 0.0
    %4351 = vmatmul.mubr.f32.gmra.mrb[0].mxu0 %v4282
    %v4352 = vpop.f32.mrb[0].mxu0
    %v4353 = vadd.f32 0.0, %v4352
    %v4354 = vpop.f32.mrb[0].mxu0
    %4355 = vdwg.mxu0
    %4356 = vrot.lane.b32.xlu0 %v4031, 96
    %v4357 = vpop.permute.xlu0 %4356
    %v4358 = vsel %vm427, %v4017, 0
    %v4360 = vsel %vm427, %v4357, 0
    %4362 = vmatprep.subr.mxu0 0.0
    %4363 = vmatpush1.xpose.msra.mxu0 %v4360
    %4364 = vmatprep.subr.mxu0 0.0
    %4365 = vmatpush1.xpose.msra.mxu0 0.0
    %4366 = vmatprep.subr.mxu0 0.0
    %4367 = vmatpush1.xpose.msra.mxu0 0.0
    %4368 = vmatprep.subr.mxu0 0.0
    %4369 = vmatpush1.xpose.msra.mxu0 0.0
    %4370 = vmatprep.subr.mxu0 0.0
    %4371 = vmatpush1.xpose.msra.mxu0 0.0
    %4372 = vmatprep.subr.mxu0 0.0
    %4373 = vmatpush1.xpose.msra.mxu0 0.0
    %4374 = vmatprep.subr.mxu0 0.0
    %4375 = vmatpush1.xpose.msra.mxu0 0.0
    %4376 = vmatprep.subr.mxu0 0.0
    %4377 = vmatpush1.xpose.msra.mxu0 0.0
    %4378 = vmatprep.subr.mxu0 0.0
    %4379 = vmatpush1.xpose.msra.mxu0 0.0
    %4380 = vmatprep.subr.mxu0 0.0
    %4381 = vmatpush1.xpose.msra.mxu0 0.0
    %4382 = vmatprep.subr.mxu0 0.0
    %4383 = vmatpush1.xpose.msra.mxu0 0.0
    %4384 = vmatprep.subr.mxu0 0.0
    %4385 = vmatpush1.xpose.msra.mxu0 0.0
    %4386 = vmatprep.subr.mxu0 0.0
    %4387 = vmatpush1.xpose.msra.mxu0 0.0
    %4388 = vmatprep.subr.mxu0 0.0
    %4389 = vmatpush1.xpose.msra.mxu0 0.0
    %4390 = vmatprep.subr.mxu0 0.0
    %4391 = vmatpush1.xpose.msra.mxu0 0.0
    %4392 = vmatprep.subr.mxu0 0.0
    %4393 = vmatpush1.xpose.msra.mxu0 0.0
    %4394 = vmatprep.subr.mxu0 0.0
    %4395 = vmatpush1.xpose.msra.mxu0 0.0
    %4396 = vmatprep.subr.mxu0 0.0
    %4397 = vmatpush1.xpose.msra.mxu0 0.0
    %4398 = vmatprep.subr.mxu0 0.0
    %4399 = vmatpush1.xpose.msra.mxu0 0.0
    %4400 = vmatprep.subr.mxu0 0.0
    %4401 = vmatpush1.xpose.msra.mxu0 0.0
    %4402 = vmatprep.subr.mxu0 0.0
    %4403 = vmatpush1.xpose.msra.mxu0 0.0
    %4404 = vmatprep.subr.mxu0 0.0
    %4405 = vmatpush1.xpose.msra.mxu0 0.0
    %4406 = vmatprep.subr.mxu0 0.0
    %4407 = vmatpush1.xpose.msra.mxu0 0.0
    %4408 = vmatprep.subr.mxu0 0.0
    %4409 = vmatpush1.xpose.msra.mxu0 0.0
    %4410 = vmatprep.subr.mxu0 0.0
    %4411 = vmatpush1.xpose.msra.mxu0 0.0
    %4412 = vmatprep.subr.mxu0 0.0
    %4413 = vmatpush1.xpose.msra.mxu0 0.0
    %4414 = vmatprep.subr.mxu0 0.0
    %4415 = vmatpush1.xpose.msra.mxu0 0.0
    %4416 = vmatprep.subr.mxu0 0.0
    %4417 = vmatpush1.xpose.msra.mxu0 0.0
    %4418 = vmatprep.subr.mxu0 0.0
    %4419 = vmatpush1.xpose.msra.mxu0 0.0
    %4420 = vmatprep.subr.mxu0 0.0
    %4421 = vmatpush1.xpose.msra.mxu0 0.0
    %4422 = vmatprep.subr.mxu0 0.0
    %4423 = vmatpush1.xpose.msra.mxu0 0.0
    %4424 = vmatprep.subr.mxu0 0.0
    %4425 = vmatpush1.xpose.msra.mxu0 0.0
    %4426 = vmatprep.mubr.f32.mxu0 0.0
    %4427 = vmatmul.mubr.f32.gmra.mrb[0].mxu0 %v4358
    %v4428 = vpop.f32.mrb[0].mxu0
    %v4429 = vadd.f32 0.0, %v4428
    %v4430 = vpop.f32.mrb[0].mxu0
    %4431 = vdwg.mxu0
    %4432 = vrot.lane.b32.xlu0 %v4033, 96
    %v4433 = vpop.permute.xlu0 %4432
    %v4434 = vsel %vm427, %v4019, 0
    %v4436 = vsel %vm427, %v4433, 0
    %4438 = vmatprep.subr.mxu0 0.0
    %4439 = vmatpush1.xpose.msra.mxu0 %v4436
    %4440 = vmatprep.subr.mxu0 0.0
    %4441 = vmatpush1.xpose.msra.mxu0 0.0
    %4442 = vmatprep.subr.mxu0 0.0
    %4443 = vmatpush1.xpose.msra.mxu0 0.0
    %4444 = vmatprep.subr.mxu0 0.0
    %4445 = vmatpush1.xpose.msra.mxu0 0.0
    %4446 = vmatprep.subr.mxu0 0.0
    %4447 = vmatpush1.xpose.msra.mxu0 0.0
    %4448 = vmatprep.subr.mxu0 0.0
    %4449 = vmatpush1.xpose.msra.mxu0 0.0
    %4450 = vmatprep.subr.mxu0 0.0
    %4451 = vmatpush1.xpose.msra.mxu0 0.0
    %4452 = vmatprep.subr.mxu0 0.0
    %4453 = vmatpush1.xpose.msra.mxu0 0.0
    %4454 = vmatprep.subr.mxu0 0.0
    %4455 = vmatpush1.xpose.msra.mxu0 0.0
    %4456 = vmatprep.subr.mxu0 0.0
    %4457 = vmatpush1.xpose.msra.mxu0 0.0
    %4458 = vmatprep.subr.mxu0 0.0
    %4459 = vmatpush1.xpose.msra.mxu0 0.0
    %4460 = vmatprep.subr.mxu0 0.0
    %4461 = vmatpush1.xpose.msra.mxu0 0.0
    %4462 = vmatprep.subr.mxu0 0.0
    %4463 = vmatpush1.xpose.msra.mxu0 0.0
    %4464 = vmatprep.subr.mxu0 0.0
    %4465 = vmatpush1.xpose.msra.mxu0 0.0
    %4466 = vmatprep.subr.mxu0 0.0
    %4467 = vmatpush1.xpose.msra.mxu0 0.0
    %4468 = vmatprep.subr.mxu0 0.0
    %4469 = vmatpush1.xpose.msra.mxu0 0.0
    %4470 = vmatprep.subr.mxu0 0.0
    %4471 = vmatpush1.xpose.msra.mxu0 0.0
    %4472 = vmatprep.subr.mxu0 0.0
    %4473 = vmatpush1.xpose.msra.mxu0 0.0
    %4474 = vmatprep.subr.mxu0 0.0
    %4475 = vmatpush1.xpose.msra.mxu0 0.0
    %4476 = vmatprep.subr.mxu0 0.0
    %4477 = vmatpush1.xpose.msra.mxu0 0.0
    %4478 = vmatprep.subr.mxu0 0.0
    %4479 = vmatpush1.xpose.msra.mxu0 0.0
    %4480 = vmatprep.subr.mxu0 0.0
    %4481 = vmatpush1.xpose.msra.mxu0 0.0
    %4482 = vmatprep.subr.mxu0 0.0
    %4483 = vmatpush1.xpose.msra.mxu0 0.0
    %4484 = vmatprep.subr.mxu0 0.0
    %4485 = vmatpush1.xpose.msra.mxu0 0.0
    %4486 = vmatprep.subr.mxu0 0.0
    %4487 = vmatpush1.xpose.msra.mxu0 0.0
    %4488 = vmatprep.subr.mxu0 0.0
    %4489 = vmatpush1.xpose.msra.mxu0 0.0
    %4490 = vmatprep.subr.mxu0 0.0
    %4491 = vmatpush1.xpose.msra.mxu0 0.0
    %4492 = vmatprep.subr.mxu0 0.0
    %4493 = vmatpush1.xpose.msra.mxu0 0.0
    %4494 = vmatprep.subr.mxu0 0.0
    %4495 = vmatpush1.xpose.msra.mxu0 0.0
    %4496 = vmatprep.subr.mxu0 0.0
    %4497 = vmatpush1.xpose.msra.mxu0 0.0
    %4498 = vmatprep.subr.mxu0 0.0
    %4499 = vmatpush1.xpose.msra.mxu0 0.0
    %4500 = vmatprep.subr.mxu0 0.0
    %4501 = vmatpush1.xpose.msra.mxu0 0.0
    %4502 = vmatprep.mubr.f32.mxu0 0.0
    %4503 = vmatmul.mubr.f32.gmra.mrb[0].mxu0 %v4434
    %v4504 = vpop.f32.mrb[0].mxu0
    %v4505 = vadd.f32 0.0, %v4504
    %v4506 = vpop.f32.mrb[0].mxu0
    %4507 = vdwg.mxu0
    %4508 = vrot.lane.b32.xlu0 %v4035, 96
    %v4509 = vpop.permute.xlu0 %4508
    %v4510 = vsel %vm427, %v4021, 0
    %v4512 = vsel %vm427, %v4509, 0
    %4514 = vmatprep.subr.mxu0 0.0
    %4515 = vmatpush1.xpose.msra.mxu0 %v4512
    %4516 = vmatprep.subr.mxu0 0.0
    %4517 = vmatpush1.xpose.msra.mxu0 0.0
    %4518 = vmatprep.subr.mxu0 0.0
    %4519 = vmatpush1.xpose.msra.mxu0 0.0
    %4520 = vmatprep.subr.mxu0 0.0
    %4521 = vmatpush1.xpose.msra.mxu0 0.0
    %4522 = vmatprep.subr.mxu0 0.0
    %4523 = vmatpush1.xpose.msra.mxu0 0.0
    %4524 = vmatprep.subr.mxu0 0.0
    %4525 = vmatpush1.xpose.msra.mxu0 0.0
    %4526 = vmatprep.subr.mxu0 0.0
    %4527 = vmatpush1.xpose.msra.mxu0 0.0
    %4528 = vmatprep.subr.mxu0 0.0
    %4529 = vmatpush1.xpose.msra.mxu0 0.0
    %4530 = vmatprep.subr.mxu0 0.0
    %4531 = vmatpush1.xpose.msra.mxu0 0.0
    %4532 = vmatprep.subr.mxu0 0.0
    %4533 = vmatpush1.xpose.msra.mxu0 0.0
    %4534 = vmatprep.subr.mxu0 0.0
    %4535 = vmatpush1.xpose.msra.mxu0 0.0
    %4536 = vmatprep.subr.mxu0 0.0
    %4537 = vmatpush1.xpose.msra.mxu0 0.0
    %4538 = vmatprep.subr.mxu0 0.0
    %4539 = vmatpush1.xpose.msra.mxu0 0.0
    %4540 = vmatprep.subr.mxu0 0.0
    %4541 = vmatpush1.xpose.msra.mxu0 0.0
    %4542 = vmatprep.subr.mxu0 0.0
    %4543 = vmatpush1.xpose.msra.mxu0 0.0
    %4544 = vmatprep.subr.mxu0 0.0
    %4545 = vmatpush1.xpose.msra.mxu0 0.0
    %4546 = vmatprep.subr.mxu0 0.0
    %4547 = vmatpush1.xpose.msra.mxu0 0.0
    %4548 = vmatprep.subr.mxu0 0.0
    %4549 = vmatpush1.xpose.msra.mxu0 0.0
    %4550 = vmatprep.subr.mxu0 0.0
    %4551 = vmatpush1.xpose.msra.mxu0 0.0
    %4552 = vmatprep.subr.mxu0 0.0
    %4553 = vmatpush1.xpose.msra.mxu0 0.0
    %4554 = vmatprep.subr.mxu0 0.0
    %4555 = vmatpush1.xpose.msra.mxu0 0.0
    %4556 = vmatprep.subr.mxu0 0.0
    %4557 = vmatpush1.xpose.msra.mxu0 0.0
    %4558 = vmatprep.subr.mxu0 0.0
    %4559 = vmatpush1.xpose.msra.mxu0 0.0
    %4560 = vmatprep.subr.mxu0 0.0
    %4561 = vmatpush1.xpose.msra.mxu0 0.0
    %4562 = vmatprep.subr.mxu0 0.0
    %4563 = vmatpush1.xpose.msra.mxu0 0.0
    %4564 = vmatprep.subr.mxu0 0.0
    %4565 = vmatpush1.xpose.msra.mxu0 0.0
    %4566 = vmatprep.subr.mxu0 0.0
    %4567 = vmatpush1.xpose.msra.mxu0 0.0
    %4568 = vmatprep.subr.mxu0 0.0
    %4569 = vmatpush1.xpose.msra.mxu0 0.0
    %4570 = vmatprep.subr.mxu0 0.0
    %4571 = vmatpush1.xpose.msra.mxu0 0.0
    %4572 = vmatprep.subr.mxu0 0.0
    %4573 = vmatpush1.xpose.msra.mxu0 0.0
    %4574 = vmatprep.subr.mxu0 0.0
    %4575 = vmatpush1.xpose.msra.mxu0 0.0
    %4576 = vmatprep.subr.mxu0 0.0
    %4577 = vmatpush1.xpose.msra.mxu0 0.0
    %4578 = vmatprep.mubr.f32.mxu0 0.0
    %4579 = vmatmul.mubr.f32.gmra.mrb[0].mxu0 %v4510
    %v4580 = vpop.f32.mrb[0].mxu0
    %v4581 = vadd.f32 0.0, %v4580
    %v4582 = vpop.f32.mrb[0].mxu0
    %4583 = vdwg.mxu0
    %4584 = vrot.lane.b32.xlu0 %v4037, 96
    %v4585 = vpop.permute.xlu0 %4584
    %v4586 = vsel %vm427, %v4023, 0
    %v4588 = vsel %vm427, %v4585, 0
    %4590 = vmatprep.subr.mxu0 0.0
    %4591 = vmatpush1.xpose.msra.mxu0 %v4588
    %4592 = vmatprep.subr.mxu0 0.0
    %4593 = vmatpush1.xpose.msra.mxu0 0.0
    %4594 = vmatprep.subr.mxu0 0.0
    %4595 = vmatpush1.xpose.msra.mxu0 0.0
    %4596 = vmatprep.subr.mxu0 0.0
    %4597 = vmatpush1.xpose.msra.mxu0 0.0
    %4598 = vmatprep.subr.mxu0 0.0
    %4599 = vmatpush1.xpose.msra.mxu0 0.0
    %4600 = vmatprep.subr.mxu0 0.0
    %4601 = vmatpush1.xpose.msra.mxu0 0.0
    %4602 = vmatprep.subr.mxu0 0.0
    %4603 = vmatpush1.xpose.msra.mxu0 0.0
    %4604 = vmatprep.subr.mxu0 0.0
    %4605 = vmatpush1.xpose.msra.mxu0 0.0
    %4606 = vmatprep.subr.mxu0 0.0
    %4607 = vmatpush1.xpose.msra.mxu0 0.0
    %4608 = vmatprep.subr.mxu0 0.0
    %4609 = vmatpush1.xpose.msra.mxu0 0.0
    %4610 = vmatprep.subr.mxu0 0.0
    %4611 = vmatpush1.xpose.msra.mxu0 0.0
    %4612 = vmatprep.subr.mxu0 0.0
    %4613 = vmatpush1.xpose.msra.mxu0 0.0
    %4614 = vmatprep.subr.mxu0 0.0
    %4615 = vmatpush1.xpose.msra.mxu0 0.0
    %4616 = vmatprep.subr.mxu0 0.0
    %4617 = vmatpush1.xpose.msra.mxu0 0.0
    %4618 = vmatprep.subr.mxu0 0.0
    %4619 = vmatpush1.xpose.msra.mxu0 0.0
    %4620 = vmatprep.subr.mxu0 0.0
    %4621 = vmatpush1.xpose.msra.mxu0 0.0
    %4622 = vmatprep.subr.mxu0 0.0
    %4623 = vmatpush1.xpose.msra.mxu0 0.0
    %4624 = vmatprep.subr.mxu0 0.0
    %4625 = vmatpush1.xpose.msra.mxu0 0.0
    %4626 = vmatprep.subr.mxu0 0.0
    %4627 = vmatpush1.xpose.msra.mxu0 0.0
    %4628 = vmatprep.subr.mxu0 0.0
    %4629 = vmatpush1.xpose.msra.mxu0 0.0
    %4630 = vmatprep.subr.mxu0 0.0
    %4631 = vmatpush1.xpose.msra.mxu0 0.0
    %4632 = vmatprep.subr.mxu0 0.0
    %4633 = vmatpush1.xpose.msra.mxu0 0.0
    %4634 = vmatprep.subr.mxu0 0.0
    %4635 = vmatpush1.xpose.msra.mxu0 0.0
    %4636 = vmatprep.subr.mxu0 0.0
    %4637 = vmatpush1.xpose.msra.mxu0 0.0
    %4638 = vmatprep.subr.mxu0 0.0
    %4639 = vmatpush1.xpose.msra.mxu0 0.0
    %4640 = vmatprep.subr.mxu0 0.0
    %4641 = vmatpush1.xpose.msra.mxu0 0.0
    %4642 = vmatprep.subr.mxu0 0.0
    %4643 = vmatpush1.xpose.msra.mxu0 0.0
    %4644 = vmatprep.subr.mxu0 0.0
    %4645 = vmatpush1.xpose.msra.mxu0 0.0
    %4646 = vmatprep.subr.mxu0 0.0
    %4647 = vmatpush1.xpose.msra.mxu0 0.0
    %4648 = vmatprep.subr.mxu0 0.0
    %4649 = vmatpush1.xpose.msra.mxu0 0.0
    %4650 = vmatprep.subr.mxu0 0.0
    %4651 = vmatpush1.xpose.msra.mxu0 0.0
    %4652 = vmatprep.subr.mxu0 0.0
    %4653 = vmatpush1.xpose.msra.mxu0 0.0
    %4654 = vmatprep.mubr.f32.mxu0 0.0
    %4655 = vmatmul.mubr.f32.gmra.mrb[0].mxu0 %v4586
    %v4656 = vpop.f32.mrb[0].mxu0
    %v4657 = vadd.f32 0.0, %v4656
    %v4658 = vpop.f32.mrb[0].mxu0
    %4659 = vdwg.mxu0
    %v4660 = vsel %vm427, %v4125, -inf
    %4661 = vmax.xlane.f32.xlu0 %v4660
    %v4662 = vpop.xlane.xlu0 %4661
    %v4663 = vsel %vm427, %v4201, -inf
    %4664 = vmax.xlane.f32.xlu0 %v4663
    %v4665 = vpop.xlane.xlu0 %4664
    %v4666 = vsel %vm427, %v4277, -inf
    %4667 = vmax.xlane.f32.xlu0 %v4666
    %v4668 = vpop.xlane.xlu0 %4667
    %v4669 = vsel %vm427, %v4353, -inf
    %4670 = vmax.xlane.f32.xlu0 %v4669
    %v4671 = vpop.xlane.xlu0 %4670
    %v4672 = vsel %vm427, %v4429, -inf
    %4673 = vmax.xlane.f32.xlu0 %v4672
    %v4674 = vpop.xlane.xlu0 %4673
    %v4675 = vsel %vm427, %v4505, -inf
    %4676 = vmax.xlane.f32.xlu0 %v4675
    %v4677 = vpop.xlane.xlu0 %4676
    %v4678 = vsel %vm427, %v4581, -inf
    %4679 = vmax.xlane.f32.xlu0 %v4678
    %v4680 = vpop.xlane.xlu0 %4679
    %v4681 = vsel %vm427, %v4657, -inf
    %4682 = vmax.xlane.f32.xlu0 %v4681
    %v4683 = vpop.xlane.xlu0 %4682
    %v4684 = vsub.f32 %v4125, %v4662
    %v4685 = vsub.f32 %v4201, %v4665
    %v4686 = vsub.f32 %v4277, %v4668
    %v4687 = vsub.f32 %v4353, %v4671
    %v4688 = vsub.f32 %v4429, %v4674
    %v4689 = vsub.f32 %v4505, %v4677
    %v4690 = vsub.f32 %v4581, %v4680
    %v4691 = vsub.f32 %v4657, %v4683
    %v4692 = vmul.f32 %v4684, 1.442695
    %v4693 = vpow.pop %v4692
    %v4694 = vmul.f32 %v4685, 1.442695
    %v4695 = vpow.pop %v4694
    %v4696 = vmul.f32 %v4686, 1.442695
    %v4697 = vpow.pop %v4696
    %v4698 = vmul.f32 %v4687, 1.442695
    %v4699 = vpow.pop %v4698
    %v4700 = vmul.f32 %v4688, 1.442695
    %v4701 = vpow.pop %v4700
    %v4702 = vmul.f32 %v4689, 1.442695
    %v4703 = vpow.pop %v4702
    %v4704 = vmul.f32 %v4690, 1.442695
    %v4705 = vpow.pop %v4704
    %v4706 = vmul.f32 %v4691, 1.442695
    %v4707 = vpow.pop %v4706
    %v4708 = vsel %vm427, %v4693, 0.0
    %4709 = vadd.xlane.f32.xlu0 %v4708
    %v4710 = vpop.xlane.xlu0 %4709
    %v4711 = vsel %vm427, %v4695, 0.0
    %4712 = vadd.xlane.f32.xlu0 %v4711
    %v4713 = vpop.xlane.xlu0 %4712
    %v4714 = vsel %vm427, %v4697, 0.0
    %4715 = vadd.xlane.f32.xlu0 %v4714
    %v4716 = vpop.xlane.xlu0 %4715
    %v4717 = vsel %vm427, %v4699, 0.0
    %4718 = vadd.xlane.f32.xlu0 %v4717
    %v4719 = vpop.xlane.xlu0 %4718
    %v4720 = vsel %vm427, %v4701, 0.0
    %4721 = vadd.xlane.f32.xlu0 %v4720
    %v4722 = vpop.xlane.xlu0 %4721
    %v4723 = vsel %vm427, %v4703, 0.0
    %4724 = vadd.xlane.f32.xlu0 %v4723
    %v4725 = vpop.xlane.xlu0 %4724
    %v4726 = vsel %vm427, %v4705, 0.0
    %4727 = vadd.xlane.f32.xlu0 %v4726
    %v4728 = vpop.xlane.xlu0 %4727
    %v4729 = vsel %vm427, %v4707, 0.0
    %4730 = vadd.xlane.f32.xlu0 %v4729
    %v4731 = vpop.xlane.xlu0 %4730
    %v4732 = vrcp.pop %v4710
    %v4733 = vmul.f32 %v4693, %v4732
    %v4734 = vrcp.pop %v4713
    %v4735 = vmul.f32 %v4695, %v4734
    %v4736 = vrcp.pop %v4716
    %v4737 = vmul.f32 %v4697, %v4736
    %v4738 = vrcp.pop %v4719
    %v4739 = vmul.f32 %v4699, %v4738
    %v4740 = vrcp.pop %v4722
    %v4741 = vmul.f32 %v4701, %v4740
    %v4742 = vrcp.pop %v4725
    %v4743 = vmul.f32 %v4703, %v4742
    %v4744 = vrcp.pop %v4728
    %v4745 = vmul.f32 %v4705, %v4744
    %v4746 = vrcp.pop %v4731
    %v4747 = vmul.f32 %v4707, %v4746
    %4748 = vrot.lane.b32.xlu0 %v4000, 64
    %v4749 = vpop.permute.xlu0 %4748
    %v4752 = vsel %vm427, %v4733, 0
    %4754 = vmatprep.subr.mxu0 0.0
    %4755 = vmatpush1.msra.mxu0 %v4749
    %4756 = vmatprep.subr.mxu0 0.0
    %4757 = vmatpush1.msra.mxu0 0.0
    %4758 = vmatprep.subr.mxu0 0.0
    %4759 = vmatpush1.msra.mxu0 0.0
    %4760 = vmatprep.subr.mxu0 0.0
    %4761 = vmatpush1.msra.mxu0 0.0
    %4762 = vmatprep.subr.mxu0 0.0
    %4763 = vmatpush1.msra.mxu0 0.0
    %4764 = vmatprep.subr.mxu0 0.0
    %4765 = vmatpush1.msra.mxu0 0.0
    %4766 = vmatprep.subr.mxu0 0.0
    %4767 = vmatpush1.msra.mxu0 0.0
    %4768 = vmatprep.subr.mxu0 0.0
    %4769 = vmatpush1.msra.mxu0 0.0
    %4770 = vmatprep.subr.mxu0 0.0
    %4771 = vmatpush1.msra.mxu0 0.0
    %4772 = vmatprep.subr.mxu0 0.0
    %4773 = vmatpush1.msra.mxu0 0.0
    %4774 = vmatprep.subr.mxu0 0.0
    %4775 = vmatpush1.msra.mxu0 0.0
    %4776 = vmatprep.subr.mxu0 0.0
    %4777 = vmatpush1.msra.mxu0 0.0
    %4778 = vmatprep.subr.mxu0 0.0
    %4779 = vmatpush1.msra.mxu0 0.0
    %4780 = vmatprep.subr.mxu0 0.0
    %4781 = vmatpush1.msra.mxu0 0.0
    %4782 = vmatprep.subr.mxu0 0.0
    %4783 = vmatpush1.msra.mxu0 0.0
    %4784 = vmatprep.subr.mxu0 0.0
    %4785 = vmatpush1.msra.mxu0 0.0
    %4786 = vmatprep.subr.mxu0 0.0
    %4787 = vmatpush1.msra.mxu0 0.0
    %4788 = vmatprep.subr.mxu0 0.0
    %4789 = vmatpush1.msra.mxu0 0.0
    %4790 = vmatprep.subr.mxu0 0.0
    %4791 = vmatpush1.msra.mxu0 0.0
    %4792 = vmatprep.subr.mxu0 0.0
    %4793 = vmatpush1.msra.mxu0 0.0
    %4794 = vmatprep.subr.mxu0 0.0
    %4795 = vmatpush1.msra.mxu0 0.0
    %4796 = vmatprep.subr.mxu0 0.0
    %4797 = vmatpush1.msra.mxu0 0.0
    %4798 = vmatprep.subr.mxu0 0.0
    %4799 = vmatpush1.msra.mxu0 0.0
    %4800 = vmatprep.subr.mxu0 0.0
    %4801 = vmatpush1.msra.mxu0 0.0
    %4802 = vmatprep.subr.mxu0 0.0
    %4803 = vmatpush1.msra.mxu0 0.0
    %4804 = vmatprep.subr.mxu0 0.0
    %4805 = vmatpush1.msra.mxu0 0.0
    %4806 = vmatprep.subr.mxu0 0.0
    %4807 = vmatpush1.msra.mxu0 0.0
    %4808 = vmatprep.subr.mxu0 0.0
    %4809 = vmatpush1.msra.mxu0 0.0
    %4810 = vmatprep.subr.mxu0 0.0
    %4811 = vmatpush1.msra.mxu0 0.0
    %4812 = vmatprep.subr.mxu0 0.0
    %4813 = vmatpush1.msra.mxu0 0.0
    %4814 = vmatprep.subr.mxu0 0.0
    %4815 = vmatpush1.msra.mxu0 0.0
    %4816 = vmatprep.subr.mxu0 0.0
    %4817 = vmatpush1.msra.mxu0 0.0
    %4818 = vmatprep.mubr.f32.mxu0 0.0
    %4819 = vmatmul.mubr.f32.gmra.mrb[0].mxu0 %v4752
    %v4820 = vpop.f32.mrb[0].mxu0
    %v4821 = vadd.f32 0.0, %v4820
    %v4822 = vpop.f32.mrb[0].mxu0
    %4823 = vdwg.mxu0
    %4824 = vrot.lane.b32.xlu0 %v4005, 64
    %v4825 = vpop.permute.xlu0 %4824
    %v4828 = vsel %vm427, %v4735, 0
    %4830 = vmatprep.subr.mxu0 0.0
    %4831 = vmatpush1.msra.mxu0 %v4825
    %4832 = vmatprep.subr.mxu0 0.0
    %4833 = vmatpush1.msra.mxu0 0.0
    %4834 = vmatprep.subr.mxu0 0.0
    %4835 = vmatpush1.msra.mxu0 0.0
    %4836 = vmatprep.subr.mxu0 0.0
    %4837 = vmatpush1.msra.mxu0 0.0
    %4838 = vmatprep.subr.mxu0 0.0
    %4839 = vmatpush1.msra.mxu0 0.0
    %4840 = vmatprep.subr.mxu0 0.0
    %4841 = vmatpush1.msra.mxu0 0.0
    %4842 = vmatprep.subr.mxu0 0.0
    %4843 = vmatpush1.msra.mxu0 0.0
    %4844 = vmatprep.subr.mxu0 0.0
    %4845 = vmatpush1.msra.mxu0 0.0
    %4846 = vmatprep.subr.mxu0 0.0
    %4847 = vmatpush1.msra.mxu0 0.0
    %4848 = vmatprep.subr.mxu0 0.0
    %4849 = vmatpush1.msra.mxu0 0.0
    %4850 = vmatprep.subr.mxu0 0.0
    %4851 = vmatpush1.msra.mxu0 0.0
    %4852 = vmatprep.subr.mxu0 0.0
    %4853 = vmatpush1.msra.mxu0 0.0
    %4854 = vmatprep.subr.mxu0 0.0
    %4855 = vmatpush1.msra.mxu0 0.0
    %4856 = vmatprep.subr.mxu0 0.0
    %4857 = vmatpush1.msra.mxu0 0.0
    %4858 = vmatprep.subr.mxu0 0.0
    %4859 = vmatpush1.msra.mxu0 0.0
    %4860 = vmatprep.subr.mxu0 0.0
    %4861 = vmatpush1.msra.mxu0 0.0
    %4862 = vmatprep.subr.mxu0 0.0
    %4863 = vmatpush1.msra.mxu0 0.0
    %4864 = vmatprep.subr.mxu0 0.0
    %4865 = vmatpush1.msra.mxu0 0.0
    %4866 = vmatprep.subr.mxu0 0.0
    %4867 = vmatpush1.msra.mxu0 0.0
    %4868 = vmatprep.subr.mxu0 0.0
    %4869 = vmatpush1.msra.mxu0 0.0
    %4870 = vmatprep.subr.mxu0 0.0
    %4871 = vmatpush1.msra.mxu0 0.0
    %4872 = vmatprep.subr.mxu0 0.0
    %4873 = vmatpush1.msra.mxu0 0.0
    %4874 = vmatprep.subr.mxu0 0.0
    %4875 = vmatpush1.msra.mxu0 0.0
    %4876 = vmatprep.subr.mxu0 0.0
    %4877 = vmatpush1.msra.mxu0 0.0
    %4878 = vmatprep.subr.mxu0 0.0
    %4879 = vmatpush1.msra.mxu0 0.0
    %4880 = vmatprep.subr.mxu0 0.0
    %4881 = vmatpush1.msra.mxu0 0.0
    %4882 = vmatprep.subr.mxu0 0.0
    %4883 = vmatpush1.msra.mxu0 0.0
    %4884 = vmatprep.subr.mxu0 0.0
    %4885 = vmatpush1.msra.mxu0 0.0
    %4886 = vmatprep.subr.mxu0 0.0
    %4887 = vmatpush1.msra.mxu0 0.0
    %4888 = vmatprep.subr.mxu0 0.0
    %4889 = vmatpush1.msra.mxu0 0.0
    %4890 = vmatprep.subr.mxu0 0.0
    %4891 = vmatpush1.msra.mxu0 0.0
    %4892 = vmatprep.subr.mxu0 0.0
    %4893 = vmatpush1.msra.mxu0 0.0
    %4894 = vmatprep.mubr.f32.mxu0 0.0
    %4895 = vmatmul.mubr.f32.gmra.mrb[0].mxu0 %v4828
    %v4896 = vpop.f32.mrb[0].mxu0
    %v4897 = vadd.f32 0.0, %v4896
    %v4898 = vpop.f32.mrb[0].mxu0
    %4899 = vdwg.mxu0
    %4900 = vrot.lane.b32.xlu0 %v4041, 64
    %v4901 = vpop.permute.xlu0 %4900
    %v4904 = vsel %vm427, %v4737, 0
    %4906 = vmatprep.subr.mxu0 0.0
    %4907 = vmatpush1.msra.mxu0 %v4901
    %4908 = vmatprep.subr.mxu0 0.0
    %4909 = vmatpush1.msra.mxu0 0.0
    %4910 = vmatprep.subr.mxu0 0.0
    %4911 = vmatpush1.msra.mxu0 0.0
    %4912 = vmatprep.subr.mxu0 0.0
    %4913 = vmatpush1.msra.mxu0 0.0
    %4914 = vmatprep.subr.mxu0 0.0
    %4915 = vmatpush1.msra.mxu0 0.0
    %4916 = vmatprep.subr.mxu0 0.0
    %4917 = vmatpush1.msra.mxu0 0.0
    %4918 = vmatprep.subr.mxu0 0.0
    %4919 = vmatpush1.msra.mxu0 0.0
    %4920 = vmatprep.subr.mxu0 0.0
    %4921 = vmatpush1.msra.mxu0 0.0
    %4922 = vmatprep.subr.mxu0 0.0
    %4923 = vmatpush1.msra.mxu0 0.0
    %4924 = vmatprep.subr.mxu0 0.0
    %4925 = vmatpush1.msra.mxu0 0.0
    %4926 = vmatprep.subr.mxu0 0.0
    %4927 = vmatpush1.msra.mxu0 0.0
    %4928 = vmatprep.subr.mxu0 0.0
    %4929 = vmatpush1.msra.mxu0 0.0
    %4930 = vmatprep.subr.mxu0 0.0
    %4931 = vmatpush1.msra.mxu0 0.0
    %4932 = vmatprep.subr.mxu0 0.0
    %4933 = vmatpush1.msra.mxu0 0.0
    %4934 = vmatprep.subr.mxu0 0.0
    %4935 = vmatpush1.msra.mxu0 0.0
    %4936 = vmatprep.subr.mxu0 0.0
    %4937 = vmatpush1.msra.mxu0 0.0
    %4938 = vmatprep.subr.mxu0 0.0
    %4939 = vmatpush1.msra.mxu0 0.0
    %4940 = vmatprep.subr.mxu0 0.0
    %4941 = vmatpush1.msra.mxu0 0.0
    %4942 = vmatprep.subr.mxu0 0.0
    %4943 = vmatpush1.msra.mxu0 0.0
    %4944 = vmatprep.subr.mxu0 0.0
    %4945 = vmatpush1.msra.mxu0 0.0
    %4946 = vmatprep.subr.mxu0 0.0
    %4947 = vmatpush1.msra.mxu0 0.0
    %4948 = vmatprep.subr.mxu0 0.0
    %4949 = vmatpush1.msra.mxu0 0.0
    %4950 = vmatprep.subr.mxu0 0.0
    %4951 = vmatpush1.msra.mxu0 0.0
    %4952 = vmatprep.subr.mxu0 0.0
    %4953 = vmatpush1.msra.mxu0 0.0
    %4954 = vmatprep.subr.mxu0 0.0
    %4955 = vmatpush1.msra.mxu0 0.0
    %4956 = vmatprep.subr.mxu0 0.0
    %4957 = vmatpush1.msra.mxu0 0.0
    %4958 = vmatprep.subr.mxu0 0.0
    %4959 = vmatpush1.msra.mxu0 0.0
    %4960 = vmatprep.subr.mxu0 0.0
    %4961 = vmatpush1.msra.mxu0 0.0
    %4962 = vmatprep.subr.mxu0 0.0
    %4963 = vmatpush1.msra.mxu0 0.0
    %4964 = vmatprep.subr.mxu0 0.0
    %4965 = vmatpush1.msra.mxu0 0.0
    %4966 = vmatprep.subr.mxu0 0.0
    %4967 = vmatpush1.msra.mxu0 0.0
    %4968 = vmatprep.subr.mxu0 0.0
    %4969 = vmatpush1.msra.mxu0 0.0
    %4970 = vmatprep.mubr.f32.mxu0 0.0
    %4971 = vmatmul.mubr.f32.gmra.mrb[0].mxu0 %v4904
    %v4972 = vpop.f32.mrb[0].mxu0
    %v4973 = vadd.f32 0.0, %v4972
    %v4974 = vpop.f32.mrb[0].mxu0
    %4975 = vdwg.mxu0
    %4976 = vrot.lane.b32.xlu0 %v4043, 64
    %v4977 = vpop.permute.xlu0 %4976
    %v4980 = vsel %vm427, %v4739, 0
    %4982 = vmatprep.subr.mxu0 0.0
    %4983 = vmatpush1.msra.mxu0 %v4977
    %4984 = vmatprep.subr.mxu0 0.0
    %4985 = vmatpush1.msra.mxu0 0.0
    %4986 = vmatprep.subr.mxu0 0.0
    %4987 = vmatpush1.msra.mxu0 0.0
    %4988 = vmatprep.subr.mxu0 0.0
    %4989 = vmatpush1.msra.mxu0 0.0
    %4990 = vmatprep.subr.mxu0 0.0
    %4991 = vmatpush1.msra.mxu0 0.0
    %4992 = vmatprep.subr.mxu0 0.0
    %4993 = vmatpush1.msra.mxu0 0.0
    %4994 = vmatprep.subr.mxu0 0.0
    %4995 = vmatpush1.msra.mxu0 0.0
    %4996 = vmatprep.subr.mxu0 0.0
    %4997 = vmatpush1.msra.mxu0 0.0
    %4998 = vmatprep.subr.mxu0 0.0
    %4999 = vmatpush1.msra.mxu0 0.0
    %5000 = vmatprep.subr.mxu0 0.0
    %5001 = vmatpush1.msra.mxu0 0.0
    %5002 = vmatprep.subr.mxu0 0.0
    %5003 = vmatpush1.msra.mxu0 0.0
    %5004 = vmatprep.subr.mxu0 0.0
    %5005 = vmatpush1.msra.mxu0 0.0
    %5006 = vmatprep.subr.mxu0 0.0
    %5007 = vmatpush1.msra.mxu0 0.0
    %5008 = vmatprep.subr.mxu0 0.0
    %5009 = vmatpush1.msra.mxu0 0.0
    %5010 = vmatprep.subr.mxu0 0.0
    %5011 = vmatpush1.msra.mxu0 0.0
    %5012 = vmatprep.subr.mxu0 0.0
    %5013 = vmatpush1.msra.mxu0 0.0
    %5014 = vmatprep.subr.mxu0 0.0
    %5015 = vmatpush1.msra.mxu0 0.0
    %5016 = vmatprep.subr.mxu0 0.0
    %5017 = vmatpush1.msra.mxu0 0.0
    %5018 = vmatprep.subr.mxu0 0.0
    %5019 = vmatpush1.msra.mxu0 0.0
    %5020 = vmatprep.subr.mxu0 0.0
    %5021 = vmatpush1.msra.mxu0 0.0
    %5022 = vmatprep.subr.mxu0 0.0
    %5023 = vmatpush1.msra.mxu0 0.0
    %5024 = vmatprep.subr.mxu0 0.0
    %5025 = vmatpush1.msra.mxu0 0.0
    %5026 = vmatprep.subr.mxu0 0.0
    %5027 = vmatpush1.msra.mxu0 0.0
    %5028 = vmatprep.subr.mxu0 0.0
    %5029 = vmatpush1.msra.mxu0 0.0
    %5030 = vmatprep.subr.mxu0 0.0
    %5031 = vmatpush1.msra.mxu0 0.0
    %5032 = vmatprep.subr.mxu0 0.0
    %5033 = vmatpush1.msra.mxu0 0.0
    %5034 = vmatprep.subr.mxu0 0.0
    %5035 = vmatpush1.msra.mxu0 0.0
    %5036 = vmatprep.subr.mxu0 0.0
    %5037 = vmatpush1.msra.mxu0 0.0
    %5038 = vmatprep.subr.mxu0 0.0
    %5039 = vmatpush1.msra.mxu0 0.0
    %5040 = vmatprep.subr.mxu0 0.0
    %5041 = vmatpush1.msra.mxu0 0.0
    %5042 = vmatprep.subr.mxu0 0.0
    %5043 = vmatpush1.msra.mxu0 0.0
    %5044 = vmatprep.subr.mxu0 0.0
    %5045 = vmatpush1.msra.mxu0 0.0
    %5046 = vmatprep.mubr.f32.mxu0 0.0
    %5047 = vmatmul.mubr.f32.gmra.mrb[0].mxu0 %v4980
    %v5048 = vpop.f32.mrb[0].mxu0
    %v5049 = vadd.f32 0.0, %v5048
    %v5050 = vpop.f32.mrb[0].mxu0
    %5051 = vdwg.mxu0
    %5052 = vrot.lane.b32.xlu0 %v4045, 64
    %v5053 = vpop.permute.xlu0 %5052
    %v5056 = vsel %vm427, %v4741, 0
    %5058 = vmatprep.subr.mxu0 0.0
    %5059 = vmatpush1.msra.mxu0 %v5053
    %5060 = vmatprep.subr.mxu0 0.0
    %5061 = vmatpush1.msra.mxu0 0.0
    %5062 = vmatprep.subr.mxu0 0.0
    %5063 = vmatpush1.msra.mxu0 0.0
    %5064 = vmatprep.subr.mxu0 0.0
    %5065 = vmatpush1.msra.mxu0 0.0
    %5066 = vmatprep.subr.mxu0 0.0
    %5067 = vmatpush1.msra.mxu0 0.0
    %5068 = vmatprep.subr.mxu0 0.0
    %5069 = vmatpush1.msra.mxu0 0.0
    %5070 = vmatprep.subr.mxu0 0.0
    %5071 = vmatpush1.msra.mxu0 0.0
    %5072 = vmatprep.subr.mxu0 0.0
    %5073 = vmatpush1.msra.mxu0 0.0
    %5074 = vmatprep.subr.mxu0 0.0
    %5075 = vmatpush1.msra.mxu0 0.0
    %5076 = vmatprep.subr.mxu0 0.0
    %5077 = vmatpush1.msra.mxu0 0.0
    %5078 = vmatprep.subr.mxu0 0.0
    %5079 = vmatpush1.msra.mxu0 0.0
    %5080 = vmatprep.subr.mxu0 0.0
    %5081 = vmatpush1.msra.mxu0 0.0
    %5082 = vmatprep.subr.mxu0 0.0
    %5083 = vmatpush1.msra.mxu0 0.0
    %5084 = vmatprep.subr.mxu0 0.0
    %5085 = vmatpush1.msra.mxu0 0.0
    %5086 = vmatprep.subr.mxu0 0.0
    %5087 = vmatpush1.msra.mxu0 0.0
    %5088 = vmatprep.subr.mxu0 0.0
    %5089 = vmatpush1.msra.mxu0 0.0
    %5090 = vmatprep.subr.mxu0 0.0
    %5091 = vmatpush1.msra.mxu0 0.0
    %5092 = vmatprep.subr.mxu0 0.0
    %5093 = vmatpush1.msra.mxu0 0.0
    %5094 = vmatprep.subr.mxu0 0.0
    %5095 = vmatpush1.msra.mxu0 0.0
    %5096 = vmatprep.subr.mxu0 0.0
    %5097 = vmatpush1.msra.mxu0 0.0
    %5098 = vmatprep.subr.mxu0 0.0
    %5099 = vmatpush1.msra.mxu0 0.0
    %5100 = vmatprep.subr.mxu0 0.0
    %5101 = vmatpush1.msra.mxu0 0.0
    %5102 = vmatprep.subr.mxu0 0.0
    %5103 = vmatpush1.msra.mxu0 0.0
    %5104 = vmatprep.subr.mxu0 0.0
    %5105 = vmatpush1.msra.mxu0 0.0
    %5106 = vmatprep.subr.mxu0 0.0
    %5107 = vmatpush1.msra.mxu0 0.0
    %5108 = vmatprep.subr.mxu0 0.0
    %5109 = vmatpush1.msra.mxu0 0.0
    %5110 = vmatprep.subr.mxu0 0.0
    %5111 = vmatpush1.msra.mxu0 0.0
    %5112 = vmatprep.subr.mxu0 0.0
    %5113 = vmatpush1.msra.mxu0 0.0
    %5114 = vmatprep.subr.mxu0 0.0
    %5115 = vmatpush1.msra.mxu0 0.0
    %5116 = vmatprep.subr.mxu0 0.0
    %5117 = vmatpush1.msra.mxu0 0.0
    %5118 = vmatprep.subr.mxu0 0.0
    %5119 = vmatpush1.msra.mxu0 0.0
    %5120 = vmatprep.subr.mxu0 0.0
    %5121 = vmatpush1.msra.mxu0 0.0
    %5122 = vmatprep.mubr.f32.mxu0 0.0
    %5123 = vmatmul.mubr.f32.gmra.mrb[0].mxu0 %v5056
    %v5124 = vpop.f32.mrb[0].mxu0
    %v5125 = vadd.f32 0.0, %v5124
    %v5126 = vpop.f32.mrb[0].mxu0
    %5127 = vdwg.mxu0
    %5128 = vrot.lane.b32.xlu0 %v4047, 64
    %v5129 = vpop.permute.xlu0 %5128
    %v5132 = vsel %vm427, %v4743, 0
    %5134 = vmatprep.subr.mxu0 0.0
    %5135 = vmatpush1.msra.mxu0 %v5129
    %5136 = vmatprep.subr.mxu0 0.0
    %5137 = vmatpush1.msra.mxu0 0.0
    %5138 = vmatprep.subr.mxu0 0.0
    %5139 = vmatpush1.msra.mxu0 0.0
    %5140 = vmatprep.subr.mxu0 0.0
    %5141 = vmatpush1.msra.mxu0 0.0
    %5142 = vmatprep.subr.mxu0 0.0
    %5143 = vmatpush1.msra.mxu0 0.0
    %5144 = vmatprep.subr.mxu0 0.0
    %5145 = vmatpush1.msra.mxu0 0.0
    %5146 = vmatprep.subr.mxu0 0.0
    %5147 = vmatpush1.msra.mxu0 0.0
    %5148 = vmatprep.subr.mxu0 0.0
    %5149 = vmatpush1.msra.mxu0 0.0
    %5150 = vmatprep.subr.mxu0 0.0
    %5151 = vmatpush1.msra.mxu0 0.0
    %5152 = vmatprep.subr.mxu0 0.0
    %5153 = vmatpush1.msra.mxu0 0.0
    %5154 = vmatprep.subr.mxu0 0.0
    %5155 = vmatpush1.msra.mxu0 0.0
    %5156 = vmatprep.subr.mxu0 0.0
    %5157 = vmatpush1.msra.mxu0 0.0
    %5158 = vmatprep.subr.mxu0 0.0
    %5159 = vmatpush1.msra.mxu0 0.0
    %5160 = vmatprep.subr.mxu0 0.0
    %5161 = vmatpush1.msra.mxu0 0.0
    %5162 = vmatprep.subr.mxu0 0.0
    %5163 = vmatpush1.msra.mxu0 0.0
    %5164 = vmatprep.subr.mxu0 0.0
    %5165 = vmatpush1.msra.mxu0 0.0
    %5166 = vmatprep.subr.mxu0 0.0
    %5167 = vmatpush1.msra.mxu0 0.0
    %5168 = vmatprep.subr.mxu0 0.0
    %5169 = vmatpush1.msra.mxu0 0.0
    %5170 = vmatprep.subr.mxu0 0.0
    %5171 = vmatpush1.msra.mxu0 0.0
    %5172 = vmatprep.subr.mxu0 0.0
    %5173 = vmatpush1.msra.mxu0 0.0
    %5174 = vmatprep.subr.mxu0 0.0
    %5175 = vmatpush1.msra.mxu0 0.0
    %5176 = vmatprep.subr.mxu0 0.0
    %5177 = vmatpush1.msra.mxu0 0.0
    %5178 = vmatprep.subr.mxu0 0.0
    %5179 = vmatpush1.msra.mxu0 0.0
    %5180 = vmatprep.subr.mxu0 0.0
    %5181 = vmatpush1.msra.mxu0 0.0
    %5182 = vmatprep.subr.mxu0 0.0
    %5183 = vmatpush1.msra.mxu0 0.0
    %5184 = vmatprep.subr.mxu0 0.0
    %5185 = vmatpush1.msra.mxu0 0.0
    %5186 = vmatprep.subr.mxu0 0.0
    %5187 = vmatpush1.msra.mxu0 0.0
    %5188 = vmatprep.subr.mxu0 0.0
    %5189 = vmatpush1.msra.mxu0 0.0
    %5190 = vmatprep.subr.mxu0 0.0
    %5191 = vmatpush1.msra.mxu0 0.0
    %5192 = vmatprep.subr.mxu0 0.0
    %5193 = vmatpush1.msra.mxu0 0.0
    %5194 = vmatprep.subr.mxu0 0.0
    %5195 = vmatpush1.msra.mxu0 0.0
    %5196 = vmatprep.subr.mxu0 0.0
    %5197 = vmatpush1.msra.mxu0 0.0
    %5198 = vmatprep.mubr.f32.mxu0 0.0
    %5199 = vmatmul.mubr.f32.gmra.mrb[0].mxu0 %v5132
    %v5200 = vpop.f32.mrb[0].mxu0
    %v5201 = vadd.f32 0.0, %v5200
    %v5202 = vpop.f32.mrb[0].mxu0
    %5203 = vdwg.mxu0
    %5204 = vrot.lane.b32.xlu0 %v4049, 64
    %v5205 = vpop.permute.xlu0 %5204
    %v5208 = vsel %vm427, %v4745, 0
    %5210 = vmatprep.subr.mxu0 0.0
    %5211 = vmatpush1.msra.mxu0 %v5205
    %5212 = vmatprep.subr.mxu0 0.0
    %5213 = vmatpush1.msra.mxu0 0.0
    %5214 = vmatprep.subr.mxu0 0.0
    %5215 = vmatpush1.msra.mxu0 0.0
    %5216 = vmatprep.subr.mxu0 0.0
    %5217 = vmatpush1.msra.mxu0 0.0
    %5218 = vmatprep.subr.mxu0 0.0
    %5219 = vmatpush1.msra.mxu0 0.0
    %5220 = vmatprep.subr.mxu0 0.0
    %5221 = vmatpush1.msra.mxu0 0.0
    %5222 = vmatprep.subr.mxu0 0.0
    %5223 = vmatpush1.msra.mxu0 0.0
    %5224 = vmatprep.subr.mxu0 0.0
    %5225 = vmatpush1.msra.mxu0 0.0
    %5226 = vmatprep.subr.mxu0 0.0
    %5227 = vmatpush1.msra.mxu0 0.0
    %5228 = vmatprep.subr.mxu0 0.0
    %5229 = vmatpush1.msra.mxu0 0.0
    %5230 = vmatprep.subr.mxu0 0.0
    %5231 = vmatpush1.msra.mxu0 0.0
    %5232 = vmatprep.subr.mxu0 0.0
    %5233 = vmatpush1.msra.mxu0 0.0
    %5234 = vmatprep.subr.mxu0 0.0
    %5235 = vmatpush1.msra.mxu0 0.0
    %5236 = vmatprep.subr.mxu0 0.0
    %5237 = vmatpush1.msra.mxu0 0.0
    %5238 = vmatprep.subr.mxu0 0.0
    %5239 = vmatpush1.msra.mxu0 0.0
    %5240 = vmatprep.subr.mxu0 0.0
    %5241 = vmatpush1.msra.mxu0 0.0
    %5242 = vmatprep.subr.mxu0 0.0
    %5243 = vmatpush1.msra.mxu0 0.0
    %5244 = vmatprep.subr.mxu0 0.0
    %5245 = vmatpush1.msra.mxu0 0.0
    %5246 = vmatprep.subr.mxu0 0.0
    %5247 = vmatpush1.msra.mxu0 0.0
    %5248 = vmatprep.subr.mxu0 0.0
    %5249 = vmatpush1.msra.mxu0 0.0
    %5250 = vmatprep.subr.mxu0 0.0
    %5251 = vmatpush1.msra.mxu0 0.0
    %5252 = vmatprep.subr.mxu0 0.0
    %5253 = vmatpush1.msra.mxu0 0.0
    %5254 = vmatprep.subr.mxu0 0.0
    %5255 = vmatpush1.msra.mxu0 0.0
    %5256 = vmatprep.subr.mxu0 0.0
    %5257 = vmatpush1.msra.mxu0 0.0
    %5258 = vmatprep.subr.mxu0 0.0
    %5259 = vmatpush1.msra.mxu0 0.0
    %5260 = vmatprep.subr.mxu0 0.0
    %5261 = vmatpush1.msra.mxu0 0.0
    %5262 = vmatprep.subr.mxu0 0.0
    %5263 = vmatpush1.msra.mxu0 0.0
    %5264 = vmatprep.subr.mxu0 0.0
    %5265 = vmatpush1.msra.mxu0 0.0
    %5266 = vmatprep.subr.mxu0 0.0
    %5267 = vmatpush1.msra.mxu0 0.0
    %5268 = vmatprep.subr.mxu0 0.0
    %5269 = vmatpush1.msra.mxu0 0.0
    %5270 = vmatprep.subr.mxu0 0.0
    %5271 = vmatpush1.msra.mxu0 0.0
    %5272 = vmatprep.subr.mxu0 0.0
    %5273 = vmatpush1.msra.mxu0 0.0
    %5274 = vmatprep.mubr.f32.mxu0 0.0
    %5275 = vmatmul.mubr.f32.gmra.mrb[0].mxu0 %v5208
    %v5276 = vpop.f32.mrb[0].mxu0
    %v5277 = vadd.f32 0.0, %v5276
    %v5278 = vpop.f32.mrb[0].mxu0
    %5279 = vdwg.mxu0
    %5280 = vrot.lane.b32.xlu0 %v4051, 64
    %v5281 = vpop.permute.xlu0 %5280
    %v5284 = vsel %vm427, %v4747, 0
    %5286 = vmatprep.subr.mxu0 0.0
    %5287 = vmatpush1.msra.mxu0 %v5281
    %5288 = vmatprep.subr.mxu0 0.0
    %5289 = vmatpush1.msra.mxu0 0.0
    %5290 = vmatprep.subr.mxu0 0.0
    %5291 = vmatpush1.msra.mxu0 0.0
    %5292 = vmatprep.subr.mxu0 0.0
    %5293 = vmatpush1.msra.mxu0 0.0
    %5294 = vmatprep.subr.mxu0 0.0
    %5295 = vmatpush1.msra.mxu0 0.0
    %5296 = vmatprep.subr.mxu0 0.0
    %5297 = vmatpush1.msra.mxu0 0.0
    %5298 = vmatprep.subr.mxu0 0.0
    %5299 = vmatpush1.msra.mxu0 0.0
    %5300 = vmatprep.subr.mxu0 0.0
    %5301 = vmatpush1.msra.mxu0 0.0
    %5302 = vmatprep.subr.mxu0 0.0
    %5303 = vmatpush1.msra.mxu0 0.0
    %5304 = vmatprep.subr.mxu0 0.0
    %5305 = vmatpush1.msra.mxu0 0.0
    %5306 = vmatprep.subr.mxu0 0.0
    %5307 = vmatpush1.msra.mxu0 0.0
    %5308 = vmatprep.subr.mxu0 0.0
    %5309 = vmatpush1.msra.mxu0 0.0
    %5310 = vmatprep.subr.mxu0 0.0
    %5311 = vmatpush1.msra.mxu0 0.0
    %5312 = vmatprep.subr.mxu0 0.0
    %5313 = vmatpush1.msra.mxu0 0.0
    %5314 = vmatprep.subr.mxu0 0.0
    %5315 = vmatpush1.msra.mxu0 0.0
    %5316 = vmatprep.subr.mxu0 0.0
    %5317 = vmatpush1.msra.mxu0 0.0
    %5318 = vmatprep.subr.mxu0 0.0
    %5319 = vmatpush1.msra.mxu0 0.0
    %5320 = vmatprep.subr.mxu0 0.0
    %5321 = vmatpush1.msra.mxu0 0.0
    %5322 = vmatprep.subr.mxu0 0.0
    %5323 = vmatpush1.msra.mxu0 0.0
    %5324 = vmatprep.subr.mxu0 0.0
    %5325 = vmatpush1.msra.mxu0 0.0
    %5326 = vmatprep.subr.mxu0 0.0
    %5327 = vmatpush1.msra.mxu0 0.0
    %5328 = vmatprep.subr.mxu0 0.0
    %5329 = vmatpush1.msra.mxu0 0.0
    %5330 = vmatprep.subr.mxu0 0.0
    %5331 = vmatpush1.msra.mxu0 0.0
    %5332 = vmatprep.subr.mxu0 0.0
    %5333 = vmatpush1.msra.mxu0 0.0
    %5334 = vmatprep.subr.mxu0 0.0
    %5335 = vmatpush1.msra.mxu0 0.0
    %5336 = vmatprep.subr.mxu0 0.0
    %5337 = vmatpush1.msra.mxu0 0.0
    %5338 = vmatprep.subr.mxu0 0.0
    %5339 = vmatpush1.msra.mxu0 0.0
    %5340 = vmatprep.subr.mxu0 0.0
    %5341 = vmatpush1.msra.mxu0 0.0
    %5342 = vmatprep.subr.mxu0 0.0
    %5343 = vmatpush1.msra.mxu0 0.0
    %5344 = vmatprep.subr.mxu0 0.0
    %5345 = vmatpush1.msra.mxu0 0.0
    %5346 = vmatprep.subr.mxu0 0.0
    %5347 = vmatpush1.msra.mxu0 0.0
    %5348 = vmatprep.subr.mxu0 0.0
    %5349 = vmatpush1.msra.mxu0 0.0
    %5350 = vmatprep.mubr.f32.mxu0 0.0
    %5351 = vmatmul.mubr.f32.gmra.mrb[0].mxu0 %v5284
    %v5352 = vpop.f32.mrb[0].mxu0
    %v5353 = vadd.f32 0.0, %v5352
    %v5354 = vpop.f32.mrb[0].mxu0
    %5355 = vdwg.mxu0
    %5358 = vrot.lane.b32.xlu0 %v4973, 8
    %v5359 = vpop.permute.xlu0 %5358
    %5360 = vrot.lane.b32.xlu0 %v5049, 8
    %v5361 = vpop.permute.xlu0 %5360
    %5366 = vrot.lane.b32.xlu0 %v5125, 16
    %v5367 = vpop.permute.xlu0 %5366
    %5368 = vrot.lane.b32.xlu0 %v5201, 16
    %v5369 = vpop.permute.xlu0 %5368
    %5374 = vrot.lane.b32.xlu0 %v5277, 24
    %v5375 = vpop.permute.xlu0 %5374
    %5376 = vrot.lane.b32.xlu0 %v5353, 24
    %v5377 = vpop.permute.xlu0 %5376
    %v5380 = vsel %vm427, %v4821, %v5359
    %v5381 = vsel %vm427, %v4897, %v5361
    %v5382 = vsel %vm1756, %v5380, %v5367
    %v5383 = vsel %vm1756, %v5381, %v5369
    %v5384 = vsel %vm1759, %v5382, %v5375
    %v5385 = vsel %vm1759, %v5383, %v5377
    %s5386 = scalar_lea.vmem %s6, 32
    %v5387 = vld [vmem:[%s5386] sm:$0xff]
    %v5388 = vld [vmem:[%s5386 + $0x8] sm:$0xff]
    %v5389 = vld [vmem:[%s5386 + $0x10] sm:$0xff]
    %v5390 = vld [vmem:[%s5386 + $0x18] sm:$0xff]
    %s5391 = scalar_lea.vmem %s7, 1
    %v5392 = vld [vmem:[%s5391] sm:$0x1]
    %v5394 = vlaneseq
    %v5395 = vshrl.u32 %v5394, 7
    %v5396 = vsub.s32 0, %v5395
    %v5397 = vrot.slane %v5392, %v5396
    %v5400 = vsel %vm283, %v5384, 0
    %v5403 = vsel %vm283, %v5385, 0
    %5405 = vmatprep.subr.mxu0 0.0
    %5406 = vmatpush1.msra.mxu0 %v5387
    %5407 = vmatprep.subr.mxu0 0.0
    %5408 = vmatpush1.msra.mxu0 %v5388
    %5409 = vmatprep.subr.mxu0 0.0
    %5410 = vmatpush1.msra.mxu0 %v5389
    %5411 = vmatprep.subr.mxu0 0.0
    %5412 = vmatpush1.msra.mxu0 %v5390
    %5413 = vmatprep.subr.mxu0 0.0
    %5414 = vmatpush1.msra.mxu0 0.0
    %5415 = vmatprep.subr.mxu0 0.0
    %5416 = vmatpush1.msra.mxu0 0.0
    %5417 = vmatprep.subr.mxu0 0.0
    %5418 = vmatpush1.msra.mxu0 0.0
    %5419 = vmatprep.subr.mxu0 0.0
    %5420 = vmatpush1.msra.mxu0 0.0
    %5421 = vmatprep.subr.mxu0 0.0
    %5422 = vmatpush1.msra.mxu0 0.0
    %5423 = vmatprep.subr.mxu0 0.0
    %5424 = vmatpush1.msra.mxu0 0.0
    %5425 = vmatprep.subr.mxu0 0.0
    %5426 = vmatpush1.msra.mxu0 0.0
    %5427 = vmatprep.subr.mxu0 0.0
    %5428 = vmatpush1.msra.mxu0 0.0
    %5429 = vmatprep.subr.mxu0 0.0
    %5430 = vmatpush1.msra.mxu0 0.0
    %5431 = vmatprep.subr.mxu0 0.0
    %5432 = vmatpush1.msra.mxu0 0.0
    %5433 = vmatprep.subr.mxu0 0.0
    %5434 = vmatpush1.msra.mxu0 0.0
    %5435 = vmatprep.subr.mxu0 0.0
    %5436 = vmatpush1.msra.mxu0 0.0
    %5437 = vmatprep.subr.mxu0 0.0
    %5438 = vmatpush1.msra.mxu0 0.0
    %5439 = vmatprep.subr.mxu0 0.0
    %5440 = vmatpush1.msra.mxu0 0.0
    %5441 = vmatprep.subr.mxu0 0.0
    %5442 = vmatpush1.msra.mxu0 0.0
    %5443 = vmatprep.subr.mxu0 0.0
    %5444 = vmatpush1.msra.mxu0 0.0
    %5445 = vmatprep.subr.mxu0 0.0
    %5446 = vmatpush1.msra.mxu0 0.0
    %5447 = vmatprep.subr.mxu0 0.0
    %5448 = vmatpush1.msra.mxu0 0.0
    %5449 = vmatprep.subr.mxu0 0.0
    %5450 = vmatpush1.msra.mxu0 0.0
    %5451 = vmatprep.subr.mxu0 0.0
    %5452 = vmatpush1.msra.mxu0 0.0
    %5453 = vmatprep.subr.mxu0 0.0
    %5454 = vmatpush1.msra.mxu0 0.0
    %5455 = vmatprep.subr.mxu0 0.0
    %5456 = vmatpush1.msra.mxu0 0.0
    %5457 = vmatprep.subr.mxu0 0.0
    %5458 = vmatpush1.msra.mxu0 0.0
    %5459 = vmatprep.subr.mxu0 0.0
    %5460 = vmatpush1.msra.mxu0 0.0
    %5461 = vmatprep.subr.mxu0 0.0
    %5462 = vmatpush1.msra.mxu0 0.0
    %5463 = vmatprep.subr.mxu0 0.0
    %5464 = vmatpush1.msra.mxu0 0.0
    %5465 = vmatprep.subr.mxu0 0.0
    %5466 = vmatpush1.msra.mxu0 0.0
    %5467 = vmatprep.subr.mxu0 0.0
    %5468 = vmatpush1.msra.mxu0 0.0
    %5469 = vmatprep.mubr.f32.mxu0 0.0
    %5470 = vmatmul.mubr.f32.gmra.mrb[0].mxu0 %v5400
    %v5471 = vpop.f32.mrb[0].mxu0
    %v5472 = vadd.f32 %v5397, %v5471
    %v5473 = vpop.f32.mrb[0].mxu0
    %5474 = vmatprep.mubr.f32.mxu0 0.0
    %5475 = vmatmul.mubr.f32.gmra.mrb[0].mxu0 %v5403
    %v5476 = vpop.f32.mrb[0].mxu0
    %v5477 = vadd.f32 %v5397, %v5476
    %v5478 = vpop.f32.mrb[0].mxu0
    %5479 = vdwg.mxu0
    %v5480 = vadd.f32 %v3894, %v5472
    %v5481 = vadd.f32 %v3895, %v5477
    %s5482 = scalar_lea.vmem [#allocation10], 1
    %v5483 = vld [vmem:[%s5482] sm:$0x1]
    %s5484 = scalar_lea.vmem [#allocation11], 1
    %v5485 = vld [vmem:[%s5484] sm:$0x1]
    %v5486 = vsel %vm283, %v5480, 0.0
    %5487 = vadd.xlane.f32.xlu0 %v5486
    %v5488 = vpop.xlane.xlu0 %5487
    %v5489 = vsel %vm283, %v5481, 0.0
    %5490 = vadd.xlane.f32.xlu0 %v5489
    %v5491 = vpop.xlane.xlu0 %5490
    %v5492 = vmul.f32 %v5488, %v1864
    %v5493 = vmul.f32 %v5491, %v1864
    %v5494 = vsub.f32 %v5480, %v5492
    %v5495 = vsub.f32 %v5481, %v5493
    %v5496 = vmul.f32 %v5494, %v5494
    %v5497 = vmul.f32 %v5495, %v5495
    %v5498 = vsel %vm283, %v5496, 0.0
    %5499 = vadd.xlane.f32.xlu0 %v5498
    %v5500 = vpop.xlane.xlu0 %5499
    %v5501 = vsel %vm283, %v5497, 0.0
    %5502 = vadd.xlane.f32.xlu0 %v5501
    %v5503 = vpop.xlane.xlu0 %5502
    %v5504 = vmul.f32 %v5500, %v1864
    %v5505 = vmul.f32 %v5503, %v1864
    %v5506 = vadd.f32 %v5504, 1e-05
    %v5507 = vadd.f32 %v5505, 1e-05
    %v5508 = vrsqrt.pop %v5506
    %v5509 = vrsqrt.pop %v5507
    %v5510 = vmul.f32 %v5494, %v5508
    %v5511 = vmul.f32 %v5495, %v5509
    %v5513 = vlaneseq
    %v5514 = vshrl.u32 %v5513, 7
    %v5515 = vsub.s32 0, %v5514
    %v5516 = vrot.slane %v5483, %v5515
    %v5518 = vmul.f32 %v5510, %v5516
    %v5519 = vmul.f32 %v5511, %v5516
    %v5521 = vlaneseq
    %v5522 = vshrl.u32 %v5521, 7
    %v5523 = vsub.s32 0, %v5522
    %v5524 = vrot.slane %v5485, %v5523
    %v5526 = vadd.f32 %v5518, %v5524
    %v5527 = vadd.f32 %v5519, %v5524
    %v5528 = vadd.f32 %v5526, %v256
    %v5529 = vadd.f32 %v5527, %v257
    %s5530 = scalar_lea.vmem %s10, 32
    %v5531 = vld [vmem:[%s5530] sm:$0xff]
    %v5532 = vld [vmem:[%s5530 + $0x8] sm:$0xff]
    %v5533 = vld [vmem:[%s5530 + $0x10] sm:$0xff]
    %v5534 = vld [vmem:[%s5530 + $0x18] sm:$0xff]
    %s5535 = scalar_lea.vmem [#allocation13], 1
    %v5536 = vld [vmem:[%s5535] sm:$0x1]
    %v5538 = vlaneseq
    %v5539 = vshrl.u32 %v5538, 7
    %v5540 = vsub.s32 0, %v5539
    %v5541 = vrot.slane %v5536, %v5540
    %v5544 = vsel %vm283, %v5528, 0
    %v5547 = vsel %vm283, %v5529, 0
    %5549 = vmatprep.subr.mxu0 0.0
    %5550 = vmatpush1.msra.mxu0 %v5531
    %5551 = vmatprep.subr.mxu0 0.0
    %5552 = vmatpush1.msra.mxu0 %v5532
    %5553 = vmatprep.subr.mxu0 0.0
    %5554 = vmatpush1.msra.mxu0 %v5533
    %5555 = vmatprep.subr.mxu0 0.0
    %5556 = vmatpush1.msra.mxu0 %v5534
    %5557 = vmatprep.subr.mxu0 0.0
    %5558 = vmatpush1.msra.mxu0 0.0
    %5559 = vmatprep.subr.mxu0 0.0
    %5560 = vmatpush1.msra.mxu0 0.0
    %5561 = vmatprep.subr.mxu0 0.0
    %5562 = vmatpush1.msra.mxu0 0.0
    %5563 = vmatprep.subr.mxu0 0.0
    %5564 = vmatpush1.msra.mxu0 0.0
    %5565 = vmatprep.subr.mxu0 0.0
    %5566 = vmatpush1.msra.mxu0 0.0
    %5567 = vmatprep.subr.mxu0 0.0
    %5568 = vmatpush1.msra.mxu0 0.0
    %5569 = vmatprep.subr.mxu0 0.0
    %5570 = vmatpush1.msra.mxu0 0.0
    %5571 = vmatprep.subr.mxu0 0.0
    %5572 = vmatpush1.msra.mxu0 0.0
    %5573 = vmatprep.subr.mxu0 0.0
    %5574 = vmatpush1.msra.mxu0 0.0
    %5575 = vmatprep.subr.mxu0 0.0
    %5576 = vmatpush1.msra.mxu0 0.0
    %5577 = vmatprep.subr.mxu0 0.0
    %5578 = vmatpush1.msra.mxu0 0.0
    %5579 = vmatprep.subr.mxu0 0.0
    %5580 = vmatpush1.msra.mxu0 0.0
    %5581 = vmatprep.subr.mxu0 0.0
    %5582 = vmatpush1.msra.mxu0 0.0
    %5583 = vmatprep.subr.mxu0 0.0
    %5584 = vmatpush1.msra.mxu0 0.0
    %5585 = vmatprep.subr.mxu0 0.0
    %5586 = vmatpush1.msra.mxu0 0.0
    %5587 = vmatprep.subr.mxu0 0.0
    %5588 = vmatpush1.msra.mxu0 0.0
    %5589 = vmatprep.subr.mxu0 0.0
    %5590 = vmatpush1.msra.mxu0 0.0
    %5591 = vmatprep.subr.mxu0 0.0
    %5592 = vmatpush1.msra.mxu0 0.0
    %5593 = vmatprep.subr.mxu0 0.0
    %5594 = vmatpush1.msra.mxu0 0.0
    %5595 = vmatprep.subr.mxu0 0.0
    %5596 = vmatpush1.msra.mxu0 0.0
    %5597 = vmatprep.subr.mxu0 0.0
    %5598 = vmatpush1.msra.mxu0 0.0
    %5599 = vmatprep.subr.mxu0 0.0
    %5600 = vmatpush1.msra.mxu0 0.0
    %5601 = vmatprep.subr.mxu0 0.0
    %5602 = vmatpush1.msra.mxu0 0.0
    %5603 = vmatprep.subr.mxu0 0.0
    %5604 = vmatpush1.msra.mxu0 0.0
    %5605 = vmatprep.subr.mxu0 0.0
    %5606 = vmatpush1.msra.mxu0 0.0
    %5607 = vmatprep.subr.mxu0 0.0
    %5608 = vmatpush1.msra.mxu0 0.0
    %5609 = vmatprep.subr.mxu0 0.0
    %5610 = vmatpush1.msra.mxu0 0.0
    %5611 = vmatprep.subr.mxu0 0.0
    %5612 = vmatpush1.msra.mxu0 0.0
    %5613 = vmatprep.mubr.f32.mxu0 0.0
    %5614 = vmatmul.mubr.f32.gmra.mrb[0].mxu0 %v5544
    %v5615 = vpop.f32.mrb[0].mxu0
    %v5616 = vadd.f32 %v5541, %v5615
    %v5617 = vpop.f32.mrb[0].mxu0
    %5618 = vmatprep.mubr.f32.mxu0 0.0
    %5619 = vmatmul.mubr.f32.gmra.mrb[0].mxu0 %v5547
    %v5620 = vpop.f32.mrb[0].mxu0
    %v5621 = vadd.f32 %v5541, %v5620
    %v5622 = vpop.f32.mrb[0].mxu0
    %5623 = vmatprep.mubr.f32.mxu0 0.0
    %5624 = vmatmul.mubr.f32.gmra.mrb[0].mxu0 %v1921
    %v5625 = vpop.f32.mrb[0].mxu0
    %v5626 = vadd.f32 %v5541, %v5625
    %v5627 = vpop.f32.mrb[0].mxu0
    %5628 = vmatprep.mubr.f32.mxu0 0.0
    %5629 = vmatmul.mubr.f32.gmra.mrb[0].mxu0 %v1924
    %v5630 = vpop.f32.mrb[0].mxu0
    %v5631 = vadd.f32 %v5541, %v5630
    %v5632 = vpop.f32.mrb[0].mxu0
    %5633 = vmatprep.mubr.f32.mxu0 0.0
    %5634 = vmatmul.mubr.f32.gmra.mrb[0].mxu0 %v1927
    %v5635 = vpop.f32.mrb[0].mxu0
    %v5636 = vadd.f32 %v5541, %v5635
    %v5637 = vpop.f32.mrb[0].mxu0
    %5638 = vmatprep.mubr.f32.mxu0 0.0
    %5639 = vmatmul.mubr.f32.gmra.mrb[0].mxu0 %v1930
    %v5640 = vpop.f32.mrb[0].mxu0
    %v5641 = vadd.f32 %v5541, %v5640
    %v5642 = vpop.f32.mrb[0].mxu0
    %5643 = vmatprep.mubr.f32.mxu0 0.0
    %5644 = vmatmul.mubr.f32.gmra.mrb[0].mxu0 %v1933
    %v5645 = vpop.f32.mrb[0].mxu0
    %v5646 = vadd.f32 %v5541, %v5645
    %v5647 = vpop.f32.mrb[0].mxu0
    %5648 = vmatprep.mubr.f32.mxu0 0.0
    %5649 = vmatmul.mubr.f32.gmra.mrb[0].mxu0 %v1936
    %v5650 = vpop.f32.mrb[0].mxu0
    %v5651 = vadd.f32 %v5541, %v5650
    %v5652 = vpop.f32.mrb[0].mxu0
    %5653 = vmatprep.mubr.f32.mxu0 0.0
    %5654 = vmatmul.mubr.f32.gmra.mrb[0].mxu0 %v1939
    %v5655 = vpop.f32.mrb[0].mxu0
    %v5656 = vadd.f32 %v5541, %v5655
    %v5657 = vpop.f32.mrb[0].mxu0
    %5658 = vmatprep.mubr.f32.mxu0 0.0
    %5659 = vmatmul.mubr.f32.gmra.mrb[0].mxu0 %v1942
    %v5660 = vpop.f32.mrb[0].mxu0
    %v5661 = vadd.f32 %v5541, %v5660
    %v5662 = vpop.f32.mrb[0].mxu0
    %5663 = vdwg.mxu0
    %v5664 = vmul.f32 %v5616, 0.35355338
    %v5665 = vmul.f32 %v5621, 0.35355338
    %5668 = vrot.lane.b32.xlu0 %v5664, 120
    %v5669 = vpop.permute.xlu0 %5668
    %5670 = vrot.lane.b32.xlu0 %v5665, 120
    %v5671 = vpop.permute.xlu0 %5670
    %5672 = vrot.lane.b32.xlu0 %v5664, 112
    %v5673 = vpop.permute.xlu0 %5672
    %5674 = vrot.lane.b32.xlu0 %v5665, 112
    %v5675 = vpop.permute.xlu0 %5674
    %5676 = vrot.lane.b32.xlu0 %v5664, 104
    %v5677 = vpop.permute.xlu0 %5676
    %5678 = vrot.lane.b32.xlu0 %v5665, 104
    %v5679 = vpop.permute.xlu0 %5678
    %5684 = vrot.lane.b32.xlu0 %v5626, 120
    %v5685 = vpop.permute.xlu0 %5684
    %5686 = vrot.lane.b32.xlu0 %v5631, 120
    %v5687 = vpop.permute.xlu0 %5686
    %5688 = vrot.lane.b32.xlu0 %v5636, 120
    %v5689 = vpop.permute.xlu0 %5688
    %5690 = vrot.lane.b32.xlu0 %v5641, 120
    %v5691 = vpop.permute.xlu0 %5690
    %5692 = vrot.lane.b32.xlu0 %v5626, 112
    %v5693 = vpop.permute.xlu0 %5692
    %5694 = vrot.lane.b32.xlu0 %v5631, 112
    %v5695 = vpop.permute.xlu0 %5694
    %5696 = vrot.lane.b32.xlu0 %v5636, 112
    %v5697 = vpop.permute.xlu0 %5696
    %5698 = vrot.lane.b32.xlu0 %v5641, 112
    %v5699 = vpop.permute.xlu0 %5698
    %5700 = vrot.lane.b32.xlu0 %v5626, 104
    %v5701 = vpop.permute.xlu0 %5700
    %5702 = vrot.lane.b32.xlu0 %v5631, 104
    %v5703 = vpop.permute.xlu0 %5702
    %5704 = vrot.lane.b32.xlu0 %v5636, 104
    %v5705 = vpop.permute.xlu0 %5704
    %5706 = vrot.lane.b32.xlu0 %v5641, 104
    %v5707 = vpop.permute.xlu0 %5706
    %5712 = vrot.lane.b32.xlu0 %v5646, 120
    %v5713 = vpop.permute.xlu0 %5712
    %5714 = vrot.lane.b32.xlu0 %v5651, 120
    %v5715 = vpop.permute.xlu0 %5714
    %5716 = vrot.lane.b32.xlu0 %v5656, 120
    %v5717 = vpop.permute.xlu0 %5716
    %5718 = vrot.lane.b32.xlu0 %v5661, 120
    %v5719 = vpop.permute.xlu0 %5718
    %5720 = vrot.lane.b32.xlu0 %v5646, 112
    %v5721 = vpop.permute.xlu0 %5720
    %5722 = vrot.lane.b32.xlu0 %v5651, 112
    %v5723 = vpop.permute.xlu0 %5722
    %5724 = vrot.lane.b32.xlu0 %v5656, 112
    %v5725 = vpop.permute.xlu0 %5724
    %5726 = vrot.lane.b32.xlu0 %v5661, 112
    %v5727 = vpop.permute.xlu0 %5726
    %5728 = vrot.lane.b32.xlu0 %v5646, 104
    %v5729 = vpop.permute.xlu0 %5728
    %5730 = vrot.lane.b32.xlu0 %v5651, 104
    %v5731 = vpop.permute.xlu0 %5730
    %5732 = vrot.lane.b32.xlu0 %v5656, 104
    %v5733 = vpop.permute.xlu0 %5732
    %5734 = vrot.lane.b32.xlu0 %v5661, 104
    %v5735 = vpop.permute.xlu0 %5734
    %5736 = vrot.lane.b32.xlu0 %v5626, 96
    %v5737 = vpop.permute.xlu0 %5736
    %5738 = vrot.lane.b32.xlu0 %v5631, 96
    %v5739 = vpop.permute.xlu0 %5738
    %v5740 = vsel %vm427, %v5664, 0
    %v5742 = vsel %vm427, %v5737, 0
    %v5744 = vsel %vm427, %v5739, 0
    %5746 = vmatprep.subr.mxu0 0.0
    %5747 = vmatpush1.xpose.msra.mxu0 %v5742
    %5748 = vmatprep.subr.mxu0 0.0
    %5749 = vmatpush1.xpose.msra.mxu0 %v5744
    %5750 = vmatprep.subr.mxu0 0.0
    %5751 = vmatpush1.xpose.msra.mxu0 0.0
    %5752 = vmatprep.subr.mxu0 0.0
    %5753 = vmatpush1.xpose.msra.mxu0 0.0
    %5754 = vmatprep.subr.mxu0 0.0
    %5755 = vmatpush1.xpose.msra.mxu0 0.0
    %5756 = vmatprep.subr.mxu0 0.0
    %5757 = vmatpush1.xpose.msra.mxu0 0.0
    %5758 = vmatprep.subr.mxu0 0.0
    %5759 = vmatpush1.xpose.msra.mxu0 0.0
    %5760 = vmatprep.subr.mxu0 0.0
    %5761 = vmatpush1.xpose.msra.mxu0 0.0
    %5762 = vmatprep.subr.mxu0 0.0
    %5763 = vmatpush1.xpose.msra.mxu0 0.0
    %5764 = vmatprep.subr.mxu0 0.0
    %5765 = vmatpush1.xpose.msra.mxu0 0.0
    %5766 = vmatprep.subr.mxu0 0.0
    %5767 = vmatpush1.xpose.msra.mxu0 0.0
    %5768 = vmatprep.subr.mxu0 0.0
    %5769 = vmatpush1.xpose.msra.mxu0 0.0
    %5770 = vmatprep.subr.mxu0 0.0
    %5771 = vmatpush1.xpose.msra.mxu0 0.0
    %5772 = vmatprep.subr.mxu0 0.0
    %5773 = vmatpush1.xpose.msra.mxu0 0.0
    %5774 = vmatprep.subr.mxu0 0.0
    %5775 = vmatpush1.xpose.msra.mxu0 0.0
    %5776 = vmatprep.subr.mxu0 0.0
    %5777 = vmatpush1.xpose.msra.mxu0 0.0
    %5778 = vmatprep.subr.mxu0 0.0
    %5779 = vmatpush1.xpose.msra.mxu0 0.0
    %5780 = vmatprep.subr.mxu0 0.0
    %5781 = vmatpush1.xpose.msra.mxu0 0.0
    %5782 = vmatprep.subr.mxu0 0.0
    %5783 = vmatpush1.xpose.msra.mxu0 0.0
    %5784 = vmatprep.subr.mxu0 0.0
    %5785 = vmatpush1.xpose.msra.mxu0 0.0
    %5786 = vmatprep.subr.mxu0 0.0
    %5787 = vmatpush1.xpose.msra.mxu0 0.0
    %5788 = vmatprep.subr.mxu0 0.0
    %5789 = vmatpush1.xpose.msra.mxu0 0.0
    %5790 = vmatprep.subr.mxu0 0.0
    %5791 = vmatpush1.xpose.msra.mxu0 0.0
    %5792 = vmatprep.subr.mxu0 0.0
    %5793 = vmatpush1.xpose.msra.mxu0 0.0
    %5794 = vmatprep.subr.mxu0 0.0
    %5795 = vmatpush1.xpose.msra.mxu0 0.0
    %5796 = vmatprep.subr.mxu0 0.0
    %5797 = vmatpush1.xpose.msra.mxu0 0.0
    %5798 = vmatprep.subr.mxu0 0.0
    %5799 = vmatpush1.xpose.msra.mxu0 0.0
    %5800 = vmatprep.subr.mxu0 0.0
    %5801 = vmatpush1.xpose.msra.mxu0 0.0
    %5802 = vmatprep.subr.mxu0 0.0
    %5803 = vmatpush1.xpose.msra.mxu0 0.0
    %5804 = vmatprep.subr.mxu0 0.0
    %5805 = vmatpush1.xpose.msra.mxu0 0.0
    %5806 = vmatprep.subr.mxu0 0.0
    %5807 = vmatpush1.xpose.msra.mxu0 0.0
    %5808 = vmatprep.subr.mxu0 0.0
    %5809 = vmatpush1.xpose.msra.mxu0 0.0
    %5810 = vmatprep.mubr.f32.mxu0 0.0
    %5811 = vmatmul.mubr.f32.gmra.mrb[0].mxu0 %v5740
    %v5812 = vpop.f32.mrb[0].mxu0
    %v5813 = vadd.f32 0.0, %v5812
    %v5814 = vpop.f32.mrb[0].mxu0
    %5815 = vdwg.mxu0
    %5816 = vrot.lane.b32.xlu0 %v5636, 96
    %v5817 = vpop.permute.xlu0 %5816
    %5818 = vrot.lane.b32.xlu0 %v5641, 96
    %v5819 = vpop.permute.xlu0 %5818
    %v5820 = vsel %vm427, %v5665, 0
    %v5822 = vsel %vm427, %v5817, 0
    %v5824 = vsel %vm427, %v5819, 0
    %5826 = vmatprep.subr.mxu0 0.0
    %5827 = vmatpush1.xpose.msra.mxu0 %v5822
    %5828 = vmatprep.subr.mxu0 0.0
    %5829 = vmatpush1.xpose.msra.mxu0 %v5824
    %5830 = vmatprep.subr.mxu0 0.0
    %5831 = vmatpush1.xpose.msra.mxu0 0.0
    %5832 = vmatprep.subr.mxu0 0.0
    %5833 = vmatpush1.xpose.msra.mxu0 0.0
    %5834 = vmatprep.subr.mxu0 0.0
    %5835 = vmatpush1.xpose.msra.mxu0 0.0
    %5836 = vmatprep.subr.mxu0 0.0
    %5837 = vmatpush1.xpose.msra.mxu0 0.0
    %5838 = vmatprep.subr.mxu0 0.0
    %5839 = vmatpush1.xpose.msra.mxu0 0.0
    %5840 = vmatprep.subr.mxu0 0.0
    %5841 = vmatpush1.xpose.msra.mxu0 0.0
    %5842 = vmatprep.subr.mxu0 0.0
    %5843 = vmatpush1.xpose.msra.mxu0 0.0
    %5844 = vmatprep.subr.mxu0 0.0
    %5845 = vmatpush1.xpose.msra.mxu0 0.0
    %5846 = vmatprep.subr.mxu0 0.0
    %5847 = vmatpush1.xpose.msra.mxu0 0.0
    %5848 = vmatprep.subr.mxu0 0.0
    %5849 = vmatpush1.xpose.msra.mxu0 0.0
    %5850 = vmatprep.subr.mxu0 0.0
    %5851 = vmatpush1.xpose.msra.mxu0 0.0
    %5852 = vmatprep.subr.mxu0 0.0
    %5853 = vmatpush1.xpose.msra.mxu0 0.0
    %5854 = vmatprep.subr.mxu0 0.0
    %5855 = vmatpush1.xpose.msra.mxu0 0.0
    %5856 = vmatprep.subr.mxu0 0.0
    %5857 = vmatpush1.xpose.msra.mxu0 0.0
    %5858 = vmatprep.subr.mxu0 0.0
    %5859 = vmatpush1.xpose.msra.mxu0 0.0
    %5860 = vmatprep.subr.mxu0 0.0
    %5861 = vmatpush1.xpose.msra.mxu0 0.0
    %5862 = vmatprep.subr.mxu0 0.0
    %5863 = vmatpush1.xpose.msra.mxu0 0.0
    %5864 = vmatprep.subr.mxu0 0.0
    %5865 = vmatpush1.xpose.msra.mxu0 0.0
    %5866 = vmatprep.subr.mxu0 0.0
    %5867 = vmatpush1.xpose.msra.mxu0 0.0
    %5868 = vmatprep.subr.mxu0 0.0
    %5869 = vmatpush1.xpose.msra.mxu0 0.0
    %5870 = vmatprep.subr.mxu0 0.0
    %5871 = vmatpush1.xpose.msra.mxu0 0.0
    %5872 = vmatprep.subr.mxu0 0.0
    %5873 = vmatpush1.xpose.msra.mxu0 0.0
    %5874 = vmatprep.subr.mxu0 0.0
    %5875 = vmatpush1.xpose.msra.mxu0 0.0
    %5876 = vmatprep.subr.mxu0 0.0
    %5877 = vmatpush1.xpose.msra.mxu0 0.0
    %5878 = vmatprep.subr.mxu0 0.0
    %5879 = vmatpush1.xpose.msra.mxu0 0.0
    %5880 = vmatprep.subr.mxu0 0.0
    %5881 = vmatpush1.xpose.msra.mxu0 0.0
    %5882 = vmatprep.subr.mxu0 0.0
    %5883 = vmatpush1.xpose.msra.mxu0 0.0
    %5884 = vmatprep.subr.mxu0 0.0
    %5885 = vmatpush1.xpose.msra.mxu0 0.0
    %5886 = vmatprep.subr.mxu0 0.0
    %5887 = vmatpush1.xpose.msra.mxu0 0.0
    %5888 = vmatprep.subr.mxu0 0.0
    %5889 = vmatpush1.xpose.msra.mxu0 0.0
    %5890 = vmatprep.mubr.f32.mxu0 0.0
    %5891 = vmatmul.mubr.f32.gmra.mrb[0].mxu0 %v5820
    %v5892 = vpop.f32.mrb[0].mxu0
    %v5893 = vadd.f32 0.0, %v5892
    %v5894 = vpop.f32.mrb[0].mxu0
    %5895 = vdwg.mxu0
    %5896 = vrot.lane.b32.xlu0 %v5685, 96
    %v5897 = vpop.permute.xlu0 %5896
    %5898 = vrot.lane.b32.xlu0 %v5687, 96
    %v5899 = vpop.permute.xlu0 %5898
    %v5900 = vsel %vm427, %v5669, 0
    %v5902 = vsel %vm427, %v5897, 0
    %v5904 = vsel %vm427, %v5899, 0
    %5906 = vmatprep.subr.mxu0 0.0
    %5907 = vmatpush1.xpose.msra.mxu0 %v5902
    %5908 = vmatprep.subr.mxu0 0.0
    %5909 = vmatpush1.xpose.msra.mxu0 %v5904
    %5910 = vmatprep.subr.mxu0 0.0
    %5911 = vmatpush1.xpose.msra.mxu0 0.0
    %5912 = vmatprep.subr.mxu0 0.0
    %5913 = vmatpush1.xpose.msra.mxu0 0.0
    %5914 = vmatprep.subr.mxu0 0.0
    %5915 = vmatpush1.xpose.msra.mxu0 0.0
    %5916 = vmatprep.subr.mxu0 0.0
    %5917 = vmatpush1.xpose.msra.mxu0 0.0
    %5918 = vmatprep.subr.mxu0 0.0
    %5919 = vmatpush1.xpose.msra.mxu0 0.0
    %5920 = vmatprep.subr.mxu0 0.0
    %5921 = vmatpush1.xpose.msra.mxu0 0.0
    %5922 = vmatprep.subr.mxu0 0.0
    %5923 = vmatpush1.xpose.msra.mxu0 0.0
    %5924 = vmatprep.subr.mxu0 0.0
    %5925 = vmatpush1.xpose.msra.mxu0 0.0
    %5926 = vmatprep.subr.mxu0 0.0
    %5927 = vmatpush1.xpose.msra.mxu0 0.0
    %5928 = vmatprep.subr.mxu0 0.0
    %5929 = vmatpush1.xpose.msra.mxu0 0.0
    %5930 = vmatprep.subr.mxu0 0.0
    %5931 = vmatpush1.xpose.msra.mxu0 0.0
    %5932 = vmatprep.subr.mxu0 0.0
    %5933 = vmatpush1.xpose.msra.mxu0 0.0
    %5934 = vmatprep.subr.mxu0 0.0
    %5935 = vmatpush1.xpose.msra.mxu0 0.0
    %5936 = vmatprep.subr.mxu0 0.0
    %5937 = vmatpush1.xpose.msra.mxu0 0.0
    %5938 = vmatprep.subr.mxu0 0.0
    %5939 = vmatpush1.xpose.msra.mxu0 0.0
    %5940 = vmatprep.subr.mxu0 0.0
    %5941 = vmatpush1.xpose.msra.mxu0 0.0
    %5942 = vmatprep.subr.mxu0 0.0
    %5943 = vmatpush1.xpose.msra.mxu0 0.0
    %5944 = vmatprep.subr.mxu0 0.0
    %5945 = vmatpush1.xpose.msra.mxu0 0.0
    %5946 = vmatprep.subr.mxu0 0.0
    %5947 = vmatpush1.xpose.msra.mxu0 0.0
    %5948 = vmatprep.subr.mxu0 0.0
    %5949 = vmatpush1.xpose.msra.mxu0 0.0
    %5950 = vmatprep.subr.mxu0 0.0
    %5951 = vmatpush1.xpose.msra.mxu0 0.0
    %5952 = vmatprep.subr.mxu0 0.0
    %5953 = vmatpush1.xpose.msra.mxu0 0.0
    %5954 = vmatprep.subr.mxu0 0.0
    %5955 = vmatpush1.xpose.msra.mxu0 0.0
    %5956 = vmatprep.subr.mxu0 0.0
    %5957 = vmatpush1.xpose.msra.mxu0 0.0
    %5958 = vmatprep.subr.mxu0 0.0
    %5959 = vmatpush1.xpose.msra.mxu0 0.0
    %5960 = vmatprep.subr.mxu0 0.0
    %5961 = vmatpush1.xpose.msra.mxu0 0.0
    %5962 = vmatprep.subr.mxu0 0.0
    %5963 = vmatpush1.xpose.msra.mxu0 0.0
    %5964 = vmatprep.subr.mxu0 0.0
    %5965 = vmatpush1.xpose.msra.mxu0 0.0
    %5966 = vmatprep.subr.mxu0 0.0
    %5967 = vmatpush1.xpose.msra.mxu0 0.0
    %5968 = vmatprep.subr.mxu0 0.0
    %5969 = vmatpush1.xpose.msra.mxu0 0.0
    %5970 = vmatprep.mubr.f32.mxu0 0.0
    %5971 = vmatmul.mubr.f32.gmra.mrb[0].mxu0 %v5900
    %v5972 = vpop.f32.mrb[0].mxu0
    %v5973 = vadd.f32 0.0, %v5972
    %v5974 = vpop.f32.mrb[0].mxu0
    %5975 = vdwg.mxu0
    %5976 = vrot.lane.b32.xlu0 %v5689, 96
    %v5977 = vpop.permute.xlu0 %5976
    %5978 = vrot.lane.b32.xlu0 %v5691, 96
    %v5979 = vpop.permute.xlu0 %5978
    %v5980 = vsel %vm427, %v5671, 0
    %v5982 = vsel %vm427, %v5977, 0
    %v5984 = vsel %vm427, %v5979, 0
    %5986 = vmatprep.subr.mxu0 0.0
    %5987 = vmatpush1.xpose.msra.mxu0 %v5982
    %5988 = vmatprep.subr.mxu0 0.0
    %5989 = vmatpush1.xpose.msra.mxu0 %v5984
    %5990 = vmatprep.subr.mxu0 0.0
    %5991 = vmatpush1.xpose.msra.mxu0 0.0
    %5992 = vmatprep.subr.mxu0 0.0
    %5993 = vmatpush1.xpose.msra.mxu0 0.0
    %5994 = vmatprep.subr.mxu0 0.0
    %5995 = vmatpush1.xpose.msra.mxu0 0.0
    %5996 = vmatprep.subr.mxu0 0.0
    %5997 = vmatpush1.xpose.msra.mxu0 0.0
    %5998 = vmatprep.subr.mxu0 0.0
    %5999 = vmatpush1.xpose.msra.mxu0 0.0
    %6000 = vmatprep.subr.mxu0 0.0
    %6001 = vmatpush1.xpose.msra.mxu0 0.0
    %6002 = vmatprep.subr.mxu0 0.0
    %6003 = vmatpush1.xpose.msra.mxu0 0.0
    %6004 = vmatprep.subr.mxu0 0.0
    %6005 = vmatpush1.xpose.msra.mxu0 0.0
    %6006 = vmatprep.subr.mxu0 0.0
    %6007 = vmatpush1.xpose.msra.mxu0 0.0
    %6008 = vmatprep.subr.mxu0 0.0
    %6009 = vmatpush1.xpose.msra.mxu0 0.0
    %6010 = vmatprep.subr.mxu0 0.0
    %6011 = vmatpush1.xpose.msra.mxu0 0.0
    %6012 = vmatprep.subr.mxu0 0.0
    %6013 = vmatpush1.xpose.msra.mxu0 0.0
    %6014 = vmatprep.subr.mxu0 0.0
    %6015 = vmatpush1.xpose.msra.mxu0 0.0
    %6016 = vmatprep.subr.mxu0 0.0
    %6017 = vmatpush1.xpose.msra.mxu0 0.0
    %6018 = vmatprep.subr.mxu0 0.0
    %6019 = vmatpush1.xpose.msra.mxu0 0.0
    %6020 = vmatprep.subr.mxu0 0.0
    %6021 = vmatpush1.xpose.msra.mxu0 0.0
    %6022 = vmatprep.subr.mxu0 0.0
    %6023 = vmatpush1.xpose.msra.mxu0 0.0
    %6024 = vmatprep.subr.mxu0 0.0
    %6025 = vmatpush1.xpose.msra.mxu0 0.0
    %6026 = vmatprep.subr.mxu0 0.0
    %6027 = vmatpush1.xpose.msra.mxu0 0.0
    %6028 = vmatprep.subr.mxu0 0.0
    %6029 = vmatpush1.xpose.msra.mxu0 0.0
    %6030 = vmatprep.subr.mxu0 0.0
    %6031 = vmatpush1.xpose.msra.mxu0 0.0
    %6032 = vmatprep.subr.mxu0 0.0
    %6033 = vmatpush1.xpose.msra.mxu0 0.0
    %6034 = vmatprep.subr.mxu0 0.0
    %6035 = vmatpush1.xpose.msra.mxu0 0.0
    %6036 = vmatprep.subr.mxu0 0.0
    %6037 = vmatpush1.xpose.msra.mxu0 0.0
    %6038 = vmatprep.subr.mxu0 0.0
    %6039 = vmatpush1.xpose.msra.mxu0 0.0
    %6040 = vmatprep.subr.mxu0 0.0
    %6041 = vmatpush1.xpose.msra.mxu0 0.0
    %6042 = vmatprep.subr.mxu0 0.0
    %6043 = vmatpush1.xpose.msra.mxu0 0.0
    %6044 = vmatprep.subr.mxu0 0.0
    %6045 = vmatpush1.xpose.msra.mxu0 0.0
    %6046 = vmatprep.subr.mxu0 0.0
    %6047 = vmatpush1.xpose.msra.mxu0 0.0
    %6048 = vmatprep.subr.mxu0 0.0
    %6049 = vmatpush1.xpose.msra.mxu0 0.0
    %6050 = vmatprep.mubr.f32.mxu0 0.0
    %6051 = vmatmul.mubr.f32.gmra.mrb[0].mxu0 %v5980
    %v6052 = vpop.f32.mrb[0].mxu0
    %v6053 = vadd.f32 0.0, %v6052
    %v6054 = vpop.f32.mrb[0].mxu0
    %6055 = vdwg.mxu0
    %6056 = vrot.lane.b32.xlu0 %v5693, 96
    %v6057 = vpop.permute.xlu0 %6056
    %6058 = vrot.lane.b32.xlu0 %v5695, 96
    %v6059 = vpop.permute.xlu0 %6058
    %v6060 = vsel %vm427, %v5673, 0
    %v6062 = vsel %vm427, %v6057, 0
    %v6064 = vsel %vm427, %v6059, 0
    %6066 = vmatprep.subr.mxu0 0.0
    %6067 = vmatpush1.xpose.msra.mxu0 %v6062
    %6068 = vmatprep.subr.mxu0 0.0
    %6069 = vmatpush1.xpose.msra.mxu0 %v6064
    %6070 = vmatprep.subr.mxu0 0.0
    %6071 = vmatpush1.xpose.msra.mxu0 0.0
    %6072 = vmatprep.subr.mxu0 0.0
    %6073 = vmatpush1.xpose.msra.mxu0 0.0
    %6074 = vmatprep.subr.mxu0 0.0
    %6075 = vmatpush1.xpose.msra.mxu0 0.0
    %6076 = vmatprep.subr.mxu0 0.0
    %6077 = vmatpush1.xpose.msra.mxu0 0.0
    %6078 = vmatprep.subr.mxu0 0.0
    %6079 = vmatpush1.xpose.msra.mxu0 0.0
    %6080 = vmatprep.subr.mxu0 0.0
    %6081 = vmatpush1.xpose.msra.mxu0 0.0
    %6082 = vmatprep.subr.mxu0 0.0
    %6083 = vmatpush1.xpose.msra.mxu0 0.0
    %6084 = vmatprep.subr.mxu0 0.0
    %6085 = vmatpush1.xpose.msra.mxu0 0.0
    %6086 = vmatprep.subr.mxu0 0.0
    %6087 = vmatpush1.xpose.msra.mxu0 0.0
    %6088 = vmatprep.subr.mxu0 0.0
    %6089 = vmatpush1.xpose.msra.mxu0 0.0
    %6090 = vmatprep.subr.mxu0 0.0
    %6091 = vmatpush1.xpose.msra.mxu0 0.0
    %6092 = vmatprep.subr.mxu0 0.0
    %6093 = vmatpush1.xpose.msra.mxu0 0.0
    %6094 = vmatprep.subr.mxu0 0.0
    %6095 = vmatpush1.xpose.msra.mxu0 0.0
    %6096 = vmatprep.subr.mxu0 0.0
    %6097 = vmatpush1.xpose.msra.mxu0 0.0
    %6098 = vmatprep.subr.mxu0 0.0
    %6099 = vmatpush1.xpose.msra.mxu0 0.0
    %6100 = vmatprep.subr.mxu0 0.0
    %6101 = vmatpush1.xpose.msra.mxu0 0.0
    %6102 = vmatprep.subr.mxu0 0.0
    %6103 = vmatpush1.xpose.msra.mxu0 0.0
    %6104 = vmatprep.subr.mxu0 0.0
    %6105 = vmatpush1.xpose.msra.mxu0 0.0
    %6106 = vmatprep.subr.mxu0 0.0
    %6107 = vmatpush1.xpose.msra.mxu0 0.0
    %6108 = vmatprep.subr.mxu0 0.0
    %6109 = vmatpush1.xpose.msra.mxu0 0.0
    %6110 = vmatprep.subr.mxu0 0.0
    %6111 = vmatpush1.xpose.msra.mxu0 0.0
    %6112 = vmatprep.subr.mxu0 0.0
    %6113 = vmatpush1.xpose.msra.mxu0 0.0
    %6114 = vmatprep.subr.mxu0 0.0
    %6115 = vmatpush1.xpose.msra.mxu0 0.0
    %6116 = vmatprep.subr.mxu0 0.0
    %6117 = vmatpush1.xpose.msra.mxu0 0.0
    %6118 = vmatprep.subr.mxu0 0.0
    %6119 = vmatpush1.xpose.msra.mxu0 0.0
    %6120 = vmatprep.subr.mxu0 0.0
    %6121 = vmatpush1.xpose.msra.mxu0 0.0
    %6122 = vmatprep.subr.mxu0 0.0
    %6123 = vmatpush1.xpose.msra.mxu0 0.0
    %6124 = vmatprep.subr.mxu0 0.0
    %6125 = vmatpush1.xpose.msra.mxu0 0.0
    %6126 = vmatprep.subr.mxu0 0.0
    %6127 = vmatpush1.xpose.msra.mxu0 0.0
    %6128 = vmatprep.subr.mxu0 0.0
    %6129 = vmatpush1.xpose.msra.mxu0 0.0
    %6130 = vmatprep.mubr.f32.mxu0 0.0
    %6131 = vmatmul.mubr.f32.gmra.mrb[0].mxu0 %v6060
    %v6132 = vpop.f32.mrb[0].mxu0
    %v6133 = vadd.f32 0.0, %v6132
    %v6134 = vpop.f32.mrb[0].mxu0
    %6135 = vdwg.mxu0
    %6136 = vrot.lane.b32.xlu0 %v5697, 96
    %v6137 = vpop.permute.xlu0 %6136
    %6138 = vrot.lane.b32.xlu0 %v5699, 96
    %v6139 = vpop.permute.xlu0 %6138
    %v6140 = vsel %vm427, %v5675, 0
    %v6142 = vsel %vm427, %v6137, 0
    %v6144 = vsel %vm427, %v6139, 0
    %6146 = vmatprep.subr.mxu0 0.0
    %6147 = vmatpush1.xpose.msra.mxu0 %v6142
    %6148 = vmatprep.subr.mxu0 0.0
    %6149 = vmatpush1.xpose.msra.mxu0 %v6144
    %6150 = vmatprep.subr.mxu0 0.0
    %6151 = vmatpush1.xpose.msra.mxu0 0.0
    %6152 = vmatprep.subr.mxu0 0.0
    %6153 = vmatpush1.xpose.msra.mxu0 0.0
    %6154 = vmatprep.subr.mxu0 0.0
    %6155 = vmatpush1.xpose.msra.mxu0 0.0
    %6156 = vmatprep.subr.mxu0 0.0
    %6157 = vmatpush1.xpose.msra.mxu0 0.0
    %6158 = vmatprep.subr.mxu0 0.0
    %6159 = vmatpush1.xpose.msra.mxu0 0.0
    %6160 = vmatprep.subr.mxu0 0.0
    %6161 = vmatpush1.xpose.msra.mxu0 0.0
    %6162 = vmatprep.subr.mxu0 0.0
    %6163 = vmatpush1.xpose.msra.mxu0 0.0
    %6164 = vmatprep.subr.mxu0 0.0
    %6165 = vmatpush1.xpose.msra.mxu0 0.0
    %6166 = vmatprep.subr.mxu0 0.0
    %6167 = vmatpush1.xpose.msra.mxu0 0.0
    %6168 = vmatprep.subr.mxu0 0.0
    %6169 = vmatpush1.xpose.msra.mxu0 0.0
    %6170 = vmatprep.subr.mxu0 0.0
    %6171 = vmatpush1.xpose.msra.mxu0 0.0
    %6172 = vmatprep.subr.mxu0 0.0
    %6173 = vmatpush1.xpose.msra.mxu0 0.0
    %6174 = vmatprep.subr.mxu0 0.0
    %6175 = vmatpush1.xpose.msra.mxu0 0.0
    %6176 = vmatprep.subr.mxu0 0.0
    %6177 = vmatpush1.xpose.msra.mxu0 0.0
    %6178 = vmatprep.subr.mxu0 0.0
    %6179 = vmatpush1.xpose.msra.mxu0 0.0
    %6180 = vmatprep.subr.mxu0 0.0
    %6181 = vmatpush1.xpose.msra.mxu0 0.0
    %6182 = vmatprep.subr.mxu0 0.0
    %6183 = vmatpush1.xpose.msra.mxu0 0.0
    %6184 = vmatprep.subr.mxu0 0.0
    %6185 = vmatpush1.xpose.msra.mxu0 0.0
    %6186 = vmatprep.subr.mxu0 0.0
    %6187 = vmatpush1.xpose.msra.mxu0 0.0
    %6188 = vmatprep.subr.mxu0 0.0
    %6189 = vmatpush1.xpose.msra.mxu0 0.0
    %6190 = vmatprep.subr.mxu0 0.0
    %6191 = vmatpush1.xpose.msra.mxu0 0.0
    %6192 = vmatprep.subr.mxu0 0.0
    %6193 = vmatpush1.xpose.msra.mxu0 0.0
    %6194 = vmatprep.subr.mxu0 0.0
    %6195 = vmatpush1.xpose.msra.mxu0 0.0
    %6196 = vmatprep.subr.mxu0 0.0
    %6197 = vmatpush1.xpose.msra.mxu0 0.0
    %6198 = vmatprep.subr.mxu0 0.0
    %6199 = vmatpush1.xpose.msra.mxu0 0.0
    %6200 = vmatprep.subr.mxu0 0.0
    %6201 = vmatpush1.xpose.msra.mxu0 0.0
    %6202 = vmatprep.subr.mxu0 0.0
    %6203 = vmatpush1.xpose.msra.mxu0 0.0
    %6204 = vmatprep.subr.mxu0 0.0
    %6205 = vmatpush1.xpose.msra.mxu0 0.0
    %6206 = vmatprep.subr.mxu0 0.0
    %6207 = vmatpush1.xpose.msra.mxu0 0.0
    %6208 = vmatprep.subr.mxu0 0.0
    %6209 = vmatpush1.xpose.msra.mxu0 0.0
    %6210 = vmatprep.mubr.f32.mxu0 0.0
    %6211 = vmatmul.mubr.f32.gmra.mrb[0].mxu0 %v6140
    %v6212 = vpop.f32.mrb[0].mxu0
    %v6213 = vadd.f32 0.0, %v6212
    %v6214 = vpop.f32.mrb[0].mxu0
    %6215 = vdwg.mxu0
    %6216 = vrot.lane.b32.xlu0 %v5701, 96
    %v6217 = vpop.permute.xlu0 %6216
    %6218 = vrot.lane.b32.xlu0 %v5703, 96
    %v6219 = vpop.permute.xlu0 %6218
    %v6220 = vsel %vm427, %v5677, 0
    %v6222 = vsel %vm427, %v6217, 0
    %v6224 = vsel %vm427, %v6219, 0
    %6226 = vmatprep.subr.mxu0 0.0
    %6227 = vmatpush1.xpose.msra.mxu0 %v6222
    %6228 = vmatprep.subr.mxu0 0.0
    %6229 = vmatpush1.xpose.msra.mxu0 %v6224
    %6230 = vmatprep.subr.mxu0 0.0
    %6231 = vmatpush1.xpose.msra.mxu0 0.0
    %6232 = vmatprep.subr.mxu0 0.0
    %6233 = vmatpush1.xpose.msra.mxu0 0.0
    %6234 = vmatprep.subr.mxu0 0.0
    %6235 = vmatpush1.xpose.msra.mxu0 0.0
    %6236 = vmatprep.subr.mxu0 0.0
    %6237 = vmatpush1.xpose.msra.mxu0 0.0
    %6238 = vmatprep.subr.mxu0 0.0
    %6239 = vmatpush1.xpose.msra.mxu0 0.0
    %6240 = vmatprep.subr.mxu0 0.0
    %6241 = vmatpush1.xpose.msra.mxu0 0.0
    %6242 = vmatprep.subr.mxu0 0.0
    %6243 = vmatpush1.xpose.msra.mxu0 0.0
    %6244 = vmatprep.subr.mxu0 0.0
    %6245 = vmatpush1.xpose.msra.mxu0 0.0
    %6246 = vmatprep.subr.mxu0 0.0
    %6247 = vmatpush1.xpose.msra.mxu0 0.0
    %6248 = vmatprep.subr.mxu0 0.0
    %6249 = vmatpush1.xpose.msra.mxu0 0.0
    %6250 = vmatprep.subr.mxu0 0.0
    %6251 = vmatpush1.xpose.msra.mxu0 0.0
    %6252 = vmatprep.subr.mxu0 0.0
    %6253 = vmatpush1.xpose.msra.mxu0 0.0
    %6254 = vmatprep.subr.mxu0 0.0
    %6255 = vmatpush1.xpose.msra.mxu0 0.0
    %6256 = vmatprep.subr.mxu0 0.0
    %6257 = vmatpush1.xpose.msra.mxu0 0.0
    %6258 = vmatprep.subr.mxu0 0.0
    %6259 = vmatpush1.xpose.msra.mxu0 0.0
    %6260 = vmatprep.subr.mxu0 0.0
    %6261 = vmatpush1.xpose.msra.mxu0 0.0
    %6262 = vmatprep.subr.mxu0 0.0
    %6263 = vmatpush1.xpose.msra.mxu0 0.0
    %6264 = vmatprep.subr.mxu0 0.0
    %6265 = vmatpush1.xpose.msra.mxu0 0.0
    %6266 = vmatprep.subr.mxu0 0.0
    %6267 = vmatpush1.xpose.msra.mxu0 0.0
    %6268 = vmatprep.subr.mxu0 0.0
    %6269 = vmatpush1.xpose.msra.mxu0 0.0
    %6270 = vmatprep.subr.mxu0 0.0
    %6271 = vmatpush1.xpose.msra.mxu0 0.0
    %6272 = vmatprep.subr.mxu0 0.0
    %6273 = vmatpush1.xpose.msra.mxu0 0.0
    %6274 = vmatprep.subr.mxu0 0.0
    %6275 = vmatpush1.xpose.msra.mxu0 0.0
    %6276 = vmatprep.subr.mxu0 0.0
    %6277 = vmatpush1.xpose.msra.mxu0 0.0
    %6278 = vmatprep.subr.mxu0 0.0
    %6279 = vmatpush1.xpose.msra.mxu0 0.0
    %6280 = vmatprep.subr.mxu0 0.0
    %6281 = vmatpush1.xpose.msra.mxu0 0.0
    %6282 = vmatprep.subr.mxu0 0.0
    %6283 = vmatpush1.xpose.msra.mxu0 0.0
    %6284 = vmatprep.subr.mxu0 0.0
    %6285 = vmatpush1.xpose.msra.mxu0 0.0
    %6286 = vmatprep.subr.mxu0 0.0
    %6287 = vmatpush1.xpose.msra.mxu0 0.0
    %6288 = vmatprep.subr.mxu0 0.0
    %6289 = vmatpush1.xpose.msra.mxu0 0.0
    %6290 = vmatprep.mubr.f32.mxu0 0.0
    %6291 = vmatmul.mubr.f32.gmra.mrb[0].mxu0 %v6220
    %v6292 = vpop.f32.mrb[0].mxu0
    %v6293 = vadd.f32 0.0, %v6292
    %v6294 = vpop.f32.mrb[0].mxu0
    %6295 = vdwg.mxu0
    %6296 = vrot.lane.b32.xlu0 %v5705, 96
    %v6297 = vpop.permute.xlu0 %6296
    %6298 = vrot.lane.b32.xlu0 %v5707, 96
    %v6299 = vpop.permute.xlu0 %6298
    %v6300 = vsel %vm427, %v5679, 0
    %v6302 = vsel %vm427, %v6297, 0
    %v6304 = vsel %vm427, %v6299, 0
    %6306 = vmatprep.subr.mxu0 0.0
    %6307 = vmatpush1.xpose.msra.mxu0 %v6302
    %6308 = vmatprep.subr.mxu0 0.0
    %6309 = vmatpush1.xpose.msra.mxu0 %v6304
    %6310 = vmatprep.subr.mxu0 0.0
    %6311 = vmatpush1.xpose.msra.mxu0 0.0
    %6312 = vmatprep.subr.mxu0 0.0
    %6313 = vmatpush1.xpose.msra.mxu0 0.0
    %6314 = vmatprep.subr.mxu0 0.0
    %6315 = vmatpush1.xpose.msra.mxu0 0.0
    %6316 = vmatprep.subr.mxu0 0.0
    %6317 = vmatpush1.xpose.msra.mxu0 0.0
    %6318 = vmatprep.subr.mxu0 0.0
    %6319 = vmatpush1.xpose.msra.mxu0 0.0
    %6320 = vmatprep.subr.mxu0 0.0
    %6321 = vmatpush1.xpose.msra.mxu0 0.0
    %6322 = vmatprep.subr.mxu0 0.0
    %6323 = vmatpush1.xpose.msra.mxu0 0.0
    %6324 = vmatprep.subr.mxu0 0.0
    %6325 = vmatpush1.xpose.msra.mxu0 0.0
    %6326 = vmatprep.subr.mxu0 0.0
    %6327 = vmatpush1.xpose.msra.mxu0 0.0
    %6328 = vmatprep.subr.mxu0 0.0
    %6329 = vmatpush1.xpose.msra.mxu0 0.0
    %6330 = vmatprep.subr.mxu0 0.0
    %6331 = vmatpush1.xpose.msra.mxu0 0.0
    %6332 = vmatprep.subr.mxu0 0.0
    %6333 = vmatpush1.xpose.msra.mxu0 0.0
    %6334 = vmatprep.subr.mxu0 0.0
    %6335 = vmatpush1.xpose.msra.mxu0 0.0
    %6336 = vmatprep.subr.mxu0 0.0
    %6337 = vmatpush1.xpose.msra.mxu0 0.0
    %6338 = vmatprep.subr.mxu0 0.0
    %6339 = vmatpush1.xpose.msra.mxu0 0.0
    %6340 = vmatprep.subr.mxu0 0.0
    %6341 = vmatpush1.xpose.msra.mxu0 0.0
    %6342 = vmatprep.subr.mxu0 0.0
    %6343 = vmatpush1.xpose.msra.mxu0 0.0
    %6344 = vmatprep.subr.mxu0 0.0
    %6345 = vmatpush1.xpose.msra.mxu0 0.0
    %6346 = vmatprep.subr.mxu0 0.0
    %6347 = vmatpush1.xpose.msra.mxu0 0.0
    %6348 = vmatprep.subr.mxu0 0.0
    %6349 = vmatpush1.xpose.msra.mxu0 0.0
    %6350 = vmatprep.subr.mxu0 0.0
    %6351 = vmatpush1.xpose.msra.mxu0 0.0
    %6352 = vmatprep.subr.mxu0 0.0
    %6353 = vmatpush1.xpose.msra.mxu0 0.0
    %6354 = vmatprep.subr.mxu0 0.0
    %6355 = vmatpush1.xpose.msra.mxu0 0.0
    %6356 = vmatprep.subr.mxu0 0.0
    %6357 = vmatpush1.xpose.msra.mxu0 0.0
    %6358 = vmatprep.subr.mxu0 0.0
    %6359 = vmatpush1.xpose.msra.mxu0 0.0
    %6360 = vmatprep.subr.mxu0 0.0
    %6361 = vmatpush1.xpose.msra.mxu0 0.0
    %6362 = vmatprep.subr.mxu0 0.0
    %6363 = vmatpush1.xpose.msra.mxu0 0.0
    %6364 = vmatprep.subr.mxu0 0.0
    %6365 = vmatpush1.xpose.msra.mxu0 0.0
    %6366 = vmatprep.subr.mxu0 0.0
    %6367 = vmatpush1.xpose.msra.mxu0 0.0
    %6368 = vmatprep.subr.mxu0 0.0
    %6369 = vmatpush1.xpose.msra.mxu0 0.0
    %6370 = vmatprep.mubr.f32.mxu0 0.0
    %6371 = vmatmul.mubr.f32.gmra.mrb[0].mxu0 %v6300
    %v6372 = vpop.f32.mrb[0].mxu0
    %v6373 = vadd.f32 0.0, %v6372
    %v6374 = vpop.f32.mrb[0].mxu0
    %6375 = vdwg.mxu0
    %v6376 = vsel %vm1756, %v5813, -inf
    %6377 = vmax.xlane.f32.xlu0 %v6376
    %v6378 = vpop.xlane.xlu0 %6377
    %v6379 = vsel %vm1756, %v5893, -inf
    %6380 = vmax.xlane.f32.xlu0 %v6379
    %v6381 = vpop.xlane.xlu0 %6380
    %v6382 = vsel %vm1756, %v5973, -inf
    %6383 = vmax.xlane.f32.xlu0 %v6382
    %v6384 = vpop.xlane.xlu0 %6383
    %v6385 = vsel %vm1756, %v6053, -inf
    %6386 = vmax.xlane.f32.xlu0 %v6385
    %v6387 = vpop.xlane.xlu0 %6386
    %v6388 = vsel %vm1756, %v6133, -inf
    %6389 = vmax.xlane.f32.xlu0 %v6388
    %v6390 = vpop.xlane.xlu0 %6389
    %v6391 = vsel %vm1756, %v6213, -inf
    %6392 = vmax.xlane.f32.xlu0 %v6391
    %v6393 = vpop.xlane.xlu0 %6392
    %v6394 = vsel %vm1756, %v6293, -inf
    %6395 = vmax.xlane.f32.xlu0 %v6394
    %v6396 = vpop.xlane.xlu0 %6395
    %v6397 = vsel %vm1756, %v6373, -inf
    %6398 = vmax.xlane.f32.xlu0 %v6397
    %v6399 = vpop.xlane.xlu0 %6398
    %v6400 = vsub.f32 %v5813, %v6378
    %v6401 = vsub.f32 %v5893, %v6381
    %v6402 = vsub.f32 %v5973, %v6384
    %v6403 = vsub.f32 %v6053, %v6387
    %v6404 = vsub.f32 %v6133, %v6390
    %v6405 = vsub.f32 %v6213, %v6393
    %v6406 = vsub.f32 %v6293, %v6396
    %v6407 = vsub.f32 %v6373, %v6399
    %v6408 = vmul.f32 %v6400, 1.442695
    %v6409 = vpow.pop %v6408
    %v6410 = vmul.f32 %v6401, 1.442695
    %v6411 = vpow.pop %v6410
    %v6412 = vmul.f32 %v6402, 1.442695
    %v6413 = vpow.pop %v6412
    %v6414 = vmul.f32 %v6403, 1.442695
    %v6415 = vpow.pop %v6414
    %v6416 = vmul.f32 %v6404, 1.442695
    %v6417 = vpow.pop %v6416
    %v6418 = vmul.f32 %v6405, 1.442695
    %v6419 = vpow.pop %v6418
    %v6420 = vmul.f32 %v6406, 1.442695
    %v6421 = vpow.pop %v6420
    %v6422 = vmul.f32 %v6407, 1.442695
    %v6423 = vpow.pop %v6422
    %v6424 = vsel %vm1756, %v6409, 0.0
    %6425 = vadd.xlane.f32.xlu0 %v6424
    %v6426 = vpop.xlane.xlu0 %6425
    %v6427 = vsel %vm1756, %v6411, 0.0
    %6428 = vadd.xlane.f32.xlu0 %v6427
    %v6429 = vpop.xlane.xlu0 %6428
    %v6430 = vsel %vm1756, %v6413, 0.0
    %6431 = vadd.xlane.f32.xlu0 %v6430
    %v6432 = vpop.xlane.xlu0 %6431
    %v6433 = vsel %vm1756, %v6415, 0.0
    %6434 = vadd.xlane.f32.xlu0 %v6433
    %v6435 = vpop.xlane.xlu0 %6434
    %v6436 = vsel %vm1756, %v6417, 0.0
    %6437 = vadd.xlane.f32.xlu0 %v6436
    %v6438 = vpop.xlane.xlu0 %6437
    %v6439 = vsel %vm1756, %v6419, 0.0
    %6440 = vadd.xlane.f32.xlu0 %v6439
    %v6441 = vpop.xlane.xlu0 %6440
    %v6442 = vsel %vm1756, %v6421, 0.0
    %6443 = vadd.xlane.f32.xlu0 %v6442
    %v6444 = vpop.xlane.xlu0 %6443
    %v6445 = vsel %vm1756, %v6423, 0.0
    %6446 = vadd.xlane.f32.xlu0 %v6445
    %v6447 = vpop.xlane.xlu0 %6446
    %v6448 = vrcp.pop %v6426
    %v6449 = vmul.f32 %v6409, %v6448
    %v6450 = vrcp.pop %v6429
    %v6451 = vmul.f32 %v6411, %v6450
    %v6452 = vrcp.pop %v6432
    %v6453 = vmul.f32 %v6413, %v6452
    %v6454 = vrcp.pop %v6435
    %v6455 = vmul.f32 %v6415, %v6454
    %v6456 = vrcp.pop %v6438
    %v6457 = vmul.f32 %v6417, %v6456
    %v6458 = vrcp.pop %v6441
    %v6459 = vmul.f32 %v6419, %v6458
    %v6460 = vrcp.pop %v6444
    %v6461 = vmul.f32 %v6421, %v6460
    %v6462 = vrcp.pop %v6447
    %v6463 = vmul.f32 %v6423, %v6462
    %6464 = vrot.lane.b32.xlu0 %v5646, 64
    %v6465 = vpop.permute.xlu0 %6464
    %6466 = vrot.lane.b32.xlu0 %v5651, 64
    %v6467 = vpop.permute.xlu0 %6466
    %v6471 = vsel %vm1756, %v6449, 0
    %6473 = vmatprep.subr.mxu0 0.0
    %6474 = vmatpush1.msra.mxu0 %v6465
    %6475 = vmatprep.subr.mxu0 0.0
    %6476 = vmatpush1.msra.mxu0 %v6467
    %6477 = vmatprep.subr.mxu0 0.0
    %6478 = vmatpush1.msra.mxu0 0.0
    %6479 = vmatprep.subr.mxu0 0.0
    %6480 = vmatpush1.msra.mxu0 0.0
    %6481 = vmatprep.subr.mxu0 0.0
    %6482 = vmatpush1.msra.mxu0 0.0
    %6483 = vmatprep.subr.mxu0 0.0
    %6484 = vmatpush1.msra.mxu0 0.0
    %6485 = vmatprep.subr.mxu0 0.0
    %6486 = vmatpush1.msra.mxu0 0.0
    %6487 = vmatprep.subr.mxu0 0.0
    %6488 = vmatpush1.msra.mxu0 0.0
    %6489 = vmatprep.subr.mxu0 0.0
    %6490 = vmatpush1.msra.mxu0 0.0
    %6491 = vmatprep.subr.mxu0 0.0
    %6492 = vmatpush1.msra.mxu0 0.0
    %6493 = vmatprep.subr.mxu0 0.0
    %6494 = vmatpush1.msra.mxu0 0.0
    %6495 = vmatprep.subr.mxu0 0.0
    %6496 = vmatpush1.msra.mxu0 0.0
    %6497 = vmatprep.subr.mxu0 0.0
    %6498 = vmatpush1.msra.mxu0 0.0
    %6499 = vmatprep.subr.mxu0 0.0
    %6500 = vmatpush1.msra.mxu0 0.0
    %6501 = vmatprep.subr.mxu0 0.0
    %6502 = vmatpush1.msra.mxu0 0.0
    %6503 = vmatprep.subr.mxu0 0.0
    %6504 = vmatpush1.msra.mxu0 0.0
    %6505 = vmatprep.subr.mxu0 0.0
    %6506 = vmatpush1.msra.mxu0 0.0
    %6507 = vmatprep.subr.mxu0 0.0
    %6508 = vmatpush1.msra.mxu0 0.0
    %6509 = vmatprep.subr.mxu0 0.0
    %6510 = vmatpush1.msra.mxu0 0.0
    %6511 = vmatprep.subr.mxu0 0.0
    %6512 = vmatpush1.msra.mxu0 0.0
    %6513 = vmatprep.subr.mxu0 0.0
    %6514 = vmatpush1.msra.mxu0 0.0
    %6515 = vmatprep.subr.mxu0 0.0
    %6516 = vmatpush1.msra.mxu0 0.0
    %6517 = vmatprep.subr.mxu0 0.0
    %6518 = vmatpush1.msra.mxu0 0.0
    %6519 = vmatprep.subr.mxu0 0.0
    %6520 = vmatpush1.msra.mxu0 0.0
    %6521 = vmatprep.subr.mxu0 0.0
    %6522 = vmatpush1.msra.mxu0 0.0
    %6523 = vmatprep.subr.mxu0 0.0
    %6524 = vmatpush1.msra.mxu0 0.0
    %6525 = vmatprep.subr.mxu0 0.0
    %6526 = vmatpush1.msra.mxu0 0.0
    %6527 = vmatprep.subr.mxu0 0.0
    %6528 = vmatpush1.msra.mxu0 0.0
    %6529 = vmatprep.subr.mxu0 0.0
    %6530 = vmatpush1.msra.mxu0 0.0
    %6531 = vmatprep.subr.mxu0 0.0
    %6532 = vmatpush1.msra.mxu0 0.0
    %6533 = vmatprep.subr.mxu0 0.0
    %6534 = vmatpush1.msra.mxu0 0.0
    %6535 = vmatprep.subr.mxu0 0.0
    %6536 = vmatpush1.msra.mxu0 0.0
    %6537 = vmatprep.mubr.f32.mxu0 0.0
    %6538 = vmatmul.mubr.f32.gmra.mrb[0].mxu0 %v6471
    %v6539 = vpop.f32.mrb[0].mxu0
    %v6540 = vadd.f32 0.0, %v6539
    %v6541 = vpop.f32.mrb[0].mxu0
    %6542 = vdwg.mxu0
    %6543 = vrot.lane.b32.xlu0 %v5656, 64
    %v6544 = vpop.permute.xlu0 %6543
    %6545 = vrot.lane.b32.xlu0 %v5661, 64
    %v6546 = vpop.permute.xlu0 %6545
    %v6550 = vsel %vm1756, %v6451, 0
    %6552 = vmatprep.subr.mxu0 0.0
    %6553 = vmatpush1.msra.mxu0 %v6544
    %6554 = vmatprep.subr.mxu0 0.0
    %6555 = vmatpush1.msra.mxu0 %v6546
    %6556 = vmatprep.subr.mxu0 0.0
    %6557 = vmatpush1.msra.mxu0 0.0
    %6558 = vmatprep.subr.mxu0 0.0
    %6559 = vmatpush1.msra.mxu0 0.0
    %6560 = vmatprep.subr.mxu0 0.0
    %6561 = vmatpush1.msra.mxu0 0.0
    %6562 = vmatprep.subr.mxu0 0.0
    %6563 = vmatpush1.msra.mxu0 0.0
    %6564 = vmatprep.subr.mxu0 0.0
    %6565 = vmatpush1.msra.mxu0 0.0
    %6566 = vmatprep.subr.mxu0 0.0
    %6567 = vmatpush1.msra.mxu0 0.0
    %6568 = vmatprep.subr.mxu0 0.0
    %6569 = vmatpush1.msra.mxu0 0.0
    %6570 = vmatprep.subr.mxu0 0.0
    %6571 = vmatpush1.msra.mxu0 0.0
    %6572 = vmatprep.subr.mxu0 0.0
    %6573 = vmatpush1.msra.mxu0 0.0
    %6574 = vmatprep.subr.mxu0 0.0
    %6575 = vmatpush1.msra.mxu0 0.0
    %6576 = vmatprep.subr.mxu0 0.0
    %6577 = vmatpush1.msra.mxu0 0.0
    %6578 = vmatprep.subr.mxu0 0.0
    %6579 = vmatpush1.msra.mxu0 0.0
    %6580 = vmatprep.subr.mxu0 0.0
    %6581 = vmatpush1.msra.mxu0 0.0
    %6582 = vmatprep.subr.mxu0 0.0
    %6583 = vmatpush1.msra.mxu0 0.0
    %6584 = vmatprep.subr.mxu0 0.0
    %6585 = vmatpush1.msra.mxu0 0.0
    %6586 = vmatprep.subr.mxu0 0.0
    %6587 = vmatpush1.msra.mxu0 0.0
    %6588 = vmatprep.subr.mxu0 0.0
    %6589 = vmatpush1.msra.mxu0 0.0
    %6590 = vmatprep.subr.mxu0 0.0
    %6591 = vmatpush1.msra.mxu0 0.0
    %6592 = vmatprep.subr.mxu0 0.0
    %6593 = vmatpush1.msra.mxu0 0.0
    %6594 = vmatprep.subr.mxu0 0.0
    %6595 = vmatpush1.msra.mxu0 0.0
    %6596 = vmatprep.subr.mxu0 0.0
    %6597 = vmatpush1.msra.mxu0 0.0
    %6598 = vmatprep.subr.mxu0 0.0
    %6599 = vmatpush1.msra.mxu0 0.0
    %6600 = vmatprep.subr.mxu0 0.0
    %6601 = vmatpush1.msra.mxu0 0.0
    %6602 = vmatprep.subr.mxu0 0.0
    %6603 = vmatpush1.msra.mxu0 0.0
    %6604 = vmatprep.subr.mxu0 0.0
    %6605 = vmatpush1.msra.mxu0 0.0
    %6606 = vmatprep.subr.mxu0 0.0
    %6607 = vmatpush1.msra.mxu0 0.0
    %6608 = vmatprep.subr.mxu0 0.0
    %6609 = vmatpush1.msra.mxu0 0.0
    %6610 = vmatprep.subr.mxu0 0.0
    %6611 = vmatpush1.msra.mxu0 0.0
    %6612 = vmatprep.subr.mxu0 0.0
    %6613 = vmatpush1.msra.mxu0 0.0
    %6614 = vmatprep.subr.mxu0 0.0
    %6615 = vmatpush1.msra.mxu0 0.0
    %6616 = vmatprep.mubr.f32.mxu0 0.0
    %6617 = vmatmul.mubr.f32.gmra.mrb[0].mxu0 %v6550
    %v6618 = vpop.f32.mrb[0].mxu0
    %v6619 = vadd.f32 0.0, %v6618
    %v6620 = vpop.f32.mrb[0].mxu0
    %6621 = vdwg.mxu0
    %6622 = vrot.lane.b32.xlu0 %v5713, 64
    %v6623 = vpop.permute.xlu0 %6622
    %6624 = vrot.lane.b32.xlu0 %v5715, 64
    %v6625 = vpop.permute.xlu0 %6624
    %v6629 = vsel %vm1756, %v6453, 0
    %6631 = vmatprep.subr.mxu0 0.0
    %6632 = vmatpush1.msra.mxu0 %v6623
    %6633 = vmatprep.subr.mxu0 0.0
    %6634 = vmatpush1.msra.mxu0 %v6625
    %6635 = vmatprep.subr.mxu0 0.0
    %6636 = vmatpush1.msra.mxu0 0.0
    %6637 = vmatprep.subr.mxu0 0.0
    %6638 = vmatpush1.msra.mxu0 0.0
    %6639 = vmatprep.subr.mxu0 0.0
    %6640 = vmatpush1.msra.mxu0 0.0
    %6641 = vmatprep.subr.mxu0 0.0
    %6642 = vmatpush1.msra.mxu0 0.0
    %6643 = vmatprep.subr.mxu0 0.0
    %6644 = vmatpush1.msra.mxu0 0.0
    %6645 = vmatprep.subr.mxu0 0.0
    %6646 = vmatpush1.msra.mxu0 0.0
    %6647 = vmatprep.subr.mxu0 0.0
    %6648 = vmatpush1.msra.mxu0 0.0
    %6649 = vmatprep.subr.mxu0 0.0
    %6650 = vmatpush1.msra.mxu0 0.0
    %6651 = vmatprep.subr.mxu0 0.0
    %6652 = vmatpush1.msra.mxu0 0.0
    %6653 = vmatprep.subr.mxu0 0.0
    %6654 = vmatpush1.msra.mxu0 0.0
    %6655 = vmatprep.subr.mxu0 0.0
    %6656 = vmatpush1.msra.mxu0 0.0
    %6657 = vmatprep.subr.mxu0 0.0
    %6658 = vmatpush1.msra.mxu0 0.0
    %6659 = vmatprep.subr.mxu0 0.0
    %6660 = vmatpush1.msra.mxu0 0.0
    %6661 = vmatprep.subr.mxu0 0.0
    %6662 = vmatpush1.msra.mxu0 0.0
    %6663 = vmatprep.subr.mxu0 0.0
    %6664 = vmatpush1.msra.mxu0 0.0
    %6665 = vmatprep.subr.mxu0 0.0
    %6666 = vmatpush1.msra.mxu0 0.0
    %6667 = vmatprep.subr.mxu0 0.0
    %6668 = vmatpush1.msra.mxu0 0.0
    %6669 = vmatprep.subr.mxu0 0.0
    %6670 = vmatpush1.msra.mxu0 0.0
    %6671 = vmatprep.subr.mxu0 0.0
    %6672 = vmatpush1.msra.mxu0 0.0
    %6673 = vmatprep.subr.mxu0 0.0
    %6674 = vmatpush1.msra.mxu0 0.0
    %6675 = vmatprep.subr.mxu0 0.0
    %6676 = vmatpush1.msra.mxu0 0.0
    %6677 = vmatprep.subr.mxu0 0.0
    %6678 = vmatpush1.msra.mxu0 0.0
    %6679 = vmatprep.subr.mxu0 0.0
    %6680 = vmatpush1.msra.mxu0 0.0
    %6681 = vmatprep.subr.mxu0 0.0
    %6682 = vmatpush1.msra.mxu0 0.0
    %6683 = vmatprep.subr.mxu0 0.0
    %6684 = vmatpush1.msra.mxu0 0.0
    %6685 = vmatprep.subr.mxu0 0.0
    %6686 = vmatpush1.msra.mxu0 0.0
    %6687 = vmatprep.subr.mxu0 0.0
    %6688 = vmatpush1.msra.mxu0 0.0
    %6689 = vmatprep.subr.mxu0 0.0
    %6690 = vmatpush1.msra.mxu0 0.0
    %6691 = vmatprep.subr.mxu0 0.0
    %6692 = vmatpush1.msra.mxu0 0.0
    %6693 = vmatprep.subr.mxu0 0.0
    %6694 = vmatpush1.msra.mxu0 0.0
    %6695 = vmatprep.mubr.f32.mxu0 0.0
    %6696 = vmatmul.mubr.f32.gmra.mrb[0].mxu0 %v6629
    %v6697 = vpop.f32.mrb[0].mxu0
    %v6698 = vadd.f32 0.0, %v6697
    %v6699 = vpop.f32.mrb[0].mxu0
    %6700 = vdwg.mxu0
    %6701 = vrot.lane.b32.xlu0 %v5717, 64
    %v6702 = vpop.permute.xlu0 %6701
    %6703 = vrot.lane.b32.xlu0 %v5719, 64
    %v6704 = vpop.permute.xlu0 %6703
    %v6708 = vsel %vm1756, %v6455, 0
    %6710 = vmatprep.subr.mxu0 0.0
    %6711 = vmatpush1.msra.mxu0 %v6702
    %6712 = vmatprep.subr.mxu0 0.0
    %6713 = vmatpush1.msra.mxu0 %v6704
    %6714 = vmatprep.subr.mxu0 0.0
    %6715 = vmatpush1.msra.mxu0 0.0
    %6716 = vmatprep.subr.mxu0 0.0
    %6717 = vmatpush1.msra.mxu0 0.0
    %6718 = vmatprep.subr.mxu0 0.0
    %6719 = vmatpush1.msra.mxu0 0.0
    %6720 = vmatprep.subr.mxu0 0.0
    %6721 = vmatpush1.msra.mxu0 0.0
    %6722 = vmatprep.subr.mxu0 0.0
    %6723 = vmatpush1.msra.mxu0 0.0
    %6724 = vmatprep.subr.mxu0 0.0
    %6725 = vmatpush1.msra.mxu0 0.0
    %6726 = vmatprep.subr.mxu0 0.0
    %6727 = vmatpush1.msra.mxu0 0.0
    %6728 = vmatprep.subr.mxu0 0.0
    %6729 = vmatpush1.msra.mxu0 0.0
    %6730 = vmatprep.subr.mxu0 0.0
    %6731 = vmatpush1.msra.mxu0 0.0
    %6732 = vmatprep.subr.mxu0 0.0
    %6733 = vmatpush1.msra.mxu0 0.0
    %6734 = vmatprep.subr.mxu0 0.0
    %6735 = vmatpush1.msra.mxu0 0.0
    %6736 = vmatprep.subr.mxu0 0.0
    %6737 = vmatpush1.msra.mxu0 0.0
    %6738 = vmatprep.subr.mxu0 0.0
    %6739 = vmatpush1.msra.mxu0 0.0
    %6740 = vmatprep.subr.mxu0 0.0
    %6741 = vmatpush1.msra.mxu0 0.0
    %6742 = vmatprep.subr.mxu0 0.0
    %6743 = vmatpush1.msra.mxu0 0.0
    %6744 = vmatprep.subr.mxu0 0.0
    %6745 = vmatpush1.msra.mxu0 0.0
    %6746 = vmatprep.subr.mxu0 0.0
    %6747 = vmatpush1.msra.mxu0 0.0
    %6748 = vmatprep.subr.mxu0 0.0
    %6749 = vmatpush1.msra.mxu0 0.0
    %6750 = vmatprep.subr.mxu0 0.0
    %6751 = vmatpush1.msra.mxu0 0.0
    %6752 = vmatprep.subr.mxu0 0.0
    %6753 = vmatpush1.msra.mxu0 0.0
    %6754 = vmatprep.subr.mxu0 0.0
    %6755 = vmatpush1.msra.mxu0 0.0
    %6756 = vmatprep.subr.mxu0 0.0
    %6757 = vmatpush1.msra.mxu0 0.0
    %6758 = vmatprep.subr.mxu0 0.0
    %6759 = vmatpush1.msra.mxu0 0.0
    %6760 = vmatprep.subr.mxu0 0.0
    %6761 = vmatpush1.msra.mxu0 0.0
    %6762 = vmatprep.subr.mxu0 0.0
    %6763 = vmatpush1.msra.mxu0 0.0
    %6764 = vmatprep.subr.mxu0 0.0
    %6765 = vmatpush1.msra.mxu0 0.0
    %6766 = vmatprep.subr.mxu0 0.0
    %6767 = vmatpush1.msra.mxu0 0.0
    %6768 = vmatprep.subr.mxu0 0.0
    %6769 = vmatpush1.msra.mxu0 0.0
    %6770 = vmatprep.subr.mxu0 0.0
    %6771 = vmatpush1.msra.mxu0 0.0
    %6772 = vmatprep.subr.mxu0 0.0
    %6773 = vmatpush1.msra.mxu0 0.0
    %6774 = vmatprep.mubr.f32.mxu0 0.0
    %6775 = vmatmul.mubr.f32.gmra.mrb[0].mxu0 %v6708
    %v6776 = vpop.f32.mrb[0].mxu0
    %v6777 = vadd.f32 0.0, %v6776
    %v6778 = vpop.f32.mrb[0].mxu0
    %6779 = vdwg.mxu0
    %6780 = vrot.lane.b32.xlu0 %v5721, 64
    %v6781 = vpop.permute.xlu0 %6780
    %6782 = vrot.lane.b32.xlu0 %v5723, 64
    %v6783 = vpop.permute.xlu0 %6782
    %v6787 = vsel %vm1756, %v6457, 0
    %6789 = vmatprep.subr.mxu0 0.0
    %6790 = vmatpush1.msra.mxu0 %v6781
    %6791 = vmatprep.subr.mxu0 0.0
    %6792 = vmatpush1.msra.mxu0 %v6783
    %6793 = vmatprep.subr.mxu0 0.0
    %6794 = vmatpush1.msra.mxu0 0.0
    %6795 = vmatprep.subr.mxu0 0.0
    %6796 = vmatpush1.msra.mxu0 0.0
    %6797 = vmatprep.subr.mxu0 0.0
    %6798 = vmatpush1.msra.mxu0 0.0
    %6799 = vmatprep.subr.mxu0 0.0
    %6800 = vmatpush1.msra.mxu0 0.0
    %6801 = vmatprep.subr.mxu0 0.0
    %6802 = vmatpush1.msra.mxu0 0.0
    %6803 = vmatprep.subr.mxu0 0.0
    %6804 = vmatpush1.msra.mxu0 0.0
    %6805 = vmatprep.subr.mxu0 0.0
    %6806 = vmatpush1.msra.mxu0 0.0
    %6807 = vmatprep.subr.mxu0 0.0
    %6808 = vmatpush1.msra.mxu0 0.0
    %6809 = vmatprep.subr.mxu0 0.0
    %6810 = vmatpush1.msra.mxu0 0.0
    %6811 = vmatprep.subr.mxu0 0.0
    %6812 = vmatpush1.msra.mxu0 0.0
    %6813 = vmatprep.subr.mxu0 0.0
    %6814 = vmatpush1.msra.mxu0 0.0
    %6815 = vmatprep.subr.mxu0 0.0
    %6816 = vmatpush1.msra.mxu0 0.0
    %6817 = vmatprep.subr.mxu0 0.0
    %6818 = vmatpush1.msra.mxu0 0.0
    %6819 = vmatprep.subr.mxu0 0.0
    %6820 = vmatpush1.msra.mxu0 0.0
    %6821 = vmatprep.subr.mxu0 0.0
    %6822 = vmatpush1.msra.mxu0 0.0
    %6823 = vmatprep.subr.mxu0 0.0
    %6824 = vmatpush1.msra.mxu0 0.0
    %6825 = vmatprep.subr.mxu0 0.0
    %6826 = vmatpush1.msra.mxu0 0.0
    %6827 = vmatprep.subr.mxu0 0.0
    %6828 = vmatpush1.msra.mxu0 0.0
    %6829 = vmatprep.subr.mxu0 0.0
    %6830 = vmatpush1.msra.mxu0 0.0
    %6831 = vmatprep.subr.mxu0 0.0
    %6832 = vmatpush1.msra.mxu0 0.0
    %6833 = vmatprep.subr.mxu0 0.0
    %6834 = vmatpush1.msra.mxu0 0.0
    %6835 = vmatprep.subr.mxu0 0.0
    %6836 = vmatpush1.msra.mxu0 0.0
    %6837 = vmatprep.subr.mxu0 0.0
    %6838 = vmatpush1.msra.mxu0 0.0
    %6839 = vmatprep.subr.mxu0 0.0
    %6840 = vmatpush1.msra.mxu0 0.0
    %6841 = vmatprep.subr.mxu0 0.0
    %6842 = vmatpush1.msra.mxu0 0.0
    %6843 = vmatprep.subr.mxu0 0.0
    %6844 = vmatpush1.msra.mxu0 0.0
    %6845 = vmatprep.subr.mxu0 0.0
    %6846 = vmatpush1.msra.mxu0 0.0
    %6847 = vmatprep.subr.mxu0 0.0
    %6848 = vmatpush1.msra.mxu0 0.0
    %6849 = vmatprep.subr.mxu0 0.0
    %6850 = vmatpush1.msra.mxu0 0.0
    %6851 = vmatprep.subr.mxu0 0.0
    %6852 = vmatpush1.msra.mxu0 0.0
    %6853 = vmatprep.mubr.f32.mxu0 0.0
    %6854 = vmatmul.mubr.f32.gmra.mrb[0].mxu0 %v6787
    %v6855 = vpop.f32.mrb[0].mxu0
    %v6856 = vadd.f32 0.0, %v6855
    %v6857 = vpop.f32.mrb[0].mxu0
    %6858 = vdwg.mxu0
    %6859 = vrot.lane.b32.xlu0 %v5725, 64
    %v6860 = vpop.permute.xlu0 %6859
    %6861 = vrot.lane.b32.xlu0 %v5727, 64
    %v6862 = vpop.permute.xlu0 %6861
    %v6866 = vsel %vm1756, %v6459, 0
    %6868 = vmatprep.subr.mxu0 0.0
    %6869 = vmatpush1.msra.mxu0 %v6860
    %6870 = vmatprep.subr.mxu0 0.0
    %6871 = vmatpush1.msra.mxu0 %v6862
    %6872 = vmatprep.subr.mxu0 0.0
    %6873 = vmatpush1.msra.mxu0 0.0
    %6874 = vmatprep.subr.mxu0 0.0
    %6875 = vmatpush1.msra.mxu0 0.0
    %6876 = vmatprep.subr.mxu0 0.0
    %6877 = vmatpush1.msra.mxu0 0.0
    %6878 = vmatprep.subr.mxu0 0.0
    %6879 = vmatpush1.msra.mxu0 0.0
    %6880 = vmatprep.subr.mxu0 0.0
    %6881 = vmatpush1.msra.mxu0 0.0
    %6882 = vmatprep.subr.mxu0 0.0
    %6883 = vmatpush1.msra.mxu0 0.0
    %6884 = vmatprep.subr.mxu0 0.0
    %6885 = vmatpush1.msra.mxu0 0.0
    %6886 = vmatprep.subr.mxu0 0.0
    %6887 = vmatpush1.msra.mxu0 0.0
    %6888 = vmatprep.subr.mxu0 0.0
    %6889 = vmatpush1.msra.mxu0 0.0
    %6890 = vmatprep.subr.mxu0 0.0
    %6891 = vmatpush1.msra.mxu0 0.0
    %6892 = vmatprep.subr.mxu0 0.0
    %6893 = vmatpush1.msra.mxu0 0.0
    %6894 = vmatprep.subr.mxu0 0.0
    %6895 = vmatpush1.msra.mxu0 0.0
    %6896 = vmatprep.subr.mxu0 0.0
    %6897 = vmatpush1.msra.mxu0 0.0
    %6898 = vmatprep.subr.mxu0 0.0
    %6899 = vmatpush1.msra.mxu0 0.0
    %6900 = vmatprep.subr.mxu0 0.0
    %6901 = vmatpush1.msra.mxu0 0.0
    %6902 = vmatprep.subr.mxu0 0.0
    %6903 = vmatpush1.msra.mxu0 0.0
    %6904 = vmatprep.subr.mxu0 0.0
    %6905 = vmatpush1.msra.mxu0 0.0
    %6906 = vmatprep.subr.mxu0 0.0
    %6907 = vmatpush1.msra.mxu0 0.0
    %6908 = vmatprep.subr.mxu0 0.0
    %6909 = vmatpush1.msra.mxu0 0.0
    %6910 = vmatprep.subr.mxu0 0.0
    %6911 = vmatpush1.msra.mxu0 0.0
    %6912 = vmatprep.subr.mxu0 0.0
    %6913 = vmatpush1.msra.mxu0 0.0
    %6914 = vmatprep.subr.mxu0 0.0
    %6915 = vmatpush1.msra.mxu0 0.0
    %6916 = vmatprep.subr.mxu0 0.0
    %6917 = vmatpush1.msra.mxu0 0.0
    %6918 = vmatprep.subr.mxu0 0.0
    %6919 = vmatpush1.msra.mxu0 0.0
    %6920 = vmatprep.subr.mxu0 0.0
    %6921 = vmatpush1.msra.mxu0 0.0
    %6922 = vmatprep.subr.mxu0 0.0
    %6923 = vmatpush1.msra.mxu0 0.0
    %6924 = vmatprep.subr.mxu0 0.0
    %6925 = vmatpush1.msra.mxu0 0.0
    %6926 = vmatprep.subr.mxu0 0.0
    %6927 = vmatpush1.msra.mxu0 0.0
    %6928 = vmatprep.subr.mxu0 0.0
    %6929 = vmatpush1.msra.mxu0 0.0
    %6930 = vmatprep.subr.mxu0 0.0
    %6931 = vmatpush1.msra.mxu0 0.0
    %6932 = vmatprep.mubr.f32.mxu0 0.0
    %6933 = vmatmul.mubr.f32.gmra.mrb[0].mxu0 %v6866
    %v6934 = vpop.f32.mrb[0].mxu0
    %v6935 = vadd.f32 0.0, %v6934
    %v6936 = vpop.f32.mrb[0].mxu0
    %6937 = vdwg.mxu0
    %6938 = vrot.lane.b32.xlu0 %v5729, 64
    %v6939 = vpop.permute.xlu0 %6938
    %6940 = vrot.lane.b32.xlu0 %v5731, 64
    %v6941 = vpop.permute.xlu0 %6940
    %v6945 = vsel %vm1756, %v6461, 0
    %6947 = vmatprep.subr.mxu0 0.0
    %6948 = vmatpush1.msra.mxu0 %v6939
    %6949 = vmatprep.subr.mxu0 0.0
    %6950 = vmatpush1.msra.mxu0 %v6941
    %6951 = vmatprep.subr.mxu0 0.0
    %6952 = vmatpush1.msra.mxu0 0.0
    %6953 = vmatprep.subr.mxu0 0.0
    %6954 = vmatpush1.msra.mxu0 0.0
    %6955 = vmatprep.subr.mxu0 0.0
    %6956 = vmatpush1.msra.mxu0 0.0
    %6957 = vmatprep.subr.mxu0 0.0
    %6958 = vmatpush1.msra.mxu0 0.0
    %6959 = vmatprep.subr.mxu0 0.0
    %6960 = vmatpush1.msra.mxu0 0.0
    %6961 = vmatprep.subr.mxu0 0.0
    %6962 = vmatpush1.msra.mxu0 0.0
    %6963 = vmatprep.subr.mxu0 0.0
    %6964 = vmatpush1.msra.mxu0 0.0
    %6965 = vmatprep.subr.mxu0 0.0
    %6966 = vmatpush1.msra.mxu0 0.0
    %6967 = vmatprep.subr.mxu0 0.0
    %6968 = vmatpush1.msra.mxu0 0.0
    %6969 = vmatprep.subr.mxu0 0.0
    %6970 = vmatpush1.msra.mxu0 0.0
    %6971 = vmatprep.subr.mxu0 0.0
    %6972 = vmatpush1.msra.mxu0 0.0
    %6973 = vmatprep.subr.mxu0 0.0
    %6974 = vmatpush1.msra.mxu0 0.0
    %6975 = vmatprep.subr.mxu0 0.0
    %6976 = vmatpush1.msra.mxu0 0.0
    %6977 = vmatprep.subr.mxu0 0.0
    %6978 = vmatpush1.msra.mxu0 0.0
    %6979 = vmatprep.subr.mxu0 0.0
    %6980 = vmatpush1.msra.mxu0 0.0
    %6981 = vmatprep.subr.mxu0 0.0
    %6982 = vmatpush1.msra.mxu0 0.0
    %6983 = vmatprep.subr.mxu0 0.0
    %6984 = vmatpush1.msra.mxu0 0.0
    %6985 = vmatprep.subr.mxu0 0.0
    %6986 = vmatpush1.msra.mxu0 0.0
    %6987 = vmatprep.subr.mxu0 0.0
    %6988 = vmatpush1.msra.mxu0 0.0
    %6989 = vmatprep.subr.mxu0 0.0
    %6990 = vmatpush1.msra.mxu0 0.0
    %6991 = vmatprep.subr.mxu0 0.0
    %6992 = vmatpush1.msra.mxu0 0.0
    %6993 = vmatprep.subr.mxu0 0.0
    %6994 = vmatpush1.msra.mxu0 0.0
    %6995 = vmatprep.subr.mxu0 0.0
    %6996 = vmatpush1.msra.mxu0 0.0
    %6997 = vmatprep.subr.mxu0 0.0
    %6998 = vmatpush1.msra.mxu0 0.0
    %6999 = vmatprep.subr.mxu0 0.0
    %7000 = vmatpush1.msra.mxu0 0.0
    %7001 = vmatprep.subr.mxu0 0.0
    %7002 = vmatpush1.msra.mxu0 0.0
    %7003 = vmatprep.subr.mxu0 0.0
    %7004 = vmatpush1.msra.mxu0 0.0
    %7005 = vmatprep.subr.mxu0 0.0
    %7006 = vmatpush1.msra.mxu0 0.0
    %7007 = vmatprep.subr.mxu0 0.0
    %7008 = vmatpush1.msra.mxu0 0.0
    %7009 = vmatprep.subr.mxu0 0.0
    %7010 = vmatpush1.msra.mxu0 0.0
    %7011 = vmatprep.mubr.f32.mxu0 0.0
    %7012 = vmatmul.mubr.f32.gmra.mrb[0].mxu0 %v6945
    %v7013 = vpop.f32.mrb[0].mxu0
    %v7014 = vadd.f32 0.0, %v7013
    %v7015 = vpop.f32.mrb[0].mxu0
    %7016 = vdwg.mxu0
    %7017 = vrot.lane.b32.xlu0 %v5733, 64
    %v7018 = vpop.permute.xlu0 %7017
    %7019 = vrot.lane.b32.xlu0 %v5735, 64
    %v7020 = vpop.permute.xlu0 %7019
    %v7024 = vsel %vm1756, %v6463, 0
    %7026 = vmatprep.subr.mxu0 0.0
    %7027 = vmatpush1.msra.mxu0 %v7018
    %7028 = vmatprep.subr.mxu0 0.0
    %7029 = vmatpush1.msra.mxu0 %v7020
    %7030 = vmatprep.subr.mxu0 0.0
    %7031 = vmatpush1.msra.mxu0 0.0
    %7032 = vmatprep.subr.mxu0 0.0
    %7033 = vmatpush1.msra.mxu0 0.0
    %7034 = vmatprep.subr.mxu0 0.0
    %7035 = vmatpush1.msra.mxu0 0.0
    %7036 = vmatprep.subr.mxu0 0.0
    %7037 = vmatpush1.msra.mxu0 0.0
    %7038 = vmatprep.subr.mxu0 0.0
    %7039 = vmatpush1.msra.mxu0 0.0
    %7040 = vmatprep.subr.mxu0 0.0
    %7041 = vmatpush1.msra.mxu0 0.0
    %7042 = vmatprep.subr.mxu0 0.0
    %7043 = vmatpush1.msra.mxu0 0.0
    %7044 = vmatprep.subr.mxu0 0.0
    %7045 = vmatpush1.msra.mxu0 0.0
    %7046 = vmatprep.subr.mxu0 0.0
    %7047 = vmatpush1.msra.mxu0 0.0
    %7048 = vmatprep.subr.mxu0 0.0
    %7049 = vmatpush1.msra.mxu0 0.0
    %7050 = vmatprep.subr.mxu0 0.0
    %7051 = vmatpush1.msra.mxu0 0.0
    %7052 = vmatprep.subr.mxu0 0.0
    %7053 = vmatpush1.msra.mxu0 0.0
    %7054 = vmatprep.subr.mxu0 0.0
    %7055 = vmatpush1.msra.mxu0 0.0
    %7056 = vmatprep.subr.mxu0 0.0
    %7057 = vmatpush1.msra.mxu0 0.0
    %7058 = vmatprep.subr.mxu0 0.0
    %7059 = vmatpush1.msra.mxu0 0.0
    %7060 = vmatprep.subr.mxu0 0.0
    %7061 = vmatpush1.msra.mxu0 0.0
    %7062 = vmatprep.subr.mxu0 0.0
    %7063 = vmatpush1.msra.mxu0 0.0
    %7064 = vmatprep.subr.mxu0 0.0
    %7065 = vmatpush1.msra.mxu0 0.0
    %7066 = vmatprep.subr.mxu0 0.0
    %7067 = vmatpush1.msra.mxu0 0.0
    %7068 = vmatprep.subr.mxu0 0.0
    %7069 = vmatpush1.msra.mxu0 0.0
    %7070 = vmatprep.subr.mxu0 0.0
    %7071 = vmatpush1.msra.mxu0 0.0
    %7072 = vmatprep.subr.mxu0 0.0
    %7073 = vmatpush1.msra.mxu0 0.0
    %7074 = vmatprep.subr.mxu0 0.0
    %7075 = vmatpush1.msra.mxu0 0.0
    %7076 = vmatprep.subr.mxu0 0.0
    %7077 = vmatpush1.msra.mxu0 0.0
    %7078 = vmatprep.subr.mxu0 0.0
    %7079 = vmatpush1.msra.mxu0 0.0
    %7080 = vmatprep.subr.mxu0 0.0
    %7081 = vmatpush1.msra.mxu0 0.0
    %7082 = vmatprep.subr.mxu0 0.0
    %7083 = vmatpush1.msra.mxu0 0.0
    %7084 = vmatprep.subr.mxu0 0.0
    %7085 = vmatpush1.msra.mxu0 0.0
    %7086 = vmatprep.subr.mxu0 0.0
    %7087 = vmatpush1.msra.mxu0 0.0
    %7088 = vmatprep.subr.mxu0 0.0
    %7089 = vmatpush1.msra.mxu0 0.0
    %7090 = vmatprep.mubr.f32.mxu0 0.0
    %7091 = vmatmul.mubr.f32.gmra.mrb[0].mxu0 %v7024
    %v7092 = vpop.f32.mrb[0].mxu0
    %v7093 = vadd.f32 0.0, %v7092
    %v7094 = vpop.f32.mrb[0].mxu0
    %7095 = vdwg.mxu0
    %7098 = vrot.lane.b32.xlu0 %v6698, 8
    %v7099 = vpop.permute.xlu0 %7098
    %7100 = vrot.lane.b32.xlu0 %v6777, 8
    %v7101 = vpop.permute.xlu0 %7100
    %7106 = vrot.lane.b32.xlu0 %v6856, 16
    %v7107 = vpop.permute.xlu0 %7106
    %7108 = vrot.lane.b32.xlu0 %v6935, 16
    %v7109 = vpop.permute.xlu0 %7108
    %7114 = vrot.lane.b32.xlu0 %v7014, 24
    %v7115 = vpop.permute.xlu0 %7114
    %7116 = vrot.lane.b32.xlu0 %v7093, 24
    %v7117 = vpop.permute.xlu0 %7116
    %v7120 = vsel %vm427, %v6540, %v7099
    %v7121 = vsel %vm427, %v6619, %v7101
    %v7122 = vsel %vm1756, %v7120, %v7107
    %v7123 = vsel %vm1756, %v7121, %v7109
    %v7124 = vsel %vm1759, %v7122, %v7115
    %v7125 = vsel %vm1759, %v7123, %v7117
    %s7126 = scalar_lea.vmem [#allocation14], 32
    %v7127 = vld [vmem:[%s7126] sm:$0xff]
    %v7128 = vld [vmem:[%s7126 + $0x8] sm:$0xff]
    %v7129 = vld [vmem:[%s7126 + $0x10] sm:$0xff]
    %v7130 = vld [vmem:[%s7126 + $0x18] sm:$0xff]
    %s7131 = scalar_lea.vmem [#allocation16], 1
    %v7132 = vld [vmem:[%s7131] sm:$0x1]
    %v7134 = vlaneseq
    %v7135 = vshrl.u32 %v7134, 7
    %v7136 = vsub.s32 0, %v7135
    %v7137 = vrot.slane %v7132, %v7136
    %v7140 = vsel %vm283, %v7124, 0
    %v7143 = vsel %vm283, %v7125, 0
    %7145 = vmatprep.subr.mxu0 0.0
    %7146 = vmatpush1.msra.mxu0 %v7127
    %7147 = vmatprep.subr.mxu0 0.0
    %7148 = vmatpush1.msra.mxu0 %v7128
    %7149 = vmatprep.subr.mxu0 0.0
    %7150 = vmatpush1.msra.mxu0 %v7129
    %7151 = vmatprep.subr.mxu0 0.0
    %7152 = vmatpush1.msra.mxu0 %v7130
    %7153 = vmatprep.subr.mxu0 0.0
    %7154 = vmatpush1.msra.mxu0 0.0
    %7155 = vmatprep.subr.mxu0 0.0
    %7156 = vmatpush1.msra.mxu0 0.0
    %7157 = vmatprep.subr.mxu0 0.0
    %7158 = vmatpush1.msra.mxu0 0.0
    %7159 = vmatprep.subr.mxu0 0.0
    %7160 = vmatpush1.msra.mxu0 0.0
    %7161 = vmatprep.subr.mxu0 0.0
    %7162 = vmatpush1.msra.mxu0 0.0
    %7163 = vmatprep.subr.mxu0 0.0
    %7164 = vmatpush1.msra.mxu0 0.0
    %7165 = vmatprep.subr.mxu0 0.0
    %7166 = vmatpush1.msra.mxu0 0.0
    %7167 = vmatprep.subr.mxu0 0.0
    %7168 = vmatpush1.msra.mxu0 0.0
    %7169 = vmatprep.subr.mxu0 0.0
    %7170 = vmatpush1.msra.mxu0 0.0
    %7171 = vmatprep.subr.mxu0 0.0
    %7172 = vmatpush1.msra.mxu0 0.0
    %7173 = vmatprep.subr.mxu0 0.0
    %7174 = vmatpush1.msra.mxu0 0.0
    %7175 = vmatprep.subr.mxu0 0.0
    %7176 = vmatpush1.msra.mxu0 0.0
    %7177 = vmatprep.subr.mxu0 0.0
    %7178 = vmatpush1.msra.mxu0 0.0
    %7179 = vmatprep.subr.mxu0 0.0
    %7180 = vmatpush1.msra.mxu0 0.0
    %7181 = vmatprep.subr.mxu0 0.0
    %7182 = vmatpush1.msra.mxu0 0.0
    %7183 = vmatprep.subr.mxu0 0.0
    %7184 = vmatpush1.msra.mxu0 0.0
    %7185 = vmatprep.subr.mxu0 0.0
    %7186 = vmatpush1.msra.mxu0 0.0
    %7187 = vmatprep.subr.mxu0 0.0
    %7188 = vmatpush1.msra.mxu0 0.0
    %7189 = vmatprep.subr.mxu0 0.0
    %7190 = vmatpush1.msra.mxu0 0.0
    %7191 = vmatprep.subr.mxu0 0.0
    %7192 = vmatpush1.msra.mxu0 0.0
    %7193 = vmatprep.subr.mxu0 0.0
    %7194 = vmatpush1.msra.mxu0 0.0
    %7195 = vmatprep.subr.mxu0 0.0
    %7196 = vmatpush1.msra.mxu0 0.0
    %7197 = vmatprep.subr.mxu0 0.0
    %7198 = vmatpush1.msra.mxu0 0.0
    %7199 = vmatprep.subr.mxu0 0.0
    %7200 = vmatpush1.msra.mxu0 0.0
    %7201 = vmatprep.subr.mxu0 0.0
    %7202 = vmatpush1.msra.mxu0 0.0
    %7203 = vmatprep.subr.mxu0 0.0
    %7204 = vmatpush1.msra.mxu0 0.0
    %7205 = vmatprep.subr.mxu0 0.0
    %7206 = vmatpush1.msra.mxu0 0.0
    %7207 = vmatprep.subr.mxu0 0.0
    %7208 = vmatpush1.msra.mxu0 0.0
    %7209 = vmatprep.mubr.f32.mxu0 0.0
    %7210 = vmatmul.mubr.f32.gmra.mrb[0].mxu0 %v7140
    %v7211 = vpop.f32.mrb[0].mxu0
    %v7212 = vadd.f32 %v7137, %v7211
    %v7213 = vpop.f32.mrb[0].mxu0
    %7214 = vmatprep.mubr.f32.mxu0 0.0
    %7215 = vmatmul.mubr.f32.gmra.mrb[0].mxu0 %v7143
    %v7216 = vpop.f32.mrb[0].mxu0
    %v7217 = vadd.f32 %v7137, %v7216
    %v7218 = vpop.f32.mrb[0].mxu0
    %7219 = vdwg.mxu0
    %v7220 = vadd.f32 %v5526, %v7212
    %v7221 = vadd.f32 %v5527, %v7217
    %s7222 = scalar_lea.vmem [#allocation17], 1
    %v7223 = vld [vmem:[%s7222] sm:$0x1]
    %s7224 = scalar_lea.vmem [#allocation19], 1
    %v7225 = vld [vmem:[%s7224] sm:$0x1]
    %v7226 = vsel %vm283, %v7220, 0.0
    %7227 = vadd.xlane.f32.xlu0 %v7226
    %v7228 = vpop.xlane.xlu0 %7227
    %v7229 = vsel %vm283, %v7221, 0.0
    %7230 = vadd.xlane.f32.xlu0 %v7229
    %v7231 = vpop.xlane.xlu0 %7230
    %v7232 = vmul.f32 %v7228, %v1864
    %v7233 = vmul.f32 %v7231, %v1864
    %v7234 = vsub.f32 %v7220, %v7232
    %v7235 = vsub.f32 %v7221, %v7233
    %v7236 = vmul.f32 %v7234, %v7234
    %v7237 = vmul.f32 %v7235, %v7235
    %v7238 = vsel %vm283, %v7236, 0.0
    %7239 = vadd.xlane.f32.xlu0 %v7238
    %v7240 = vpop.xlane.xlu0 %7239
    %v7241 = vsel %vm283, %v7237, 0.0
    %7242 = vadd.xlane.f32.xlu0 %v7241
    %v7243 = vpop.xlane.xlu0 %7242
    %v7244 = vmul.f32 %v7240, %v1864
    %v7245 = vmul.f32 %v7243, %v1864
    %v7246 = vadd.f32 %v7244, 1e-05
    %v7247 = vadd.f32 %v7245, 1e-05
    %v7248 = vrsqrt.pop %v7246
    %v7249 = vrsqrt.pop %v7247
    %v7250 = vmul.f32 %v7234, %v7248
    %v7251 = vmul.f32 %v7235, %v7249
    %v7253 = vlaneseq
    %v7254 = vshrl.u32 %v7253, 7
    %v7255 = vsub.s32 0, %v7254
    %v7256 = vrot.slane %v7223, %v7255
    %v7258 = vmul.f32 %v7250, %v7256
    %v7259 = vmul.f32 %v7251, %v7256
    %v7261 = vlaneseq
    %v7262 = vshrl.u32 %v7261, 7
    %v7263 = vsub.s32 0, %v7262
    %v7264 = vrot.slane %v7225, %v7263
    %v7266 = vadd.f32 %v7258, %v7264
    %v7267 = vadd.f32 %v7259, %v7264
    %s7268 = scalar_lea.vmem [#allocation20], 32
    %v7269 = vld [vmem:[%s7268] sm:$0xff]
    %v7270 = vld [vmem:[%s7268 + $0x8] sm:$0xff]
    %v7271 = vld [vmem:[%s7268 + $0x10] sm:$0xff]
    %v7272 = vld [vmem:[%s7268 + $0x18] sm:$0xff]
    %s7273 = scalar_lea.vmem [#allocation22], 1
    %v7274 = vld [vmem:[%s7273] sm:$0x1]
    %v7276 = vlaneseq
    %v7277 = vshrl.u32 %v7276, 7
    %v7278 = vsub.s32 0, %v7277
    %v7279 = vrot.slane %v7274, %v7278
    %v7282 = vsel %vm283, %v7266, 0
    %v7285 = vsel %vm283, %v7267, 0
    %7287 = vmatprep.subr.mxu0 0.0
    %7288 = vmatpush1.msra.mxu0 %v7269
    %7289 = vmatprep.subr.mxu0 0.0
    %7290 = vmatpush1.msra.mxu0 %v7270
    %7291 = vmatprep.subr.mxu0 0.0
    %7292 = vmatpush1.msra.mxu0 %v7271
    %7293 = vmatprep.subr.mxu0 0.0
    %7294 = vmatpush1.msra.mxu0 %v7272
    %7295 = vmatprep.subr.mxu0 0.0
    %7296 = vmatpush1.msra.mxu0 0.0
    %7297 = vmatprep.subr.mxu0 0.0
    %7298 = vmatpush1.msra.mxu0 0.0
    %7299 = vmatprep.subr.mxu0 0.0
    %7300 = vmatpush1.msra.mxu0 0.0
    %7301 = vmatprep.subr.mxu0 0.0
    %7302 = vmatpush1.msra.mxu0 0.0
    %7303 = vmatprep.subr.mxu0 0.0
    %7304 = vmatpush1.msra.mxu0 0.0
    %7305 = vmatprep.subr.mxu0 0.0
    %7306 = vmatpush1.msra.mxu0 0.0
    %7307 = vmatprep.subr.mxu0 0.0
    %7308 = vmatpush1.msra.mxu0 0.0
    %7309 = vmatprep.subr.mxu0 0.0
    %7310 = vmatpush1.msra.mxu0 0.0
    %7311 = vmatprep.subr.mxu0 0.0
    %7312 = vmatpush1.msra.mxu0 0.0
    %7313 = vmatprep.subr.mxu0 0.0
    %7314 = vmatpush1.msra.mxu0 0.0
    %7315 = vmatprep.subr.mxu0 0.0
    %7316 = vmatpush1.msra.mxu0 0.0
    %7317 = vmatprep.subr.mxu0 0.0
    %7318 = vmatpush1.msra.mxu0 0.0
    %7319 = vmatprep.subr.mxu0 0.0
    %7320 = vmatpush1.msra.mxu0 0.0
    %7321 = vmatprep.subr.mxu0 0.0
    %7322 = vmatpush1.msra.mxu0 0.0
    %7323 = vmatprep.subr.mxu0 0.0
    %7324 = vmatpush1.msra.mxu0 0.0
    %7325 = vmatprep.subr.mxu0 0.0
    %7326 = vmatpush1.msra.mxu0 0.0
    %7327 = vmatprep.subr.mxu0 0.0
    %7328 = vmatpush1.msra.mxu0 0.0
    %7329 = vmatprep.subr.mxu0 0.0
    %7330 = vmatpush1.msra.mxu0 0.0
    %7331 = vmatprep.subr.mxu0 0.0
    %7332 = vmatpush1.msra.mxu0 0.0
    %7333 = vmatprep.subr.mxu0 0.0
    %7334 = vmatpush1.msra.mxu0 0.0
    %7335 = vmatprep.subr.mxu0 0.0
    %7336 = vmatpush1.msra.mxu0 0.0
    %7337 = vmatprep.subr.mxu0 0.0
    %7338 = vmatpush1.msra.mxu0 0.0
    %7339 = vmatprep.subr.mxu0 0.0
    %7340 = vmatpush1.msra.mxu0 0.0
    %7341 = vmatprep.subr.mxu0 0.0
    %7342 = vmatpush1.msra.mxu0 0.0
    %7343 = vmatprep.subr.mxu0 0.0
    %7344 = vmatpush1.msra.mxu0 0.0
    %7345 = vmatprep.subr.mxu0 0.0
    %7346 = vmatpush1.msra.mxu0 0.0
    %7347 = vmatprep.subr.mxu0 0.0
    %7348 = vmatpush1.msra.mxu0 0.0
    %7349 = vmatprep.subr.mxu0 0.0
    %7350 = vmatpush1.msra.mxu0 0.0
    %7351 = vmatprep.mubr.f32.mxu0 0.0
    %7352 = vmatmul.mubr.f32.gmra.mrb[0].mxu0 %v7282
    %v7353 = vpop.f32.mrb[0].mxu0
    %v7354 = vadd.f32 %v7279, %v7353
    %v7355 = vpop.f32.mrb[0].mxu0
    %7356 = vmatprep.mubr.f32.mxu0 0.0
    %7357 = vmatmul.mubr.f32.gmra.mrb[0].mxu0 %v7285
    %v7358 = vpop.f32.mrb[0].mxu0
    %v7359 = vadd.f32 %v7279, %v7358
    %v7360 = vpop.f32.mrb[0].mxu0
    %7361 = vdwg.mxu0
    %v7362 = vmax.f32 %v7354, 0.0
    %v7363 = vmax.f32 %v7359, 0.0
    %s7364 = scalar_lea.vmem %s18, 64
    %v7365 = vld [vmem:[%s7364] sm:$0xff]
    %v7366 = vld [vmem:[%s7364 + $0x8] sm:$0xff]
    %v7367 = vld [vmem:[%s7364 + $0x10] sm:$0xff]
    %v7368 = vld [vmem:[%s7364 + $0x18] sm:$0xff]
    %v7369 = vld [vmem:[%s7364 + $0x20] sm:$0xff]
    %v7370 = vld [vmem:[%s7364 + $0x28] sm:$0xff]
    %v7371 = vld [vmem:[%s7364 + $0x30] sm:$0xff]
    %v7372 = vld [vmem:[%s7364 + $0x38] sm:$0xff]
    %s7373 = scalar_lea.vmem %s19, 1
    %v7374 = vld [vmem:[%s7373] sm:$0x1]
    %v7376 = vlaneseq
    %v7377 = vshrl.u32 %v7376, 7
    %v7378 = vsub.s32 0, %v7377
    %v7379 = vrot.slane %v7374, %v7378
    %v7382 = vsel %vm3768, %v7362, 0
    %v7385 = vsel %vm3768, %v7363, 0
    %7387 = vmatprep.subr.mxu0 0.0
    %7388 = vmatpush1.msra.mxu0 %v7365
    %7389 = vmatprep.subr.mxu0 0.0
    %7390 = vmatpush1.msra.mxu0 %v7366
    %7391 = vmatprep.subr.mxu0 0.0
    %7392 = vmatpush1.msra.mxu0 %v7367
    %7393 = vmatprep.subr.mxu0 0.0
    %7394 = vmatpush1.msra.mxu0 %v7368
    %7395 = vmatprep.subr.mxu0 0.0
    %7396 = vmatpush1.msra.mxu0 %v7369
    %7397 = vmatprep.subr.mxu0 0.0
    %7398 = vmatpush1.msra.mxu0 %v7370
    %7399 = vmatprep.subr.mxu0 0.0
    %7400 = vmatpush1.msra.mxu0 %v7371
    %7401 = vmatprep.subr.mxu0 0.0
    %7402 = vmatpush1.msra.mxu0 %v7372
    %7403 = vmatprep.subr.mxu0 0.0
    %7404 = vmatpush1.msra.mxu0 0.0
    %7405 = vmatprep.subr.mxu0 0.0
    %7406 = vmatpush1.msra.mxu0 0.0
    %7407 = vmatprep.subr.mxu0 0.0
    %7408 = vmatpush1.msra.mxu0 0.0
    %7409 = vmatprep.subr.mxu0 0.0
    %7410 = vmatpush1.msra.mxu0 0.0
    %7411 = vmatprep.subr.mxu0 0.0
    %7412 = vmatpush1.msra.mxu0 0.0
    %7413 = vmatprep.subr.mxu0 0.0
    %7414 = vmatpush1.msra.mxu0 0.0
    %7415 = vmatprep.subr.mxu0 0.0
    %7416 = vmatpush1.msra.mxu0 0.0
    %7417 = vmatprep.subr.mxu0 0.0
    %7418 = vmatpush1.msra.mxu0 0.0
    %7419 = vmatprep.subr.mxu0 0.0
    %7420 = vmatpush1.msra.mxu0 0.0
    %7421 = vmatprep.subr.mxu0 0.0
    %7422 = vmatpush1.msra.mxu0 0.0
    %7423 = vmatprep.subr.mxu0 0.0
    %7424 = vmatpush1.msra.mxu0 0.0
    %7425 = vmatprep.subr.mxu0 0.0
    %7426 = vmatpush1.msra.mxu0 0.0
    %7427 = vmatprep.subr.mxu0 0.0
    %7428 = vmatpush1.msra.mxu0 0.0
    %7429 = vmatprep.subr.mxu0 0.0
    %7430 = vmatpush1.msra.mxu0 0.0
    %7431 = vmatprep.subr.mxu0 0.0
    %7432 = vmatpush1.msra.mxu0 0.0
    %7433 = vmatprep.subr.mxu0 0.0
    %7434 = vmatpush1.msra.mxu0 0.0
    %7435 = vmatprep.subr.mxu0 0.0
    %7436 = vmatpush1.msra.mxu0 0.0
    %7437 = vmatprep.subr.mxu0 0.0
    %7438 = vmatpush1.msra.mxu0 0.0
    %7439 = vmatprep.subr.mxu0 0.0
    %7440 = vmatpush1.msra.mxu0 0.0
    %7441 = vmatprep.subr.mxu0 0.0
    %7442 = vmatpush1.msra.mxu0 0.0
    %7443 = vmatprep.subr.mxu0 0.0
    %7444 = vmatpush1.msra.mxu0 0.0
    %7445 = vmatprep.subr.mxu0 0.0
    %7446 = vmatpush1.msra.mxu0 0.0
    %7447 = vmatprep.subr.mxu0 0.0
    %7448 = vmatpush1.msra.mxu0 0.0
    %7449 = vmatprep.subr.mxu0 0.0
    %7450 = vmatpush1.msra.mxu0 0.0
    %7451 = vmatprep.mubr.f32.mxu0 0.0
    %7452 = vmatmul.mubr.f32.gmra.mrb[0].mxu0 %v7382
    %v7453 = vpop.f32.mrb[0].mxu0
    %v7454 = vadd.f32 %v7379, %v7453
    %v7455 = vpop.f32.mrb[0].mxu0
    %7456 = vmatprep.mubr.f32.mxu0 0.0
    %7457 = vmatmul.mubr.f32.gmra.mrb[0].mxu0 %v7385
    %v7458 = vpop.f32.mrb[0].mxu0
    %v7459 = vadd.f32 %v7379, %v7458
    %v7460 = vpop.f32.mrb[0].mxu0
    %7461 = vdwg.mxu0
    %v7462 = vadd.f32 %v7266, %v7454
    %v7463 = vadd.f32 %v7267, %v7459
    %s7464 = scalar_lea.vmem %s20, 1
    %v7465 = vld [vmem:[%s7464] sm:$0x1]
    %s7466 = scalar_lea.vmem %s21, 1
    %v7467 = vld [vmem:[%s7466] sm:$0x1]
    %v7468 = vsel %vm283, %v7462, 0.0
    %7469 = vadd.xlane.f32.xlu0 %v7468
    %v7470 = vpop.xlane.xlu0 %7469
    %v7471 = vsel %vm283, %v7463, 0.0
    %7472 = vadd.xlane.f32.xlu0 %v7471
    %v7473 = vpop.xlane.xlu0 %7472
    %v7474 = vmul.f32 %v7470, %v1864
    %v7475 = vmul.f32 %v7473, %v1864
    %v7476 = vsub.f32 %v7462, %v7474
    %v7477 = vsub.f32 %v7463, %v7475
    %v7478 = vmul.f32 %v7476, %v7476
    %v7479 = vmul.f32 %v7477, %v7477
    %v7480 = vsel %vm283, %v7478, 0.0
    %7481 = vadd.xlane.f32.xlu0 %v7480
    %v7482 = vpop.xlane.xlu0 %7481
    %v7483 = vsel %vm283, %v7479, 0.0
    %7484 = vadd.xlane.f32.xlu0 %v7483
    %v7485 = vpop.xlane.xlu0 %7484
    %v7486 = vmul.f32 %v7482, %v1864
    %v7487 = vmul.f32 %v7485, %v1864
    %v7488 = vadd.f32 %v7486, 1e-05
    %v7489 = vadd.f32 %v7487, 1e-05
    %v7490 = vrsqrt.pop %v7488
    %v7491 = vrsqrt.pop %v7489
    %v7492 = vmul.f32 %v7476, %v7490
    %v7493 = vmul.f32 %v7477, %v7491
    %v7495 = vlaneseq
    %v7496 = vshrl.u32 %v7495, 7
    %v7497 = vsub.s32 0, %v7496
    %v7498 = vrot.slane %v7465, %v7497
    %v7500 = vmul.f32 %v7492, %v7498
    %v7501 = vmul.f32 %v7493, %v7498
    %v7503 = vlaneseq
    %v7504 = vshrl.u32 %v7503, 7
    %v7505 = vsub.s32 0, %v7504
    %v7506 = vrot.slane %v7467, %v7505
    %v7508 = vadd.f32 %v7500, %v7506
    %v7509 = vadd.f32 %v7501, %v7506
    %v7510 = vld [vmem:[%s22] sm:$0x1]
    %v7511 = vld [vmem:[%s23] sm:$0x1]
    %v7512 = vsel %vm283, %v7508, 0.0
    %7513 = vadd.xlane.f32.xlu0 %v7512
    %v7514 = vpop.xlane.xlu0 %7513
    %v7515 = vsel %vm283, %v7509, 0.0
    %7516 = vadd.xlane.f32.xlu0 %v7515
    %v7517 = vpop.xlane.xlu0 %7516
    %v7518 = vmul.f32 %v7514, %v1864
    %v7519 = vmul.f32 %v7517, %v1864
    %v7520 = vsub.f32 %v7508, %v7518
    %v7521 = vsub.f32 %v7509, %v7519
    %v7522 = vmul.f32 %v7520, %v7520
    %v7523 = vmul.f32 %v7521, %v7521
    %v7524 = vsel %vm283, %v7522, 0.0
    %7525 = vadd.xlane.f32.xlu0 %v7524
    %v7526 = vpop.xlane.xlu0 %7525
    %v7527 = vsel %vm283, %v7523, 0.0
    %7528 = vadd.xlane.f32.xlu0 %v7527
    %v7529 = vpop.xlane.xlu0 %7528
    %v7530 = vmul.f32 %v7526, %v1864
    %v7531 = vmul.f32 %v7529, %v1864
    %v7532 = vadd.f32 %v7530, 1e-05
    %v7533 = vadd.f32 %v7531, 1e-05
    %v7534 = vrsqrt.pop %v7532
    %v7535 = vrsqrt.pop %v7533
    %v7536 = vmul.f32 %v7520, %v7534
    %v7537 = vmul.f32 %v7521, %v7535
    %v7539 = vlaneseq
    %v7540 = vshrl.u32 %v7539, 7
    %v7541 = vsub.s32 0, %v7540
    %v7542 = vrot.slane %v7510, %v7541
    %v7544 = vmul.f32 %v7536, %v7542
    %v7545 = vmul.f32 %v7537, %v7542
    %v7547 = vlaneseq
    %v7548 = vshrl.u32 %v7547, 7
    %v7549 = vsub.s32 0, %v7548
    %v7550 = vrot.slane %v7511, %v7549
    %v7552 = vadd.f32 %v7544, %v7550
    %v7553 = vadd.f32 %v7545, %v7550
    %7554 = vst.msk [vmem:[#allocation23] sm:$0xff] %vm283, %v7552
    %7555 = vst.msk [vmem:[#allocation23 + $0x8] sm:$0xff] %vm283, %v7553
    // Predicated region
    $region150: #{tpu_custom_call.1} parent=1 // pred_check
      _
    $region151: #{tpu_custom_call.1} parent=1 // pred_check_branch
      %7557 = sbr.rel (0) target = $region153
    $region152: #{tpu_custom_call.1} parent=1 // pred_region
      %s7559 = ssub.s32 256, 256
      %7560 = vsyncadd [#allocation4], %s7559
      %s7561 = sshll.u32 [#allocation23], 4
      %s7562 = int_to_ptr.vmem [resolvable:$true] %s7561
      %7567 = dma.vmem_to_hbm [thread:$0]  %s7562, 256, %s24, [#allocation4], 128, 128, 8
    $region153: #{tpu_custom_call.1} parent=1 // pred_fallthru
      _
    // Predicated region
    $region154: #{tpu_custom_call.1} parent=1 // pred_check
      _
    $region155: #{tpu_custom_call.1} parent=1 // pred_check_branch
      %7569 = sbr.rel (0) target = $region157
    $region156: #{tpu_custom_call.1} parent=1 // pred_region
      %7570 = dma.done [#allocation4], 256
    $region157: #{tpu_custom_call.1} parent=1 // pred_fallthru
      _
    %7571 = vsyncpa [#allocation3], 1
    %7572 = vsyncpa [#allocation6], 1
    %7573 = vsyncpa [#allocation9], 1
    %7574 = vsyncpa [#allocation12], 1
    %7575 = vsyncpa [#allocation15], 1
    %7576 = vsyncpa [#allocation18], 1
    %7577 = vsyncpa [#allocation21], 1
    %7578 = vsyncpa [#allocation4], 1

</llo_original>
